<compile_context>
chip_gen: v6e
topology: v6e:2x2x1
jax: 0.10.0
libtpu: 0.0.40
codegen_flags: <defaults>
</compile_context>

<pallas_src>
import jax
import jax.numpy as jnp
from jax.experimental import pallas as pl
from jax.experimental.pallas import tpu as pltpu


# ------------------------------ Pallas kernel ------------------------------ #

def _fused_stem_kernel(patches_ref, wc1_ref, wblk_ref, shmat_ref,
                       bns_ref, bnb_ref, out_ref):
    """One batch image: conv1+bn+relu -> maxpool -> 2 BasicBlocks, all in VMEM.

    patches_ref: (1, 256, 152) bf16  conv1 im2col patches, rows ordered
                 r = (w%2)*128 + (h%2)*64 + (h//2)*8 + (w//2) on the 16x16 map
    wc1_ref:     (152, 64)  bf16     conv1 weight (tap-major, cin, cout)
    wblk_ref:    (4, 9, 64, 64) bf16 layer1 conv weights [conv, tap, cin, cout]
    shmat_ref:   (4, 64, 64) bf16    0/1 shift matrices [w-1, w+1, h-1, h+1]
    bns_ref/bnb_ref: (5, 1, 64) f32  BN scale / shift (eval running stats)
    out_ref:     (1, 64, 64) f32     rows = h*8 + w over the 8x8 output map
    """
    f32 = jnp.float32
    bf16 = jnp.bfloat16

    cm = shmat_ref[0]   # (h, w) <- (h, w-1), zero row where w == 0
    cp = shmat_ref[1]   # (h, w) <- (h, w+1), zero row where w == 7
    rm = shmat_ref[2]   # (h, w) <- (h-1, w), zero row where h == 0
    rp = shmat_ref[3]   # (h, w) <- (h+1, w), zero row where h == 7

    def sel32(mat, v16):
        # 0/1 selection matmul == exact spatial shift of bf16 data (lossless).
        return jnp.dot(mat, v16, preferred_element_type=f32)

    def selb(mat, v16):
        return sel32(mat, v16).astype(bf16)

    # ---- conv1 7x7/s2 + BN + ReLU: one GEMM over pre-packed patches ------- #
    y1 = jnp.dot(patches_ref[0], wc1_ref[...], preferred_element_type=f32)
    y1 = jnp.maximum(y1 * bns_ref[0] + bnb_ref[0], 0.0)          # (256, 64) f32

    # ---- maxpool 3x3/s2/p1: 9 window taps from parity groups + shifts ----- #
    # Post-ReLU values are >= 0, so the zero rows produced by the shift
    # matrices at image borders never affect the max (they stand in for the
    # -inf padding).  Rounding to bf16 is monotone, so max() is unchanged and
    # the BasicBlocks consume bf16 operands anyway.
    yb = y1.astype(bf16)
    pa = yb[0:64, :]       # (2p,   2q)
    pb = yb[64:128, :]     # (2p+1, 2q)
    pc = yb[128:192, :]    # (2p,   2q+1)
    pd = yb[192:256, :]    # (2p+1, 2q+1)
    pe = sel32(cm, pc)                   # (2p,   2q-1)
    pf = sel32(cm, pd)                   # (2p+1, 2q-1)
    pg = sel32(rm, pb)                   # (2p-1, 2q)
    ph = sel32(rm, pd)                   # (2p-1, 2q+1)
    pi = sel32(rm, pf.astype(bf16))      # (2p-1, 2q-1)

    x = pa.astype(f32)
    for t in (pb, pc, pd):
        x = jnp.maximum(x, t.astype(f32))
    for t in (pe, pf, pg, ph, pi):
        x = jnp.maximum(x, t)
    # x: (64, 64) f32, rows = p*8 + q over the pooled 8x8 map

    # ---- layer1: two BasicBlocks, implicit-GEMM 3x3/s1/p1 convs ----------- #
    def conv3x3(xin, ci):
        xb = xin.astype(bf16)
        u = {-1: selb(cm, xb), 0: xb, 1: selb(cp, xb)}   # w-shifted copies
        acc = jnp.zeros((64, 64), f32)
        for dh in (-1, 0, 1):
            for dw in (-1, 0, 1):
                lhs = u[dw] if dh == 0 else selb(rm if dh < 0 else rp, u[dw])
                acc = acc + jnp.dot(lhs, wblk_ref[ci, (dh + 1) * 3 + (dw + 1)],
                                    preferred_element_type=f32)
        return acc

    k = 1
    for blk in range(2):
        identity = x
        y = conv3x3(x, 2 * blk)
        y = jnp.maximum(y * bns_ref[k] + bnb_ref[k], 0.0)
        k += 1
        y = conv3x3(y, 2 * blk + 1)
        y = y * bns_ref[k] + bnb_ref[k]
        k += 1
        x = jnp.maximum(y + identity, 0.0)               # residual + ReLU (f32)

    out_ref[0] = x


# ------------------------------- host packing ------------------------------ #

def _conv1_patches(x_nhwc):
    """im2col of the 3-channel input for conv1 (7x7/s2/p3), parity-ordered rows."""
    n = x_nhwc.shape[0]
    xp = jnp.pad(x_nhwc, ((0, 0), (3, 3), (3, 3), (0, 0)))          # (N,38,38,3)
    taps = []
    for i in range(7):
        for j in range(7):
            taps.append(xp[:, i:i + 31:2, j:j + 31:2, :])           # (N,16,16,3)
    pt = jnp.stack(taps, axis=3).reshape(n, 16, 16, 147)            # k = tap*3+cin
    # row order r = (w%2)*128 + (h%2)*64 + (h//2)*8 + (w//2)
    pt = pt.reshape(n, 8, 2, 8, 2, 147).transpose(0, 4, 2, 1, 3, 5)
    pt = pt.reshape(n, 256, 147)
    pt = jnp.pad(pt, ((0, 0), (0, 0), (0, 5)))                      # K 147 -> 152
    return pt.astype(jnp.bfloat16)


def _shift_matrices():
    """0/1 matrices implementing +-1 spatial shifts on an (8x8, C) activation."""
    r = jnp.arange(64)
    h, w = r // 8, r % 8
    col = jnp.arange(64)[None, :]

    def mat(valid, src):
        return ((col == src[:, None]) & valid[:, None]).astype(jnp.bfloat16)

    cm = mat(w >= 1, r - 1)    # (h, w) <- (h, w-1)
    cp = mat(w <= 6, r + 1)    # (h, w) <- (h, w+1)
    rm = mat(h >= 1, r - 8)    # (h, w) <- (h-1, w)
    rp = mat(h <= 6, r + 8)    # (h, w) <- (h+1, w)
    return jnp.stack([cm, cp, rm, rp], axis=0)                      # (4,64,64)


def _pack_params(p):
    wc1 = jnp.transpose(p["conv1_w"], (2, 3, 1, 0)).reshape(147, 64)
    wc1 = jnp.pad(wc1, ((0, 5), (0, 0))).astype(jnp.bfloat16)       # (152,64)
    wblk = jnp.stack(
        [jnp.transpose(p[f"l1_{b}_conv{c}_w"], (2, 3, 1, 0)).reshape(9, 64, 64)
         for b in range(2) for c in (1, 2)], axis=0).astype(jnp.bfloat16)
    bns, bnb = [], []
    for name in ("bn1", "l1_0_bn1", "l1_0_bn2", "l1_1_bn1", "l1_1_bn2"):
        g, beta, mean, var = p[name]
        s = g / jnp.sqrt(var + 1e-5)
        bns.append(s)
        bnb.append(beta - mean * s)
    bns = jnp.stack(bns).reshape(5, 1, 64).astype(jnp.float32)
    bnb = jnp.stack(bnb).reshape(5, 1, 64).astype(jnp.float32)
    return wc1, wblk, bns, bnb


# --------------------------------- forward --------------------------------- #

def truncate_resnet_forward(x_nchw, p):
    """Truncate_Resnet(output_layer='layer1'): conv1->bn->relu->maxpool->layer1."""
    n, c, hh, ww = x_nchw.shape
    assert (c, hh, ww) == (3, 32, 32), "fused kernel is specialized to 3x32x32 input"
    x = jnp.transpose(x_nchw, (0, 2, 3, 1)).astype(jnp.float32)     # NCHW -> NHWC

    patches = _conv1_patches(x)
    wc1, wblk, bns, bnb = _pack_params(p)
    shmat = _shift_matrices()

    out = pl.pallas_call(
        _fused_stem_kernel,
        out_shape=jax.ShapeDtypeStruct((n, 64, 64), jnp.float32),
        grid=(n,),
        in_specs=[
            pl.BlockSpec((1, 256, 152), lambda b: (b, 0, 0)),
            pl.BlockSpec((152, 64), lambda b: (0, 0)),
            pl.BlockSpec((4, 9, 64, 64), lambda b: (0, 0, 0, 0)),
            pl.BlockSpec((4, 64, 64), lambda b: (0, 0, 0)),
            pl.BlockSpec((5, 1, 64), lambda b: (0, 0, 0)),
            pl.BlockSpec((5, 1, 64), lambda b: (0, 0, 0)),
        ],
        out_specs=pl.BlockSpec((1, 64, 64), lambda b: (b, 0, 0)),
        compiler_params=pltpu.CompilerParams(
            dimension_semantics=("parallel",),      # images shard across TCs
            vmem_limit_bytes=32 * 1024 * 1024,      # safe on v5e/v6e/v7x
        ),
    )(patches, wc1, wblk, shmat, bns, bnb)

    # (N, 8*8, 64) [h*8+w, c] -> NCHW (N, 64, 8, 8)
    return jnp.transpose(out.reshape(n, 8, 8, 64), (0, 3, 1, 2))


# ------------------------------ params / check ----------------------------- #

def init_params(key):
    """Deterministic synthetic ResNet18 params up to (and incl.) layer1."""
    def conv(k, cout, cin, kh, kw):
        fan_in = cin * kh * kw
        return jax.random.normal(k, (cout, cin, kh, kw), jnp.float32) * jnp.sqrt(2.0 / fan_in)

    def bn(k, c):
        k1, k2, k3, k4 = jax.random.split(k, 4)
        gamma = 1.0 + 0.1 * jax.random.normal(k1, (c,), jnp.float32)
        beta = 0.1 * jax.random.normal(k2, (c,), jnp.float32)
        mean = 0.1 * jax.random.normal(k3, (c,), jnp.float32)
        var = jnp.abs(jax.random.normal(k4, (c,), jnp.float32)) + 0.5
        return (gamma, beta, mean, var)

    keys = jax.random.split(key, 16)
    p = {"conv1_w": conv(keys[0], 64, 3, 7, 7), "bn1": bn(keys[1], 64)}
    for b in range(2):  # layer1: two BasicBlocks (64 -> 64, stride 1)
        p[f"l1_{b}_conv1_w"] = conv(keys[2 + 4 * b], 64, 64, 3, 3)
        p[f"l1_{b}_bn1"] = bn(keys[3 + 4 * b], 64)
        p[f"l1_{b}_conv2_w"] = conv(keys[4 + 4 * b], 64, 64, 3, 3)
        p[f"l1_{b}_bn2"] = bn(keys[5 + 4 * b], 64)
    return p


def _reference_forward(x_nchw, p):
    """Pure-XLA f32 reference of the truncated ResNet18 forward."""
    x = jnp.transpose(x_nchw, (0, 2, 3, 1)).astype(jnp.float32)

    def conv(x, w, stride, pad):
        return jax.lax.conv_general_dilated(
            x, jnp.transpose(w, (2, 3, 1, 0)), (stride, stride),
            [(pad, pad), (pad, pad)],
            dimension_numbers=("NHWC", "HWIO", "NHWC"))

    def bn(x, bnp):
        g, b, m, v = bnp
        return (x - m) * (g / jnp.sqrt(v + 1e-5)) + b

    x = jax.nn.relu(bn(conv(x, p["conv1_w"], 2, 3), p["bn1"]))
    x = jax.lax.reduce_window(x, -jnp.inf, jax.lax.max, (1, 3, 3, 1),
                              (1, 2, 2, 1), [(0, 0), (1, 1), (1, 1), (0, 0)])
    for b in range(2):
        idn = x
        y = jax.nn.relu(bn(conv(x, p[f"l1_{b}_conv1_w"], 1, 1), p[f"l1_{b}_bn1"]))
        y = bn(conv(y, p[f"l1_{b}_conv2_w"], 1, 1), p[f"l1_{b}_bn2"])
        x = jax.nn.relu(y + idn)
    return jnp.transpose(x, (0, 3, 1, 2))


if __name__ == "__main__":
    key = jax.random.PRNGKey(0)
    kx, kp = jax.random.split(key)
    x = jax.random.normal(kx, (2, 3, 32, 32), jnp.float32)   # NCHW RGB input
    params = init_params(kp)

    fwd = jax.jit(truncate_resnet_forward)
    out = fwd(x, params)
    jax.block_until_ready(out)

    assert out.shape == (2, 64, 8, 8), out.shape
    assert out.dtype == jnp.float32

    ref = _reference_forward(x, params)
    err = float(jnp.max(jnp.abs(out - ref)) / (jnp.max(jnp.abs(ref)) + 1e-6))
    assert err < 0.05, f"kernel mismatch vs f32 reference: scaled max err {err}"
    print("KERNEL_OK")
</pallas_src>

<mosaic_0001>
module attributes {stable_mosaic.version = 11 : i64} {
  func.func @_fused_stem_kernel(%arg0: i32, %arg1: memref<1x256x152xbf16, #tpu.memory_space<vmem>>, %arg2: memref<152x64xbf16, #tpu.memory_space<vmem>>, %arg3: memref<4x9x64x64xbf16, #tpu.memory_space<vmem>>, %arg4: memref<4x64x64xbf16, #tpu.memory_space<vmem>>, %arg5: memref<5x1x64xf32, #tpu.memory_space<vmem>>, %arg6: memref<5x1x64xf32, #tpu.memory_space<vmem>>, %arg7: memref<1x64x64xf32, #tpu.memory_space<vmem>>) attributes {dimension_semantics = [#tpu.dimension_semantics<parallel>], iteration_bounds = array<i64: 2>, scalar_prefetch = 0 : i64, scratch_operands = 0 : i64, tpu.core_type = #tpu.core_type<tc>, window_params = [{transform_indices = @transform_0, window_bounds = array<i64: 1, 256, 152>}, {pipeline_mode = #tpu.pipeline_mode<synchronous>, transform_indices = @transform_1, window_bounds = array<i64: 152, 64>}, {pipeline_mode = #tpu.pipeline_mode<synchronous>, transform_indices = @transform_2, window_bounds = array<i64: 4, 9, 64, 64>}, {pipeline_mode = #tpu.pipeline_mode<synchronous>, transform_indices = @transform_3, window_bounds = array<i64: 4, 64, 64>}, {pipeline_mode = #tpu.pipeline_mode<synchronous>, transform_indices = @transform_4, window_bounds = array<i64: 5, 1, 64>}, {pipeline_mode = #tpu.pipeline_mode<synchronous>, transform_indices = @transform_5, window_bounds = array<i64: 5, 1, 64>}, {transform_indices = @transform_6, window_bounds = array<i64: 1, 64, 64>}]} {
    %c0 = arith.constant 0 : index
    %c0_0 = arith.constant 0 : index
    %c0_1 = arith.constant 0 : index
    %0 = vector.load %arg4[%c0, %c0_0, %c0_1] : memref<4x64x64xbf16, #tpu.memory_space<vmem>>, vector<1x64x64xbf16>
    %1 = vector.shape_cast %0 : vector<1x64x64xbf16> to vector<64x64xbf16>
    %c1 = arith.constant 1 : index
    %c0_2 = arith.constant 0 : index
    %c0_3 = arith.constant 0 : index
    %2 = vector.load %arg4[%c1, %c0_2, %c0_3] : memref<4x64x64xbf16, #tpu.memory_space<vmem>>, vector<1x64x64xbf16>
    %3 = vector.shape_cast %2 : vector<1x64x64xbf16> to vector<64x64xbf16>
    %c2 = arith.constant 2 : index
    %c0_4 = arith.constant 0 : index
    %c0_5 = arith.constant 0 : index
    %4 = vector.load %arg4[%c2, %c0_4, %c0_5] : memref<4x64x64xbf16, #tpu.memory_space<vmem>>, vector<1x64x64xbf16>
    %5 = vector.shape_cast %4 : vector<1x64x64xbf16> to vector<64x64xbf16>
    %c3 = arith.constant 3 : index
    %c0_6 = arith.constant 0 : index
    %c0_7 = arith.constant 0 : index
    %6 = vector.load %arg4[%c3, %c0_6, %c0_7] : memref<4x64x64xbf16, #tpu.memory_space<vmem>>, vector<1x64x64xbf16>
    %7 = vector.shape_cast %6 : vector<1x64x64xbf16> to vector<64x64xbf16>
    %c0_8 = arith.constant 0 : index
    %c0_9 = arith.constant 0 : index
    %c0_10 = arith.constant 0 : index
    %8 = vector.load %arg1[%c0_8, %c0_9, %c0_10] : memref<1x256x152xbf16, #tpu.memory_space<vmem>>, vector<1x256x152xbf16>
    %9 = vector.shape_cast %8 : vector<1x256x152xbf16> to vector<256x152xbf16>
    %c0_11 = arith.constant 0 : index
    %c0_12 = arith.constant 0 : index
    %10 = vector.load %arg2[%c0_11, %c0_12] : memref<152x64xbf16, #tpu.memory_space<vmem>>, vector<152x64xbf16>
    %cst = arith.constant dense<0.000000e+00> : vector<256x64xf32>
    %11 = tpu.matmul %9, %10, %cst {dimension_numbers = #tpu.dot_dimension_numbers<[1], [0], [0], [1], [0, 0, 1, 1], [], []>} : vector<256x152xbf16>, vector<152x64xbf16>, vector<256x64xf32> -> vector<256x64xf32>
    %c0_13 = arith.constant 0 : index
    %c0_14 = arith.constant 0 : index
    %c0_15 = arith.constant 0 : index
    %12 = vector.load %arg5[%c0_13, %c0_14, %c0_15] : memref<5x1x64xf32, #tpu.memory_space<vmem>>, vector<1x1x64xf32>
    %13 = vector.shape_cast %12 : vector<1x1x64xf32> to vector<1x64xf32>
    %14 = vector.broadcast %13 : vector<1x64xf32> to vector<256x64xf32>
    %15 = arith.mulf %11, %14 : vector<256x64xf32>
    %c0_16 = arith.constant 0 : index
    %c0_17 = arith.constant 0 : index
    %c0_18 = arith.constant 0 : index
    %16 = vector.load %arg6[%c0_16, %c0_17, %c0_18] : memref<5x1x64xf32, #tpu.memory_space<vmem>>, vector<1x1x64xf32>
    %17 = vector.shape_cast %16 : vector<1x1x64xf32> to vector<1x64xf32>
    %18 = vector.broadcast %17 : vector<1x64xf32> to vector<256x64xf32>
    %19 = arith.addf %15, %18 : vector<256x64xf32>
    %cst_19 = arith.constant 0.000000e+00 : f32
    %20 = vector.broadcast %cst_19 : f32 to vector<256x64xf32>
    %21 = arith.maximumf %19, %20 : vector<256x64xf32>
    %22 = arith.truncf %21 : vector<256x64xf32> to vector<256x64xbf16>
    %23 = vector.extract_strided_slice %22 {offsets = [0, 0], sizes = [64, 64], strides = [1, 1]} : vector<256x64xbf16> to vector<64x64xbf16>
    %24 = vector.extract_strided_slice %22 {offsets = [64, 0], sizes = [64, 64], strides = [1, 1]} : vector<256x64xbf16> to vector<64x64xbf16>
    %25 = vector.extract_strided_slice %22 {offsets = [128, 0], sizes = [64, 64], strides = [1, 1]} : vector<256x64xbf16> to vector<64x64xbf16>
    %26 = vector.extract_strided_slice %22 {offsets = [192, 0], sizes = [64, 64], strides = [1, 1]} : vector<256x64xbf16> to vector<64x64xbf16>
    %cst_20 = arith.constant dense<0.000000e+00> : vector<64x64xf32>
    %27 = tpu.matmul %1, %25, %cst_20 {dimension_numbers = #tpu.dot_dimension_numbers<[1], [0], [0], [1], [0, 0, 1, 1], [], []>} : vector<64x64xbf16>, vector<64x64xbf16>, vector<64x64xf32> -> vector<64x64xf32>
    %cst_21 = arith.constant dense<0.000000e+00> : vector<64x64xf32>
    %28 = tpu.matmul %1, %26, %cst_21 {dimension_numbers = #tpu.dot_dimension_numbers<[1], [0], [0], [1], [0, 0, 1, 1], [], []>} : vector<64x64xbf16>, vector<64x64xbf16>, vector<64x64xf32> -> vector<64x64xf32>
    %cst_22 = arith.constant dense<0.000000e+00> : vector<64x64xf32>
    %29 = tpu.matmul %5, %24, %cst_22 {dimension_numbers = #tpu.dot_dimension_numbers<[1], [0], [0], [1], [0, 0, 1, 1], [], []>} : vector<64x64xbf16>, vector<64x64xbf16>, vector<64x64xf32> -> vector<64x64xf32>
    %cst_23 = arith.constant dense<0.000000e+00> : vector<64x64xf32>
    %30 = tpu.matmul %5, %26, %cst_23 {dimension_numbers = #tpu.dot_dimension_numbers<[1], [0], [0], [1], [0, 0, 1, 1], [], []>} : vector<64x64xbf16>, vector<64x64xbf16>, vector<64x64xf32> -> vector<64x64xf32>
    %31 = arith.truncf %28 : vector<64x64xf32> to vector<64x64xbf16>
    %cst_24 = arith.constant dense<0.000000e+00> : vector<64x64xf32>
    %32 = tpu.matmul %5, %31, %cst_24 {dimension_numbers = #tpu.dot_dimension_numbers<[1], [0], [0], [1], [0, 0, 1, 1], [], []>} : vector<64x64xbf16>, vector<64x64xbf16>, vector<64x64xf32> -> vector<64x64xf32>
    %33 = arith.extf %23 : vector<64x64xbf16> to vector<64x64xf32>
    %34 = arith.extf %24 : vector<64x64xbf16> to vector<64x64xf32>
    %35 = arith.maximumf %33, %34 : vector<64x64xf32>
    %36 = arith.extf %25 : vector<64x64xbf16> to vector<64x64xf32>
    %37 = arith.maximumf %35, %36 : vector<64x64xf32>
    %38 = arith.extf %26 : vector<64x64xbf16> to vector<64x64xf32>
    %39 = arith.maximumf %37, %38 : vector<64x64xf32>
    %40 = arith.maximumf %39, %27 : vector<64x64xf32>
    %41 = arith.maximumf %40, %28 : vector<64x64xf32>
    %42 = arith.maximumf %41, %29 : vector<64x64xf32>
    %43 = arith.maximumf %42, %30 : vector<64x64xf32>
    %44 = arith.maximumf %43, %32 : vector<64x64xf32>
    %45 = arith.truncf %44 : vector<64x64xf32> to vector<64x64xbf16>
    %cst_25 = arith.constant dense<0.000000e+00> : vector<64x64xf32>
    %46 = tpu.matmul %1, %45, %cst_25 {dimension_numbers = #tpu.dot_dimension_numbers<[1], [0], [0], [1], [0, 0, 1, 1], [], []>} : vector<64x64xbf16>, vector<64x64xbf16>, vector<64x64xf32> -> vector<64x64xf32>
    %47 = arith.truncf %46 : vector<64x64xf32> to vector<64x64xbf16>
    %cst_26 = arith.constant dense<0.000000e+00> : vector<64x64xf32>
    %48 = tpu.matmul %3, %45, %cst_26 {dimension_numbers = #tpu.dot_dimension_numbers<[1], [0], [0], [1], [0, 0, 1, 1], [], []>} : vector<64x64xbf16>, vector<64x64xbf16>, vector<64x64xf32> -> vector<64x64xf32>
    %49 = arith.truncf %48 : vector<64x64xf32> to vector<64x64xbf16>
    %cst_27 = arith.constant 0.000000e+00 : f32
    %50 = vector.broadcast %cst_27 : f32 to vector<64x64xf32>
    %cst_28 = arith.constant dense<0.000000e+00> : vector<64x64xf32>
    %51 = tpu.matmul %5, %47, %cst_28 {dimension_numbers = #tpu.dot_dimension_numbers<[1], [0], [0], [1], [0, 0, 1, 1], [], []>} : vector<64x64xbf16>, vector<64x64xbf16>, vector<64x64xf32> -> vector<64x64xf32>
    %52 = arith.truncf %51 : vector<64x64xf32> to vector<64x64xbf16>
    %c0_29 = arith.constant 0 : index
    %c0_30 = arith.constant 0 : index
    %c0_31 = arith.constant 0 : index
    %c0_32 = arith.constant 0 : index
    %53 = vector.load %arg3[%c0_29, %c0_30, %c0_31, %c0_32] : memref<4x9x64x64xbf16, #tpu.memory_space<vmem>>, vector<1x1x64x64xbf16>
    %54 = vector.shape_cast %53 : vector<1x1x64x64xbf16> to vector<64x64xbf16>
    %cst_33 = arith.constant dense<0.000000e+00> : vector<64x64xf32>
    %55 = tpu.matmul %52, %54, %cst_33 {dimension_numbers = #tpu.dot_dimension_numbers<[1], [0], [0], [1], [0, 0, 1, 1], [], []>} : vector<64x64xbf16>, vector<64x64xbf16>, vector<64x64xf32> -> vector<64x64xf32>
    %56 = arith.addf %50, %55 : vector<64x64xf32>
    %cst_34 = arith.constant dense<0.000000e+00> : vector<64x64xf32>
    %57 = tpu.matmul %5, %45, %cst_34 {dimension_numbers = #tpu.dot_dimension_numbers<[1], [0], [0], [1], [0, 0, 1, 1], [], []>} : vector<64x64xbf16>, vector<64x64xbf16>, vector<64x64xf32> -> vector<64x64xf32>
    %58 = arith.truncf %57 : vector<64x64xf32> to vector<64x64xbf16>
    %c0_35 = arith.constant 0 : index
    %c1_36 = arith.constant 1 : index
    %c0_37 = arith.constant 0 : index
    %c0_38 = arith.constant 0 : index
    %59 = vector.load %arg3[%c0_35, %c1_36, %c0_37, %c0_38] : memref<4x9x64x64xbf16, #tpu.memory_space<vmem>>, vector<1x1x64x64xbf16>
    %60 = vector.shape_cast %59 : vector<1x1x64x64xbf16> to vector<64x64xbf16>
    %cst_39 = arith.constant dense<0.000000e+00> : vector<64x64xf32>
    %61 = tpu.matmul %58, %60, %cst_39 {dimension_numbers = #tpu.dot_dimension_numbers<[1], [0], [0], [1], [0, 0, 1, 1], [], []>} : vector<64x64xbf16>, vector<64x64xbf16>, vector<64x64xf32> -> vector<64x64xf32>
    %62 = arith.addf %56, %61 : vector<64x64xf32>
    %cst_40 = arith.constant dense<0.000000e+00> : vector<64x64xf32>
    %63 = tpu.matmul %5, %49, %cst_40 {dimension_numbers = #tpu.dot_dimension_numbers<[1], [0], [0], [1], [0, 0, 1, 1], [], []>} : vector<64x64xbf16>, vector<64x64xbf16>, vector<64x64xf32> -> vector<64x64xf32>
    %64 = arith.truncf %63 : vector<64x64xf32> to vector<64x64xbf16>
    %c0_41 = arith.constant 0 : index
    %c2_42 = arith.constant 2 : index
    %c0_43 = arith.constant 0 : index
    %c0_44 = arith.constant 0 : index
    %65 = vector.load %arg3[%c0_41, %c2_42, %c0_43, %c0_44] : memref<4x9x64x64xbf16, #tpu.memory_space<vmem>>, vector<1x1x64x64xbf16>
    %66 = vector.shape_cast %65 : vector<1x1x64x64xbf16> to vector<64x64xbf16>
    %cst_45 = arith.constant dense<0.000000e+00> : vector<64x64xf32>
    %67 = tpu.matmul %64, %66, %cst_45 {dimension_numbers = #tpu.dot_dimension_numbers<[1], [0], [0], [1], [0, 0, 1, 1], [], []>} : vector<64x64xbf16>, vector<64x64xbf16>, vector<64x64xf32> -> vector<64x64xf32>
    %68 = arith.addf %62, %67 : vector<64x64xf32>
    %c0_46 = arith.constant 0 : index
    %c3_47 = arith.constant 3 : index
    %c0_48 = arith.constant 0 : index
    %c0_49 = arith.constant 0 : index
    %69 = vector.load %arg3[%c0_46, %c3_47, %c0_48, %c0_49] : memref<4x9x64x64xbf16, #tpu.memory_space<vmem>>, vector<1x1x64x64xbf16>
    %70 = vector.shape_cast %69 : vector<1x1x64x64xbf16> to vector<64x64xbf16>
    %cst_50 = arith.constant dense<0.000000e+00> : vector<64x64xf32>
    %71 = tpu.matmul %47, %70, %cst_50 {dimension_numbers = #tpu.dot_dimension_numbers<[1], [0], [0], [1], [0, 0, 1, 1], [], []>} : vector<64x64xbf16>, vector<64x64xbf16>, vector<64x64xf32> -> vector<64x64xf32>
    %72 = arith.addf %68, %71 : vector<64x64xf32>
    %c0_51 = arith.constant 0 : index
    %c4 = arith.constant 4 : index
    %c0_52 = arith.constant 0 : index
    %c0_53 = arith.constant 0 : index
    %73 = vector.load %arg3[%c0_51, %c4, %c0_52, %c0_53] : memref<4x9x64x64xbf16, #tpu.memory_space<vmem>>, vector<1x1x64x64xbf16>
    %74 = vector.shape_cast %73 : vector<1x1x64x64xbf16> to vector<64x64xbf16>
    %cst_54 = arith.constant dense<0.000000e+00> : vector<64x64xf32>
    %75 = tpu.matmul %45, %74, %cst_54 {dimension_numbers = #tpu.dot_dimension_numbers<[1], [0], [0], [1], [0, 0, 1, 1], [], []>} : vector<64x64xbf16>, vector<64x64xbf16>, vector<64x64xf32> -> vector<64x64xf32>
    %76 = arith.addf %72, %75 : vector<64x64xf32>
    %c0_55 = arith.constant 0 : index
    %c5 = arith.constant 5 : index
    %c0_56 = arith.constant 0 : index
    %c0_57 = arith.constant 0 : index
    %77 = vector.load %arg3[%c0_55, %c5, %c0_56, %c0_57] : memref<4x9x64x64xbf16, #tpu.memory_space<vmem>>, vector<1x1x64x64xbf16>
    %78 = vector.shape_cast %77 : vector<1x1x64x64xbf16> to vector<64x64xbf16>
    %cst_58 = arith.constant dense<0.000000e+00> : vector<64x64xf32>
    %79 = tpu.matmul %49, %78, %cst_58 {dimension_numbers = #tpu.dot_dimension_numbers<[1], [0], [0], [1], [0, 0, 1, 1], [], []>} : vector<64x64xbf16>, vector<64x64xbf16>, vector<64x64xf32> -> vector<64x64xf32>
    %80 = arith.addf %76, %79 : vector<64x64xf32>
    %cst_59 = arith.constant dense<0.000000e+00> : vector<64x64xf32>
    %81 = tpu.matmul %7, %47, %cst_59 {dimension_numbers = #tpu.dot_dimension_numbers<[1], [0], [0], [1], [0, 0, 1, 1], [], []>} : vector<64x64xbf16>, vector<64x64xbf16>, vector<64x64xf32> -> vector<64x64xf32>
    %82 = arith.truncf %81 : vector<64x64xf32> to vector<64x64xbf16>
    %c0_60 = arith.constant 0 : index
    %c6 = arith.constant 6 : index
    %c0_61 = arith.constant 0 : index
    %c0_62 = arith.constant 0 : index
    %83 = vector.load %arg3[%c0_60, %c6, %c0_61, %c0_62] : memref<4x9x64x64xbf16, #tpu.memory_space<vmem>>, vector<1x1x64x64xbf16>
    %84 = vector.shape_cast %83 : vector<1x1x64x64xbf16> to vector<64x64xbf16>
    %cst_63 = arith.constant dense<0.000000e+00> : vector<64x64xf32>
    %85 = tpu.matmul %82, %84, %cst_63 {dimension_numbers = #tpu.dot_dimension_numbers<[1], [0], [0], [1], [0, 0, 1, 1], [], []>} : vector<64x64xbf16>, vector<64x64xbf16>, vector<64x64xf32> -> vector<64x64xf32>
    %86 = arith.addf %80, %85 : vector<64x64xf32>
    %cst_64 = arith.constant dense<0.000000e+00> : vector<64x64xf32>
    %87 = tpu.matmul %7, %45, %cst_64 {dimension_numbers = #tpu.dot_dimension_numbers<[1], [0], [0], [1], [0, 0, 1, 1], [], []>} : vector<64x64xbf16>, vector<64x64xbf16>, vector<64x64xf32> -> vector<64x64xf32>
    %88 = arith.truncf %87 : vector<64x64xf32> to vector<64x64xbf16>
    %c0_65 = arith.constant 0 : index
    %c7 = arith.constant 7 : index
    %c0_66 = arith.constant 0 : index
    %c0_67 = arith.constant 0 : index
    %89 = vector.load %arg3[%c0_65, %c7, %c0_66, %c0_67] : memref<4x9x64x64xbf16, #tpu.memory_space<vmem>>, vector<1x1x64x64xbf16>
    %90 = vector.shape_cast %89 : vector<1x1x64x64xbf16> to vector<64x64xbf16>
    %cst_68 = arith.constant dense<0.000000e+00> : vector<64x64xf32>
    %91 = tpu.matmul %88, %90, %cst_68 {dimension_numbers = #tpu.dot_dimension_numbers<[1], [0], [0], [1], [0, 0, 1, 1], [], []>} : vector<64x64xbf16>, vector<64x64xbf16>, vector<64x64xf32> -> vector<64x64xf32>
    %92 = arith.addf %86, %91 : vector<64x64xf32>
    %cst_69 = arith.constant dense<0.000000e+00> : vector<64x64xf32>
    %93 = tpu.matmul %7, %49, %cst_69 {dimension_numbers = #tpu.dot_dimension_numbers<[1], [0], [0], [1], [0, 0, 1, 1], [], []>} : vector<64x64xbf16>, vector<64x64xbf16>, vector<64x64xf32> -> vector<64x64xf32>
    %94 = arith.truncf %93 : vector<64x64xf32> to vector<64x64xbf16>
    %c0_70 = arith.constant 0 : index
    %c8 = arith.constant 8 : index
    %c0_71 = arith.constant 0 : index
    %c0_72 = arith.constant 0 : index
    %95 = vector.load %arg3[%c0_70, %c8, %c0_71, %c0_72] : memref<4x9x64x64xbf16, #tpu.memory_space<vmem>>, vector<1x1x64x64xbf16>
    %96 = vector.shape_cast %95 : vector<1x1x64x64xbf16> to vector<64x64xbf16>
    %cst_73 = arith.constant dense<0.000000e+00> : vector<64x64xf32>
    %97 = tpu.matmul %94, %96, %cst_73 {dimension_numbers = #tpu.dot_dimension_numbers<[1], [0], [0], [1], [0, 0, 1, 1], [], []>} : vector<64x64xbf16>, vector<64x64xbf16>, vector<64x64xf32> -> vector<64x64xf32>
    %98 = arith.addf %92, %97 : vector<64x64xf32>
    %c1_74 = arith.constant 1 : index
    %c0_75 = arith.constant 0 : index
    %c0_76 = arith.constant 0 : index
    %99 = vector.load %arg5[%c1_74, %c0_75, %c0_76] : memref<5x1x64xf32, #tpu.memory_space<vmem>>, vector<1x1x64xf32>
    %100 = vector.shape_cast %99 : vector<1x1x64xf32> to vector<1x64xf32>
    %101 = vector.broadcast %100 : vector<1x64xf32> to vector<64x64xf32>
    %102 = arith.mulf %98, %101 : vector<64x64xf32>
    %c1_77 = arith.constant 1 : index
    %c0_78 = arith.constant 0 : index
    %c0_79 = arith.constant 0 : index
    %103 = vector.load %arg6[%c1_77, %c0_78, %c0_79] : memref<5x1x64xf32, #tpu.memory_space<vmem>>, vector<1x1x64xf32>
    %104 = vector.shape_cast %103 : vector<1x1x64xf32> to vector<1x64xf32>
    %105 = vector.broadcast %104 : vector<1x64xf32> to vector<64x64xf32>
    %106 = arith.addf %102, %105 : vector<64x64xf32>
    %cst_80 = arith.constant 0.000000e+00 : f32
    %107 = vector.broadcast %cst_80 : f32 to vector<64x64xf32>
    %108 = arith.maximumf %106, %107 : vector<64x64xf32>
    %109 = arith.truncf %108 : vector<64x64xf32> to vector<64x64xbf16>
    %cst_81 = arith.constant dense<0.000000e+00> : vector<64x64xf32>
    %110 = tpu.matmul %1, %109, %cst_81 {dimension_numbers = #tpu.dot_dimension_numbers<[1], [0], [0], [1], [0, 0, 1, 1], [], []>} : vector<64x64xbf16>, vector<64x64xbf16>, vector<64x64xf32> -> vector<64x64xf32>
    %111 = arith.truncf %110 : vector<64x64xf32> to vector<64x64xbf16>
    %cst_82 = arith.constant dense<0.000000e+00> : vector<64x64xf32>
    %112 = tpu.matmul %3, %109, %cst_82 {dimension_numbers = #tpu.dot_dimension_numbers<[1], [0], [0], [1], [0, 0, 1, 1], [], []>} : vector<64x64xbf16>, vector<64x64xbf16>, vector<64x64xf32> -> vector<64x64xf32>
    %113 = arith.truncf %112 : vector<64x64xf32> to vector<64x64xbf16>
    %cst_83 = arith.constant 0.000000e+00 : f32
    %114 = vector.broadcast %cst_83 : f32 to vector<64x64xf32>
    %cst_84 = arith.constant dense<0.000000e+00> : vector<64x64xf32>
    %115 = tpu.matmul %5, %111, %cst_84 {dimension_numbers = #tpu.dot_dimension_numbers<[1], [0], [0], [1], [0, 0, 1, 1], [], []>} : vector<64x64xbf16>, vector<64x64xbf16>, vector<64x64xf32> -> vector<64x64xf32>
    %116 = arith.truncf %115 : vector<64x64xf32> to vector<64x64xbf16>
    %c1_85 = arith.constant 1 : index
    %c0_86 = arith.constant 0 : index
    %c0_87 = arith.constant 0 : index
    %c0_88 = arith.constant 0 : index
    %117 = vector.load %arg3[%c1_85, %c0_86, %c0_87, %c0_88] : memref<4x9x64x64xbf16, #tpu.memory_space<vmem>>, vector<1x1x64x64xbf16>
    %118 = vector.shape_cast %117 : vector<1x1x64x64xbf16> to vector<64x64xbf16>
    %cst_89 = arith.constant dense<0.000000e+00> : vector<64x64xf32>
    %119 = tpu.matmul %116, %118, %cst_89 {dimension_numbers = #tpu.dot_dimension_numbers<[1], [0], [0], [1], [0, 0, 1, 1], [], []>} : vector<64x64xbf16>, vector<64x64xbf16>, vector<64x64xf32> -> vector<64x64xf32>
    %120 = arith.addf %114, %119 : vector<64x64xf32>
    %cst_90 = arith.constant dense<0.000000e+00> : vector<64x64xf32>
    %121 = tpu.matmul %5, %109, %cst_90 {dimension_numbers = #tpu.dot_dimension_numbers<[1], [0], [0], [1], [0, 0, 1, 1], [], []>} : vector<64x64xbf16>, vector<64x64xbf16>, vector<64x64xf32> -> vector<64x64xf32>
    %122 = arith.truncf %121 : vector<64x64xf32> to vector<64x64xbf16>
    %c1_91 = arith.constant 1 : index
    %c1_92 = arith.constant 1 : index
    %c0_93 = arith.constant 0 : index
    %c0_94 = arith.constant 0 : index
    %123 = vector.load %arg3[%c1_91, %c1_92, %c0_93, %c0_94] : memref<4x9x64x64xbf16, #tpu.memory_space<vmem>>, vector<1x1x64x64xbf16>
    %124 = vector.shape_cast %123 : vector<1x1x64x64xbf16> to vector<64x64xbf16>
    %cst_95 = arith.constant dense<0.000000e+00> : vector<64x64xf32>
    %125 = tpu.matmul %122, %124, %cst_95 {dimension_numbers = #tpu.dot_dimension_numbers<[1], [0], [0], [1], [0, 0, 1, 1], [], []>} : vector<64x64xbf16>, vector<64x64xbf16>, vector<64x64xf32> -> vector<64x64xf32>
    %126 = arith.addf %120, %125 : vector<64x64xf32>
    %cst_96 = arith.constant dense<0.000000e+00> : vector<64x64xf32>
    %127 = tpu.matmul %5, %113, %cst_96 {dimension_numbers = #tpu.dot_dimension_numbers<[1], [0], [0], [1], [0, 0, 1, 1], [], []>} : vector<64x64xbf16>, vector<64x64xbf16>, vector<64x64xf32> -> vector<64x64xf32>
    %128 = arith.truncf %127 : vector<64x64xf32> to vector<64x64xbf16>
    %c1_97 = arith.constant 1 : index
    %c2_98 = arith.constant 2 : index
    %c0_99 = arith.constant 0 : index
    %c0_100 = arith.constant 0 : index
    %129 = vector.load %arg3[%c1_97, %c2_98, %c0_99, %c0_100] : memref<4x9x64x64xbf16, #tpu.memory_space<vmem>>, vector<1x1x64x64xbf16>
    %130 = vector.shape_cast %129 : vector<1x1x64x64xbf16> to vector<64x64xbf16>
    %cst_101 = arith.constant dense<0.000000e+00> : vector<64x64xf32>
    %131 = tpu.matmul %128, %130, %cst_101 {dimension_numbers = #tpu.dot_dimension_numbers<[1], [0], [0], [1], [0, 0, 1, 1], [], []>} : vector<64x64xbf16>, vector<64x64xbf16>, vector<64x64xf32> -> vector<64x64xf32>
    %132 = arith.addf %126, %131 : vector<64x64xf32>
    %c1_102 = arith.constant 1 : index
    %c3_103 = arith.constant 3 : index
    %c0_104 = arith.constant 0 : index
    %c0_105 = arith.constant 0 : index
    %133 = vector.load %arg3[%c1_102, %c3_103, %c0_104, %c0_105] : memref<4x9x64x64xbf16, #tpu.memory_space<vmem>>, vector<1x1x64x64xbf16>
    %134 = vector.shape_cast %133 : vector<1x1x64x64xbf16> to vector<64x64xbf16>
    %cst_106 = arith.constant dense<0.000000e+00> : vector<64x64xf32>
    %135 = tpu.matmul %111, %134, %cst_106 {dimension_numbers = #tpu.dot_dimension_numbers<[1], [0], [0], [1], [0, 0, 1, 1], [], []>} : vector<64x64xbf16>, vector<64x64xbf16>, vector<64x64xf32> -> vector<64x64xf32>
    %136 = arith.addf %132, %135 : vector<64x64xf32>
    %c1_107 = arith.constant 1 : index
    %c4_108 = arith.constant 4 : index
    %c0_109 = arith.constant 0 : index
    %c0_110 = arith.constant 0 : index
    %137 = vector.load %arg3[%c1_107, %c4_108, %c0_109, %c0_110] : memref<4x9x64x64xbf16, #tpu.memory_space<vmem>>, vector<1x1x64x64xbf16>
    %138 = vector.shape_cast %137 : vector<1x1x64x64xbf16> to vector<64x64xbf16>
    %cst_111 = arith.constant dense<0.000000e+00> : vector<64x64xf32>
    %139 = tpu.matmul %109, %138, %cst_111 {dimension_numbers = #tpu.dot_dimension_numbers<[1], [0], [0], [1], [0, 0, 1, 1], [], []>} : vector<64x64xbf16>, vector<64x64xbf16>, vector<64x64xf32> -> vector<64x64xf32>
    %140 = arith.addf %136, %139 : vector<64x64xf32>
    %c1_112 = arith.constant 1 : index
    %c5_113 = arith.constant 5 : index
    %c0_114 = arith.constant 0 : index
    %c0_115 = arith.constant 0 : index
    %141 = vector.load %arg3[%c1_112, %c5_113, %c0_114, %c0_115] : memref<4x9x64x64xbf16, #tpu.memory_space<vmem>>, vector<1x1x64x64xbf16>
    %142 = vector.shape_cast %141 : vector<1x1x64x64xbf16> to vector<64x64xbf16>
    %cst_116 = arith.constant dense<0.000000e+00> : vector<64x64xf32>
    %143 = tpu.matmul %113, %142, %cst_116 {dimension_numbers = #tpu.dot_dimension_numbers<[1], [0], [0], [1], [0, 0, 1, 1], [], []>} : vector<64x64xbf16>, vector<64x64xbf16>, vector<64x64xf32> -> vector<64x64xf32>
    %144 = arith.addf %140, %143 : vector<64x64xf32>
    %cst_117 = arith.constant dense<0.000000e+00> : vector<64x64xf32>
    %145 = tpu.matmul %7, %111, %cst_117 {dimension_numbers = #tpu.dot_dimension_numbers<[1], [0], [0], [1], [0, 0, 1, 1], [], []>} : vector<64x64xbf16>, vector<64x64xbf16>, vector<64x64xf32> -> vector<64x64xf32>
    %146 = arith.truncf %145 : vector<64x64xf32> to vector<64x64xbf16>
    %c1_118 = arith.constant 1 : index
    %c6_119 = arith.constant 6 : index
    %c0_120 = arith.constant 0 : index
    %c0_121 = arith.constant 0 : index
    %147 = vector.load %arg3[%c1_118, %c6_119, %c0_120, %c0_121] : memref<4x9x64x64xbf16, #tpu.memory_space<vmem>>, vector<1x1x64x64xbf16>
    %148 = vector.shape_cast %147 : vector<1x1x64x64xbf16> to vector<64x64xbf16>
    %cst_122 = arith.constant dense<0.000000e+00> : vector<64x64xf32>
    %149 = tpu.matmul %146, %148, %cst_122 {dimension_numbers = #tpu.dot_dimension_numbers<[1], [0], [0], [1], [0, 0, 1, 1], [], []>} : vector<64x64xbf16>, vector<64x64xbf16>, vector<64x64xf32> -> vector<64x64xf32>
    %150 = arith.addf %144, %149 : vector<64x64xf32>
    %cst_123 = arith.constant dense<0.000000e+00> : vector<64x64xf32>
    %151 = tpu.matmul %7, %109, %cst_123 {dimension_numbers = #tpu.dot_dimension_numbers<[1], [0], [0], [1], [0, 0, 1, 1], [], []>} : vector<64x64xbf16>, vector<64x64xbf16>, vector<64x64xf32> -> vector<64x64xf32>
    %152 = arith.truncf %151 : vector<64x64xf32> to vector<64x64xbf16>
    %c1_124 = arith.constant 1 : index
    %c7_125 = arith.constant 7 : index
    %c0_126 = arith.constant 0 : index
    %c0_127 = arith.constant 0 : index
    %153 = vector.load %arg3[%c1_124, %c7_125, %c0_126, %c0_127] : memref<4x9x64x64xbf16, #tpu.memory_space<vmem>>, vector<1x1x64x64xbf16>
    %154 = vector.shape_cast %153 : vector<1x1x64x64xbf16> to vector<64x64xbf16>
    %cst_128 = arith.constant dense<0.000000e+00> : vector<64x64xf32>
    %155 = tpu.matmul %152, %154, %cst_128 {dimension_numbers = #tpu.dot_dimension_numbers<[1], [0], [0], [1], [0, 0, 1, 1], [], []>} : vector<64x64xbf16>, vector<64x64xbf16>, vector<64x64xf32> -> vector<64x64xf32>
    %156 = arith.addf %150, %155 : vector<64x64xf32>
    %cst_129 = arith.constant dense<0.000000e+00> : vector<64x64xf32>
    %157 = tpu.matmul %7, %113, %cst_129 {dimension_numbers = #tpu.dot_dimension_numbers<[1], [0], [0], [1], [0, 0, 1, 1], [], []>} : vector<64x64xbf16>, vector<64x64xbf16>, vector<64x64xf32> -> vector<64x64xf32>
    %158 = arith.truncf %157 : vector<64x64xf32> to vector<64x64xbf16>
    %c1_130 = arith.constant 1 : index
    %c8_131 = arith.constant 8 : index
    %c0_132 = arith.constant 0 : index
    %c0_133 = arith.constant 0 : index
    %159 = vector.load %arg3[%c1_130, %c8_131, %c0_132, %c0_133] : memref<4x9x64x64xbf16, #tpu.memory_space<vmem>>, vector<1x1x64x64xbf16>
    %160 = vector.shape_cast %159 : vector<1x1x64x64xbf16> to vector<64x64xbf16>
    %cst_134 = arith.constant dense<0.000000e+00> : vector<64x64xf32>
    %161 = tpu.matmul %158, %160, %cst_134 {dimension_numbers = #tpu.dot_dimension_numbers<[1], [0], [0], [1], [0, 0, 1, 1], [], []>} : vector<64x64xbf16>, vector<64x64xbf16>, vector<64x64xf32> -> vector<64x64xf32>
    %162 = arith.addf %156, %161 : vector<64x64xf32>
    %c2_135 = arith.constant 2 : index
    %c0_136 = arith.constant 0 : index
    %c0_137 = arith.constant 0 : index
    %163 = vector.load %arg5[%c2_135, %c0_136, %c0_137] : memref<5x1x64xf32, #tpu.memory_space<vmem>>, vector<1x1x64xf32>
    %164 = vector.shape_cast %163 : vector<1x1x64xf32> to vector<1x64xf32>
    %165 = vector.broadcast %164 : vector<1x64xf32> to vector<64x64xf32>
    %166 = arith.mulf %162, %165 : vector<64x64xf32>
    %c2_138 = arith.constant 2 : index
    %c0_139 = arith.constant 0 : index
    %c0_140 = arith.constant 0 : index
    %167 = vector.load %arg6[%c2_138, %c0_139, %c0_140] : memref<5x1x64xf32, #tpu.memory_space<vmem>>, vector<1x1x64xf32>
    %168 = vector.shape_cast %167 : vector<1x1x64xf32> to vector<1x64xf32>
    %169 = vector.broadcast %168 : vector<1x64xf32> to vector<64x64xf32>
    %170 = arith.addf %166, %169 : vector<64x64xf32>
    %171 = arith.addf %170, %44 : vector<64x64xf32>
    %cst_141 = arith.constant 0.000000e+00 : f32
    %172 = vector.broadcast %cst_141 : f32 to vector<64x64xf32>
    %173 = arith.maximumf %171, %172 : vector<64x64xf32>
    %174 = arith.truncf %173 : vector<64x64xf32> to vector<64x64xbf16>
    %cst_142 = arith.constant dense<0.000000e+00> : vector<64x64xf32>
    %175 = tpu.matmul %1, %174, %cst_142 {dimension_numbers = #tpu.dot_dimension_numbers<[1], [0], [0], [1], [0, 0, 1, 1], [], []>} : vector<64x64xbf16>, vector<64x64xbf16>, vector<64x64xf32> -> vector<64x64xf32>
    %176 = arith.truncf %175 : vector<64x64xf32> to vector<64x64xbf16>
    %cst_143 = arith.constant dense<0.000000e+00> : vector<64x64xf32>
    %177 = tpu.matmul %3, %174, %cst_143 {dimension_numbers = #tpu.dot_dimension_numbers<[1], [0], [0], [1], [0, 0, 1, 1], [], []>} : vector<64x64xbf16>, vector<64x64xbf16>, vector<64x64xf32> -> vector<64x64xf32>
    %178 = arith.truncf %177 : vector<64x64xf32> to vector<64x64xbf16>
    %cst_144 = arith.constant 0.000000e+00 : f32
    %179 = vector.broadcast %cst_144 : f32 to vector<64x64xf32>
    %cst_145 = arith.constant dense<0.000000e+00> : vector<64x64xf32>
    %180 = tpu.matmul %5, %176, %cst_145 {dimension_numbers = #tpu.dot_dimension_numbers<[1], [0], [0], [1], [0, 0, 1, 1], [], []>} : vector<64x64xbf16>, vector<64x64xbf16>, vector<64x64xf32> -> vector<64x64xf32>
    %181 = arith.truncf %180 : vector<64x64xf32> to vector<64x64xbf16>
    %c2_146 = arith.constant 2 : index
    %c0_147 = arith.constant 0 : index
    %c0_148 = arith.constant 0 : index
    %c0_149 = arith.constant 0 : index
    %182 = vector.load %arg3[%c2_146, %c0_147, %c0_148, %c0_149] : memref<4x9x64x64xbf16, #tpu.memory_space<vmem>>, vector<1x1x64x64xbf16>
    %183 = vector.shape_cast %182 : vector<1x1x64x64xbf16> to vector<64x64xbf16>
    %cst_150 = arith.constant dense<0.000000e+00> : vector<64x64xf32>
    %184 = tpu.matmul %181, %183, %cst_150 {dimension_numbers = #tpu.dot_dimension_numbers<[1], [0], [0], [1], [0, 0, 1, 1], [], []>} : vector<64x64xbf16>, vector<64x64xbf16>, vector<64x64xf32> -> vector<64x64xf32>
    %185 = arith.addf %179, %184 : vector<64x64xf32>
    %cst_151 = arith.constant dense<0.000000e+00> : vector<64x64xf32>
    %186 = tpu.matmul %5, %174, %cst_151 {dimension_numbers = #tpu.dot_dimension_numbers<[1], [0], [0], [1], [0, 0, 1, 1], [], []>} : vector<64x64xbf16>, vector<64x64xbf16>, vector<64x64xf32> -> vector<64x64xf32>
    %187 = arith.truncf %186 : vector<64x64xf32> to vector<64x64xbf16>
    %c2_152 = arith.constant 2 : index
    %c1_153 = arith.constant 1 : index
    %c0_154 = arith.constant 0 : index
    %c0_155 = arith.constant 0 : index
    %188 = vector.load %arg3[%c2_152, %c1_153, %c0_154, %c0_155] : memref<4x9x64x64xbf16, #tpu.memory_space<vmem>>, vector<1x1x64x64xbf16>
    %189 = vector.shape_cast %188 : vector<1x1x64x64xbf16> to vector<64x64xbf16>
    %cst_156 = arith.constant dense<0.000000e+00> : vector<64x64xf32>
    %190 = tpu.matmul %187, %189, %cst_156 {dimension_numbers = #tpu.dot_dimension_numbers<[1], [0], [0], [1], [0, 0, 1, 1], [], []>} : vector<64x64xbf16>, vector<64x64xbf16>, vector<64x64xf32> -> vector<64x64xf32>
    %191 = arith.addf %185, %190 : vector<64x64xf32>
    %cst_157 = arith.constant dense<0.000000e+00> : vector<64x64xf32>
    %192 = tpu.matmul %5, %178, %cst_157 {dimension_numbers = #tpu.dot_dimension_numbers<[1], [0], [0], [1], [0, 0, 1, 1], [], []>} : vector<64x64xbf16>, vector<64x64xbf16>, vector<64x64xf32> -> vector<64x64xf32>
    %193 = arith.truncf %192 : vector<64x64xf32> to vector<64x64xbf16>
    %c2_158 = arith.constant 2 : index
    %c2_159 = arith.constant 2 : index
    %c0_160 = arith.constant 0 : index
    %c0_161 = arith.constant 0 : index
    %194 = vector.load %arg3[%c2_158, %c2_159, %c0_160, %c0_161] : memref<4x9x64x64xbf16, #tpu.memory_space<vmem>>, vector<1x1x64x64xbf16>
    %195 = vector.shape_cast %194 : vector<1x1x64x64xbf16> to vector<64x64xbf16>
    %cst_162 = arith.constant dense<0.000000e+00> : vector<64x64xf32>
    %196 = tpu.matmul %193, %195, %cst_162 {dimension_numbers = #tpu.dot_dimension_numbers<[1], [0], [0], [1], [0, 0, 1, 1], [], []>} : vector<64x64xbf16>, vector<64x64xbf16>, vector<64x64xf32> -> vector<64x64xf32>
    %197 = arith.addf %191, %196 : vector<64x64xf32>
    %c2_163 = arith.constant 2 : index
    %c3_164 = arith.constant 3 : index
    %c0_165 = arith.constant 0 : index
    %c0_166 = arith.constant 0 : index
    %198 = vector.load %arg3[%c2_163, %c3_164, %c0_165, %c0_166] : memref<4x9x64x64xbf16, #tpu.memory_space<vmem>>, vector<1x1x64x64xbf16>
    %199 = vector.shape_cast %198 : vector<1x1x64x64xbf16> to vector<64x64xbf16>
    %cst_167 = arith.constant dense<0.000000e+00> : vector<64x64xf32>
    %200 = tpu.matmul %176, %199, %cst_167 {dimension_numbers = #tpu.dot_dimension_numbers<[1], [0], [0], [1], [0, 0, 1, 1], [], []>} : vector<64x64xbf16>, vector<64x64xbf16>, vector<64x64xf32> -> vector<64x64xf32>
    %201 = arith.addf %197, %200 : vector<64x64xf32>
    %c2_168 = arith.constant 2 : index
    %c4_169 = arith.constant 4 : index
    %c0_170 = arith.constant 0 : index
    %c0_171 = arith.constant 0 : index
    %202 = vector.load %arg3[%c2_168, %c4_169, %c0_170, %c0_171] : memref<4x9x64x64xbf16, #tpu.memory_space<vmem>>, vector<1x1x64x64xbf16>
    %203 = vector.shape_cast %202 : vector<1x1x64x64xbf16> to vector<64x64xbf16>
    %cst_172 = arith.constant dense<0.000000e+00> : vector<64x64xf32>
    %204 = tpu.matmul %174, %203, %cst_172 {dimension_numbers = #tpu.dot_dimension_numbers<[1], [0], [0], [1], [0, 0, 1, 1], [], []>} : vector<64x64xbf16>, vector<64x64xbf16>, vector<64x64xf32> -> vector<64x64xf32>
    %205 = arith.addf %201, %204 : vector<64x64xf32>
    %c2_173 = arith.constant 2 : index
    %c5_174 = arith.constant 5 : index
    %c0_175 = arith.constant 0 : index
    %c0_176 = arith.constant 0 : index
    %206 = vector.load %arg3[%c2_173, %c5_174, %c0_175, %c0_176] : memref<4x9x64x64xbf16, #tpu.memory_space<vmem>>, vector<1x1x64x64xbf16>
    %207 = vector.shape_cast %206 : vector<1x1x64x64xbf16> to vector<64x64xbf16>
    %cst_177 = arith.constant dense<0.000000e+00> : vector<64x64xf32>
    %208 = tpu.matmul %178, %207, %cst_177 {dimension_numbers = #tpu.dot_dimension_numbers<[1], [0], [0], [1], [0, 0, 1, 1], [], []>} : vector<64x64xbf16>, vector<64x64xbf16>, vector<64x64xf32> -> vector<64x64xf32>
    %209 = arith.addf %205, %208 : vector<64x64xf32>
    %cst_178 = arith.constant dense<0.000000e+00> : vector<64x64xf32>
    %210 = tpu.matmul %7, %176, %cst_178 {dimension_numbers = #tpu.dot_dimension_numbers<[1], [0], [0], [1], [0, 0, 1, 1], [], []>} : vector<64x64xbf16>, vector<64x64xbf16>, vector<64x64xf32> -> vector<64x64xf32>
    %211 = arith.truncf %210 : vector<64x64xf32> to vector<64x64xbf16>
    %c2_179 = arith.constant 2 : index
    %c6_180 = arith.constant 6 : index
    %c0_181 = arith.constant 0 : index
    %c0_182 = arith.constant 0 : index
    %212 = vector.load %arg3[%c2_179, %c6_180, %c0_181, %c0_182] : memref<4x9x64x64xbf16, #tpu.memory_space<vmem>>, vector<1x1x64x64xbf16>
    %213 = vector.shape_cast %212 : vector<1x1x64x64xbf16> to vector<64x64xbf16>
    %cst_183 = arith.constant dense<0.000000e+00> : vector<64x64xf32>
    %214 = tpu.matmul %211, %213, %cst_183 {dimension_numbers = #tpu.dot_dimension_numbers<[1], [0], [0], [1], [0, 0, 1, 1], [], []>} : vector<64x64xbf16>, vector<64x64xbf16>, vector<64x64xf32> -> vector<64x64xf32>
    %215 = arith.addf %209, %214 : vector<64x64xf32>
    %cst_184 = arith.constant dense<0.000000e+00> : vector<64x64xf32>
    %216 = tpu.matmul %7, %174, %cst_184 {dimension_numbers = #tpu.dot_dimension_numbers<[1], [0], [0], [1], [0, 0, 1, 1], [], []>} : vector<64x64xbf16>, vector<64x64xbf16>, vector<64x64xf32> -> vector<64x64xf32>
    %217 = arith.truncf %216 : vector<64x64xf32> to vector<64x64xbf16>
    %c2_185 = arith.constant 2 : index
    %c7_186 = arith.constant 7 : index
    %c0_187 = arith.constant 0 : index
    %c0_188 = arith.constant 0 : index
    %218 = vector.load %arg3[%c2_185, %c7_186, %c0_187, %c0_188] : memref<4x9x64x64xbf16, #tpu.memory_space<vmem>>, vector<1x1x64x64xbf16>
    %219 = vector.shape_cast %218 : vector<1x1x64x64xbf16> to vector<64x64xbf16>
    %cst_189 = arith.constant dense<0.000000e+00> : vector<64x64xf32>
    %220 = tpu.matmul %217, %219, %cst_189 {dimension_numbers = #tpu.dot_dimension_numbers<[1], [0], [0], [1], [0, 0, 1, 1], [], []>} : vector<64x64xbf16>, vector<64x64xbf16>, vector<64x64xf32> -> vector<64x64xf32>
    %221 = arith.addf %215, %220 : vector<64x64xf32>
    %cst_190 = arith.constant dense<0.000000e+00> : vector<64x64xf32>
    %222 = tpu.matmul %7, %178, %cst_190 {dimension_numbers = #tpu.dot_dimension_numbers<[1], [0], [0], [1], [0, 0, 1, 1], [], []>} : vector<64x64xbf16>, vector<64x64xbf16>, vector<64x64xf32> -> vector<64x64xf32>
    %223 = arith.truncf %222 : vector<64x64xf32> to vector<64x64xbf16>
    %c2_191 = arith.constant 2 : index
    %c8_192 = arith.constant 8 : index
    %c0_193 = arith.constant 0 : index
    %c0_194 = arith.constant 0 : index
    %224 = vector.load %arg3[%c2_191, %c8_192, %c0_193, %c0_194] : memref<4x9x64x64xbf16, #tpu.memory_space<vmem>>, vector<1x1x64x64xbf16>
    %225 = vector.shape_cast %224 : vector<1x1x64x64xbf16> to vector<64x64xbf16>
    %cst_195 = arith.constant dense<0.000000e+00> : vector<64x64xf32>
    %226 = tpu.matmul %223, %225, %cst_195 {dimension_numbers = #tpu.dot_dimension_numbers<[1], [0], [0], [1], [0, 0, 1, 1], [], []>} : vector<64x64xbf16>, vector<64x64xbf16>, vector<64x64xf32> -> vector<64x64xf32>
    %227 = arith.addf %221, %226 : vector<64x64xf32>
    %c3_196 = arith.constant 3 : index
    %c0_197 = arith.constant 0 : index
    %c0_198 = arith.constant 0 : index
    %228 = vector.load %arg5[%c3_196, %c0_197, %c0_198] : memref<5x1x64xf32, #tpu.memory_space<vmem>>, vector<1x1x64xf32>
    %229 = vector.shape_cast %228 : vector<1x1x64xf32> to vector<1x64xf32>
    %230 = vector.broadcast %229 : vector<1x64xf32> to vector<64x64xf32>
    %231 = arith.mulf %227, %230 : vector<64x64xf32>
    %c3_199 = arith.constant 3 : index
    %c0_200 = arith.constant 0 : index
    %c0_201 = arith.constant 0 : index
    %232 = vector.load %arg6[%c3_199, %c0_200, %c0_201] : memref<5x1x64xf32, #tpu.memory_space<vmem>>, vector<1x1x64xf32>
    %233 = vector.shape_cast %232 : vector<1x1x64xf32> to vector<1x64xf32>
    %234 = vector.broadcast %233 : vector<1x64xf32> to vector<64x64xf32>
    %235 = arith.addf %231, %234 : vector<64x64xf32>
    %cst_202 = arith.constant 0.000000e+00 : f32
    %236 = vector.broadcast %cst_202 : f32 to vector<64x64xf32>
    %237 = arith.maximumf %235, %236 : vector<64x64xf32>
    %238 = arith.truncf %237 : vector<64x64xf32> to vector<64x64xbf16>
    %cst_203 = arith.constant dense<0.000000e+00> : vector<64x64xf32>
    %239 = tpu.matmul %1, %238, %cst_203 {dimension_numbers = #tpu.dot_dimension_numbers<[1], [0], [0], [1], [0, 0, 1, 1], [], []>} : vector<64x64xbf16>, vector<64x64xbf16>, vector<64x64xf32> -> vector<64x64xf32>
    %240 = arith.truncf %239 : vector<64x64xf32> to vector<64x64xbf16>
    %cst_204 = arith.constant dense<0.000000e+00> : vector<64x64xf32>
    %241 = tpu.matmul %3, %238, %cst_204 {dimension_numbers = #tpu.dot_dimension_numbers<[1], [0], [0], [1], [0, 0, 1, 1], [], []>} : vector<64x64xbf16>, vector<64x64xbf16>, vector<64x64xf32> -> vector<64x64xf32>
    %242 = arith.truncf %241 : vector<64x64xf32> to vector<64x64xbf16>
    %cst_205 = arith.constant 0.000000e+00 : f32
    %243 = vector.broadcast %cst_205 : f32 to vector<64x64xf32>
    %cst_206 = arith.constant dense<0.000000e+00> : vector<64x64xf32>
    %244 = tpu.matmul %5, %240, %cst_206 {dimension_numbers = #tpu.dot_dimension_numbers<[1], [0], [0], [1], [0, 0, 1, 1], [], []>} : vector<64x64xbf16>, vector<64x64xbf16>, vector<64x64xf32> -> vector<64x64xf32>
    %245 = arith.truncf %244 : vector<64x64xf32> to vector<64x64xbf16>
    %c3_207 = arith.constant 3 : index
    %c0_208 = arith.constant 0 : index
    %c0_209 = arith.constant 0 : index
    %c0_210 = arith.constant 0 : index
    %246 = vector.load %arg3[%c3_207, %c0_208, %c0_209, %c0_210] : memref<4x9x64x64xbf16, #tpu.memory_space<vmem>>, vector<1x1x64x64xbf16>
    %247 = vector.shape_cast %246 : vector<1x1x64x64xbf16> to vector<64x64xbf16>
    %cst_211 = arith.constant dense<0.000000e+00> : vector<64x64xf32>
    %248 = tpu.matmul %245, %247, %cst_211 {dimension_numbers = #tpu.dot_dimension_numbers<[1], [0], [0], [1], [0, 0, 1, 1], [], []>} : vector<64x64xbf16>, vector<64x64xbf16>, vector<64x64xf32> -> vector<64x64xf32>
    %249 = arith.addf %243, %248 : vector<64x64xf32>
    %cst_212 = arith.constant dense<0.000000e+00> : vector<64x64xf32>
    %250 = tpu.matmul %5, %238, %cst_212 {dimension_numbers = #tpu.dot_dimension_numbers<[1], [0], [0], [1], [0, 0, 1, 1], [], []>} : vector<64x64xbf16>, vector<64x64xbf16>, vector<64x64xf32> -> vector<64x64xf32>
    %251 = arith.truncf %250 : vector<64x64xf32> to vector<64x64xbf16>
    %c3_213 = arith.constant 3 : index
    %c1_214 = arith.constant 1 : index
    %c0_215 = arith.constant 0 : index
    %c0_216 = arith.constant 0 : index
    %252 = vector.load %arg3[%c3_213, %c1_214, %c0_215, %c0_216] : memref<4x9x64x64xbf16, #tpu.memory_space<vmem>>, vector<1x1x64x64xbf16>
    %253 = vector.shape_cast %252 : vector<1x1x64x64xbf16> to vector<64x64xbf16>
    %cst_217 = arith.constant dense<0.000000e+00> : vector<64x64xf32>
    %254 = tpu.matmul %251, %253, %cst_217 {dimension_numbers = #tpu.dot_dimension_numbers<[1], [0], [0], [1], [0, 0, 1, 1], [], []>} : vector<64x64xbf16>, vector<64x64xbf16>, vector<64x64xf32> -> vector<64x64xf32>
    %255 = arith.addf %249, %254 : vector<64x64xf32>
    %cst_218 = arith.constant dense<0.000000e+00> : vector<64x64xf32>
    %256 = tpu.matmul %5, %242, %cst_218 {dimension_numbers = #tpu.dot_dimension_numbers<[1], [0], [0], [1], [0, 0, 1, 1], [], []>} : vector<64x64xbf16>, vector<64x64xbf16>, vector<64x64xf32> -> vector<64x64xf32>
    %257 = arith.truncf %256 : vector<64x64xf32> to vector<64x64xbf16>
    %c3_219 = arith.constant 3 : index
    %c2_220 = arith.constant 2 : index
    %c0_221 = arith.constant 0 : index
    %c0_222 = arith.constant 0 : index
    %258 = vector.load %arg3[%c3_219, %c2_220, %c0_221, %c0_222] : memref<4x9x64x64xbf16, #tpu.memory_space<vmem>>, vector<1x1x64x64xbf16>
    %259 = vector.shape_cast %258 : vector<1x1x64x64xbf16> to vector<64x64xbf16>
    %cst_223 = arith.constant dense<0.000000e+00> : vector<64x64xf32>
    %260 = tpu.matmul %257, %259, %cst_223 {dimension_numbers = #tpu.dot_dimension_numbers<[1], [0], [0], [1], [0, 0, 1, 1], [], []>} : vector<64x64xbf16>, vector<64x64xbf16>, vector<64x64xf32> -> vector<64x64xf32>
    %261 = arith.addf %255, %260 : vector<64x64xf32>
    %c3_224 = arith.constant 3 : index
    %c3_225 = arith.constant 3 : index
    %c0_226 = arith.constant 0 : index
    %c0_227 = arith.constant 0 : index
    %262 = vector.load %arg3[%c3_224, %c3_225, %c0_226, %c0_227] : memref<4x9x64x64xbf16, #tpu.memory_space<vmem>>, vector<1x1x64x64xbf16>
    %263 = vector.shape_cast %262 : vector<1x1x64x64xbf16> to vector<64x64xbf16>
    %cst_228 = arith.constant dense<0.000000e+00> : vector<64x64xf32>
    %264 = tpu.matmul %240, %263, %cst_228 {dimension_numbers = #tpu.dot_dimension_numbers<[1], [0], [0], [1], [0, 0, 1, 1], [], []>} : vector<64x64xbf16>, vector<64x64xbf16>, vector<64x64xf32> -> vector<64x64xf32>
    %265 = arith.addf %261, %264 : vector<64x64xf32>
    %c3_229 = arith.constant 3 : index
    %c4_230 = arith.constant 4 : index
    %c0_231 = arith.constant 0 : index
    %c0_232 = arith.constant 0 : index
    %266 = vector.load %arg3[%c3_229, %c4_230, %c0_231, %c0_232] : memref<4x9x64x64xbf16, #tpu.memory_space<vmem>>, vector<1x1x64x64xbf16>
    %267 = vector.shape_cast %266 : vector<1x1x64x64xbf16> to vector<64x64xbf16>
    %cst_233 = arith.constant dense<0.000000e+00> : vector<64x64xf32>
    %268 = tpu.matmul %238, %267, %cst_233 {dimension_numbers = #tpu.dot_dimension_numbers<[1], [0], [0], [1], [0, 0, 1, 1], [], []>} : vector<64x64xbf16>, vector<64x64xbf16>, vector<64x64xf32> -> vector<64x64xf32>
    %269 = arith.addf %265, %268 : vector<64x64xf32>
    %c3_234 = arith.constant 3 : index
    %c5_235 = arith.constant 5 : index
    %c0_236 = arith.constant 0 : index
    %c0_237 = arith.constant 0 : index
    %270 = vector.load %arg3[%c3_234, %c5_235, %c0_236, %c0_237] : memref<4x9x64x64xbf16, #tpu.memory_space<vmem>>, vector<1x1x64x64xbf16>
    %271 = vector.shape_cast %270 : vector<1x1x64x64xbf16> to vector<64x64xbf16>
    %cst_238 = arith.constant dense<0.000000e+00> : vector<64x64xf32>
    %272 = tpu.matmul %242, %271, %cst_238 {dimension_numbers = #tpu.dot_dimension_numbers<[1], [0], [0], [1], [0, 0, 1, 1], [], []>} : vector<64x64xbf16>, vector<64x64xbf16>, vector<64x64xf32> -> vector<64x64xf32>
    %273 = arith.addf %269, %272 : vector<64x64xf32>
    %cst_239 = arith.constant dense<0.000000e+00> : vector<64x64xf32>
    %274 = tpu.matmul %7, %240, %cst_239 {dimension_numbers = #tpu.dot_dimension_numbers<[1], [0], [0], [1], [0, 0, 1, 1], [], []>} : vector<64x64xbf16>, vector<64x64xbf16>, vector<64x64xf32> -> vector<64x64xf32>
    %275 = arith.truncf %274 : vector<64x64xf32> to vector<64x64xbf16>
    %c3_240 = arith.constant 3 : index
    %c6_241 = arith.constant 6 : index
    %c0_242 = arith.constant 0 : index
    %c0_243 = arith.constant 0 : index
    %276 = vector.load %arg3[%c3_240, %c6_241, %c0_242, %c0_243] : memref<4x9x64x64xbf16, #tpu.memory_space<vmem>>, vector<1x1x64x64xbf16>
    %277 = vector.shape_cast %276 : vector<1x1x64x64xbf16> to vector<64x64xbf16>
    %cst_244 = arith.constant dense<0.000000e+00> : vector<64x64xf32>
    %278 = tpu.matmul %275, %277, %cst_244 {dimension_numbers = #tpu.dot_dimension_numbers<[1], [0], [0], [1], [0, 0, 1, 1], [], []>} : vector<64x64xbf16>, vector<64x64xbf16>, vector<64x64xf32> -> vector<64x64xf32>
    %279 = arith.addf %273, %278 : vector<64x64xf32>
    %cst_245 = arith.constant dense<0.000000e+00> : vector<64x64xf32>
    %280 = tpu.matmul %7, %238, %cst_245 {dimension_numbers = #tpu.dot_dimension_numbers<[1], [0], [0], [1], [0, 0, 1, 1], [], []>} : vector<64x64xbf16>, vector<64x64xbf16>, vector<64x64xf32> -> vector<64x64xf32>
    %281 = arith.truncf %280 : vector<64x64xf32> to vector<64x64xbf16>
    %c3_246 = arith.constant 3 : index
    %c7_247 = arith.constant 7 : index
    %c0_248 = arith.constant 0 : index
    %c0_249 = arith.constant 0 : index
    %282 = vector.load %arg3[%c3_246, %c7_247, %c0_248, %c0_249] : memref<4x9x64x64xbf16, #tpu.memory_space<vmem>>, vector<1x1x64x64xbf16>
    %283 = vector.shape_cast %282 : vector<1x1x64x64xbf16> to vector<64x64xbf16>
    %cst_250 = arith.constant dense<0.000000e+00> : vector<64x64xf32>
    %284 = tpu.matmul %281, %283, %cst_250 {dimension_numbers = #tpu.dot_dimension_numbers<[1], [0], [0], [1], [0, 0, 1, 1], [], []>} : vector<64x64xbf16>, vector<64x64xbf16>, vector<64x64xf32> -> vector<64x64xf32>
    %285 = arith.addf %279, %284 : vector<64x64xf32>
    %cst_251 = arith.constant dense<0.000000e+00> : vector<64x64xf32>
    %286 = tpu.matmul %7, %242, %cst_251 {dimension_numbers = #tpu.dot_dimension_numbers<[1], [0], [0], [1], [0, 0, 1, 1], [], []>} : vector<64x64xbf16>, vector<64x64xbf16>, vector<64x64xf32> -> vector<64x64xf32>
    %287 = arith.truncf %286 : vector<64x64xf32> to vector<64x64xbf16>
    %c3_252 = arith.constant 3 : index
    %c8_253 = arith.constant 8 : index
    %c0_254 = arith.constant 0 : index
    %c0_255 = arith.constant 0 : index
    %288 = vector.load %arg3[%c3_252, %c8_253, %c0_254, %c0_255] : memref<4x9x64x64xbf16, #tpu.memory_space<vmem>>, vector<1x1x64x64xbf16>
    %289 = vector.shape_cast %288 : vector<1x1x64x64xbf16> to vector<64x64xbf16>
    %cst_256 = arith.constant dense<0.000000e+00> : vector<64x64xf32>
    %290 = tpu.matmul %287, %289, %cst_256 {dimension_numbers = #tpu.dot_dimension_numbers<[1], [0], [0], [1], [0, 0, 1, 1], [], []>} : vector<64x64xbf16>, vector<64x64xbf16>, vector<64x64xf32> -> vector<64x64xf32>
    %291 = arith.addf %285, %290 : vector<64x64xf32>
    %c4_257 = arith.constant 4 : index
    %c0_258 = arith.constant 0 : index
    %c0_259 = arith.constant 0 : index
    %292 = vector.load %arg5[%c4_257, %c0_258, %c0_259] : memref<5x1x64xf32, #tpu.memory_space<vmem>>, vector<1x1x64xf32>
    %293 = vector.shape_cast %292 : vector<1x1x64xf32> to vector<1x64xf32>
    %294 = vector.broadcast %293 : vector<1x64xf32> to vector<64x64xf32>
    %295 = arith.mulf %291, %294 : vector<64x64xf32>
    %c4_260 = arith.constant 4 : index
    %c0_261 = arith.constant 0 : index
    %c0_262 = arith.constant 0 : index
    %296 = vector.load %arg6[%c4_260, %c0_261, %c0_262] : memref<5x1x64xf32, #tpu.memory_space<vmem>>, vector<1x1x64xf32>
    %297 = vector.shape_cast %296 : vector<1x1x64xf32> to vector<1x64xf32>
    %298 = vector.broadcast %297 : vector<1x64xf32> to vector<64x64xf32>
    %299 = arith.addf %295, %298 : vector<64x64xf32>
    %300 = arith.addf %299, %173 : vector<64x64xf32>
    %cst_263 = arith.constant 0.000000e+00 : f32
    %301 = vector.broadcast %cst_263 : f32 to vector<64x64xf32>
    %302 = arith.maximumf %300, %301 : vector<64x64xf32>
    %c0_264 = arith.constant 0 : index
    %c0_265 = arith.constant 0 : index
    %c0_266 = arith.constant 0 : index
    %303 = vector.load %arg7[%c0_264, %c0_265, %c0_266] : memref<1x64x64xf32, #tpu.memory_space<vmem>>, vector<1x64x64xf32>
    %304 = vector.shape_cast %303 : vector<1x64x64xf32> to vector<64x64xf32>
    %305 = vector.shape_cast %302 : vector<64x64xf32> to vector<1x64x64xf32>
    tpu.vector_store %arg7[%c0_264, %c0_265, %c0_266], %305 {strides = array<i32>} : memref<1x64x64xf32, #tpu.memory_space<vmem>>, vector<1x64x64xf32>,
    return
  }
  func.func @transform_0(%arg0: i32) -> (i32, i32, i32) {
    %c0_i32 = arith.constant 0 : i32
    %c0_i32_0 = arith.constant 0 : i32
    %c0_i32_1 = arith.constant 0 : i32
    return %arg0, %c0_i32, %c0_i32_0 : i32, i32, i32
  }
  func.func @transform_1(%arg0: i32) -> (i32, i32) {
    %c0_i32 = arith.constant 0 : i32
    %c0_i32_0 = arith.constant 0 : i32
    %c0_i32_1 = arith.constant 0 : i32
    return %c0_i32, %c0_i32_0 : i32, i32
  }
  func.func @transform_2(%arg0: i32) -> (i32, i32, i32, i32) {
    %c0_i32 = arith.constant 0 : i32
    %c0_i32_0 = arith.constant 0 : i32
    %c0_i32_1 = arith.constant 0 : i32
    %c0_i32_2 = arith.constant 0 : i32
    %c0_i32_3 = arith.constant 0 : i32
    return %c0_i32, %c0_i32_0, %c0_i32_1, %c0_i32_2 : i32, i32, i32, i32
  }
  func.func @transform_3(%arg0: i32) -> (i32, i32, i32) {
    %c0_i32 = arith.constant 0 : i32
    %c0_i32_0 = arith.constant 0 : i32
    %c0_i32_1 = arith.constant 0 : i32
    %c0_i32_2 = arith.constant 0 : i32
    return %c0_i32, %c0_i32_0, %c0_i32_1 : i32, i32, i32
  }
  func.func @transform_4(%arg0: i32) -> (i32, i32, i32) {
    %c0_i32 = arith.constant 0 : i32
    %c0_i32_0 = arith.constant 0 : i32
    %c0_i32_1 = arith.constant 0 : i32
    %c0_i32_2 = arith.constant 0 : i32
    return %c0_i32, %c0_i32_0, %c0_i32_1 : i32, i32, i32
  }
  func.func @transform_5(%arg0: i32) -> (i32, i32, i32) {
    %c0_i32 = arith.constant 0 : i32
    %c0_i32_0 = arith.constant 0 : i32
    %c0_i32_1 = arith.constant 0 : i32
    %c0_i32_2 = arith.constant 0 : i32
    return %c0_i32, %c0_i32_0, %c0_i32_1 : i32, i32, i32
  }
  func.func @transform_6(%arg0: i32) -> (i32, i32, i32) {
    %c0_i32 = arith.constant 0 : i32
    %c0_i32_0 = arith.constant 0 : i32
    %c0_i32_1 = arith.constant 0 : i32
    return %arg0, %c0_i32, %c0_i32_0 : i32, i32, i32
  }
}

</mosaic_0001>

<llo_original>
// kernel: truncate_resnet_forward.1
$region0: #{truncate_resnet_forward.1}
  #allocation0 [shape = 'u32[]', space=smem, size = 0x4, offset = 0x4, fixed_abs, tag = 'smem constant byte address 0x4 - core index']
  #allocation1 [shape = 'u32[144,128]{1,0:T(1,128)}', space=vmem, size = 0x12000, scoped, tag = 'internal scratch']
  %s0 = inlined_call_operand.vmem [shape: bf16[2,256,152], index: 0, kind: input, shape index: {}]
  %s1 = inlined_call_operand.vmem [shape: bf16[152,64], index: 1, kind: input, shape index: {}]
  %s2 = inlined_call_operand.vmem [shape: bf16[4,9,64,64], index: 2, kind: input, shape index: {}]
  %s3 = inlined_call_operand.vmem [shape: bf16[4,64,64], index: 3, kind: input, shape index: {}]
  %s4 = inlined_call_operand.vmem [shape: f32[5,1,64], index: 4, kind: input, shape index: {}]
  %s5 = inlined_call_operand.vmem [shape: f32[5,1,64], index: 5, kind: input, shape index: {}]
  %s6 = inlined_call_operand.hbm [shape: f32[2,64,64], index: 6, kind: output, shape index: {}]
  %s7 = sld [smem:[#allocation0]]
  $region57: #{truncate_resnet_forward.1} parent=0
    _
  %s9 = ssub.s32 1, %s7
  %s10 = scalar_select 0, %s9, %s7
  $region1: #{truncate_resnet_forward.1} parent=0
    #allocation2 [shape = 'u8[65536]{0}', space=vmem, size = 0x10000, scoped, tag = 'output window, operand 0']
    #allocation3 [shape = 's32[2]{0}', space=sflag, size = 0x8, scoped, tag = 'scoped memory for truncate_resnet_forward.1']
    %11 = vsyncpa [#allocation3], 0
    %s12 = scalar_lea.sflag [#allocation3], 1
    %13 = vsyncpa %s12, 0
    loop: start=0, step=1, limit=4
    $region2: #{truncate_resnet_forward.1} parent=1 // loop_pre_header
      _
    $region3: #{truncate_resnet_forward.1} parent=1 // loop_header
      %s15 = sphi 0, %s19
      %p16 = scmp.ge.s32.totalorder %s15, 4
      %s25 = sphi 0, %s27
      %s28 = sphi 0, %s25
      %s29 = sphi 0, %s28
      %s45 = sphi 0, %s29
      %s49 = sphi 0, %s49
      %s51 = sphi 0, %s49
      %s52 = sphi 0, %s51
      %s66 = sphi 0, %s52
      %s70 = sphi 0, %s70
      %s72 = sphi 0, %s70
      %s73 = sphi 0, %s72
      %s87 = sphi 0, %s73
      %s91 = sphi 0, %s91
      %s93 = sphi 0, %s91
      %s94 = sphi 0, %s93
      %s108 = sphi 0, %s94
      %s112 = sphi 0, %s112
      %s114 = sphi 0, %s112
      %s115 = sphi 0, %s114
      %s129 = sphi 0, %s115
      %s133 = sphi 0, %s133
      %s135 = sphi 0, %s133
      %s136 = sphi 0, %s135
      %s150 = sphi 0, %s136
      %s156 = sphi 0, %s158
      %s159 = sphi 0, %s156
      %s160 = sphi 0, %s159
      %s176 = sphi 0, %s160
    $region4: #{truncate_resnet_forward.1} parent=1 // loop_header_branch
      %18 = sbr.rel (%p16) target = $region8
    $region5: #{truncate_resnet_forward.1} parent=1 // loop_body
      %s20 = ssub.s32 %s15, 1
      %s21 = ssub.s32 %s15, 2
      %s22 = sadd.s32 %s15, 1
      %s23 = ssub.s32 %s15, %s22
      %p24 = scmp.eq.s32.totalorder %s23, 0
      %s26 = sadd.s32 %s25, 1
      %s27 = scalar_select %p24, %s25, %s26
      %p30 = pneg %p24
      %p31 = scmp.eq.s32.totalorder %s15, 1
      %p32 = por %p30, %p31
      %p33 = scmp.ne.s32.totalorder %s25, %s28
      %p34 = scmp.eq.s32.totalorder %s15, 0
      %p35 = por %p33, %p34
      %p36 = scmp.ne.s32.totalorder %s25, %s28
      %p37 = scmp.eq.s32.totalorder %s20, 1
      %p38 = por %p36, %p37
      %p39 = scmp.ne.s32.totalorder %s28, %s29
      %p40 = scmp.eq.s32.totalorder %s20, 0
      %p41 = por %p39, %p40
      %p42 = scmp.ne.s32.totalorder %s28, %s29
      %p43 = scmp.eq.s32.totalorder %s21, 1
      %p44 = por %p42, %p43
      %p46 = scmp.ne.s32.totalorder %s29, %s45
      %p47 = scmp.eq.s32.totalorder %s21, 0
      %p48 = por %p46, %p47
      %s50 = sadd.s32 %s49, 1
      %p53 = scmp.eq.s32.totalorder %s15, 1
      %p54 = scmp.ne.s32.totalorder %s49, %s51
      %p55 = scmp.eq.s32.totalorder %s15, 0
      %p56 = por %p54, %p55
      %p57 = scmp.ne.s32.totalorder %s49, %s51
      %p58 = scmp.eq.s32.totalorder %s20, 1
      %p59 = por %p57, %p58
      %p60 = scmp.ne.s32.totalorder %s51, %s52
      %p61 = scmp.eq.s32.totalorder %s20, 0
      %p62 = por %p60, %p61
      %p63 = scmp.ne.s32.totalorder %s51, %s52
      %p64 = scmp.eq.s32.totalorder %s21, 1
      %p65 = por %p63, %p64
      %p67 = scmp.ne.s32.totalorder %s52, %s66
      %p68 = scmp.eq.s32.totalorder %s21, 0
      %p69 = por %p67, %p68
      %s71 = sadd.s32 %s70, 1
      %p74 = scmp.eq.s32.totalorder %s15, 1
      %p75 = scmp.ne.s32.totalorder %s70, %s72
      %p76 = scmp.eq.s32.totalorder %s15, 0
      %p77 = por %p75, %p76
      %p78 = scmp.ne.s32.totalorder %s70, %s72
      %p79 = scmp.eq.s32.totalorder %s20, 1
      %p80 = por %p78, %p79
      %p81 = scmp.ne.s32.totalorder %s72, %s73
      %p82 = scmp.eq.s32.totalorder %s20, 0
      %p83 = por %p81, %p82
      %p84 = scmp.ne.s32.totalorder %s72, %s73
      %p85 = scmp.eq.s32.totalorder %s21, 1
      %p86 = por %p84, %p85
      %p88 = scmp.ne.s32.totalorder %s73, %s87
      %p89 = scmp.eq.s32.totalorder %s21, 0
      %p90 = por %p88, %p89
      %s92 = sadd.s32 %s91, 1
      %p95 = scmp.eq.s32.totalorder %s15, 1
      %p96 = scmp.ne.s32.totalorder %s91, %s93
      %p97 = scmp.eq.s32.totalorder %s15, 0
      %p98 = por %p96, %p97
      %p99 = scmp.ne.s32.totalorder %s91, %s93
      %p100 = scmp.eq.s32.totalorder %s20, 1
      %p101 = por %p99, %p100
      %p102 = scmp.ne.s32.totalorder %s93, %s94
      %p103 = scmp.eq.s32.totalorder %s20, 0
      %p104 = por %p102, %p103
      %p105 = scmp.ne.s32.totalorder %s93, %s94
      %p106 = scmp.eq.s32.totalorder %s21, 1
      %p107 = por %p105, %p106
      %p109 = scmp.ne.s32.totalorder %s94, %s108
      %p110 = scmp.eq.s32.totalorder %s21, 0
      %p111 = por %p109, %p110
      %s113 = sadd.s32 %s112, 1
      %p116 = scmp.eq.s32.totalorder %s15, 1
      %p117 = scmp.ne.s32.totalorder %s112, %s114
      %p118 = scmp.eq.s32.totalorder %s15, 0
      %p119 = por %p117, %p118
      %p120 = scmp.ne.s32.totalorder %s112, %s114
      %p121 = scmp.eq.s32.totalorder %s20, 1
      %p122 = por %p120, %p121
      %p123 = scmp.ne.s32.totalorder %s114, %s115
      %p124 = scmp.eq.s32.totalorder %s20, 0
      %p125 = por %p123, %p124
      %p126 = scmp.ne.s32.totalorder %s114, %s115
      %p127 = scmp.eq.s32.totalorder %s21, 1
      %p128 = por %p126, %p127
      %p130 = scmp.ne.s32.totalorder %s115, %s129
      %p131 = scmp.eq.s32.totalorder %s21, 0
      %p132 = por %p130, %p131
      %s134 = sadd.s32 %s133, 1
      %p137 = scmp.eq.s32.totalorder %s15, 1
      %p138 = scmp.ne.s32.totalorder %s133, %s135
      %p139 = scmp.eq.s32.totalorder %s15, 0
      %p140 = por %p138, %p139
      %p141 = scmp.ne.s32.totalorder %s133, %s135
      %p142 = scmp.eq.s32.totalorder %s20, 1
      %p143 = por %p141, %p142
      %p144 = scmp.ne.s32.totalorder %s135, %s136
      %p145 = scmp.eq.s32.totalorder %s20, 0
      %p146 = por %p144, %p145
      %p147 = scmp.ne.s32.totalorder %s135, %s136
      %p148 = scmp.eq.s32.totalorder %s21, 1
      %p149 = por %p147, %p148
      %p151 = scmp.ne.s32.totalorder %s136, %s150
      %p152 = scmp.eq.s32.totalorder %s21, 0
      %p153 = por %p151, %p152
      %s154 = ssub.s32 %s15, %s22
      %p155 = scmp.eq.s32.totalorder %s154, 0
      %s157 = sadd.s32 %s156, 1
      %s158 = scalar_select %p155, %s156, %s157
      %p161 = pneg %p155
      %p162 = scmp.eq.s32.totalorder %s15, 1
      %p163 = por %p161, %p162
      %p164 = scmp.ne.s32.totalorder %s156, %s159
      %p165 = scmp.eq.s32.totalorder %s15, 0
      %p166 = por %p164, %p165
      %p167 = scmp.ne.s32.totalorder %s156, %s159
      %p168 = scmp.eq.s32.totalorder %s20, 1
      %p169 = por %p167, %p168
      %p170 = scmp.ne.s32.totalorder %s159, %s160
      %p171 = scmp.eq.s32.totalorder %s20, 0
      %p172 = por %p170, %p171
      %p173 = scmp.ne.s32.totalorder %s159, %s160
      %p174 = scmp.eq.s32.totalorder %s21, 1
      %p175 = por %p173, %p174
      %p177 = scmp.ne.s32.totalorder %s160, %s176
      %p178 = scmp.eq.s32.totalorder %s21, 0
      %p179 = por %p177, %p178
      %p180 = scmp.le.s32.totalorder 1, %s15
      %p181 = scmp.lt.s32.totalorder %s15, 3
      %p182 = pnand %p180, %p181
      %p183 = pneg %p182
      // Predicated region
      $region9: #{truncate_resnet_forward.1} parent=5 // pred_check
        _
      $region10: #{truncate_resnet_forward.1} parent=5 // pred_check_branch
        %185 = sbr.rel (%p182) target = $region12
      $region11: #{truncate_resnet_forward.1} parent=5 // pred_region
        %s186 = ssub.s32 %s15, 1
        // Predicated region
        $region13: #{truncate_resnet_forward.1} parent=11 // pred_check
          %p187 = pneg %p62
        $region14: #{truncate_resnet_forward.1} parent=11 // pred_check_branch
          %189 = sbr.rel (%p187) target = $region16
        $region15: #{truncate_resnet_forward.1} parent=11 // pred_region
          _
        $region16: #{truncate_resnet_forward.1} parent=11 // pred_fallthru
          _
        // Predicated region
        $region17: #{truncate_resnet_forward.1} parent=11 // pred_check
          %p190 = pneg %p83
        $region18: #{truncate_resnet_forward.1} parent=11 // pred_check_branch
          %192 = sbr.rel (%p190) target = $region20
        $region19: #{truncate_resnet_forward.1} parent=11 // pred_region
          _
        $region20: #{truncate_resnet_forward.1} parent=11 // pred_fallthru
          _
        // Predicated region
        $region21: #{truncate_resnet_forward.1} parent=11 // pred_check
          %p193 = pneg %p104
        $region22: #{truncate_resnet_forward.1} parent=11 // pred_check_branch
          %195 = sbr.rel (%p193) target = $region24
        $region23: #{truncate_resnet_forward.1} parent=11 // pred_region
          _
        $region24: #{truncate_resnet_forward.1} parent=11 // pred_fallthru
          _
        // Predicated region
        $region25: #{truncate_resnet_forward.1} parent=11 // pred_check
          %p196 = pneg %p125
        $region26: #{truncate_resnet_forward.1} parent=11 // pred_check_branch
          %198 = sbr.rel (%p196) target = $region28
        $region27: #{truncate_resnet_forward.1} parent=11 // pred_region
          _
        $region28: #{truncate_resnet_forward.1} parent=11 // pred_fallthru
          _
        // Predicated region
        $region29: #{truncate_resnet_forward.1} parent=11 // pred_check
          %p199 = pneg %p146
        $region30: #{truncate_resnet_forward.1} parent=11 // pred_check_branch
          %201 = sbr.rel (%p199) target = $region32
        $region31: #{truncate_resnet_forward.1} parent=11 // pred_region
          _
        $region32: #{truncate_resnet_forward.1} parent=11 // pred_fallthru
          _
      $region12: #{truncate_resnet_forward.1} parent=5 // pred_fallthru
        _
      %p202 = scmp.lt.s32.totalorder %s15, 2
      // Predicated region
      $region33: #{truncate_resnet_forward.1} parent=5 // pred_check
        %p203 = pneg %p202
      $region34: #{truncate_resnet_forward.1} parent=5 // pred_check_branch
        %205 = sbr.rel (%p203) target = $region36
      $region35: #{truncate_resnet_forward.1} parent=5 // pred_region
        // Predicated region
        $region37: #{truncate_resnet_forward.1} parent=35 // pred_check
          %p206 = pneg %p35
        $region38: #{truncate_resnet_forward.1} parent=35 // pred_check_branch
          %208 = sbr.rel (%p206) target = $region40
        $region39: #{truncate_resnet_forward.1} parent=35 // pred_region
          %p209 = scmp.lt.s32.totalorder %s15, 1
          %s210 = scalar_select %p209, %s15, 1
          %s211 = smul.addr %s210, 64
          %s212 = smul.addr %s211, 4
          %s213 = scalar_lea.vmem %s0, %s212
        $region40: #{truncate_resnet_forward.1} parent=35 // pred_fallthru
          _
      $region36: #{truncate_resnet_forward.1} parent=5 // pred_fallthru
        _
      %p214 = scmp.le.s32.totalorder 1, %s15
      %p215 = scmp.lt.s32.totalorder %s15, 3
      %p216 = pnand %p214, %p215
      %p217 = pneg %p216
      // Predicated region
      $region41: #{truncate_resnet_forward.1} parent=5 // pred_check
        _
      $region42: #{truncate_resnet_forward.1} parent=5 // pred_check_branch
        %219 = sbr.rel (%p216) target = $region44
      $region43: #{truncate_resnet_forward.1} parent=5 // pred_region
        %s220 = ssub.s32 %s15, 1
        %p221 = scmp.lt.s32.totalorder %s20, 1
        %s222 = scalar_select %p221, %s20, 1
        %s223 = smul.addr %s222, 64
        %s224 = smul.addr %s223, 4
        %s225 = scalar_lea.vmem %s0, %s224
        %p226 = pneg %p41
        %p227 = pneg %p38
        %p228 = pneg %p62
        %p229 = pneg %p59
        %p230 = pneg %p83
        %p231 = pneg %p80
        %p232 = pneg %p104
        %p233 = pneg %p101
        %p234 = pneg %p125
        %p235 = pneg %p122
        %p236 = pneg %p146
        %p237 = pneg %p143
        %p238 = pneg %p172
        %p239 = pneg %p169
        %s240 = sand.u32 %s159, 1
        %s241 = scalar_lea.sflag [#allocation3], %s240
        %s242 = sand.u32 %s159, 1
        %s243 = smul.addr %s242, 64
        %s244 = scalar_lea.vmem [#allocation2], %s243
        %p245 = scmp.lt.s32.totalorder %s20, 1
        %s246 = scalar_select %p245, %s20, 1
        %s247 = smul.addr %s246, 64
        %s248 = smul.addr %s247, 4
        %s249 = scalar_lea.vmem %s0, %s248
        %v251 = vld [vmem:[%s3] sm:$0xf]
        %v252 = vld [vmem:[%s3 + $0x4] sm:$0xf]
        %v253 = vld [vmem:[%s3 + $0x8] sm:$0xf]
        %v254 = vld [vmem:[%s3 + $0xc] sm:$0xf]
        %v255 = vld [vmem:[%s3 + $0x10] sm:$0xf]
        %v256 = vld [vmem:[%s3 + $0x14] sm:$0xf]
        %v257 = vld [vmem:[%s3 + $0x18] sm:$0xf]
        %v258 = vld [vmem:[%s3 + $0x1c] sm:$0xf]
        %s259 = scalar_lea.vmem %s3, 32
        %v260 = vld [vmem:[%s259] sm:$0xf]
        %v261 = vld [vmem:[%s259 + $0x4] sm:$0xf]
        %v262 = vld [vmem:[%s259 + $0x8] sm:$0xf]
        %v263 = vld [vmem:[%s259 + $0xc] sm:$0xf]
        %v264 = vld [vmem:[%s259 + $0x10] sm:$0xf]
        %v265 = vld [vmem:[%s259 + $0x14] sm:$0xf]
        %v266 = vld [vmem:[%s259 + $0x18] sm:$0xf]
        %v267 = vld [vmem:[%s259 + $0x1c] sm:$0xf]
        %s268 = scalar_lea.vmem %s3, 64
        %v269 = vld [vmem:[%s268] sm:$0xf]
        %v270 = vld [vmem:[%s268 + $0x4] sm:$0xf]
        %v271 = vld [vmem:[%s268 + $0x8] sm:$0xf]
        %v272 = vld [vmem:[%s268 + $0xc] sm:$0xf]
        %v273 = vld [vmem:[%s268 + $0x10] sm:$0xf]
        %v274 = vld [vmem:[%s268 + $0x14] sm:$0xf]
        %v275 = vld [vmem:[%s268 + $0x18] sm:$0xf]
        %v276 = vld [vmem:[%s268 + $0x1c] sm:$0xf]
        %s277 = scalar_lea.vmem %s3, 96
        %v278 = vld [vmem:[%s277] sm:$0xf]
        %v279 = vld [vmem:[%s277 + $0x4] sm:$0xf]
        %v280 = vld [vmem:[%s277 + $0x8] sm:$0xf]
        %v281 = vld [vmem:[%s277 + $0xc] sm:$0xf]
        %v282 = vld [vmem:[%s277 + $0x10] sm:$0xf]
        %v283 = vld [vmem:[%s277 + $0x14] sm:$0xf]
        %v284 = vld [vmem:[%s277 + $0x18] sm:$0xf]
        %v285 = vld [vmem:[%s277 + $0x1c] sm:$0xf]
        %v286 = vld [vmem:[%s249] sm:$0xff]
        %v287 = vld [vmem:[%s249 + $0x8] sm:$0xff]
        %v288 = vld [vmem:[%s249 + $0x10] sm:$0xff]
        %v289 = vld [vmem:[%s249 + $0x18] sm:$0xff]
        %v290 = vld [vmem:[%s249 + $0x20] sm:$0xff]
        %v291 = vld [vmem:[%s249 + $0x28] sm:$0xff]
        %v292 = vld [vmem:[%s249 + $0x30] sm:$0xff]
        %v293 = vld [vmem:[%s249 + $0x38] sm:$0xff]
        %v294 = vld [vmem:[%s249 + $0x40] sm:$0xff]
        %v295 = vld [vmem:[%s249 + $0x48] sm:$0xff]
        %v296 = vld [vmem:[%s249 + $0x50] sm:$0xff]
        %v297 = vld [vmem:[%s249 + $0x58] sm:$0xff]
        %v298 = vld [vmem:[%s249 + $0x60] sm:$0xff]
        %v299 = vld [vmem:[%s249 + $0x68] sm:$0xff]
        %v300 = vld [vmem:[%s249 + $0x70] sm:$0xff]
        %v301 = vld [vmem:[%s249 + $0x78] sm:$0xff]
        %v302 = vld [vmem:[%s249 + $0x80] sm:$0xff]
        %v303 = vld [vmem:[%s249 + $0x88] sm:$0xff]
        %v304 = vld [vmem:[%s249 + $0x90] sm:$0xff]
        %v305 = vld [vmem:[%s249 + $0x98] sm:$0xff]
        %v306 = vld [vmem:[%s249 + $0xa0] sm:$0xff]
        %v307 = vld [vmem:[%s249 + $0xa8] sm:$0xff]
        %v308 = vld [vmem:[%s249 + $0xb0] sm:$0xff]
        %v309 = vld [vmem:[%s249 + $0xb8] sm:$0xff]
        %v310 = vld [vmem:[%s249 + $0xc0] sm:$0xff]
        %v311 = vld [vmem:[%s249 + $0xc8] sm:$0xff]
        %v312 = vld [vmem:[%s249 + $0xd0] sm:$0xff]
        %v313 = vld [vmem:[%s249 + $0xd8] sm:$0xff]
        %v314 = vld [vmem:[%s249 + $0xe0] sm:$0xff]
        %v315 = vld [vmem:[%s249 + $0xe8] sm:$0xff]
        %v316 = vld [vmem:[%s249 + $0xf0] sm:$0xff]
        %v317 = vld [vmem:[%s249 + $0xf8] sm:$0xff]
        %v318 = vld [vmem:[%s1] sm:$0xf]
        %v319 = vld [vmem:[%s1 + $0x4] sm:$0xf]
        %v320 = vld [vmem:[%s1 + $0x8] sm:$0xf]
        %v321 = vld [vmem:[%s1 + $0xc] sm:$0xf]
        %v322 = vld [vmem:[%s1 + $0x10] sm:$0xf]
        %v323 = vld [vmem:[%s1 + $0x14] sm:$0xf]
        %v324 = vld [vmem:[%s1 + $0x18] sm:$0xf]
        %v325 = vld [vmem:[%s1 + $0x1c] sm:$0xf]
        %v326 = vld [vmem:[%s1 + $0x20] sm:$0xf]
        %v327 = vld [vmem:[%s1 + $0x24] sm:$0xf]
        %v328 = vld [vmem:[%s1 + $0x28] sm:$0xf]
        %v329 = vld [vmem:[%s1 + $0x2c] sm:$0xf]
        %v330 = vld [vmem:[%s1 + $0x30] sm:$0xf]
        %v331 = vld [vmem:[%s1 + $0x34] sm:$0xf]
        %v332 = vld [vmem:[%s1 + $0x38] sm:$0xf]
        %v333 = vld [vmem:[%s1 + $0x3c] sm:$0xf]
        %v334 = vld [vmem:[%s1 + $0x40] sm:$0xf]
        %v335 = vld [vmem:[%s1 + $0x44] sm:$0xf]
        %v336 = vld [vmem:[%s1 + $0x48] sm:$0xf]
        %v369 = vunpack.c.l.b16 %v286
        %v370 = vunpack.c.h.b16 %v286
        %v371 = vunpack.c.l.b16 %v287
        %v372 = vunpack.c.h.b16 %v287
        %v373 = vunpack.c.l.b16 %v288
        %v374 = vunpack.c.h.b16 %v288
        %v375 = vunpack.c.l.b16 %v289
        %v376 = vunpack.c.h.b16 %v289
        %v377 = vunpack.c.l.b16 %v290
        %v378 = vunpack.c.h.b16 %v290
        %v379 = vunpack.c.l.b16 %v291
        %v380 = vunpack.c.h.b16 %v291
        %v381 = vunpack.c.l.b16 %v292
        %v382 = vunpack.c.h.b16 %v292
        %v383 = vunpack.c.l.b16 %v293
        %v384 = vunpack.c.h.b16 %v293
        %v385 = vunpack.c.l.b16 %v294
        %v386 = vunpack.c.h.b16 %v294
        %v387 = vunpack.c.l.b16 %v295
        %v388 = vunpack.c.h.b16 %v295
        %v389 = vunpack.c.l.b16 %v296
        %v390 = vunpack.c.h.b16 %v296
        %v391 = vunpack.c.l.b16 %v297
        %v392 = vunpack.c.h.b16 %v297
        %v393 = vunpack.c.l.b16 %v298
        %v394 = vunpack.c.h.b16 %v298
        %v395 = vunpack.c.l.b16 %v299
        %v396 = vunpack.c.h.b16 %v299
        %v397 = vunpack.c.l.b16 %v300
        %v398 = vunpack.c.h.b16 %v300
        %v399 = vunpack.c.l.b16 %v301
        %v400 = vunpack.c.h.b16 %v301
        %v401 = vunpack.c.l.b16 %v302
        %v402 = vunpack.c.h.b16 %v302
        %v403 = vunpack.c.l.b16 %v303
        %v404 = vunpack.c.h.b16 %v303
        %v405 = vunpack.c.l.b16 %v304
        %v406 = vunpack.c.h.b16 %v304
        %v407 = vunpack.c.l.b16 %v305
        %v408 = vunpack.c.h.b16 %v305
        %v409 = vunpack.c.l.b16 %v306
        %v410 = vunpack.c.h.b16 %v306
        %v411 = vunpack.c.l.b16 %v307
        %v412 = vunpack.c.h.b16 %v307
        %v413 = vunpack.c.l.b16 %v308
        %v414 = vunpack.c.h.b16 %v308
        %v415 = vunpack.c.l.b16 %v309
        %v416 = vunpack.c.h.b16 %v309
        %v417 = vunpack.c.l.b16 %v310
        %v418 = vunpack.c.h.b16 %v310
        %v419 = vunpack.c.l.b16 %v311
        %v420 = vunpack.c.h.b16 %v311
        %v421 = vunpack.c.l.b16 %v312
        %v422 = vunpack.c.h.b16 %v312
        %v423 = vunpack.c.l.b16 %v313
        %v424 = vunpack.c.h.b16 %v313
        %v425 = vunpack.c.l.b16 %v314
        %v426 = vunpack.c.h.b16 %v314
        %v427 = vunpack.c.l.b16 %v315
        %v428 = vunpack.c.h.b16 %v315
        %v429 = vunpack.c.l.b16 %v316
        %v430 = vunpack.c.h.b16 %v316
        %v431 = vunpack.c.l.b16 %v317
        %v432 = vunpack.c.h.b16 %v317
        %v433 = vpack.c.b16 %v371, %v369
        %v434 = vpack.c.b16 %v372, %v370
        %v435 = vpack.c.b16 %v375, %v373
        %v436 = vpack.c.b16 %v376, %v374
        %v437 = vpack.c.b16 %v379, %v377
        %v438 = vpack.c.b16 %v380, %v378
        %v439 = vpack.c.b16 %v383, %v381
        %v440 = vpack.c.b16 %v384, %v382
        %v441 = vpack.c.b16 %v387, %v385
        %v442 = vpack.c.b16 %v388, %v386
        %v443 = vpack.c.b16 %v391, %v389
        %v444 = vpack.c.b16 %v392, %v390
        %v445 = vpack.c.b16 %v395, %v393
        %v446 = vpack.c.b16 %v396, %v394
        %v447 = vpack.c.b16 %v399, %v397
        %v448 = vpack.c.b16 %v400, %v398
        %v449 = vpack.c.b16 %v403, %v401
        %v450 = vpack.c.b16 %v404, %v402
        %v451 = vpack.c.b16 %v407, %v405
        %v452 = vpack.c.b16 %v408, %v406
        %v453 = vpack.c.b16 %v411, %v409
        %v454 = vpack.c.b16 %v412, %v410
        %v455 = vpack.c.b16 %v415, %v413
        %v456 = vpack.c.b16 %v416, %v414
        %v457 = vpack.c.b16 %v419, %v417
        %v458 = vpack.c.b16 %v420, %v418
        %v459 = vpack.c.b16 %v423, %v421
        %v460 = vpack.c.b16 %v424, %v422
        %v461 = vpack.c.b16 %v427, %v425
        %v462 = vpack.c.b16 %v428, %v426
        %v463 = vpack.c.b16 %v431, %v429
        %v464 = vpack.c.b16 %v432, %v430
        %v500 = vunpack.c.l.b16 %v318
        %v501 = vunpack.c.l.b16 %v319
        %v502 = vunpack.c.l.b16 %v320
        %v503 = vunpack.c.l.b16 %v321
        %v504 = vunpack.c.l.b16 %v322
        %v505 = vunpack.c.l.b16 %v323
        %v506 = vunpack.c.l.b16 %v324
        %v507 = vunpack.c.l.b16 %v325
        %v508 = vunpack.c.l.b16 %v326
        %v509 = vunpack.c.l.b16 %v327
        %v510 = vunpack.c.l.b16 %v328
        %v511 = vunpack.c.l.b16 %v329
        %v512 = vunpack.c.l.b16 %v330
        %v513 = vunpack.c.l.b16 %v331
        %v514 = vunpack.c.l.b16 %v332
        %v515 = vunpack.c.l.b16 %v333
        %v516 = vunpack.c.l.b16 %v334
        %v517 = vunpack.c.l.b16 %v335
        %v518 = vunpack.c.l.b16 %v336
        %v519 = vpack.c.b16 %v501, %v500
        %v520 = vpack.c.b16 %v503, %v502
        %v521 = vpack.c.b16 %v505, %v504
        %v522 = vpack.c.b16 %v507, %v506
        %v523 = vpack.c.b16 %v509, %v508
        %v524 = vpack.c.b16 %v511, %v510
        %v525 = vpack.c.b16 %v513, %v512
        %v526 = vpack.c.b16 %v515, %v514
        %v527 = vpack.c.b16 %v517, %v516
        %v528 = vpack.c.b16 %v518, %v518
        %vm538 = vcmask 195584
        %v540 = vsel %vm538, %v434, 0
        %v543 = vsel %vm538, %v436, 0
        %v546 = vsel %vm538, %v438, 0
        %v549 = vsel %vm538, %v440, 0
        %v552 = vsel %vm538, %v442, 0
        %v555 = vsel %vm538, %v444, 0
        %v558 = vsel %vm538, %v446, 0
        %v561 = vsel %vm538, %v448, 0
        %v564 = vsel %vm538, %v450, 0
        %v567 = vsel %vm538, %v452, 0
        %v570 = vsel %vm538, %v454, 0
        %v573 = vsel %vm538, %v456, 0
        %v576 = vsel %vm538, %v458, 0
        %v579 = vsel %vm538, %v460, 0
        %v582 = vsel %vm538, %v462, 0
        %v585 = vsel %vm538, %v464, 0
        %vm587 = vcmask 1043456
        %v589 = vsel %vm587, %v528, 0
        %591 = vmatprep.subr.bf16.mxu0 0
        %592 = vmatpush1.bf16.msra.mxu0 %v526
        %593 = vmatprep.subr.bf16.mxu0 0
        %594 = vmatpush1.bf16.msra.mxu0 %v525
        %595 = vmatprep.subr.bf16.mxu0 0
        %596 = vmatpush1.bf16.msra.mxu0 %v524
        %597 = vmatprep.subr.bf16.mxu0 0
        %598 = vmatpush1.bf16.msra.mxu0 %v523
        %599 = vmatprep.subr.bf16.mxu0 0
        %600 = vmatpush1.bf16.msra.mxu0 %v522
        %601 = vmatprep.subr.bf16.mxu0 0
        %602 = vmatpush1.bf16.msra.mxu0 %v521
        %603 = vmatprep.subr.bf16.mxu0 0
        %604 = vmatpush1.bf16.msra.mxu0 %v520
        %605 = vmatprep.subr.bf16.mxu0 0
        %606 = vmatpush1.bf16.msra.mxu0 %v519
        %607 = vmatprep.subr.bf16.mxu0 0
        %608 = vmatpush2.bf16.msra.mxu0 0
        %609 = vmatprep.subr.bf16.mxu0 0
        %610 = vmatpush2.bf16.msra.mxu0 0
        %611 = vmatprep.subr.bf16.mxu0 0
        %612 = vmatpush2.bf16.msra.mxu0 0
        %613 = vmatprep.subr.bf16.mxu0 0
        %614 = vmatpush2.bf16.msra.mxu0 0
        %615 = vmatprep.subr.bf16.mxu0 0
        %616 = vmatpush2.bf16.msra.mxu0 0
        %617 = vmatprep.subr.bf16.mxu0 0
        %618 = vmatpush2.bf16.msra.mxu0 0
        %619 = vmatprep.subr.bf16.mxu0 0
        %620 = vmatpush2.bf16.msra.mxu0 %v589
        %621 = vmatprep.subr.bf16.mxu0 0
        %622 = vmatpush2.bf16.msra.mxu0 %v527
        %623 = vmatprep.mubr.bf16.mxu0 %v540
        %624 = vmatmul.mubr.bf16.gmra.mxu0 %v433
        %v625 = vpop.f32.mrf.mxu0
        %v626 = vadd.f32 0.0, %v625
        %v627 = vpop.f32.mrf.mxu0
        %v628 = vpop.f32.mrf.mxu0
        %v629 = vadd.f32 0.0, %v628
        %v630 = vpop.f32.mrf.mxu0
        %631 = vmatprep.mubr.bf16.mxu0 %v543
        %632 = vmatmul.mubr.bf16.gmra.mxu0 %v435
        %v633 = vpop.f32.mrf.mxu0
        %v634 = vadd.f32 0.0, %v633
        %v635 = vpop.f32.mrf.mxu0
        %v636 = vpop.f32.mrf.mxu0
        %v637 = vadd.f32 0.0, %v636
        %v638 = vpop.f32.mrf.mxu0
        %639 = vmatprep.mubr.bf16.mxu0 %v546
        %640 = vmatmul.mubr.bf16.gmra.mxu0 %v437
        %v641 = vpop.f32.mrf.mxu0
        %v642 = vadd.f32 0.0, %v641
        %v643 = vpop.f32.mrf.mxu0
        %v644 = vpop.f32.mrf.mxu0
        %v645 = vadd.f32 0.0, %v644
        %v646 = vpop.f32.mrf.mxu0
        %647 = vmatprep.mubr.bf16.mxu0 %v549
        %648 = vmatmul.mubr.bf16.gmra.mxu0 %v439
        %v649 = vpop.f32.mrf.mxu0
        %v650 = vadd.f32 0.0, %v649
        %v651 = vpop.f32.mrf.mxu0
        %v652 = vpop.f32.mrf.mxu0
        %v653 = vadd.f32 0.0, %v652
        %v654 = vpop.f32.mrf.mxu0
        %655 = vmatprep.mubr.bf16.mxu0 %v552
        %656 = vmatmul.mubr.bf16.gmra.mxu0 %v441
        %v657 = vpop.f32.mrf.mxu0
        %v658 = vadd.f32 0.0, %v657
        %v659 = vpop.f32.mrf.mxu0
        %v660 = vpop.f32.mrf.mxu0
        %v661 = vadd.f32 0.0, %v660
        %v662 = vpop.f32.mrf.mxu0
        %663 = vmatprep.mubr.bf16.mxu0 %v555
        %664 = vmatmul.mubr.bf16.gmra.mxu0 %v443
        %v665 = vpop.f32.mrf.mxu0
        %v666 = vadd.f32 0.0, %v665
        %v667 = vpop.f32.mrf.mxu0
        %v668 = vpop.f32.mrf.mxu0
        %v669 = vadd.f32 0.0, %v668
        %v670 = vpop.f32.mrf.mxu0
        %671 = vmatprep.mubr.bf16.mxu0 %v558
        %672 = vmatmul.mubr.bf16.gmra.mxu0 %v445
        %v673 = vpop.f32.mrf.mxu0
        %v674 = vadd.f32 0.0, %v673
        %v675 = vpop.f32.mrf.mxu0
        %v676 = vpop.f32.mrf.mxu0
        %v677 = vadd.f32 0.0, %v676
        %v678 = vpop.f32.mrf.mxu0
        %679 = vmatprep.mubr.bf16.mxu0 %v561
        %680 = vmatmul.mubr.bf16.gmra.mxu0 %v447
        %v681 = vpop.f32.mrf.mxu0
        %v682 = vadd.f32 0.0, %v681
        %v683 = vpop.f32.mrf.mxu0
        %v684 = vpop.f32.mrf.mxu0
        %v685 = vadd.f32 0.0, %v684
        %v686 = vpop.f32.mrf.mxu0
        %687 = vmatprep.mubr.bf16.mxu0 %v564
        %688 = vmatmul.mubr.bf16.gmra.mxu0 %v449
        %v689 = vpop.f32.mrf.mxu0
        %v690 = vadd.f32 0.0, %v689
        %v691 = vpop.f32.mrf.mxu0
        %v692 = vpop.f32.mrf.mxu0
        %v693 = vadd.f32 0.0, %v692
        %v694 = vpop.f32.mrf.mxu0
        %695 = vmatprep.mubr.bf16.mxu0 %v567
        %696 = vmatmul.mubr.bf16.gmra.mxu0 %v451
        %v697 = vpop.f32.mrf.mxu0
        %v698 = vadd.f32 0.0, %v697
        %v699 = vpop.f32.mrf.mxu0
        %v700 = vpop.f32.mrf.mxu0
        %v701 = vadd.f32 0.0, %v700
        %v702 = vpop.f32.mrf.mxu0
        %703 = vmatprep.mubr.bf16.mxu0 %v570
        %704 = vmatmul.mubr.bf16.gmra.mxu0 %v453
        %v705 = vpop.f32.mrf.mxu0
        %v706 = vadd.f32 0.0, %v705
        %v707 = vpop.f32.mrf.mxu0
        %v708 = vpop.f32.mrf.mxu0
        %v709 = vadd.f32 0.0, %v708
        %v710 = vpop.f32.mrf.mxu0
        %711 = vmatprep.mubr.bf16.mxu0 %v573
        %712 = vmatmul.mubr.bf16.gmra.mxu0 %v455
        %v713 = vpop.f32.mrf.mxu0
        %v714 = vadd.f32 0.0, %v713
        %v715 = vpop.f32.mrf.mxu0
        %v716 = vpop.f32.mrf.mxu0
        %v717 = vadd.f32 0.0, %v716
        %v718 = vpop.f32.mrf.mxu0
        %719 = vmatprep.mubr.bf16.mxu0 %v576
        %720 = vmatmul.mubr.bf16.gmra.mxu0 %v457
        %v721 = vpop.f32.mrf.mxu0
        %v722 = vadd.f32 0.0, %v721
        %v723 = vpop.f32.mrf.mxu0
        %v724 = vpop.f32.mrf.mxu0
        %v725 = vadd.f32 0.0, %v724
        %v726 = vpop.f32.mrf.mxu0
        %727 = vmatprep.mubr.bf16.mxu0 %v579
        %728 = vmatmul.mubr.bf16.gmra.mxu0 %v459
        %v729 = vpop.f32.mrf.mxu0
        %v730 = vadd.f32 0.0, %v729
        %v731 = vpop.f32.mrf.mxu0
        %v732 = vpop.f32.mrf.mxu0
        %v733 = vadd.f32 0.0, %v732
        %v734 = vpop.f32.mrf.mxu0
        %735 = vmatprep.mubr.bf16.mxu0 %v582
        %736 = vmatmul.mubr.bf16.gmra.mxu0 %v461
        %v737 = vpop.f32.mrf.mxu0
        %v738 = vadd.f32 0.0, %v737
        %v739 = vpop.f32.mrf.mxu0
        %v740 = vpop.f32.mrf.mxu0
        %v741 = vadd.f32 0.0, %v740
        %v742 = vpop.f32.mrf.mxu0
        %743 = vmatprep.mubr.bf16.mxu0 %v585
        %744 = vmatmul.mubr.bf16.gmra.mxu0 %v463
        %v745 = vpop.f32.mrf.mxu0
        %v746 = vadd.f32 0.0, %v745
        %v747 = vpop.f32.mrf.mxu0
        %v748 = vpop.f32.mrf.mxu0
        %v749 = vadd.f32 0.0, %v748
        %v750 = vpop.f32.mrf.mxu0
        %751 = vdwg.mxu0
        %v752 = vld [vmem:[%s4] sm:$0x1]
        %v754 = vlaneseq
        %v755 = vshrl.u32 %v754, 7
        %v756 = vsub.s32 0, %v755
        %v757 = vrot.slane %v752, %v756
        %v759 = vmul.f32 %v626, %v757
        %v760 = vmul.f32 %v629, %v757
        %v761 = vmul.f32 %v634, %v757
        %v762 = vmul.f32 %v637, %v757
        %v763 = vmul.f32 %v642, %v757
        %v764 = vmul.f32 %v645, %v757
        %v765 = vmul.f32 %v650, %v757
        %v766 = vmul.f32 %v653, %v757
        %v767 = vmul.f32 %v658, %v757
        %v768 = vmul.f32 %v661, %v757
        %v769 = vmul.f32 %v666, %v757
        %v770 = vmul.f32 %v669, %v757
        %v771 = vmul.f32 %v674, %v757
        %v772 = vmul.f32 %v677, %v757
        %v773 = vmul.f32 %v682, %v757
        %v774 = vmul.f32 %v685, %v757
        %v775 = vmul.f32 %v690, %v757
        %v776 = vmul.f32 %v693, %v757
        %v777 = vmul.f32 %v698, %v757
        %v778 = vmul.f32 %v701, %v757
        %v779 = vmul.f32 %v706, %v757
        %v780 = vmul.f32 %v709, %v757
        %v781 = vmul.f32 %v714, %v757
        %v782 = vmul.f32 %v717, %v757
        %v783 = vmul.f32 %v722, %v757
        %v784 = vmul.f32 %v725, %v757
        %v785 = vmul.f32 %v730, %v757
        %v786 = vmul.f32 %v733, %v757
        %v787 = vmul.f32 %v738, %v757
        %v788 = vmul.f32 %v741, %v757
        %v789 = vmul.f32 %v746, %v757
        %v790 = vmul.f32 %v749, %v757
        %v791 = vld [vmem:[%s5] sm:$0x1]
        %v793 = vlaneseq
        %v794 = vshrl.u32 %v793, 7
        %v795 = vsub.s32 0, %v794
        %v796 = vrot.slane %v791, %v795
        %v798 = vadd.f32 %v759, %v796
        %v799 = vadd.f32 %v760, %v796
        %v800 = vadd.f32 %v761, %v796
        %v801 = vadd.f32 %v762, %v796
        %v802 = vadd.f32 %v763, %v796
        %v803 = vadd.f32 %v764, %v796
        %v804 = vadd.f32 %v765, %v796
        %v805 = vadd.f32 %v766, %v796
        %v806 = vadd.f32 %v767, %v796
        %v807 = vadd.f32 %v768, %v796
        %v808 = vadd.f32 %v769, %v796
        %v809 = vadd.f32 %v770, %v796
        %v810 = vadd.f32 %v771, %v796
        %v811 = vadd.f32 %v772, %v796
        %v812 = vadd.f32 %v773, %v796
        %v813 = vadd.f32 %v774, %v796
        %v814 = vadd.f32 %v775, %v796
        %v815 = vadd.f32 %v776, %v796
        %v816 = vadd.f32 %v777, %v796
        %v817 = vadd.f32 %v778, %v796
        %v818 = vadd.f32 %v779, %v796
        %v819 = vadd.f32 %v780, %v796
        %v820 = vadd.f32 %v781, %v796
        %v821 = vadd.f32 %v782, %v796
        %v822 = vadd.f32 %v783, %v796
        %v823 = vadd.f32 %v784, %v796
        %v824 = vadd.f32 %v785, %v796
        %v825 = vadd.f32 %v786, %v796
        %v826 = vadd.f32 %v787, %v796
        %v827 = vadd.f32 %v788, %v796
        %v828 = vadd.f32 %v789, %v796
        %v829 = vadd.f32 %v790, %v796
        %v830 = vmax.f32 %v798, 0.0
        %v831 = vmax.f32 %v799, 0.0
        %v832 = vmax.f32 %v800, 0.0
        %v833 = vmax.f32 %v801, 0.0
        %v834 = vmax.f32 %v802, 0.0
        %v835 = vmax.f32 %v803, 0.0
        %v836 = vmax.f32 %v804, 0.0
        %v837 = vmax.f32 %v805, 0.0
        %v838 = vmax.f32 %v806, 0.0
        %v839 = vmax.f32 %v807, 0.0
        %v840 = vmax.f32 %v808, 0.0
        %v841 = vmax.f32 %v809, 0.0
        %v842 = vmax.f32 %v810, 0.0
        %v843 = vmax.f32 %v811, 0.0
        %v844 = vmax.f32 %v812, 0.0
        %v845 = vmax.f32 %v813, 0.0
        %v846 = vmax.f32 %v814, 0.0
        %v847 = vmax.f32 %v815, 0.0
        %v848 = vmax.f32 %v816, 0.0
        %v849 = vmax.f32 %v817, 0.0
        %v850 = vmax.f32 %v818, 0.0
        %v851 = vmax.f32 %v819, 0.0
        %v852 = vmax.f32 %v820, 0.0
        %v853 = vmax.f32 %v821, 0.0
        %v854 = vmax.f32 %v822, 0.0
        %v855 = vmax.f32 %v823, 0.0
        %v856 = vmax.f32 %v824, 0.0
        %v857 = vmax.f32 %v825, 0.0
        %v858 = vmax.f32 %v826, 0.0
        %v859 = vmax.f32 %v827, 0.0
        %v860 = vmax.f32 %v828, 0.0
        %v861 = vmax.f32 %v829, 0.0
        %v862 = vpack.c.bf16 %v831, %v830
        %v863 = vpack.c.bf16 %v833, %v832
        %v864 = vpack.c.bf16 %v835, %v834
        %v865 = vpack.c.bf16 %v837, %v836
        %v866 = vpack.c.bf16 %v839, %v838
        %v867 = vpack.c.bf16 %v841, %v840
        %v868 = vpack.c.bf16 %v843, %v842
        %v869 = vpack.c.bf16 %v845, %v844
        %v870 = vpack.c.bf16 %v847, %v846
        %v871 = vpack.c.bf16 %v849, %v848
        %v872 = vpack.c.bf16 %v851, %v850
        %v873 = vpack.c.bf16 %v853, %v852
        %v874 = vpack.c.bf16 %v855, %v854
        %v875 = vpack.c.bf16 %v857, %v856
        %v876 = vpack.c.bf16 %v859, %v858
        %v877 = vpack.c.bf16 %v861, %v860
        %v886 = vunpack.c.l.b16 %v251
        %v887 = vunpack.c.l.b16 %v252
        %v888 = vunpack.c.l.b16 %v253
        %v889 = vunpack.c.l.b16 %v254
        %v890 = vunpack.c.l.b16 %v255
        %v891 = vunpack.c.l.b16 %v256
        %v892 = vunpack.c.l.b16 %v257
        %v893 = vunpack.c.l.b16 %v258
        %v894 = vpack.c.b16 %v887, %v886
        %v895 = vpack.c.b16 %v889, %v888
        %v896 = vpack.c.b16 %v891, %v890
        %v897 = vpack.c.b16 %v893, %v892
        %vm898 = vcmask 523264
        %v900 = vsel %vm898, %v894, 0
        %v903 = vsel %vm898, %v895, 0
        %v906 = vsel %vm898, %v896, 0
        %v909 = vsel %vm898, %v897, 0
        %911 = vmatprep.subr.bf16.mxu0 0
        %912 = vmatpush1.bf16.msra.mxu0 0
        %913 = vmatprep.subr.bf16.mxu0 0
        %914 = vmatpush1.bf16.msra.mxu0 0
        %915 = vmatprep.subr.bf16.mxu0 0
        %916 = vmatpush1.bf16.msra.mxu0 0
        %917 = vmatprep.subr.bf16.mxu0 0
        %918 = vmatpush1.bf16.msra.mxu0 0
        %919 = vmatprep.subr.bf16.mxu0 0
        %920 = vmatpush1.bf16.msra.mxu0 %v873
        %921 = vmatprep.subr.bf16.mxu0 0
        %922 = vmatpush1.bf16.msra.mxu0 %v872
        %923 = vmatprep.subr.bf16.mxu0 0
        %924 = vmatpush1.bf16.msra.mxu0 %v871
        %925 = vmatprep.subr.bf16.mxu0 0
        %926 = vmatpush1.bf16.msra.mxu0 %v870
        %927 = vmatprep.subr.bf16.mxu0 0
        %928 = vmatpush2.bf16.msra.mxu0 0
        %929 = vmatprep.subr.bf16.mxu0 0
        %930 = vmatpush2.bf16.msra.mxu0 0
        %931 = vmatprep.subr.bf16.mxu0 0
        %932 = vmatpush2.bf16.msra.mxu0 0
        %933 = vmatprep.subr.bf16.mxu0 0
        %934 = vmatpush2.bf16.msra.mxu0 0
        %935 = vmatprep.subr.bf16.mxu0 0
        %936 = vmatpush2.bf16.msra.mxu0 0
        %937 = vmatprep.subr.bf16.mxu0 0
        %938 = vmatpush2.bf16.msra.mxu0 0
        %939 = vmatprep.subr.bf16.mxu0 0
        %940 = vmatpush2.bf16.msra.mxu0 0
        %941 = vmatprep.subr.bf16.mxu0 0
        %942 = vmatpush2.bf16.msra.mxu0 0
        %943 = vmatprep.mubr.bf16.mxu0 0
        %944 = vmatmul.mubr.bf16.gmra.mxu0 %v900
        %v945 = vpop.f32.mrf.mxu0
        %v946 = vadd.f32 0.0, %v945
        %v947 = vpop.f32.mrf.mxu0
        %v948 = vpop.f32.mrf.mxu0
        %v949 = vadd.f32 0.0, %v948
        %v950 = vpop.f32.mrf.mxu0
        %951 = vmatprep.mubr.bf16.mxu0 0
        %952 = vmatmul.mubr.bf16.gmra.mxu0 %v903
        %v953 = vpop.f32.mrf.mxu0
        %v954 = vadd.f32 0.0, %v953
        %v955 = vpop.f32.mrf.mxu0
        %v956 = vpop.f32.mrf.mxu0
        %v957 = vadd.f32 0.0, %v956
        %v958 = vpop.f32.mrf.mxu0
        %959 = vmatprep.mubr.bf16.mxu0 0
        %960 = vmatmul.mubr.bf16.gmra.mxu0 %v906
        %v961 = vpop.f32.mrf.mxu0
        %v962 = vadd.f32 0.0, %v961
        %v963 = vpop.f32.mrf.mxu0
        %v964 = vpop.f32.mrf.mxu0
        %v965 = vadd.f32 0.0, %v964
        %v966 = vpop.f32.mrf.mxu0
        %967 = vmatprep.mubr.bf16.mxu0 0
        %968 = vmatmul.mubr.bf16.gmra.mxu0 %v909
        %v969 = vpop.f32.mrf.mxu0
        %v970 = vadd.f32 0.0, %v969
        %v971 = vpop.f32.mrf.mxu0
        %v972 = vpop.f32.mrf.mxu0
        %v973 = vadd.f32 0.0, %v972
        %v974 = vpop.f32.mrf.mxu0
        %975 = vdwg.mxu0
        %976 = vmatprep.subr.bf16.mxu0 0
        %977 = vmatpush1.bf16.msra.mxu0 0
        %978 = vmatprep.subr.bf16.mxu0 0
        %979 = vmatpush1.bf16.msra.mxu0 0
        %980 = vmatprep.subr.bf16.mxu0 0
        %981 = vmatpush1.bf16.msra.mxu0 0
        %982 = vmatprep.subr.bf16.mxu0 0
        %983 = vmatpush1.bf16.msra.mxu0 0
        %984 = vmatprep.subr.bf16.mxu0 0
        %985 = vmatpush1.bf16.msra.mxu0 %v877
        %986 = vmatprep.subr.bf16.mxu0 0
        %987 = vmatpush1.bf16.msra.mxu0 %v876
        %988 = vmatprep.subr.bf16.mxu0 0
        %989 = vmatpush1.bf16.msra.mxu0 %v875
        %990 = vmatprep.subr.bf16.mxu0 0
        %991 = vmatpush1.bf16.msra.mxu0 %v874
        %992 = vmatprep.subr.bf16.mxu0 0
        %993 = vmatpush2.bf16.msra.mxu0 0
        %994 = vmatprep.subr.bf16.mxu0 0
        %995 = vmatpush2.bf16.msra.mxu0 0
        %996 = vmatprep.subr.bf16.mxu0 0
        %997 = vmatpush2.bf16.msra.mxu0 0
        %998 = vmatprep.subr.bf16.mxu0 0
        %999 = vmatpush2.bf16.msra.mxu0 0
        %1000 = vmatprep.subr.bf16.mxu0 0
        %1001 = vmatpush2.bf16.msra.mxu0 0
        %1002 = vmatprep.subr.bf16.mxu0 0
        %1003 = vmatpush2.bf16.msra.mxu0 0
        %1004 = vmatprep.subr.bf16.mxu0 0
        %1005 = vmatpush2.bf16.msra.mxu0 0
        %1006 = vmatprep.subr.bf16.mxu0 0
        %1007 = vmatpush2.bf16.msra.mxu0 0
        %1008 = vmatprep.mubr.bf16.mxu0 0
        %1009 = vmatmul.mubr.bf16.gmra.mxu0 %v900
        %v1010 = vpop.f32.mrf.mxu0
        %v1011 = vadd.f32 0.0, %v1010
        %v1012 = vpop.f32.mrf.mxu0
        %v1013 = vpop.f32.mrf.mxu0
        %v1014 = vadd.f32 0.0, %v1013
        %v1015 = vpop.f32.mrf.mxu0
        %1016 = vmatprep.mubr.bf16.mxu0 0
        %1017 = vmatmul.mubr.bf16.gmra.mxu0 %v903
        %v1018 = vpop.f32.mrf.mxu0
        %v1019 = vadd.f32 0.0, %v1018
        %v1020 = vpop.f32.mrf.mxu0
        %v1021 = vpop.f32.mrf.mxu0
        %v1022 = vadd.f32 0.0, %v1021
        %v1023 = vpop.f32.mrf.mxu0
        %1024 = vmatprep.mubr.bf16.mxu0 0
        %1025 = vmatmul.mubr.bf16.gmra.mxu0 %v906
        %v1026 = vpop.f32.mrf.mxu0
        %v1027 = vadd.f32 0.0, %v1026
        %v1028 = vpop.f32.mrf.mxu0
        %v1029 = vpop.f32.mrf.mxu0
        %v1030 = vadd.f32 0.0, %v1029
        %v1031 = vpop.f32.mrf.mxu0
        %1032 = vmatprep.mubr.bf16.mxu0 0
        %1033 = vmatmul.mubr.bf16.gmra.mxu0 %v909
        %v1034 = vpop.f32.mrf.mxu0
        %v1035 = vadd.f32 0.0, %v1034
        %v1036 = vpop.f32.mrf.mxu0
        %v1037 = vpop.f32.mrf.mxu0
        %v1038 = vadd.f32 0.0, %v1037
        %v1039 = vpop.f32.mrf.mxu0
        %1040 = vdwg.mxu0
        %v1049 = vunpack.c.l.b16 %v269
        %v1050 = vunpack.c.l.b16 %v270
        %v1051 = vunpack.c.l.b16 %v271
        %v1052 = vunpack.c.l.b16 %v272
        %v1053 = vunpack.c.l.b16 %v273
        %v1054 = vunpack.c.l.b16 %v274
        %v1055 = vunpack.c.l.b16 %v275
        %v1056 = vunpack.c.l.b16 %v276
        %v1057 = vpack.c.b16 %v1050, %v1049
        %v1058 = vpack.c.b16 %v1052, %v1051
        %v1059 = vpack.c.b16 %v1054, %v1053
        %v1060 = vpack.c.b16 %v1056, %v1055
        %v1062 = vsel %vm898, %v1057, 0
        %v1065 = vsel %vm898, %v1058, 0
        %v1068 = vsel %vm898, %v1059, 0
        %v1071 = vsel %vm898, %v1060, 0
        %1073 = vmatprep.subr.bf16.mxu0 0
        %1074 = vmatpush1.bf16.msra.mxu0 0
        %1075 = vmatprep.subr.bf16.mxu0 0
        %1076 = vmatpush1.bf16.msra.mxu0 0
        %1077 = vmatprep.subr.bf16.mxu0 0
        %1078 = vmatpush1.bf16.msra.mxu0 0
        %1079 = vmatprep.subr.bf16.mxu0 0
        %1080 = vmatpush1.bf16.msra.mxu0 0
        %1081 = vmatprep.subr.bf16.mxu0 0
        %1082 = vmatpush1.bf16.msra.mxu0 %v869
        %1083 = vmatprep.subr.bf16.mxu0 0
        %1084 = vmatpush1.bf16.msra.mxu0 %v868
        %1085 = vmatprep.subr.bf16.mxu0 0
        %1086 = vmatpush1.bf16.msra.mxu0 %v867
        %1087 = vmatprep.subr.bf16.mxu0 0
        %1088 = vmatpush1.bf16.msra.mxu0 %v866
        %1089 = vmatprep.subr.bf16.mxu0 0
        %1090 = vmatpush2.bf16.msra.mxu0 0
        %1091 = vmatprep.subr.bf16.mxu0 0
        %1092 = vmatpush2.bf16.msra.mxu0 0
        %1093 = vmatprep.subr.bf16.mxu0 0
        %1094 = vmatpush2.bf16.msra.mxu0 0
        %1095 = vmatprep.subr.bf16.mxu0 0
        %1096 = vmatpush2.bf16.msra.mxu0 0
        %1097 = vmatprep.subr.bf16.mxu0 0
        %1098 = vmatpush2.bf16.msra.mxu0 0
        %1099 = vmatprep.subr.bf16.mxu0 0
        %1100 = vmatpush2.bf16.msra.mxu0 0
        %1101 = vmatprep.subr.bf16.mxu0 0
        %1102 = vmatpush2.bf16.msra.mxu0 0
        %1103 = vmatprep.subr.bf16.mxu0 0
        %1104 = vmatpush2.bf16.msra.mxu0 0
        %1105 = vmatprep.mubr.bf16.mxu0 0
        %1106 = vmatmul.mubr.bf16.gmra.mxu0 %v1062
        %v1107 = vpop.f32.mrf.mxu0
        %v1108 = vadd.f32 0.0, %v1107
        %v1109 = vpop.f32.mrf.mxu0
        %v1110 = vpop.f32.mrf.mxu0
        %v1111 = vadd.f32 0.0, %v1110
        %v1112 = vpop.f32.mrf.mxu0
        %1113 = vmatprep.mubr.bf16.mxu0 0
        %1114 = vmatmul.mubr.bf16.gmra.mxu0 %v1065
        %v1115 = vpop.f32.mrf.mxu0
        %v1116 = vadd.f32 0.0, %v1115
        %v1117 = vpop.f32.mrf.mxu0
        %v1118 = vpop.f32.mrf.mxu0
        %v1119 = vadd.f32 0.0, %v1118
        %v1120 = vpop.f32.mrf.mxu0
        %1121 = vmatprep.mubr.bf16.mxu0 0
        %1122 = vmatmul.mubr.bf16.gmra.mxu0 %v1068
        %v1123 = vpop.f32.mrf.mxu0
        %v1124 = vadd.f32 0.0, %v1123
        %v1125 = vpop.f32.mrf.mxu0
        %v1126 = vpop.f32.mrf.mxu0
        %v1127 = vadd.f32 0.0, %v1126
        %v1128 = vpop.f32.mrf.mxu0
        %1129 = vmatprep.mubr.bf16.mxu0 0
        %1130 = vmatmul.mubr.bf16.gmra.mxu0 %v1071
        %v1131 = vpop.f32.mrf.mxu0
        %v1132 = vadd.f32 0.0, %v1131
        %v1133 = vpop.f32.mrf.mxu0
        %v1134 = vpop.f32.mrf.mxu0
        %v1135 = vadd.f32 0.0, %v1134
        %v1136 = vpop.f32.mrf.mxu0
        %1137 = vdwg.mxu0
        %1138 = vmatprep.subr.bf16.mxu0 0
        %1139 = vmatpush1.bf16.msra.mxu0 0
        %1140 = vmatprep.subr.bf16.mxu0 0
        %1141 = vmatpush1.bf16.msra.mxu0 0
        %1142 = vmatprep.subr.bf16.mxu0 0
        %1143 = vmatpush1.bf16.msra.mxu0 0
        %1144 = vmatprep.subr.bf16.mxu0 0
        %1145 = vmatpush1.bf16.msra.mxu0 0
        %1146 = vmatprep.subr.bf16.mxu0 0
        %1147 = vmatpush1.bf16.msra.mxu0 %v877
        %1148 = vmatprep.subr.bf16.mxu0 0
        %1149 = vmatpush1.bf16.msra.mxu0 %v876
        %1150 = vmatprep.subr.bf16.mxu0 0
        %1151 = vmatpush1.bf16.msra.mxu0 %v875
        %1152 = vmatprep.subr.bf16.mxu0 0
        %1153 = vmatpush1.bf16.msra.mxu0 %v874
        %1154 = vmatprep.subr.bf16.mxu0 0
        %1155 = vmatpush2.bf16.msra.mxu0 0
        %1156 = vmatprep.subr.bf16.mxu0 0
        %1157 = vmatpush2.bf16.msra.mxu0 0
        %1158 = vmatprep.subr.bf16.mxu0 0
        %1159 = vmatpush2.bf16.msra.mxu0 0
        %1160 = vmatprep.subr.bf16.mxu0 0
        %1161 = vmatpush2.bf16.msra.mxu0 0
        %1162 = vmatprep.subr.bf16.mxu0 0
        %1163 = vmatpush2.bf16.msra.mxu0 0
        %1164 = vmatprep.subr.bf16.mxu0 0
        %1165 = vmatpush2.bf16.msra.mxu0 0
        %1166 = vmatprep.subr.bf16.mxu0 0
        %1167 = vmatpush2.bf16.msra.mxu0 0
        %1168 = vmatprep.subr.bf16.mxu0 0
        %1169 = vmatpush2.bf16.msra.mxu0 0
        %1170 = vmatprep.mubr.bf16.mxu0 0
        %1171 = vmatmul.mubr.bf16.gmra.mxu0 %v1062
        %v1172 = vpop.f32.mrf.mxu0
        %v1173 = vadd.f32 0.0, %v1172
        %v1174 = vpop.f32.mrf.mxu0
        %v1175 = vpop.f32.mrf.mxu0
        %v1176 = vadd.f32 0.0, %v1175
        %v1177 = vpop.f32.mrf.mxu0
        %1178 = vmatprep.mubr.bf16.mxu0 0
        %1179 = vmatmul.mubr.bf16.gmra.mxu0 %v1065
        %v1180 = vpop.f32.mrf.mxu0
        %v1181 = vadd.f32 0.0, %v1180
        %v1182 = vpop.f32.mrf.mxu0
        %v1183 = vpop.f32.mrf.mxu0
        %v1184 = vadd.f32 0.0, %v1183
        %v1185 = vpop.f32.mrf.mxu0
        %1186 = vmatprep.mubr.bf16.mxu0 0
        %1187 = vmatmul.mubr.bf16.gmra.mxu0 %v1068
        %v1188 = vpop.f32.mrf.mxu0
        %v1189 = vadd.f32 0.0, %v1188
        %v1190 = vpop.f32.mrf.mxu0
        %v1191 = vpop.f32.mrf.mxu0
        %v1192 = vadd.f32 0.0, %v1191
        %v1193 = vpop.f32.mrf.mxu0
        %1194 = vmatprep.mubr.bf16.mxu0 0
        %1195 = vmatmul.mubr.bf16.gmra.mxu0 %v1071
        %v1196 = vpop.f32.mrf.mxu0
        %v1197 = vadd.f32 0.0, %v1196
        %v1198 = vpop.f32.mrf.mxu0
        %v1199 = vpop.f32.mrf.mxu0
        %v1200 = vadd.f32 0.0, %v1199
        %v1201 = vpop.f32.mrf.mxu0
        %1202 = vdwg.mxu0
        %v1203 = vpack.c.bf16 %v1014, %v1011
        %v1204 = vpack.c.bf16 %v1022, %v1019
        %v1205 = vpack.c.bf16 %v1030, %v1027
        %v1206 = vpack.c.bf16 %v1038, %v1035
        %1207 = vmatprep.subr.bf16.mxu0 0
        %1208 = vmatpush1.bf16.msra.mxu0 0
        %1209 = vmatprep.subr.bf16.mxu0 0
        %1210 = vmatpush1.bf16.msra.mxu0 0
        %1211 = vmatprep.subr.bf16.mxu0 0
        %1212 = vmatpush1.bf16.msra.mxu0 0
        %1213 = vmatprep.subr.bf16.mxu0 0
        %1214 = vmatpush1.bf16.msra.mxu0 0
        %1215 = vmatprep.subr.bf16.mxu0 0
        %1216 = vmatpush1.bf16.msra.mxu0 %v1206
        %1217 = vmatprep.subr.bf16.mxu0 0
        %1218 = vmatpush1.bf16.msra.mxu0 %v1205
        %1219 = vmatprep.subr.bf16.mxu0 0
        %1220 = vmatpush1.bf16.msra.mxu0 %v1204
        %1221 = vmatprep.subr.bf16.mxu0 0
        %1222 = vmatpush1.bf16.msra.mxu0 %v1203
        %1223 = vmatprep.subr.bf16.mxu0 0
        %1224 = vmatpush2.bf16.msra.mxu0 0
        %1225 = vmatprep.subr.bf16.mxu0 0
        %1226 = vmatpush2.bf16.msra.mxu0 0
        %1227 = vmatprep.subr.bf16.mxu0 0
        %1228 = vmatpush2.bf16.msra.mxu0 0
        %1229 = vmatprep.subr.bf16.mxu0 0
        %1230 = vmatpush2.bf16.msra.mxu0 0
        %1231 = vmatprep.subr.bf16.mxu0 0
        %1232 = vmatpush2.bf16.msra.mxu0 0
        %1233 = vmatprep.subr.bf16.mxu0 0
        %1234 = vmatpush2.bf16.msra.mxu0 0
        %1235 = vmatprep.subr.bf16.mxu0 0
        %1236 = vmatpush2.bf16.msra.mxu0 0
        %1237 = vmatprep.subr.bf16.mxu0 0
        %1238 = vmatpush2.bf16.msra.mxu0 0
        %1239 = vmatprep.mubr.bf16.mxu0 0
        %1240 = vmatmul.mubr.bf16.gmra.mxu0 %v1062
        %v1241 = vpop.f32.mrf.mxu0
        %v1242 = vadd.f32 0.0, %v1241
        %v1243 = vpop.f32.mrf.mxu0
        %v1244 = vpop.f32.mrf.mxu0
        %v1245 = vadd.f32 0.0, %v1244
        %v1246 = vpop.f32.mrf.mxu0
        %1247 = vmatprep.mubr.bf16.mxu0 0
        %1248 = vmatmul.mubr.bf16.gmra.mxu0 %v1065
        %v1249 = vpop.f32.mrf.mxu0
        %v1250 = vadd.f32 0.0, %v1249
        %v1251 = vpop.f32.mrf.mxu0
        %v1252 = vpop.f32.mrf.mxu0
        %v1253 = vadd.f32 0.0, %v1252
        %v1254 = vpop.f32.mrf.mxu0
        %1255 = vmatprep.mubr.bf16.mxu0 0
        %1256 = vmatmul.mubr.bf16.gmra.mxu0 %v1068
        %v1257 = vpop.f32.mrf.mxu0
        %v1258 = vadd.f32 0.0, %v1257
        %v1259 = vpop.f32.mrf.mxu0
        %v1260 = vpop.f32.mrf.mxu0
        %v1261 = vadd.f32 0.0, %v1260
        %v1262 = vpop.f32.mrf.mxu0
        %1263 = vmatprep.mubr.bf16.mxu0 0
        %1264 = vmatmul.mubr.bf16.gmra.mxu0 %v1071
        %v1265 = vpop.f32.mrf.mxu0
        %v1266 = vadd.f32 0.0, %v1265
        %v1267 = vpop.f32.mrf.mxu0
        %v1268 = vpop.f32.mrf.mxu0
        %v1269 = vadd.f32 0.0, %v1268
        %v1270 = vpop.f32.mrf.mxu0
        %1271 = vdwg.mxu0
        %v1272 = vunpack.c.l.bf16 %v862
        %v1273 = vunpack.c.h.bf16 %v862
        %v1274 = vunpack.c.l.bf16 %v863
        %v1275 = vunpack.c.h.bf16 %v863
        %v1276 = vunpack.c.l.bf16 %v864
        %v1277 = vunpack.c.h.bf16 %v864
        %v1278 = vunpack.c.l.bf16 %v865
        %v1279 = vunpack.c.h.bf16 %v865
        %v1280 = vunpack.c.l.bf16 %v866
        %v1281 = vunpack.c.h.bf16 %v866
        %v1282 = vunpack.c.l.bf16 %v867
        %v1283 = vunpack.c.h.bf16 %v867
        %v1284 = vunpack.c.l.bf16 %v868
        %v1285 = vunpack.c.h.bf16 %v868
        %v1286 = vunpack.c.l.bf16 %v869
        %v1287 = vunpack.c.h.bf16 %v869
        %v1288 = vmax.f32 %v1272, %v1280
        %v1289 = vmax.f32 %v1273, %v1281
        %v1290 = vmax.f32 %v1274, %v1282
        %v1291 = vmax.f32 %v1275, %v1283
        %v1292 = vmax.f32 %v1276, %v1284
        %v1293 = vmax.f32 %v1277, %v1285
        %v1294 = vmax.f32 %v1278, %v1286
        %v1295 = vmax.f32 %v1279, %v1287
        %v1296 = vunpack.c.l.bf16 %v870
        %v1297 = vunpack.c.h.bf16 %v870
        %v1298 = vunpack.c.l.bf16 %v871
        %v1299 = vunpack.c.h.bf16 %v871
        %v1300 = vunpack.c.l.bf16 %v872
        %v1301 = vunpack.c.h.bf16 %v872
        %v1302 = vunpack.c.l.bf16 %v873
        %v1303 = vunpack.c.h.bf16 %v873
        %v1304 = vmax.f32 %v1288, %v1296
        %v1305 = vmax.f32 %v1289, %v1297
        %v1306 = vmax.f32 %v1290, %v1298
        %v1307 = vmax.f32 %v1291, %v1299
        %v1308 = vmax.f32 %v1292, %v1300
        %v1309 = vmax.f32 %v1293, %v1301
        %v1310 = vmax.f32 %v1294, %v1302
        %v1311 = vmax.f32 %v1295, %v1303
        %v1312 = vunpack.c.l.bf16 %v874
        %v1313 = vunpack.c.h.bf16 %v874
        %v1314 = vunpack.c.l.bf16 %v875
        %v1315 = vunpack.c.h.bf16 %v875
        %v1316 = vunpack.c.l.bf16 %v876
        %v1317 = vunpack.c.h.bf16 %v876
        %v1318 = vunpack.c.l.bf16 %v877
        %v1319 = vunpack.c.h.bf16 %v877
        %v1320 = vmax.f32 %v1304, %v1312
        %v1321 = vmax.f32 %v1305, %v1313
        %v1322 = vmax.f32 %v1306, %v1314
        %v1323 = vmax.f32 %v1307, %v1315
        %v1324 = vmax.f32 %v1308, %v1316
        %v1325 = vmax.f32 %v1309, %v1317
        %v1326 = vmax.f32 %v1310, %v1318
        %v1327 = vmax.f32 %v1311, %v1319
        %v1328 = vmax.f32 %v1320, %v946
        %v1329 = vmax.f32 %v1321, %v949
        %v1330 = vmax.f32 %v1322, %v954
        %v1331 = vmax.f32 %v1323, %v957
        %v1332 = vmax.f32 %v1324, %v962
        %v1333 = vmax.f32 %v1325, %v965
        %v1334 = vmax.f32 %v1326, %v970
        %v1335 = vmax.f32 %v1327, %v973
        %v1336 = vmax.f32 %v1328, %v1011
        %v1337 = vmax.f32 %v1329, %v1014
        %v1338 = vmax.f32 %v1330, %v1019
        %v1339 = vmax.f32 %v1331, %v1022
        %v1340 = vmax.f32 %v1332, %v1027
        %v1341 = vmax.f32 %v1333, %v1030
        %v1342 = vmax.f32 %v1334, %v1035
        %v1343 = vmax.f32 %v1335, %v1038
        %v1344 = vmax.f32 %v1336, %v1108
        %v1345 = vmax.f32 %v1337, %v1111
        %v1346 = vmax.f32 %v1338, %v1116
        %v1347 = vmax.f32 %v1339, %v1119
        %v1348 = vmax.f32 %v1340, %v1124
        %v1349 = vmax.f32 %v1341, %v1127
        %v1350 = vmax.f32 %v1342, %v1132
        %v1351 = vmax.f32 %v1343, %v1135
        %v1352 = vmax.f32 %v1344, %v1173
        %v1353 = vmax.f32 %v1345, %v1176
        %v1354 = vmax.f32 %v1346, %v1181
        %v1355 = vmax.f32 %v1347, %v1184
        %v1356 = vmax.f32 %v1348, %v1189
        %v1357 = vmax.f32 %v1349, %v1192
        %v1358 = vmax.f32 %v1350, %v1197
        %v1359 = vmax.f32 %v1351, %v1200
        %v1360 = vmax.f32 %v1352, %v1242
        %v1361 = vmax.f32 %v1353, %v1245
        %v1362 = vmax.f32 %v1354, %v1250
        %v1363 = vmax.f32 %v1355, %v1253
        %v1364 = vmax.f32 %v1356, %v1258
        %v1365 = vmax.f32 %v1357, %v1261
        %v1366 = vmax.f32 %v1358, %v1266
        %v1367 = vmax.f32 %v1359, %v1269
        %v1368 = vpack.c.bf16 %v1361, %v1360
        %v1369 = vpack.c.bf16 %v1363, %v1362
        %v1370 = vpack.c.bf16 %v1365, %v1364
        %v1371 = vpack.c.bf16 %v1367, %v1366
        %1372 = vmatprep.subr.bf16.mxu0 0
        %1373 = vmatpush1.bf16.msra.mxu0 0
        %1374 = vmatprep.subr.bf16.mxu0 0
        %1375 = vmatpush1.bf16.msra.mxu0 0
        %1376 = vmatprep.subr.bf16.mxu0 0
        %1377 = vmatpush1.bf16.msra.mxu0 0
        %1378 = vmatprep.subr.bf16.mxu0 0
        %1379 = vmatpush1.bf16.msra.mxu0 0
        %1380 = vmatprep.subr.bf16.mxu0 0
        %1381 = vmatpush1.bf16.msra.mxu0 %v1371
        %1382 = vmatprep.subr.bf16.mxu0 0
        %1383 = vmatpush1.bf16.msra.mxu0 %v1370
        %1384 = vmatprep.subr.bf16.mxu0 0
        %1385 = vmatpush1.bf16.msra.mxu0 %v1369
        %1386 = vmatprep.subr.bf16.mxu0 0
        %1387 = vmatpush1.bf16.msra.mxu0 %v1368
        %1388 = vmatprep.subr.bf16.mxu0 0
        %1389 = vmatpush2.bf16.msra.mxu0 0
        %1390 = vmatprep.subr.bf16.mxu0 0
        %1391 = vmatpush2.bf16.msra.mxu0 0
        %1392 = vmatprep.subr.bf16.mxu0 0
        %1393 = vmatpush2.bf16.msra.mxu0 0
        %1394 = vmatprep.subr.bf16.mxu0 0
        %1395 = vmatpush2.bf16.msra.mxu0 0
        %1396 = vmatprep.subr.bf16.mxu0 0
        %1397 = vmatpush2.bf16.msra.mxu0 0
        %1398 = vmatprep.subr.bf16.mxu0 0
        %1399 = vmatpush2.bf16.msra.mxu0 0
        %1400 = vmatprep.subr.bf16.mxu0 0
        %1401 = vmatpush2.bf16.msra.mxu0 0
        %1402 = vmatprep.subr.bf16.mxu0 0
        %1403 = vmatpush2.bf16.msra.mxu0 0
        %1404 = vmatprep.mubr.bf16.mxu0 0
        %1405 = vmatmul.mubr.bf16.gmra.mxu0 %v900
        %v1406 = vpop.f32.mrf.mxu0
        %v1407 = vadd.f32 0.0, %v1406
        %v1408 = vpop.f32.mrf.mxu0
        %v1409 = vpop.f32.mrf.mxu0
        %v1410 = vadd.f32 0.0, %v1409
        %v1411 = vpop.f32.mrf.mxu0
        %1412 = vmatprep.mubr.bf16.mxu0 0
        %1413 = vmatmul.mubr.bf16.gmra.mxu0 %v903
        %v1414 = vpop.f32.mrf.mxu0
        %v1415 = vadd.f32 0.0, %v1414
        %v1416 = vpop.f32.mrf.mxu0
        %v1417 = vpop.f32.mrf.mxu0
        %v1418 = vadd.f32 0.0, %v1417
        %v1419 = vpop.f32.mrf.mxu0
        %1420 = vmatprep.mubr.bf16.mxu0 0
        %1421 = vmatmul.mubr.bf16.gmra.mxu0 %v906
        %v1422 = vpop.f32.mrf.mxu0
        %v1423 = vadd.f32 0.0, %v1422
        %v1424 = vpop.f32.mrf.mxu0
        %v1425 = vpop.f32.mrf.mxu0
        %v1426 = vadd.f32 0.0, %v1425
        %v1427 = vpop.f32.mrf.mxu0
        %1428 = vmatprep.mubr.bf16.mxu0 0
        %1429 = vmatmul.mubr.bf16.gmra.mxu0 %v909
        %v1430 = vpop.f32.mrf.mxu0
        %v1431 = vadd.f32 0.0, %v1430
        %v1432 = vpop.f32.mrf.mxu0
        %v1433 = vpop.f32.mrf.mxu0
        %v1434 = vadd.f32 0.0, %v1433
        %v1435 = vpop.f32.mrf.mxu0
        %1436 = vdwg.mxu0
        %v1437 = vpack.c.bf16 %v1410, %v1407
        %v1438 = vpack.c.bf16 %v1418, %v1415
        %v1439 = vpack.c.bf16 %v1426, %v1423
        %v1440 = vpack.c.bf16 %v1434, %v1431
        %v1449 = vunpack.c.l.b16 %v260
        %v1450 = vunpack.c.l.b16 %v261
        %v1451 = vunpack.c.l.b16 %v262
        %v1452 = vunpack.c.l.b16 %v263
        %v1453 = vunpack.c.l.b16 %v264
        %v1454 = vunpack.c.l.b16 %v265
        %v1455 = vunpack.c.l.b16 %v266
        %v1456 = vunpack.c.l.b16 %v267
        %v1457 = vpack.c.b16 %v1450, %v1449
        %v1458 = vpack.c.b16 %v1452, %v1451
        %v1459 = vpack.c.b16 %v1454, %v1453
        %v1460 = vpack.c.b16 %v1456, %v1455
        %v1462 = vsel %vm898, %v1457, 0
        %v1465 = vsel %vm898, %v1458, 0
        %v1468 = vsel %vm898, %v1459, 0
        %v1471 = vsel %vm898, %v1460, 0
        %1473 = vmatprep.subr.bf16.mxu0 0
        %1474 = vmatpush1.bf16.msra.mxu0 0
        %1475 = vmatprep.subr.bf16.mxu0 0
        %1476 = vmatpush1.bf16.msra.mxu0 0
        %1477 = vmatprep.subr.bf16.mxu0 0
        %1478 = vmatpush1.bf16.msra.mxu0 0
        %1479 = vmatprep.subr.bf16.mxu0 0
        %1480 = vmatpush1.bf16.msra.mxu0 0
        %1481 = vmatprep.subr.bf16.mxu0 0
        %1482 = vmatpush1.bf16.msra.mxu0 %v1371
        %1483 = vmatprep.subr.bf16.mxu0 0
        %1484 = vmatpush1.bf16.msra.mxu0 %v1370
        %1485 = vmatprep.subr.bf16.mxu0 0
        %1486 = vmatpush1.bf16.msra.mxu0 %v1369
        %1487 = vmatprep.subr.bf16.mxu0 0
        %1488 = vmatpush1.bf16.msra.mxu0 %v1368
        %1489 = vmatprep.subr.bf16.mxu0 0
        %1490 = vmatpush2.bf16.msra.mxu0 0
        %1491 = vmatprep.subr.bf16.mxu0 0
        %1492 = vmatpush2.bf16.msra.mxu0 0
        %1493 = vmatprep.subr.bf16.mxu0 0
        %1494 = vmatpush2.bf16.msra.mxu0 0
        %1495 = vmatprep.subr.bf16.mxu0 0
        %1496 = vmatpush2.bf16.msra.mxu0 0
        %1497 = vmatprep.subr.bf16.mxu0 0
        %1498 = vmatpush2.bf16.msra.mxu0 0
        %1499 = vmatprep.subr.bf16.mxu0 0
        %1500 = vmatpush2.bf16.msra.mxu0 0
        %1501 = vmatprep.subr.bf16.mxu0 0
        %1502 = vmatpush2.bf16.msra.mxu0 0
        %1503 = vmatprep.subr.bf16.mxu0 0
        %1504 = vmatpush2.bf16.msra.mxu0 0
        %1505 = vmatprep.mubr.bf16.mxu0 0
        %1506 = vmatmul.mubr.bf16.gmra.mxu0 %v1462
        %v1507 = vpop.f32.mrf.mxu0
        %v1508 = vadd.f32 0.0, %v1507
        %v1509 = vpop.f32.mrf.mxu0
        %v1510 = vpop.f32.mrf.mxu0
        %v1511 = vadd.f32 0.0, %v1510
        %v1512 = vpop.f32.mrf.mxu0
        %1513 = vmatprep.mubr.bf16.mxu0 0
        %1514 = vmatmul.mubr.bf16.gmra.mxu0 %v1465
        %v1515 = vpop.f32.mrf.mxu0
        %v1516 = vadd.f32 0.0, %v1515
        %v1517 = vpop.f32.mrf.mxu0
        %v1518 = vpop.f32.mrf.mxu0
        %v1519 = vadd.f32 0.0, %v1518
        %v1520 = vpop.f32.mrf.mxu0
        %1521 = vmatprep.mubr.bf16.mxu0 0
        %1522 = vmatmul.mubr.bf16.gmra.mxu0 %v1468
        %v1523 = vpop.f32.mrf.mxu0
        %v1524 = vadd.f32 0.0, %v1523
        %v1525 = vpop.f32.mrf.mxu0
        %v1526 = vpop.f32.mrf.mxu0
        %v1527 = vadd.f32 0.0, %v1526
        %v1528 = vpop.f32.mrf.mxu0
        %1529 = vmatprep.mubr.bf16.mxu0 0
        %1530 = vmatmul.mubr.bf16.gmra.mxu0 %v1471
        %v1531 = vpop.f32.mrf.mxu0
        %v1532 = vadd.f32 0.0, %v1531
        %v1533 = vpop.f32.mrf.mxu0
        %v1534 = vpop.f32.mrf.mxu0
        %v1535 = vadd.f32 0.0, %v1534
        %v1536 = vpop.f32.mrf.mxu0
        %1537 = vdwg.mxu0
        %v1538 = vpack.c.bf16 %v1511, %v1508
        %v1539 = vpack.c.bf16 %v1519, %v1516
        %v1540 = vpack.c.bf16 %v1527, %v1524
        %v1541 = vpack.c.bf16 %v1535, %v1532
        %1542 = vmatprep.subr.bf16.mxu0 0
        %1543 = vmatpush1.bf16.msra.mxu0 0
        %1544 = vmatprep.subr.bf16.mxu0 0
        %1545 = vmatpush1.bf16.msra.mxu0 0
        %1546 = vmatprep.subr.bf16.mxu0 0
        %1547 = vmatpush1.bf16.msra.mxu0 0
        %1548 = vmatprep.subr.bf16.mxu0 0
        %1549 = vmatpush1.bf16.msra.mxu0 0
        %1550 = vmatprep.subr.bf16.mxu0 0
        %1551 = vmatpush1.bf16.msra.mxu0 %v1440
        %1552 = vmatprep.subr.bf16.mxu0 0
        %1553 = vmatpush1.bf16.msra.mxu0 %v1439
        %1554 = vmatprep.subr.bf16.mxu0 0
        %1555 = vmatpush1.bf16.msra.mxu0 %v1438
        %1556 = vmatprep.subr.bf16.mxu0 0
        %1557 = vmatpush1.bf16.msra.mxu0 %v1437
        %1558 = vmatprep.subr.bf16.mxu0 0
        %1559 = vmatpush2.bf16.msra.mxu0 0
        %1560 = vmatprep.subr.bf16.mxu0 0
        %1561 = vmatpush2.bf16.msra.mxu0 0
        %1562 = vmatprep.subr.bf16.mxu0 0
        %1563 = vmatpush2.bf16.msra.mxu0 0
        %1564 = vmatprep.subr.bf16.mxu0 0
        %1565 = vmatpush2.bf16.msra.mxu0 0
        %1566 = vmatprep.subr.bf16.mxu0 0
        %1567 = vmatpush2.bf16.msra.mxu0 0
        %1568 = vmatprep.subr.bf16.mxu0 0
        %1569 = vmatpush2.bf16.msra.mxu0 0
        %1570 = vmatprep.subr.bf16.mxu0 0
        %1571 = vmatpush2.bf16.msra.mxu0 0
        %1572 = vmatprep.subr.bf16.mxu0 0
        %1573 = vmatpush2.bf16.msra.mxu0 0
        %1574 = vmatprep.mubr.bf16.mxu0 0
        %1575 = vmatmul.mubr.bf16.gmra.mxu0 %v1062
        %v1576 = vpop.f32.mrf.mxu0
        %v1577 = vadd.f32 0.0, %v1576
        %v1578 = vpop.f32.mrf.mxu0
        %v1579 = vpop.f32.mrf.mxu0
        %v1580 = vadd.f32 0.0, %v1579
        %v1581 = vpop.f32.mrf.mxu0
        %1582 = vmatprep.mubr.bf16.mxu0 0
        %1583 = vmatmul.mubr.bf16.gmra.mxu0 %v1065
        %v1584 = vpop.f32.mrf.mxu0
        %v1585 = vadd.f32 0.0, %v1584
        %v1586 = vpop.f32.mrf.mxu0
        %v1587 = vpop.f32.mrf.mxu0
        %v1588 = vadd.f32 0.0, %v1587
        %v1589 = vpop.f32.mrf.mxu0
        %1590 = vmatprep.mubr.bf16.mxu0 0
        %1591 = vmatmul.mubr.bf16.gmra.mxu0 %v1068
        %v1592 = vpop.f32.mrf.mxu0
        %v1593 = vadd.f32 0.0, %v1592
        %v1594 = vpop.f32.mrf.mxu0
        %v1595 = vpop.f32.mrf.mxu0
        %v1596 = vadd.f32 0.0, %v1595
        %v1597 = vpop.f32.mrf.mxu0
        %1598 = vmatprep.mubr.bf16.mxu0 0
        %1599 = vmatmul.mubr.bf16.gmra.mxu0 %v1071
        %v1600 = vpop.f32.mrf.mxu0
        %v1601 = vadd.f32 0.0, %v1600
        %v1602 = vpop.f32.mrf.mxu0
        %v1603 = vpop.f32.mrf.mxu0
        %v1604 = vadd.f32 0.0, %v1603
        %v1605 = vpop.f32.mrf.mxu0
        %1606 = vdwg.mxu0
        %v1607 = vpack.c.bf16 %v1580, %v1577
        %v1608 = vpack.c.bf16 %v1588, %v1585
        %v1609 = vpack.c.bf16 %v1596, %v1593
        %v1610 = vpack.c.bf16 %v1604, %v1601
        %v1611 = vld [vmem:[%s2] sm:$0xf]
        %v1612 = vld [vmem:[%s2 + $0x4] sm:$0xf]
        %v1613 = vld [vmem:[%s2 + $0x8] sm:$0xf]
        %v1614 = vld [vmem:[%s2 + $0xc] sm:$0xf]
        %v1615 = vld [vmem:[%s2 + $0x10] sm:$0xf]
        %v1616 = vld [vmem:[%s2 + $0x14] sm:$0xf]
        %v1617 = vld [vmem:[%s2 + $0x18] sm:$0xf]
        %v1618 = vld [vmem:[%s2 + $0x1c] sm:$0xf]
        %1619 = vmatprep.subr.bf16.mxu0 0
        %1620 = vmatpush1.bf16.msra.mxu0 0
        %1621 = vmatprep.subr.bf16.mxu0 0
        %1622 = vmatpush1.bf16.msra.mxu0 0
        %1623 = vmatprep.subr.bf16.mxu0 0
        %1624 = vmatpush1.bf16.msra.mxu0 0
        %1625 = vmatprep.subr.bf16.mxu0 0
        %1626 = vmatpush1.bf16.msra.mxu0 0
        %1627 = vmatprep.subr.bf16.mxu0 0
        %1628 = vmatpush1.bf16.msra.mxu0 %v1371
        %1629 = vmatprep.subr.bf16.mxu0 0
        %1630 = vmatpush1.bf16.msra.mxu0 %v1370
        %1631 = vmatprep.subr.bf16.mxu0 0
        %1632 = vmatpush1.bf16.msra.mxu0 %v1369
        %1633 = vmatprep.subr.bf16.mxu0 0
        %1634 = vmatpush1.bf16.msra.mxu0 %v1368
        %1635 = vmatprep.subr.bf16.mxu0 0
        %1636 = vmatpush2.bf16.msra.mxu0 0
        %1637 = vmatprep.subr.bf16.mxu0 0
        %1638 = vmatpush2.bf16.msra.mxu0 0
        %1639 = vmatprep.subr.bf16.mxu0 0
        %1640 = vmatpush2.bf16.msra.mxu0 0
        %1641 = vmatprep.subr.bf16.mxu0 0
        %1642 = vmatpush2.bf16.msra.mxu0 0
        %1643 = vmatprep.subr.bf16.mxu0 0
        %1644 = vmatpush2.bf16.msra.mxu0 0
        %1645 = vmatprep.subr.bf16.mxu0 0
        %1646 = vmatpush2.bf16.msra.mxu0 0
        %1647 = vmatprep.subr.bf16.mxu0 0
        %1648 = vmatpush2.bf16.msra.mxu0 0
        %1649 = vmatprep.subr.bf16.mxu0 0
        %1650 = vmatpush2.bf16.msra.mxu0 0
        %1651 = vmatprep.mubr.bf16.mxu0 0
        %1652 = vmatmul.mubr.bf16.gmra.mxu0 %v1062
        %v1653 = vpop.f32.mrf.mxu0
        %v1654 = vadd.f32 0.0, %v1653
        %v1655 = vpop.f32.mrf.mxu0
        %v1656 = vpop.f32.mrf.mxu0
        %v1657 = vadd.f32 0.0, %v1656
        %v1658 = vpop.f32.mrf.mxu0
        %1659 = vmatprep.mubr.bf16.mxu0 0
        %1660 = vmatmul.mubr.bf16.gmra.mxu0 %v1065
        %v1661 = vpop.f32.mrf.mxu0
        %v1662 = vadd.f32 0.0, %v1661
        %v1663 = vpop.f32.mrf.mxu0
        %v1664 = vpop.f32.mrf.mxu0
        %v1665 = vadd.f32 0.0, %v1664
        %v1666 = vpop.f32.mrf.mxu0
        %1667 = vmatprep.mubr.bf16.mxu0 0
        %1668 = vmatmul.mubr.bf16.gmra.mxu0 %v1068
        %v1669 = vpop.f32.mrf.mxu0
        %v1670 = vadd.f32 0.0, %v1669
        %v1671 = vpop.f32.mrf.mxu0
        %v1672 = vpop.f32.mrf.mxu0
        %v1673 = vadd.f32 0.0, %v1672
        %v1674 = vpop.f32.mrf.mxu0
        %1675 = vmatprep.mubr.bf16.mxu0 0
        %1676 = vmatmul.mubr.bf16.gmra.mxu0 %v1071
        %v1677 = vpop.f32.mrf.mxu0
        %v1678 = vadd.f32 0.0, %v1677
        %v1679 = vpop.f32.mrf.mxu0
        %v1680 = vpop.f32.mrf.mxu0
        %v1681 = vadd.f32 0.0, %v1680
        %v1682 = vpop.f32.mrf.mxu0
        %1683 = vdwg.mxu0
        %v1684 = vpack.c.bf16 %v1657, %v1654
        %v1685 = vpack.c.bf16 %v1665, %v1662
        %v1686 = vpack.c.bf16 %v1673, %v1670
        %v1687 = vpack.c.bf16 %v1681, %v1678
        %s1688 = scalar_lea.vmem %s2, 32
        %v1689 = vld [vmem:[%s1688] sm:$0xf]
        %v1690 = vld [vmem:[%s1688 + $0x4] sm:$0xf]
        %v1691 = vld [vmem:[%s1688 + $0x8] sm:$0xf]
        %v1692 = vld [vmem:[%s1688 + $0xc] sm:$0xf]
        %v1693 = vld [vmem:[%s1688 + $0x10] sm:$0xf]
        %v1694 = vld [vmem:[%s1688 + $0x14] sm:$0xf]
        %v1695 = vld [vmem:[%s1688 + $0x18] sm:$0xf]
        %v1696 = vld [vmem:[%s1688 + $0x1c] sm:$0xf]
        %v1705 = vunpack.c.l.b16 %v1689
        %v1706 = vunpack.c.l.b16 %v1690
        %v1707 = vunpack.c.l.b16 %v1691
        %v1708 = vunpack.c.l.b16 %v1692
        %v1709 = vunpack.c.l.b16 %v1693
        %v1710 = vunpack.c.l.b16 %v1694
        %v1711 = vunpack.c.l.b16 %v1695
        %v1712 = vunpack.c.l.b16 %v1696
        %v1713 = vpack.c.b16 %v1706, %v1705
        %v1714 = vpack.c.b16 %v1708, %v1707
        %v1715 = vpack.c.b16 %v1710, %v1709
        %v1716 = vpack.c.b16 %v1712, %v1711
        %v1722 = vsel %vm898, %v1684, 0
        %v1725 = vsel %vm898, %v1685, 0
        %v1728 = vsel %vm898, %v1686, 0
        %v1731 = vsel %vm898, %v1687, 0
        %1733 = vmatprep.subr.bf16.mxu0 0
        %1734 = vmatpush1.bf16.msra.mxu0 0
        %1735 = vmatprep.subr.bf16.mxu0 0
        %1736 = vmatpush1.bf16.msra.mxu0 0
        %1737 = vmatprep.subr.bf16.mxu0 0
        %1738 = vmatpush1.bf16.msra.mxu0 0
        %1739 = vmatprep.subr.bf16.mxu0 0
        %1740 = vmatpush1.bf16.msra.mxu0 0
        %1741 = vmatprep.subr.bf16.mxu0 0
        %1742 = vmatpush1.bf16.msra.mxu0 %v1716
        %1743 = vmatprep.subr.bf16.mxu0 0
        %1744 = vmatpush1.bf16.msra.mxu0 %v1715
        %1745 = vmatprep.subr.bf16.mxu0 0
        %1746 = vmatpush1.bf16.msra.mxu0 %v1714
        %1747 = vmatprep.subr.bf16.mxu0 0
        %1748 = vmatpush1.bf16.msra.mxu0 %v1713
        %1749 = vmatprep.subr.bf16.mxu0 0
        %1750 = vmatpush2.bf16.msra.mxu0 0
        %1751 = vmatprep.subr.bf16.mxu0 0
        %1752 = vmatpush2.bf16.msra.mxu0 0
        %1753 = vmatprep.subr.bf16.mxu0 0
        %1754 = vmatpush2.bf16.msra.mxu0 0
        %1755 = vmatprep.subr.bf16.mxu0 0
        %1756 = vmatpush2.bf16.msra.mxu0 0
        %1757 = vmatprep.subr.bf16.mxu0 0
        %1758 = vmatpush2.bf16.msra.mxu0 0
        %1759 = vmatprep.subr.bf16.mxu0 0
        %1760 = vmatpush2.bf16.msra.mxu0 0
        %1761 = vmatprep.subr.bf16.mxu0 0
        %1762 = vmatpush2.bf16.msra.mxu0 0
        %1763 = vmatprep.subr.bf16.mxu0 0
        %1764 = vmatpush2.bf16.msra.mxu0 0
        %1765 = vmatprep.mubr.bf16.mxu0 0
        %1766 = vmatmul.mubr.bf16.gmra.mxu0 %v1722
        %v1767 = vpop.f32.mrf.mxu0
        %v1768 = vadd.f32 0.0, %v1767
        %v1769 = vpop.f32.mrf.mxu0
        %v1770 = vpop.f32.mrf.mxu0
        %v1771 = vadd.f32 0.0, %v1770
        %v1772 = vpop.f32.mrf.mxu0
        %1773 = vmatprep.mubr.bf16.mxu0 0
        %1774 = vmatmul.mubr.bf16.gmra.mxu0 %v1725
        %v1775 = vpop.f32.mrf.mxu0
        %v1776 = vadd.f32 0.0, %v1775
        %v1777 = vpop.f32.mrf.mxu0
        %v1778 = vpop.f32.mrf.mxu0
        %v1779 = vadd.f32 0.0, %v1778
        %v1780 = vpop.f32.mrf.mxu0
        %1781 = vmatprep.mubr.bf16.mxu0 0
        %1782 = vmatmul.mubr.bf16.gmra.mxu0 %v1728
        %v1783 = vpop.f32.mrf.mxu0
        %v1784 = vadd.f32 0.0, %v1783
        %v1785 = vpop.f32.mrf.mxu0
        %v1786 = vpop.f32.mrf.mxu0
        %v1787 = vadd.f32 0.0, %v1786
        %v1788 = vpop.f32.mrf.mxu0
        %1789 = vmatprep.mubr.bf16.mxu0 0
        %1790 = vmatmul.mubr.bf16.gmra.mxu0 %v1731
        %v1791 = vpop.f32.mrf.mxu0
        %v1792 = vadd.f32 0.0, %v1791
        %v1793 = vpop.f32.mrf.mxu0
        %v1794 = vpop.f32.mrf.mxu0
        %v1795 = vadd.f32 0.0, %v1794
        %v1796 = vpop.f32.mrf.mxu0
        %1797 = vdwg.mxu0
        %v1806 = vunpack.c.l.b16 %v1611
        %v1807 = vunpack.c.l.b16 %v1612
        %v1808 = vunpack.c.l.b16 %v1613
        %v1809 = vunpack.c.l.b16 %v1614
        %v1810 = vunpack.c.l.b16 %v1615
        %v1811 = vunpack.c.l.b16 %v1616
        %v1812 = vunpack.c.l.b16 %v1617
        %v1813 = vunpack.c.l.b16 %v1618
        %v1814 = vpack.c.b16 %v1807, %v1806
        %v1815 = vpack.c.b16 %v1809, %v1808
        %v1816 = vpack.c.b16 %v1811, %v1810
        %v1817 = vpack.c.b16 %v1813, %v1812
        %v1823 = vsel %vm898, %v1607, 0
        %v1826 = vsel %vm898, %v1608, 0
        %v1829 = vsel %vm898, %v1609, 0
        %v1832 = vsel %vm898, %v1610, 0
        %1834 = vmatprep.subr.bf16.mxu0 0
        %1835 = vmatpush1.bf16.msra.mxu0 0
        %1836 = vmatprep.subr.bf16.mxu0 0
        %1837 = vmatpush1.bf16.msra.mxu0 0
        %1838 = vmatprep.subr.bf16.mxu0 0
        %1839 = vmatpush1.bf16.msra.mxu0 0
        %1840 = vmatprep.subr.bf16.mxu0 0
        %1841 = vmatpush1.bf16.msra.mxu0 0
        %1842 = vmatprep.subr.bf16.mxu0 0
        %1843 = vmatpush1.bf16.msra.mxu0 %v1817
        %1844 = vmatprep.subr.bf16.mxu0 0
        %1845 = vmatpush1.bf16.msra.mxu0 %v1816
        %1846 = vmatprep.subr.bf16.mxu0 0
        %1847 = vmatpush1.bf16.msra.mxu0 %v1815
        %1848 = vmatprep.subr.bf16.mxu0 0
        %1849 = vmatpush1.bf16.msra.mxu0 %v1814
        %1850 = vmatprep.subr.bf16.mxu0 0
        %1851 = vmatpush2.bf16.msra.mxu0 0
        %1852 = vmatprep.subr.bf16.mxu0 0
        %1853 = vmatpush2.bf16.msra.mxu0 0
        %1854 = vmatprep.subr.bf16.mxu0 0
        %1855 = vmatpush2.bf16.msra.mxu0 0
        %1856 = vmatprep.subr.bf16.mxu0 0
        %1857 = vmatpush2.bf16.msra.mxu0 0
        %1858 = vmatprep.subr.bf16.mxu0 0
        %1859 = vmatpush2.bf16.msra.mxu0 0
        %1860 = vmatprep.subr.bf16.mxu0 0
        %1861 = vmatpush2.bf16.msra.mxu0 0
        %1862 = vmatprep.subr.bf16.mxu0 0
        %1863 = vmatpush2.bf16.msra.mxu0 0
        %1864 = vmatprep.subr.bf16.mxu0 0
        %1865 = vmatpush2.bf16.msra.mxu0 0
        %1866 = vmatprep.mubr.bf16.mxu0 0
        %1867 = vmatmul.mubr.bf16.gmra.mxu0 %v1823
        %v1868 = vpop.f32.mrf.mxu0
        %v1869 = vadd.f32 %v1768, %v1868
        %v1870 = vpop.f32.mrf.mxu0
        %v1871 = vpop.f32.mrf.mxu0
        %v1872 = vadd.f32 %v1771, %v1871
        %v1873 = vpop.f32.mrf.mxu0
        %1874 = vmatprep.mubr.bf16.mxu0 0
        %1875 = vmatmul.mubr.bf16.gmra.mxu0 %v1826
        %v1876 = vpop.f32.mrf.mxu0
        %v1877 = vadd.f32 %v1776, %v1876
        %v1878 = vpop.f32.mrf.mxu0
        %v1879 = vpop.f32.mrf.mxu0
        %v1880 = vadd.f32 %v1779, %v1879
        %v1881 = vpop.f32.mrf.mxu0
        %1882 = vmatprep.mubr.bf16.mxu0 0
        %1883 = vmatmul.mubr.bf16.gmra.mxu0 %v1829
        %v1884 = vpop.f32.mrf.mxu0
        %v1885 = vadd.f32 %v1784, %v1884
        %v1886 = vpop.f32.mrf.mxu0
        %v1887 = vpop.f32.mrf.mxu0
        %v1888 = vadd.f32 %v1787, %v1887
        %v1889 = vpop.f32.mrf.mxu0
        %1890 = vmatprep.mubr.bf16.mxu0 0
        %1891 = vmatmul.mubr.bf16.gmra.mxu0 %v1832
        %v1892 = vpop.f32.mrf.mxu0
        %v1893 = vadd.f32 %v1792, %v1892
        %v1894 = vpop.f32.mrf.mxu0
        %v1895 = vpop.f32.mrf.mxu0
        %v1896 = vadd.f32 %v1795, %v1895
        %v1897 = vpop.f32.mrf.mxu0
        %1898 = vdwg.mxu0
        %1899 = vmatprep.subr.bf16.mxu0 0
        %1900 = vmatpush1.bf16.msra.mxu0 0
        %1901 = vmatprep.subr.bf16.mxu0 0
        %1902 = vmatpush1.bf16.msra.mxu0 0
        %1903 = vmatprep.subr.bf16.mxu0 0
        %1904 = vmatpush1.bf16.msra.mxu0 0
        %1905 = vmatprep.subr.bf16.mxu0 0
        %1906 = vmatpush1.bf16.msra.mxu0 0
        %1907 = vmatprep.subr.bf16.mxu0 0
        %1908 = vmatpush1.bf16.msra.mxu0 %v1541
        %1909 = vmatprep.subr.bf16.mxu0 0
        %1910 = vmatpush1.bf16.msra.mxu0 %v1540
        %1911 = vmatprep.subr.bf16.mxu0 0
        %1912 = vmatpush1.bf16.msra.mxu0 %v1539
        %1913 = vmatprep.subr.bf16.mxu0 0
        %1914 = vmatpush1.bf16.msra.mxu0 %v1538
        %1915 = vmatprep.subr.bf16.mxu0 0
        %1916 = vmatpush2.bf16.msra.mxu0 0
        %1917 = vmatprep.subr.bf16.mxu0 0
        %1918 = vmatpush2.bf16.msra.mxu0 0
        %1919 = vmatprep.subr.bf16.mxu0 0
        %1920 = vmatpush2.bf16.msra.mxu0 0
        %1921 = vmatprep.subr.bf16.mxu0 0
        %1922 = vmatpush2.bf16.msra.mxu0 0
        %1923 = vmatprep.subr.bf16.mxu0 0
        %1924 = vmatpush2.bf16.msra.mxu0 0
        %1925 = vmatprep.subr.bf16.mxu0 0
        %1926 = vmatpush2.bf16.msra.mxu0 0
        %1927 = vmatprep.subr.bf16.mxu0 0
        %1928 = vmatpush2.bf16.msra.mxu0 0
        %1929 = vmatprep.subr.bf16.mxu0 0
        %1930 = vmatpush2.bf16.msra.mxu0 0
        %1931 = vmatprep.mubr.bf16.mxu0 0
        %1932 = vmatmul.mubr.bf16.gmra.mxu0 %v1062
        %v1933 = vpop.f32.mrf.mxu0
        %v1934 = vadd.f32 0.0, %v1933
        %v1935 = vpop.f32.mrf.mxu0
        %v1936 = vpop.f32.mrf.mxu0
        %v1937 = vadd.f32 0.0, %v1936
        %v1938 = vpop.f32.mrf.mxu0
        %1939 = vmatprep.mubr.bf16.mxu0 0
        %1940 = vmatmul.mubr.bf16.gmra.mxu0 %v1065
        %v1941 = vpop.f32.mrf.mxu0
        %v1942 = vadd.f32 0.0, %v1941
        %v1943 = vpop.f32.mrf.mxu0
        %v1944 = vpop.f32.mrf.mxu0
        %v1945 = vadd.f32 0.0, %v1944
        %v1946 = vpop.f32.mrf.mxu0
        %1947 = vmatprep.mubr.bf16.mxu0 0
        %1948 = vmatmul.mubr.bf16.gmra.mxu0 %v1068
        %v1949 = vpop.f32.mrf.mxu0
        %v1950 = vadd.f32 0.0, %v1949
        %v1951 = vpop.f32.mrf.mxu0
        %v1952 = vpop.f32.mrf.mxu0
        %v1953 = vadd.f32 0.0, %v1952
        %v1954 = vpop.f32.mrf.mxu0
        %1955 = vmatprep.mubr.bf16.mxu0 0
        %1956 = vmatmul.mubr.bf16.gmra.mxu0 %v1071
        %v1957 = vpop.f32.mrf.mxu0
        %v1958 = vadd.f32 0.0, %v1957
        %v1959 = vpop.f32.mrf.mxu0
        %v1960 = vpop.f32.mrf.mxu0
        %v1961 = vadd.f32 0.0, %v1960
        %v1962 = vpop.f32.mrf.mxu0
        %1963 = vdwg.mxu0
        %v1964 = vpack.c.bf16 %v1937, %v1934
        %v1965 = vpack.c.bf16 %v1945, %v1942
        %v1966 = vpack.c.bf16 %v1953, %v1950
        %v1967 = vpack.c.bf16 %v1961, %v1958
        %s1968 = scalar_lea.vmem %s2, 64
        %v1969 = vld [vmem:[%s1968] sm:$0xf]
        %v1970 = vld [vmem:[%s1968 + $0x4] sm:$0xf]
        %v1971 = vld [vmem:[%s1968 + $0x8] sm:$0xf]
        %v1972 = vld [vmem:[%s1968 + $0xc] sm:$0xf]
        %v1973 = vld [vmem:[%s1968 + $0x10] sm:$0xf]
        %v1974 = vld [vmem:[%s1968 + $0x14] sm:$0xf]
        %v1975 = vld [vmem:[%s1968 + $0x18] sm:$0xf]
        %v1976 = vld [vmem:[%s1968 + $0x1c] sm:$0xf]
        %v1985 = vunpack.c.l.b16 %v1969
        %v1986 = vunpack.c.l.b16 %v1970
        %v1987 = vunpack.c.l.b16 %v1971
        %v1988 = vunpack.c.l.b16 %v1972
        %v1989 = vunpack.c.l.b16 %v1973
        %v1990 = vunpack.c.l.b16 %v1974
        %v1991 = vunpack.c.l.b16 %v1975
        %v1992 = vunpack.c.l.b16 %v1976
        %v1993 = vpack.c.b16 %v1986, %v1985
        %v1994 = vpack.c.b16 %v1988, %v1987
        %v1995 = vpack.c.b16 %v1990, %v1989
        %v1996 = vpack.c.b16 %v1992, %v1991
        %v2002 = vsel %vm898, %v1964, 0
        %v2005 = vsel %vm898, %v1965, 0
        %v2008 = vsel %vm898, %v1966, 0
        %v2011 = vsel %vm898, %v1967, 0
        %2013 = vmatprep.subr.bf16.mxu0 0
        %2014 = vmatpush1.bf16.msra.mxu0 0
        %2015 = vmatprep.subr.bf16.mxu0 0
        %2016 = vmatpush1.bf16.msra.mxu0 0
        %2017 = vmatprep.subr.bf16.mxu0 0
        %2018 = vmatpush1.bf16.msra.mxu0 0
        %2019 = vmatprep.subr.bf16.mxu0 0
        %2020 = vmatpush1.bf16.msra.mxu0 0
        %2021 = vmatprep.subr.bf16.mxu0 0
        %2022 = vmatpush1.bf16.msra.mxu0 %v1996
        %2023 = vmatprep.subr.bf16.mxu0 0
        %2024 = vmatpush1.bf16.msra.mxu0 %v1995
        %2025 = vmatprep.subr.bf16.mxu0 0
        %2026 = vmatpush1.bf16.msra.mxu0 %v1994
        %2027 = vmatprep.subr.bf16.mxu0 0
        %2028 = vmatpush1.bf16.msra.mxu0 %v1993
        %2029 = vmatprep.subr.bf16.mxu0 0
        %2030 = vmatpush2.bf16.msra.mxu0 0
        %2031 = vmatprep.subr.bf16.mxu0 0
        %2032 = vmatpush2.bf16.msra.mxu0 0
        %2033 = vmatprep.subr.bf16.mxu0 0
        %2034 = vmatpush2.bf16.msra.mxu0 0
        %2035 = vmatprep.subr.bf16.mxu0 0
        %2036 = vmatpush2.bf16.msra.mxu0 0
        %2037 = vmatprep.subr.bf16.mxu0 0
        %2038 = vmatpush2.bf16.msra.mxu0 0
        %2039 = vmatprep.subr.bf16.mxu0 0
        %2040 = vmatpush2.bf16.msra.mxu0 0
        %2041 = vmatprep.subr.bf16.mxu0 0
        %2042 = vmatpush2.bf16.msra.mxu0 0
        %2043 = vmatprep.subr.bf16.mxu0 0
        %2044 = vmatpush2.bf16.msra.mxu0 0
        %2045 = vmatprep.mubr.bf16.mxu0 0
        %2046 = vmatmul.mubr.bf16.gmra.mxu0 %v2002
        %v2047 = vpop.f32.mrf.mxu0
        %v2048 = vadd.f32 0.0, %v2047
        %v2049 = vpop.f32.mrf.mxu0
        %v2050 = vpop.f32.mrf.mxu0
        %v2051 = vadd.f32 0.0, %v2050
        %v2052 = vpop.f32.mrf.mxu0
        %2053 = vmatprep.mubr.bf16.mxu0 0
        %2054 = vmatmul.mubr.bf16.gmra.mxu0 %v2005
        %v2055 = vpop.f32.mrf.mxu0
        %v2056 = vadd.f32 0.0, %v2055
        %v2057 = vpop.f32.mrf.mxu0
        %v2058 = vpop.f32.mrf.mxu0
        %v2059 = vadd.f32 0.0, %v2058
        %v2060 = vpop.f32.mrf.mxu0
        %2061 = vmatprep.mubr.bf16.mxu0 0
        %2062 = vmatmul.mubr.bf16.gmra.mxu0 %v2008
        %v2063 = vpop.f32.mrf.mxu0
        %v2064 = vadd.f32 0.0, %v2063
        %v2065 = vpop.f32.mrf.mxu0
        %v2066 = vpop.f32.mrf.mxu0
        %v2067 = vadd.f32 0.0, %v2066
        %v2068 = vpop.f32.mrf.mxu0
        %2069 = vmatprep.mubr.bf16.mxu0 0
        %2070 = vmatmul.mubr.bf16.gmra.mxu0 %v2011
        %v2071 = vpop.f32.mrf.mxu0
        %v2072 = vadd.f32 0.0, %v2071
        %v2073 = vpop.f32.mrf.mxu0
        %v2074 = vpop.f32.mrf.mxu0
        %v2075 = vadd.f32 0.0, %v2074
        %v2076 = vpop.f32.mrf.mxu0
        %2077 = vdwg.mxu0
        %v2078 = vadd.f32 %v1869, %v2048
        %v2079 = vadd.f32 %v1872, %v2051
        %v2080 = vadd.f32 %v1877, %v2056
        %v2081 = vadd.f32 %v1880, %v2059
        %v2082 = vadd.f32 %v1885, %v2064
        %v2083 = vadd.f32 %v1888, %v2067
        %v2084 = vadd.f32 %v1893, %v2072
        %v2085 = vadd.f32 %v1896, %v2075
        %s2086 = scalar_lea.vmem %s2, 96
        %v2087 = vld [vmem:[%s2086] sm:$0xf]
        %v2088 = vld [vmem:[%s2086 + $0x4] sm:$0xf]
        %v2089 = vld [vmem:[%s2086 + $0x8] sm:$0xf]
        %v2090 = vld [vmem:[%s2086 + $0xc] sm:$0xf]
        %v2091 = vld [vmem:[%s2086 + $0x10] sm:$0xf]
        %v2092 = vld [vmem:[%s2086 + $0x14] sm:$0xf]
        %v2093 = vld [vmem:[%s2086 + $0x18] sm:$0xf]
        %v2094 = vld [vmem:[%s2086 + $0x1c] sm:$0xf]
        %v2103 = vunpack.c.l.b16 %v2087
        %v2104 = vunpack.c.l.b16 %v2088
        %v2105 = vunpack.c.l.b16 %v2089
        %v2106 = vunpack.c.l.b16 %v2090
        %v2107 = vunpack.c.l.b16 %v2091
        %v2108 = vunpack.c.l.b16 %v2092
        %v2109 = vunpack.c.l.b16 %v2093
        %v2110 = vunpack.c.l.b16 %v2094
        %v2111 = vpack.c.b16 %v2104, %v2103
        %v2112 = vpack.c.b16 %v2106, %v2105
        %v2113 = vpack.c.b16 %v2108, %v2107
        %v2114 = vpack.c.b16 %v2110, %v2109
        %v2120 = vsel %vm898, %v1437, 0
        %v2123 = vsel %vm898, %v1438, 0
        %v2126 = vsel %vm898, %v1439, 0
        %v2129 = vsel %vm898, %v1440, 0
        %2131 = vmatprep.subr.bf16.mxu0 0
        %2132 = vmatpush1.bf16.msra.mxu0 0
        %2133 = vmatprep.subr.bf16.mxu0 0
        %2134 = vmatpush1.bf16.msra.mxu0 0
        %2135 = vmatprep.subr.bf16.mxu0 0
        %2136 = vmatpush1.bf16.msra.mxu0 0
        %2137 = vmatprep.subr.bf16.mxu0 0
        %2138 = vmatpush1.bf16.msra.mxu0 0
        %2139 = vmatprep.subr.bf16.mxu0 0
        %2140 = vmatpush1.bf16.msra.mxu0 %v2114
        %2141 = vmatprep.subr.bf16.mxu0 0
        %2142 = vmatpush1.bf16.msra.mxu0 %v2113
        %2143 = vmatprep.subr.bf16.mxu0 0
        %2144 = vmatpush1.bf16.msra.mxu0 %v2112
        %2145 = vmatprep.subr.bf16.mxu0 0
        %2146 = vmatpush1.bf16.msra.mxu0 %v2111
        %2147 = vmatprep.subr.bf16.mxu0 0
        %2148 = vmatpush2.bf16.msra.mxu0 0
        %2149 = vmatprep.subr.bf16.mxu0 0
        %2150 = vmatpush2.bf16.msra.mxu0 0
        %2151 = vmatprep.subr.bf16.mxu0 0
        %2152 = vmatpush2.bf16.msra.mxu0 0
        %2153 = vmatprep.subr.bf16.mxu0 0
        %2154 = vmatpush2.bf16.msra.mxu0 0
        %2155 = vmatprep.subr.bf16.mxu0 0
        %2156 = vmatpush2.bf16.msra.mxu0 0
        %2157 = vmatprep.subr.bf16.mxu0 0
        %2158 = vmatpush2.bf16.msra.mxu0 0
        %2159 = vmatprep.subr.bf16.mxu0 0
        %2160 = vmatpush2.bf16.msra.mxu0 0
        %2161 = vmatprep.subr.bf16.mxu0 0
        %2162 = vmatpush2.bf16.msra.mxu0 0
        %2163 = vmatprep.mubr.bf16.mxu0 0
        %2164 = vmatmul.mubr.bf16.gmra.mxu0 %v2120
        %v2165 = vpop.f32.mrf.mxu0
        %v2166 = vadd.f32 0.0, %v2165
        %v2167 = vpop.f32.mrf.mxu0
        %v2168 = vpop.f32.mrf.mxu0
        %v2169 = vadd.f32 0.0, %v2168
        %v2170 = vpop.f32.mrf.mxu0
        %2171 = vmatprep.mubr.bf16.mxu0 0
        %2172 = vmatmul.mubr.bf16.gmra.mxu0 %v2123
        %v2173 = vpop.f32.mrf.mxu0
        %v2174 = vadd.f32 0.0, %v2173
        %v2175 = vpop.f32.mrf.mxu0
        %v2176 = vpop.f32.mrf.mxu0
        %v2177 = vadd.f32 0.0, %v2176
        %v2178 = vpop.f32.mrf.mxu0
        %2179 = vmatprep.mubr.bf16.mxu0 0
        %2180 = vmatmul.mubr.bf16.gmra.mxu0 %v2126
        %v2181 = vpop.f32.mrf.mxu0
        %v2182 = vadd.f32 0.0, %v2181
        %v2183 = vpop.f32.mrf.mxu0
        %v2184 = vpop.f32.mrf.mxu0
        %v2185 = vadd.f32 0.0, %v2184
        %v2186 = vpop.f32.mrf.mxu0
        %2187 = vmatprep.mubr.bf16.mxu0 0
        %2188 = vmatmul.mubr.bf16.gmra.mxu0 %v2129
        %v2189 = vpop.f32.mrf.mxu0
        %v2190 = vadd.f32 0.0, %v2189
        %v2191 = vpop.f32.mrf.mxu0
        %v2192 = vpop.f32.mrf.mxu0
        %v2193 = vadd.f32 0.0, %v2192
        %v2194 = vpop.f32.mrf.mxu0
        %2195 = vdwg.mxu0
        %v2196 = vadd.f32 %v2078, %v2166
        %v2197 = vadd.f32 %v2079, %v2169
        %v2198 = vadd.f32 %v2080, %v2174
        %v2199 = vadd.f32 %v2081, %v2177
        %v2200 = vadd.f32 %v2082, %v2182
        %v2201 = vadd.f32 %v2083, %v2185
        %v2202 = vadd.f32 %v2084, %v2190
        %v2203 = vadd.f32 %v2085, %v2193
        %s2204 = scalar_lea.vmem %s2, 128
        %v2205 = vld [vmem:[%s2204] sm:$0xf]
        %v2206 = vld [vmem:[%s2204 + $0x4] sm:$0xf]
        %v2207 = vld [vmem:[%s2204 + $0x8] sm:$0xf]
        %v2208 = vld [vmem:[%s2204 + $0xc] sm:$0xf]
        %v2209 = vld [vmem:[%s2204 + $0x10] sm:$0xf]
        %v2210 = vld [vmem:[%s2204 + $0x14] sm:$0xf]
        %v2211 = vld [vmem:[%s2204 + $0x18] sm:$0xf]
        %v2212 = vld [vmem:[%s2204 + $0x1c] sm:$0xf]
        %v2221 = vunpack.c.l.b16 %v2205
        %v2222 = vunpack.c.l.b16 %v2206
        %v2223 = vunpack.c.l.b16 %v2207
        %v2224 = vunpack.c.l.b16 %v2208
        %v2225 = vunpack.c.l.b16 %v2209
        %v2226 = vunpack.c.l.b16 %v2210
        %v2227 = vunpack.c.l.b16 %v2211
        %v2228 = vunpack.c.l.b16 %v2212
        %v2229 = vpack.c.b16 %v2222, %v2221
        %v2230 = vpack.c.b16 %v2224, %v2223
        %v2231 = vpack.c.b16 %v2226, %v2225
        %v2232 = vpack.c.b16 %v2228, %v2227
        %v2238 = vsel %vm898, %v1368, 0
        %v2241 = vsel %vm898, %v1369, 0
        %v2244 = vsel %vm898, %v1370, 0
        %v2247 = vsel %vm898, %v1371, 0
        %2249 = vmatprep.subr.bf16.mxu0 0
        %2250 = vmatpush1.bf16.msra.mxu0 0
        %2251 = vmatprep.subr.bf16.mxu0 0
        %2252 = vmatpush1.bf16.msra.mxu0 0
        %2253 = vmatprep.subr.bf16.mxu0 0
        %2254 = vmatpush1.bf16.msra.mxu0 0
        %2255 = vmatprep.subr.bf16.mxu0 0
        %2256 = vmatpush1.bf16.msra.mxu0 0
        %2257 = vmatprep.subr.bf16.mxu0 0
        %2258 = vmatpush1.bf16.msra.mxu0 %v2232
        %2259 = vmatprep.subr.bf16.mxu0 0
        %2260 = vmatpush1.bf16.msra.mxu0 %v2231
        %2261 = vmatprep.subr.bf16.mxu0 0
        %2262 = vmatpush1.bf16.msra.mxu0 %v2230
        %2263 = vmatprep.subr.bf16.mxu0 0
        %2264 = vmatpush1.bf16.msra.mxu0 %v2229
        %2265 = vmatprep.subr.bf16.mxu0 0
        %2266 = vmatpush2.bf16.msra.mxu0 0
        %2267 = vmatprep.subr.bf16.mxu0 0
        %2268 = vmatpush2.bf16.msra.mxu0 0
        %2269 = vmatprep.subr.bf16.mxu0 0
        %2270 = vmatpush2.bf16.msra.mxu0 0
        %2271 = vmatprep.subr.bf16.mxu0 0
        %2272 = vmatpush2.bf16.msra.mxu0 0
        %2273 = vmatprep.subr.bf16.mxu0 0
        %2274 = vmatpush2.bf16.msra.mxu0 0
        %2275 = vmatprep.subr.bf16.mxu0 0
        %2276 = vmatpush2.bf16.msra.mxu0 0
        %2277 = vmatprep.subr.bf16.mxu0 0
        %2278 = vmatpush2.bf16.msra.mxu0 0
        %2279 = vmatprep.subr.bf16.mxu0 0
        %2280 = vmatpush2.bf16.msra.mxu0 0
        %2281 = vmatprep.mubr.bf16.mxu0 0
        %2282 = vmatmul.mubr.bf16.gmra.mxu0 %v2238
        %v2283 = vpop.f32.mrf.mxu0
        %v2284 = vadd.f32 0.0, %v2283
        %v2285 = vpop.f32.mrf.mxu0
        %v2286 = vpop.f32.mrf.mxu0
        %v2287 = vadd.f32 0.0, %v2286
        %v2288 = vpop.f32.mrf.mxu0
        %2289 = vmatprep.mubr.bf16.mxu0 0
        %2290 = vmatmul.mubr.bf16.gmra.mxu0 %v2241
        %v2291 = vpop.f32.mrf.mxu0
        %v2292 = vadd.f32 0.0, %v2291
        %v2293 = vpop.f32.mrf.mxu0
        %v2294 = vpop.f32.mrf.mxu0
        %v2295 = vadd.f32 0.0, %v2294
        %v2296 = vpop.f32.mrf.mxu0
        %2297 = vmatprep.mubr.bf16.mxu0 0
        %2298 = vmatmul.mubr.bf16.gmra.mxu0 %v2244
        %v2299 = vpop.f32.mrf.mxu0
        %v2300 = vadd.f32 0.0, %v2299
        %v2301 = vpop.f32.mrf.mxu0
        %v2302 = vpop.f32.mrf.mxu0
        %v2303 = vadd.f32 0.0, %v2302
        %v2304 = vpop.f32.mrf.mxu0
        %2305 = vmatprep.mubr.bf16.mxu0 0
        %2306 = vmatmul.mubr.bf16.gmra.mxu0 %v2247
        %v2307 = vpop.f32.mrf.mxu0
        %v2308 = vadd.f32 0.0, %v2307
        %v2309 = vpop.f32.mrf.mxu0
        %v2310 = vpop.f32.mrf.mxu0
        %v2311 = vadd.f32 0.0, %v2310
        %v2312 = vpop.f32.mrf.mxu0
        %2313 = vdwg.mxu0
        %v2314 = vadd.f32 %v2196, %v2284
        %v2315 = vadd.f32 %v2197, %v2287
        %v2316 = vadd.f32 %v2198, %v2292
        %v2317 = vadd.f32 %v2199, %v2295
        %v2318 = vadd.f32 %v2200, %v2300
        %v2319 = vadd.f32 %v2201, %v2303
        %v2320 = vadd.f32 %v2202, %v2308
        %v2321 = vadd.f32 %v2203, %v2311
        %s2322 = scalar_lea.vmem %s2, 160
        %v2323 = vld [vmem:[%s2322] sm:$0xf]
        %v2324 = vld [vmem:[%s2322 + $0x4] sm:$0xf]
        %v2325 = vld [vmem:[%s2322 + $0x8] sm:$0xf]
        %v2326 = vld [vmem:[%s2322 + $0xc] sm:$0xf]
        %v2327 = vld [vmem:[%s2322 + $0x10] sm:$0xf]
        %v2328 = vld [vmem:[%s2322 + $0x14] sm:$0xf]
        %v2329 = vld [vmem:[%s2322 + $0x18] sm:$0xf]
        %v2330 = vld [vmem:[%s2322 + $0x1c] sm:$0xf]
        %v2339 = vunpack.c.l.b16 %v2323
        %v2340 = vunpack.c.l.b16 %v2324
        %v2341 = vunpack.c.l.b16 %v2325
        %v2342 = vunpack.c.l.b16 %v2326
        %v2343 = vunpack.c.l.b16 %v2327
        %v2344 = vunpack.c.l.b16 %v2328
        %v2345 = vunpack.c.l.b16 %v2329
        %v2346 = vunpack.c.l.b16 %v2330
        %v2347 = vpack.c.b16 %v2340, %v2339
        %v2348 = vpack.c.b16 %v2342, %v2341
        %v2349 = vpack.c.b16 %v2344, %v2343
        %v2350 = vpack.c.b16 %v2346, %v2345
        %v2356 = vsel %vm898, %v1538, 0
        %v2359 = vsel %vm898, %v1539, 0
        %v2362 = vsel %vm898, %v1540, 0
        %v2365 = vsel %vm898, %v1541, 0
        %2367 = vmatprep.subr.bf16.mxu0 0
        %2368 = vmatpush1.bf16.msra.mxu0 0
        %2369 = vmatprep.subr.bf16.mxu0 0
        %2370 = vmatpush1.bf16.msra.mxu0 0
        %2371 = vmatprep.subr.bf16.mxu0 0
        %2372 = vmatpush1.bf16.msra.mxu0 0
        %2373 = vmatprep.subr.bf16.mxu0 0
        %2374 = vmatpush1.bf16.msra.mxu0 0
        %2375 = vmatprep.subr.bf16.mxu0 0
        %2376 = vmatpush1.bf16.msra.mxu0 %v2350
        %2377 = vmatprep.subr.bf16.mxu0 0
        %2378 = vmatpush1.bf16.msra.mxu0 %v2349
        %2379 = vmatprep.subr.bf16.mxu0 0
        %2380 = vmatpush1.bf16.msra.mxu0 %v2348
        %2381 = vmatprep.subr.bf16.mxu0 0
        %2382 = vmatpush1.bf16.msra.mxu0 %v2347
        %2383 = vmatprep.subr.bf16.mxu0 0
        %2384 = vmatpush2.bf16.msra.mxu0 0
        %2385 = vmatprep.subr.bf16.mxu0 0
        %2386 = vmatpush2.bf16.msra.mxu0 0
        %2387 = vmatprep.subr.bf16.mxu0 0
        %2388 = vmatpush2.bf16.msra.mxu0 0
        %2389 = vmatprep.subr.bf16.mxu0 0
        %2390 = vmatpush2.bf16.msra.mxu0 0
        %2391 = vmatprep.subr.bf16.mxu0 0
        %2392 = vmatpush2.bf16.msra.mxu0 0
        %2393 = vmatprep.subr.bf16.mxu0 0
        %2394 = vmatpush2.bf16.msra.mxu0 0
        %2395 = vmatprep.subr.bf16.mxu0 0
        %2396 = vmatpush2.bf16.msra.mxu0 0
        %2397 = vmatprep.subr.bf16.mxu0 0
        %2398 = vmatpush2.bf16.msra.mxu0 0
        %2399 = vmatprep.mubr.bf16.mxu0 0
        %2400 = vmatmul.mubr.bf16.gmra.mxu0 %v2356
        %v2401 = vpop.f32.mrf.mxu0
        %v2402 = vadd.f32 0.0, %v2401
        %v2403 = vpop.f32.mrf.mxu0
        %v2404 = vpop.f32.mrf.mxu0
        %v2405 = vadd.f32 0.0, %v2404
        %v2406 = vpop.f32.mrf.mxu0
        %2407 = vmatprep.mubr.bf16.mxu0 0
        %2408 = vmatmul.mubr.bf16.gmra.mxu0 %v2359
        %v2409 = vpop.f32.mrf.mxu0
        %v2410 = vadd.f32 0.0, %v2409
        %v2411 = vpop.f32.mrf.mxu0
        %v2412 = vpop.f32.mrf.mxu0
        %v2413 = vadd.f32 0.0, %v2412
        %v2414 = vpop.f32.mrf.mxu0
        %2415 = vmatprep.mubr.bf16.mxu0 0
        %2416 = vmatmul.mubr.bf16.gmra.mxu0 %v2362
        %v2417 = vpop.f32.mrf.mxu0
        %v2418 = vadd.f32 0.0, %v2417
        %v2419 = vpop.f32.mrf.mxu0
        %v2420 = vpop.f32.mrf.mxu0
        %v2421 = vadd.f32 0.0, %v2420
        %v2422 = vpop.f32.mrf.mxu0
        %2423 = vmatprep.mubr.bf16.mxu0 0
        %2424 = vmatmul.mubr.bf16.gmra.mxu0 %v2365
        %v2425 = vpop.f32.mrf.mxu0
        %v2426 = vadd.f32 0.0, %v2425
        %v2427 = vpop.f32.mrf.mxu0
        %v2428 = vpop.f32.mrf.mxu0
        %v2429 = vadd.f32 0.0, %v2428
        %v2430 = vpop.f32.mrf.mxu0
        %2431 = vdwg.mxu0
        %v2432 = vadd.f32 %v2314, %v2402
        %v2433 = vadd.f32 %v2315, %v2405
        %v2434 = vadd.f32 %v2316, %v2410
        %v2435 = vadd.f32 %v2317, %v2413
        %v2436 = vadd.f32 %v2318, %v2418
        %v2437 = vadd.f32 %v2319, %v2421
        %v2438 = vadd.f32 %v2320, %v2426
        %v2439 = vadd.f32 %v2321, %v2429
        %v2448 = vunpack.c.l.b16 %v278
        %v2449 = vunpack.c.l.b16 %v279
        %v2450 = vunpack.c.l.b16 %v280
        %v2451 = vunpack.c.l.b16 %v281
        %v2452 = vunpack.c.l.b16 %v282
        %v2453 = vunpack.c.l.b16 %v283
        %v2454 = vunpack.c.l.b16 %v284
        %v2455 = vunpack.c.l.b16 %v285
        %v2456 = vpack.c.b16 %v2449, %v2448
        %v2457 = vpack.c.b16 %v2451, %v2450
        %v2458 = vpack.c.b16 %v2453, %v2452
        %v2459 = vpack.c.b16 %v2455, %v2454
        %v2461 = vsel %vm898, %v2456, 0
        %v2464 = vsel %vm898, %v2457, 0
        %v2467 = vsel %vm898, %v2458, 0
        %v2470 = vsel %vm898, %v2459, 0
        %2472 = vmatprep.subr.bf16.mxu0 0
        %2473 = vmatpush1.bf16.msra.mxu0 0
        %2474 = vmatprep.subr.bf16.mxu0 0
        %2475 = vmatpush1.bf16.msra.mxu0 0
        %2476 = vmatprep.subr.bf16.mxu0 0
        %2477 = vmatpush1.bf16.msra.mxu0 0
        %2478 = vmatprep.subr.bf16.mxu0 0
        %2479 = vmatpush1.bf16.msra.mxu0 0
        %2480 = vmatprep.subr.bf16.mxu0 0
        %2481 = vmatpush1.bf16.msra.mxu0 %v1440
        %2482 = vmatprep.subr.bf16.mxu0 0
        %2483 = vmatpush1.bf16.msra.mxu0 %v1439
        %2484 = vmatprep.subr.bf16.mxu0 0
        %2485 = vmatpush1.bf16.msra.mxu0 %v1438
        %2486 = vmatprep.subr.bf16.mxu0 0
        %2487 = vmatpush1.bf16.msra.mxu0 %v1437
        %2488 = vmatprep.subr.bf16.mxu0 0
        %2489 = vmatpush2.bf16.msra.mxu0 0
        %2490 = vmatprep.subr.bf16.mxu0 0
        %2491 = vmatpush2.bf16.msra.mxu0 0
        %2492 = vmatprep.subr.bf16.mxu0 0
        %2493 = vmatpush2.bf16.msra.mxu0 0
        %2494 = vmatprep.subr.bf16.mxu0 0
        %2495 = vmatpush2.bf16.msra.mxu0 0
        %2496 = vmatprep.subr.bf16.mxu0 0
        %2497 = vmatpush2.bf16.msra.mxu0 0
        %2498 = vmatprep.subr.bf16.mxu0 0
        %2499 = vmatpush2.bf16.msra.mxu0 0
        %2500 = vmatprep.subr.bf16.mxu0 0
        %2501 = vmatpush2.bf16.msra.mxu0 0
        %2502 = vmatprep.subr.bf16.mxu0 0
        %2503 = vmatpush2.bf16.msra.mxu0 0
        %2504 = vmatprep.mubr.bf16.mxu0 0
        %2505 = vmatmul.mubr.bf16.gmra.mxu0 %v2461
        %v2506 = vpop.f32.mrf.mxu0
        %v2507 = vadd.f32 0.0, %v2506
        %v2508 = vpop.f32.mrf.mxu0
        %v2509 = vpop.f32.mrf.mxu0
        %v2510 = vadd.f32 0.0, %v2509
        %v2511 = vpop.f32.mrf.mxu0
        %2512 = vmatprep.mubr.bf16.mxu0 0
        %2513 = vmatmul.mubr.bf16.gmra.mxu0 %v2464
        %v2514 = vpop.f32.mrf.mxu0
        %v2515 = vadd.f32 0.0, %v2514
        %v2516 = vpop.f32.mrf.mxu0
        %v2517 = vpop.f32.mrf.mxu0
        %v2518 = vadd.f32 0.0, %v2517
        %v2519 = vpop.f32.mrf.mxu0
        %2520 = vmatprep.mubr.bf16.mxu0 0
        %2521 = vmatmul.mubr.bf16.gmra.mxu0 %v2467
        %v2522 = vpop.f32.mrf.mxu0
        %v2523 = vadd.f32 0.0, %v2522
        %v2524 = vpop.f32.mrf.mxu0
        %v2525 = vpop.f32.mrf.mxu0
        %v2526 = vadd.f32 0.0, %v2525
        %v2527 = vpop.f32.mrf.mxu0
        %2528 = vmatprep.mubr.bf16.mxu0 0
        %2529 = vmatmul.mubr.bf16.gmra.mxu0 %v2470
        %v2530 = vpop.f32.mrf.mxu0
        %v2531 = vadd.f32 0.0, %v2530
        %v2532 = vpop.f32.mrf.mxu0
        %v2533 = vpop.f32.mrf.mxu0
        %v2534 = vadd.f32 0.0, %v2533
        %v2535 = vpop.f32.mrf.mxu0
        %2536 = vdwg.mxu0
        %v2537 = vpack.c.bf16 %v2510, %v2507
        %v2538 = vpack.c.bf16 %v2518, %v2515
        %v2539 = vpack.c.bf16 %v2526, %v2523
        %v2540 = vpack.c.bf16 %v2534, %v2531
        %s2541 = scalar_lea.vmem %s2, 192
        %v2542 = vld [vmem:[%s2541] sm:$0xf]
        %v2543 = vld [vmem:[%s2541 + $0x4] sm:$0xf]
        %v2544 = vld [vmem:[%s2541 + $0x8] sm:$0xf]
        %v2545 = vld [vmem:[%s2541 + $0xc] sm:$0xf]
        %v2546 = vld [vmem:[%s2541 + $0x10] sm:$0xf]
        %v2547 = vld [vmem:[%s2541 + $0x14] sm:$0xf]
        %v2548 = vld [vmem:[%s2541 + $0x18] sm:$0xf]
        %v2549 = vld [vmem:[%s2541 + $0x1c] sm:$0xf]
        %v2558 = vunpack.c.l.b16 %v2542
        %v2559 = vunpack.c.l.b16 %v2543
        %v2560 = vunpack.c.l.b16 %v2544
        %v2561 = vunpack.c.l.b16 %v2545
        %v2562 = vunpack.c.l.b16 %v2546
        %v2563 = vunpack.c.l.b16 %v2547
        %v2564 = vunpack.c.l.b16 %v2548
        %v2565 = vunpack.c.l.b16 %v2549
        %v2566 = vpack.c.b16 %v2559, %v2558
        %v2567 = vpack.c.b16 %v2561, %v2560
        %v2568 = vpack.c.b16 %v2563, %v2562
        %v2569 = vpack.c.b16 %v2565, %v2564
        %v2575 = vsel %vm898, %v2537, 0
        %v2578 = vsel %vm898, %v2538, 0
        %v2581 = vsel %vm898, %v2539, 0
        %v2584 = vsel %vm898, %v2540, 0
        %2586 = vmatprep.subr.bf16.mxu0 0
        %2587 = vmatpush1.bf16.msra.mxu0 0
        %2588 = vmatprep.subr.bf16.mxu0 0
        %2589 = vmatpush1.bf16.msra.mxu0 0
        %2590 = vmatprep.subr.bf16.mxu0 0
        %2591 = vmatpush1.bf16.msra.mxu0 0
        %2592 = vmatprep.subr.bf16.mxu0 0
        %2593 = vmatpush1.bf16.msra.mxu0 0
        %2594 = vmatprep.subr.bf16.mxu0 0
        %2595 = vmatpush1.bf16.msra.mxu0 %v2569
        %2596 = vmatprep.subr.bf16.mxu0 0
        %2597 = vmatpush1.bf16.msra.mxu0 %v2568
        %2598 = vmatprep.subr.bf16.mxu0 0
        %2599 = vmatpush1.bf16.msra.mxu0 %v2567
        %2600 = vmatprep.subr.bf16.mxu0 0
        %2601 = vmatpush1.bf16.msra.mxu0 %v2566
        %2602 = vmatprep.subr.bf16.mxu0 0
        %2603 = vmatpush2.bf16.msra.mxu0 0
        %2604 = vmatprep.subr.bf16.mxu0 0
        %2605 = vmatpush2.bf16.msra.mxu0 0
        %2606 = vmatprep.subr.bf16.mxu0 0
        %2607 = vmatpush2.bf16.msra.mxu0 0
        %2608 = vmatprep.subr.bf16.mxu0 0
        %2609 = vmatpush2.bf16.msra.mxu0 0
        %2610 = vmatprep.subr.bf16.mxu0 0
        %2611 = vmatpush2.bf16.msra.mxu0 0
        %2612 = vmatprep.subr.bf16.mxu0 0
        %2613 = vmatpush2.bf16.msra.mxu0 0
        %2614 = vmatprep.subr.bf16.mxu0 0
        %2615 = vmatpush2.bf16.msra.mxu0 0
        %2616 = vmatprep.subr.bf16.mxu0 0
        %2617 = vmatpush2.bf16.msra.mxu0 0
        %2618 = vmatprep.mubr.bf16.mxu0 0
        %2619 = vmatmul.mubr.bf16.gmra.mxu0 %v2575
        %v2620 = vpop.f32.mrf.mxu0
        %v2621 = vadd.f32 0.0, %v2620
        %v2622 = vpop.f32.mrf.mxu0
        %v2623 = vpop.f32.mrf.mxu0
        %v2624 = vadd.f32 0.0, %v2623
        %v2625 = vpop.f32.mrf.mxu0
        %2626 = vmatprep.mubr.bf16.mxu0 0
        %2627 = vmatmul.mubr.bf16.gmra.mxu0 %v2578
        %v2628 = vpop.f32.mrf.mxu0
        %v2629 = vadd.f32 0.0, %v2628
        %v2630 = vpop.f32.mrf.mxu0
        %v2631 = vpop.f32.mrf.mxu0
        %v2632 = vadd.f32 0.0, %v2631
        %v2633 = vpop.f32.mrf.mxu0
        %2634 = vmatprep.mubr.bf16.mxu0 0
        %2635 = vmatmul.mubr.bf16.gmra.mxu0 %v2581
        %v2636 = vpop.f32.mrf.mxu0
        %v2637 = vadd.f32 0.0, %v2636
        %v2638 = vpop.f32.mrf.mxu0
        %v2639 = vpop.f32.mrf.mxu0
        %v2640 = vadd.f32 0.0, %v2639
        %v2641 = vpop.f32.mrf.mxu0
        %2642 = vmatprep.mubr.bf16.mxu0 0
        %2643 = vmatmul.mubr.bf16.gmra.mxu0 %v2584
        %v2644 = vpop.f32.mrf.mxu0
        %v2645 = vadd.f32 0.0, %v2644
        %v2646 = vpop.f32.mrf.mxu0
        %v2647 = vpop.f32.mrf.mxu0
        %v2648 = vadd.f32 0.0, %v2647
        %v2649 = vpop.f32.mrf.mxu0
        %2650 = vdwg.mxu0
        %v2651 = vadd.f32 %v2432, %v2621
        %v2652 = vadd.f32 %v2433, %v2624
        %v2653 = vadd.f32 %v2434, %v2629
        %v2654 = vadd.f32 %v2435, %v2632
        %v2655 = vadd.f32 %v2436, %v2637
        %v2656 = vadd.f32 %v2437, %v2640
        %v2657 = vadd.f32 %v2438, %v2645
        %v2658 = vadd.f32 %v2439, %v2648
        %2659 = vmatprep.subr.bf16.mxu0 0
        %2660 = vmatpush1.bf16.msra.mxu0 0
        %2661 = vmatprep.subr.bf16.mxu0 0
        %2662 = vmatpush1.bf16.msra.mxu0 0
        %2663 = vmatprep.subr.bf16.mxu0 0
        %2664 = vmatpush1.bf16.msra.mxu0 0
        %2665 = vmatprep.subr.bf16.mxu0 0
        %2666 = vmatpush1.bf16.msra.mxu0 0
        %2667 = vmatprep.subr.bf16.mxu0 0
        %2668 = vmatpush1.bf16.msra.mxu0 %v1371
        %2669 = vmatprep.subr.bf16.mxu0 0
        %2670 = vmatpush1.bf16.msra.mxu0 %v1370
        %2671 = vmatprep.subr.bf16.mxu0 0
        %2672 = vmatpush1.bf16.msra.mxu0 %v1369
        %2673 = vmatprep.subr.bf16.mxu0 0
        %2674 = vmatpush1.bf16.msra.mxu0 %v1368
        %2675 = vmatprep.subr.bf16.mxu0 0
        %2676 = vmatpush2.bf16.msra.mxu0 0
        %2677 = vmatprep.subr.bf16.mxu0 0
        %2678 = vmatpush2.bf16.msra.mxu0 0
        %2679 = vmatprep.subr.bf16.mxu0 0
        %2680 = vmatpush2.bf16.msra.mxu0 0
        %2681 = vmatprep.subr.bf16.mxu0 0
        %2682 = vmatpush2.bf16.msra.mxu0 0
        %2683 = vmatprep.subr.bf16.mxu0 0
        %2684 = vmatpush2.bf16.msra.mxu0 0
        %2685 = vmatprep.subr.bf16.mxu0 0
        %2686 = vmatpush2.bf16.msra.mxu0 0
        %2687 = vmatprep.subr.bf16.mxu0 0
        %2688 = vmatpush2.bf16.msra.mxu0 0
        %2689 = vmatprep.subr.bf16.mxu0 0
        %2690 = vmatpush2.bf16.msra.mxu0 0
        %2691 = vmatprep.mubr.bf16.mxu0 0
        %2692 = vmatmul.mubr.bf16.gmra.mxu0 %v2461
        %v2693 = vpop.f32.mrf.mxu0
        %v2694 = vadd.f32 0.0, %v2693
        %v2695 = vpop.f32.mrf.mxu0
        %v2696 = vpop.f32.mrf.mxu0
        %v2697 = vadd.f32 0.0, %v2696
        %v2698 = vpop.f32.mrf.mxu0
        %2699 = vmatprep.mubr.bf16.mxu0 0
        %2700 = vmatmul.mubr.bf16.gmra.mxu0 %v2464
        %v2701 = vpop.f32.mrf.mxu0
        %v2702 = vadd.f32 0.0, %v2701
        %v2703 = vpop.f32.mrf.mxu0
        %v2704 = vpop.f32.mrf.mxu0
        %v2705 = vadd.f32 0.0, %v2704
        %v2706 = vpop.f32.mrf.mxu0
        %2707 = vmatprep.mubr.bf16.mxu0 0
        %2708 = vmatmul.mubr.bf16.gmra.mxu0 %v2467
        %v2709 = vpop.f32.mrf.mxu0
        %v2710 = vadd.f32 0.0, %v2709
        %v2711 = vpop.f32.mrf.mxu0
        %v2712 = vpop.f32.mrf.mxu0
        %v2713 = vadd.f32 0.0, %v2712
        %v2714 = vpop.f32.mrf.mxu0
        %2715 = vmatprep.mubr.bf16.mxu0 0
        %2716 = vmatmul.mubr.bf16.gmra.mxu0 %v2470
        %v2717 = vpop.f32.mrf.mxu0
        %v2718 = vadd.f32 0.0, %v2717
        %v2719 = vpop.f32.mrf.mxu0
        %v2720 = vpop.f32.mrf.mxu0
        %v2721 = vadd.f32 0.0, %v2720
        %v2722 = vpop.f32.mrf.mxu0
        %2723 = vdwg.mxu0
        %v2724 = vpack.c.bf16 %v2697, %v2694
        %v2725 = vpack.c.bf16 %v2705, %v2702
        %v2726 = vpack.c.bf16 %v2713, %v2710
        %v2727 = vpack.c.bf16 %v2721, %v2718
        %s2728 = scalar_lea.vmem %s2, 224
        %v2729 = vld [vmem:[%s2728] sm:$0xf]
        %v2730 = vld [vmem:[%s2728 + $0x4] sm:$0xf]
        %v2731 = vld [vmem:[%s2728 + $0x8] sm:$0xf]
        %v2732 = vld [vmem:[%s2728 + $0xc] sm:$0xf]
        %v2733 = vld [vmem:[%s2728 + $0x10] sm:$0xf]
        %v2734 = vld [vmem:[%s2728 + $0x14] sm:$0xf]
        %v2735 = vld [vmem:[%s2728 + $0x18] sm:$0xf]
        %v2736 = vld [vmem:[%s2728 + $0x1c] sm:$0xf]
        %v2745 = vunpack.c.l.b16 %v2729
        %v2746 = vunpack.c.l.b16 %v2730
        %v2747 = vunpack.c.l.b16 %v2731
        %v2748 = vunpack.c.l.b16 %v2732
        %v2749 = vunpack.c.l.b16 %v2733
        %v2750 = vunpack.c.l.b16 %v2734
        %v2751 = vunpack.c.l.b16 %v2735
        %v2752 = vunpack.c.l.b16 %v2736
        %v2753 = vpack.c.b16 %v2746, %v2745
        %v2754 = vpack.c.b16 %v2748, %v2747
        %v2755 = vpack.c.b16 %v2750, %v2749
        %v2756 = vpack.c.b16 %v2752, %v2751
        %v2762 = vsel %vm898, %v2724, 0
        %v2765 = vsel %vm898, %v2725, 0
        %v2768 = vsel %vm898, %v2726, 0
        %v2771 = vsel %vm898, %v2727, 0
        %2773 = vmatprep.subr.bf16.mxu0 0
        %2774 = vmatpush1.bf16.msra.mxu0 0
        %2775 = vmatprep.subr.bf16.mxu0 0
        %2776 = vmatpush1.bf16.msra.mxu0 0
        %2777 = vmatprep.subr.bf16.mxu0 0
        %2778 = vmatpush1.bf16.msra.mxu0 0
        %2779 = vmatprep.subr.bf16.mxu0 0
        %2780 = vmatpush1.bf16.msra.mxu0 0
        %2781 = vmatprep.subr.bf16.mxu0 0
        %2782 = vmatpush1.bf16.msra.mxu0 %v2756
        %2783 = vmatprep.subr.bf16.mxu0 0
        %2784 = vmatpush1.bf16.msra.mxu0 %v2755
        %2785 = vmatprep.subr.bf16.mxu0 0
        %2786 = vmatpush1.bf16.msra.mxu0 %v2754
        %2787 = vmatprep.subr.bf16.mxu0 0
        %2788 = vmatpush1.bf16.msra.mxu0 %v2753
        %2789 = vmatprep.subr.bf16.mxu0 0
        %2790 = vmatpush2.bf16.msra.mxu0 0
        %2791 = vmatprep.subr.bf16.mxu0 0
        %2792 = vmatpush2.bf16.msra.mxu0 0
        %2793 = vmatprep.subr.bf16.mxu0 0
        %2794 = vmatpush2.bf16.msra.mxu0 0
        %2795 = vmatprep.subr.bf16.mxu0 0
        %2796 = vmatpush2.bf16.msra.mxu0 0
        %2797 = vmatprep.subr.bf16.mxu0 0
        %2798 = vmatpush2.bf16.msra.mxu0 0
        %2799 = vmatprep.subr.bf16.mxu0 0
        %2800 = vmatpush2.bf16.msra.mxu0 0
        %2801 = vmatprep.subr.bf16.mxu0 0
        %2802 = vmatpush2.bf16.msra.mxu0 0
        %2803 = vmatprep.subr.bf16.mxu0 0
        %2804 = vmatpush2.bf16.msra.mxu0 0
        %2805 = vmatprep.mubr.bf16.mxu0 0
        %2806 = vmatmul.mubr.bf16.gmra.mxu0 %v2762
        %v2807 = vpop.f32.mrf.mxu0
        %v2808 = vadd.f32 0.0, %v2807
        %v2809 = vpop.f32.mrf.mxu0
        %v2810 = vpop.f32.mrf.mxu0
        %v2811 = vadd.f32 0.0, %v2810
        %v2812 = vpop.f32.mrf.mxu0
        %2813 = vmatprep.mubr.bf16.mxu0 0
        %2814 = vmatmul.mubr.bf16.gmra.mxu0 %v2765
        %v2815 = vpop.f32.mrf.mxu0
        %v2816 = vadd.f32 0.0, %v2815
        %v2817 = vpop.f32.mrf.mxu0
        %v2818 = vpop.f32.mrf.mxu0
        %v2819 = vadd.f32 0.0, %v2818
        %v2820 = vpop.f32.mrf.mxu0
        %2821 = vmatprep.mubr.bf16.mxu0 0
        %2822 = vmatmul.mubr.bf16.gmra.mxu0 %v2768
        %v2823 = vpop.f32.mrf.mxu0
        %v2824 = vadd.f32 0.0, %v2823
        %v2825 = vpop.f32.mrf.mxu0
        %v2826 = vpop.f32.mrf.mxu0
        %v2827 = vadd.f32 0.0, %v2826
        %v2828 = vpop.f32.mrf.mxu0
        %2829 = vmatprep.mubr.bf16.mxu0 0
        %2830 = vmatmul.mubr.bf16.gmra.mxu0 %v2771
        %v2831 = vpop.f32.mrf.mxu0
        %v2832 = vadd.f32 0.0, %v2831
        %v2833 = vpop.f32.mrf.mxu0
        %v2834 = vpop.f32.mrf.mxu0
        %v2835 = vadd.f32 0.0, %v2834
        %v2836 = vpop.f32.mrf.mxu0
        %2837 = vdwg.mxu0
        %v2838 = vadd.f32 %v2651, %v2808
        %v2839 = vadd.f32 %v2652, %v2811
        %v2840 = vadd.f32 %v2653, %v2816
        %v2841 = vadd.f32 %v2654, %v2819
        %v2842 = vadd.f32 %v2655, %v2824
        %v2843 = vadd.f32 %v2656, %v2827
        %v2844 = vadd.f32 %v2657, %v2832
        %v2845 = vadd.f32 %v2658, %v2835
        %2846 = vmatprep.subr.bf16.mxu0 0
        %2847 = vmatpush1.bf16.msra.mxu0 0
        %2848 = vmatprep.subr.bf16.mxu0 0
        %2849 = vmatpush1.bf16.msra.mxu0 0
        %2850 = vmatprep.subr.bf16.mxu0 0
        %2851 = vmatpush1.bf16.msra.mxu0 0
        %2852 = vmatprep.subr.bf16.mxu0 0
        %2853 = vmatpush1.bf16.msra.mxu0 0
        %2854 = vmatprep.subr.bf16.mxu0 0
        %2855 = vmatpush1.bf16.msra.mxu0 %v1541
        %2856 = vmatprep.subr.bf16.mxu0 0
        %2857 = vmatpush1.bf16.msra.mxu0 %v1540
        %2858 = vmatprep.subr.bf16.mxu0 0
        %2859 = vmatpush1.bf16.msra.mxu0 %v1539
        %2860 = vmatprep.subr.bf16.mxu0 0
        %2861 = vmatpush1.bf16.msra.mxu0 %v1538
        %2862 = vmatprep.subr.bf16.mxu0 0
        %2863 = vmatpush2.bf16.msra.mxu0 0
        %2864 = vmatprep.subr.bf16.mxu0 0
        %2865 = vmatpush2.bf16.msra.mxu0 0
        %2866 = vmatprep.subr.bf16.mxu0 0
        %2867 = vmatpush2.bf16.msra.mxu0 0
        %2868 = vmatprep.subr.bf16.mxu0 0
        %2869 = vmatpush2.bf16.msra.mxu0 0
        %2870 = vmatprep.subr.bf16.mxu0 0
        %2871 = vmatpush2.bf16.msra.mxu0 0
        %2872 = vmatprep.subr.bf16.mxu0 0
        %2873 = vmatpush2.bf16.msra.mxu0 0
        %2874 = vmatprep.subr.bf16.mxu0 0
        %2875 = vmatpush2.bf16.msra.mxu0 0
        %2876 = vmatprep.subr.bf16.mxu0 0
        %2877 = vmatpush2.bf16.msra.mxu0 0
        %2878 = vmatprep.mubr.bf16.mxu0 0
        %2879 = vmatmul.mubr.bf16.gmra.mxu0 %v2461
        %v2880 = vpop.f32.mrf.mxu0
        %v2881 = vadd.f32 0.0, %v2880
        %v2882 = vpop.f32.mrf.mxu0
        %v2883 = vpop.f32.mrf.mxu0
        %v2884 = vadd.f32 0.0, %v2883
        %v2885 = vpop.f32.mrf.mxu0
        %2886 = vmatprep.mubr.bf16.mxu0 0
        %2887 = vmatmul.mubr.bf16.gmra.mxu0 %v2464
        %v2888 = vpop.f32.mrf.mxu0
        %v2889 = vadd.f32 0.0, %v2888
        %v2890 = vpop.f32.mrf.mxu0
        %v2891 = vpop.f32.mrf.mxu0
        %v2892 = vadd.f32 0.0, %v2891
        %v2893 = vpop.f32.mrf.mxu0
        %2894 = vmatprep.mubr.bf16.mxu0 0
        %2895 = vmatmul.mubr.bf16.gmra.mxu0 %v2467
        %v2896 = vpop.f32.mrf.mxu0
        %v2897 = vadd.f32 0.0, %v2896
        %v2898 = vpop.f32.mrf.mxu0
        %v2899 = vpop.f32.mrf.mxu0
        %v2900 = vadd.f32 0.0, %v2899
        %v2901 = vpop.f32.mrf.mxu0
        %2902 = vmatprep.mubr.bf16.mxu0 0
        %2903 = vmatmul.mubr.bf16.gmra.mxu0 %v2470
        %v2904 = vpop.f32.mrf.mxu0
        %v2905 = vadd.f32 0.0, %v2904
        %v2906 = vpop.f32.mrf.mxu0
        %v2907 = vpop.f32.mrf.mxu0
        %v2908 = vadd.f32 0.0, %v2907
        %v2909 = vpop.f32.mrf.mxu0
        %2910 = vdwg.mxu0
        %v2911 = vpack.c.bf16 %v2884, %v2881
        %v2912 = vpack.c.bf16 %v2892, %v2889
        %v2913 = vpack.c.bf16 %v2900, %v2897
        %v2914 = vpack.c.bf16 %v2908, %v2905
        %s2915 = scalar_lea.vmem %s2, 256
        %v2916 = vld [vmem:[%s2915] sm:$0xf]
        %v2917 = vld [vmem:[%s2915 + $0x4] sm:$0xf]
        %v2918 = vld [vmem:[%s2915 + $0x8] sm:$0xf]
        %v2919 = vld [vmem:[%s2915 + $0xc] sm:$0xf]
        %v2920 = vld [vmem:[%s2915 + $0x10] sm:$0xf]
        %v2921 = vld [vmem:[%s2915 + $0x14] sm:$0xf]
        %v2922 = vld [vmem:[%s2915 + $0x18] sm:$0xf]
        %v2923 = vld [vmem:[%s2915 + $0x1c] sm:$0xf]
        %v2932 = vunpack.c.l.b16 %v2916
        %v2933 = vunpack.c.l.b16 %v2917
        %v2934 = vunpack.c.l.b16 %v2918
        %v2935 = vunpack.c.l.b16 %v2919
        %v2936 = vunpack.c.l.b16 %v2920
        %v2937 = vunpack.c.l.b16 %v2921
        %v2938 = vunpack.c.l.b16 %v2922
        %v2939 = vunpack.c.l.b16 %v2923
        %v2940 = vpack.c.b16 %v2933, %v2932
        %v2941 = vpack.c.b16 %v2935, %v2934
        %v2942 = vpack.c.b16 %v2937, %v2936
        %v2943 = vpack.c.b16 %v2939, %v2938
        %v2949 = vsel %vm898, %v2911, 0
        %v2952 = vsel %vm898, %v2912, 0
        %v2955 = vsel %vm898, %v2913, 0
        %v2958 = vsel %vm898, %v2914, 0
        %2960 = vmatprep.subr.bf16.mxu0 0
        %2961 = vmatpush1.bf16.msra.mxu0 0
        %2962 = vmatprep.subr.bf16.mxu0 0
        %2963 = vmatpush1.bf16.msra.mxu0 0
        %2964 = vmatprep.subr.bf16.mxu0 0
        %2965 = vmatpush1.bf16.msra.mxu0 0
        %2966 = vmatprep.subr.bf16.mxu0 0
        %2967 = vmatpush1.bf16.msra.mxu0 0
        %2968 = vmatprep.subr.bf16.mxu0 0
        %2969 = vmatpush1.bf16.msra.mxu0 %v2943
        %2970 = vmatprep.subr.bf16.mxu0 0
        %2971 = vmatpush1.bf16.msra.mxu0 %v2942
        %2972 = vmatprep.subr.bf16.mxu0 0
        %2973 = vmatpush1.bf16.msra.mxu0 %v2941
        %2974 = vmatprep.subr.bf16.mxu0 0
        %2975 = vmatpush1.bf16.msra.mxu0 %v2940
        %2976 = vmatprep.subr.bf16.mxu0 0
        %2977 = vmatpush2.bf16.msra.mxu0 0
        %2978 = vmatprep.subr.bf16.mxu0 0
        %2979 = vmatpush2.bf16.msra.mxu0 0
        %2980 = vmatprep.subr.bf16.mxu0 0
        %2981 = vmatpush2.bf16.msra.mxu0 0
        %2982 = vmatprep.subr.bf16.mxu0 0
        %2983 = vmatpush2.bf16.msra.mxu0 0
        %2984 = vmatprep.subr.bf16.mxu0 0
        %2985 = vmatpush2.bf16.msra.mxu0 0
        %2986 = vmatprep.subr.bf16.mxu0 0
        %2987 = vmatpush2.bf16.msra.mxu0 0
        %2988 = vmatprep.subr.bf16.mxu0 0
        %2989 = vmatpush2.bf16.msra.mxu0 0
        %2990 = vmatprep.subr.bf16.mxu0 0
        %2991 = vmatpush2.bf16.msra.mxu0 0
        %2992 = vmatprep.mubr.bf16.mxu0 0
        %2993 = vmatmul.mubr.bf16.gmra.mxu0 %v2949
        %v2994 = vpop.f32.mrf.mxu0
        %v2995 = vadd.f32 0.0, %v2994
        %v2996 = vpop.f32.mrf.mxu0
        %v2997 = vpop.f32.mrf.mxu0
        %v2998 = vadd.f32 0.0, %v2997
        %v2999 = vpop.f32.mrf.mxu0
        %3000 = vmatprep.mubr.bf16.mxu0 0
        %3001 = vmatmul.mubr.bf16.gmra.mxu0 %v2952
        %v3002 = vpop.f32.mrf.mxu0
        %v3003 = vadd.f32 0.0, %v3002
        %v3004 = vpop.f32.mrf.mxu0
        %v3005 = vpop.f32.mrf.mxu0
        %v3006 = vadd.f32 0.0, %v3005
        %v3007 = vpop.f32.mrf.mxu0
        %3008 = vmatprep.mubr.bf16.mxu0 0
        %3009 = vmatmul.mubr.bf16.gmra.mxu0 %v2955
        %v3010 = vpop.f32.mrf.mxu0
        %v3011 = vadd.f32 0.0, %v3010
        %v3012 = vpop.f32.mrf.mxu0
        %v3013 = vpop.f32.mrf.mxu0
        %v3014 = vadd.f32 0.0, %v3013
        %v3015 = vpop.f32.mrf.mxu0
        %3016 = vmatprep.mubr.bf16.mxu0 0
        %3017 = vmatmul.mubr.bf16.gmra.mxu0 %v2958
        %v3018 = vpop.f32.mrf.mxu0
        %v3019 = vadd.f32 0.0, %v3018
        %v3020 = vpop.f32.mrf.mxu0
        %v3021 = vpop.f32.mrf.mxu0
        %v3022 = vadd.f32 0.0, %v3021
        %v3023 = vpop.f32.mrf.mxu0
        %3024 = vdwg.mxu0
        %v3025 = vadd.f32 %v2838, %v2995
        %v3026 = vadd.f32 %v2839, %v2998
        %v3027 = vadd.f32 %v2840, %v3003
        %v3028 = vadd.f32 %v2841, %v3006
        %v3029 = vadd.f32 %v2842, %v3011
        %v3030 = vadd.f32 %v2843, %v3014
        %v3031 = vadd.f32 %v2844, %v3019
        %v3032 = vadd.f32 %v2845, %v3022
        %s3033 = scalar_lea.vmem %s4, 1
        %v3034 = vld [vmem:[%s3033] sm:$0x1]
        %v3036 = vlaneseq
        %v3037 = vshrl.u32 %v3036, 7
        %v3038 = vsub.s32 0, %v3037
        %v3039 = vrot.slane %v3034, %v3038
        %v3041 = vmul.f32 %v3025, %v3039
        %v3042 = vmul.f32 %v3026, %v3039
        %v3043 = vmul.f32 %v3027, %v3039
        %v3044 = vmul.f32 %v3028, %v3039
        %v3045 = vmul.f32 %v3029, %v3039
        %v3046 = vmul.f32 %v3030, %v3039
        %v3047 = vmul.f32 %v3031, %v3039
        %v3048 = vmul.f32 %v3032, %v3039
        %s3049 = scalar_lea.vmem %s5, 1
        %v3050 = vld [vmem:[%s3049] sm:$0x1]
        %v3052 = vlaneseq
        %v3053 = vshrl.u32 %v3052, 7
        %v3054 = vsub.s32 0, %v3053
        %v3055 = vrot.slane %v3050, %v3054
        %v3057 = vadd.f32 %v3041, %v3055
        %v3058 = vadd.f32 %v3042, %v3055
        %v3059 = vadd.f32 %v3043, %v3055
        %v3060 = vadd.f32 %v3044, %v3055
        %v3061 = vadd.f32 %v3045, %v3055
        %v3062 = vadd.f32 %v3046, %v3055
        %v3063 = vadd.f32 %v3047, %v3055
        %v3064 = vadd.f32 %v3048, %v3055
        %v3065 = vmax.f32 %v3057, 0.0
        %v3066 = vmax.f32 %v3058, 0.0
        %v3067 = vmax.f32 %v3059, 0.0
        %v3068 = vmax.f32 %v3060, 0.0
        %v3069 = vmax.f32 %v3061, 0.0
        %v3070 = vmax.f32 %v3062, 0.0
        %v3071 = vmax.f32 %v3063, 0.0
        %v3072 = vmax.f32 %v3064, 0.0
        %v3073 = vpack.c.bf16 %v3066, %v3065
        %v3074 = vpack.c.bf16 %v3068, %v3067
        %v3075 = vpack.c.bf16 %v3070, %v3069
        %v3076 = vpack.c.bf16 %v3072, %v3071
        %3077 = vmatprep.subr.bf16.mxu0 0
        %3078 = vmatpush1.bf16.msra.mxu0 0
        %3079 = vmatprep.subr.bf16.mxu0 0
        %3080 = vmatpush1.bf16.msra.mxu0 0
        %3081 = vmatprep.subr.bf16.mxu0 0
        %3082 = vmatpush1.bf16.msra.mxu0 0
        %3083 = vmatprep.subr.bf16.mxu0 0
        %3084 = vmatpush1.bf16.msra.mxu0 0
        %3085 = vmatprep.subr.bf16.mxu0 0
        %3086 = vmatpush1.bf16.msra.mxu0 %v3076
        %3087 = vmatprep.subr.bf16.mxu0 0
        %3088 = vmatpush1.bf16.msra.mxu0 %v3075
        %3089 = vmatprep.subr.bf16.mxu0 0
        %3090 = vmatpush1.bf16.msra.mxu0 %v3074
        %3091 = vmatprep.subr.bf16.mxu0 0
        %3092 = vmatpush1.bf16.msra.mxu0 %v3073
        %3093 = vmatprep.subr.bf16.mxu0 0
        %3094 = vmatpush2.bf16.msra.mxu0 0
        %3095 = vmatprep.subr.bf16.mxu0 0
        %3096 = vmatpush2.bf16.msra.mxu0 0
        %3097 = vmatprep.subr.bf16.mxu0 0
        %3098 = vmatpush2.bf16.msra.mxu0 0
        %3099 = vmatprep.subr.bf16.mxu0 0
        %3100 = vmatpush2.bf16.msra.mxu0 0
        %3101 = vmatprep.subr.bf16.mxu0 0
        %3102 = vmatpush2.bf16.msra.mxu0 0
        %3103 = vmatprep.subr.bf16.mxu0 0
        %3104 = vmatpush2.bf16.msra.mxu0 0
        %3105 = vmatprep.subr.bf16.mxu0 0
        %3106 = vmatpush2.bf16.msra.mxu0 0
        %3107 = vmatprep.subr.bf16.mxu0 0
        %3108 = vmatpush2.bf16.msra.mxu0 0
        %3109 = vmatprep.mubr.bf16.mxu0 0
        %3110 = vmatmul.mubr.bf16.gmra.mxu0 %v900
        %v3111 = vpop.f32.mrf.mxu0
        %v3112 = vadd.f32 0.0, %v3111
        %v3113 = vpop.f32.mrf.mxu0
        %v3114 = vpop.f32.mrf.mxu0
        %v3115 = vadd.f32 0.0, %v3114
        %v3116 = vpop.f32.mrf.mxu0
        %3117 = vmatprep.mubr.bf16.mxu0 0
        %3118 = vmatmul.mubr.bf16.gmra.mxu0 %v903
        %v3119 = vpop.f32.mrf.mxu0
        %v3120 = vadd.f32 0.0, %v3119
        %v3121 = vpop.f32.mrf.mxu0
        %v3122 = vpop.f32.mrf.mxu0
        %v3123 = vadd.f32 0.0, %v3122
        %v3124 = vpop.f32.mrf.mxu0
        %3125 = vmatprep.mubr.bf16.mxu0 0
        %3126 = vmatmul.mubr.bf16.gmra.mxu0 %v906
        %v3127 = vpop.f32.mrf.mxu0
        %v3128 = vadd.f32 0.0, %v3127
        %v3129 = vpop.f32.mrf.mxu0
        %v3130 = vpop.f32.mrf.mxu0
        %v3131 = vadd.f32 0.0, %v3130
        %v3132 = vpop.f32.mrf.mxu0
        %3133 = vmatprep.mubr.bf16.mxu0 0
        %3134 = vmatmul.mubr.bf16.gmra.mxu0 %v909
        %v3135 = vpop.f32.mrf.mxu0
        %v3136 = vadd.f32 0.0, %v3135
        %v3137 = vpop.f32.mrf.mxu0
        %v3138 = vpop.f32.mrf.mxu0
        %v3139 = vadd.f32 0.0, %v3138
        %v3140 = vpop.f32.mrf.mxu0
        %3141 = vdwg.mxu0
        %v3142 = vpack.c.bf16 %v3115, %v3112
        %v3143 = vpack.c.bf16 %v3123, %v3120
        %v3144 = vpack.c.bf16 %v3131, %v3128
        %v3145 = vpack.c.bf16 %v3139, %v3136
        %3146 = vmatprep.subr.bf16.mxu0 0
        %3147 = vmatpush1.bf16.msra.mxu0 0
        %3148 = vmatprep.subr.bf16.mxu0 0
        %3149 = vmatpush1.bf16.msra.mxu0 0
        %3150 = vmatprep.subr.bf16.mxu0 0
        %3151 = vmatpush1.bf16.msra.mxu0 0
        %3152 = vmatprep.subr.bf16.mxu0 0
        %3153 = vmatpush1.bf16.msra.mxu0 0
        %3154 = vmatprep.subr.bf16.mxu0 0
        %3155 = vmatpush1.bf16.msra.mxu0 %v3076
        %3156 = vmatprep.subr.bf16.mxu0 0
        %3157 = vmatpush1.bf16.msra.mxu0 %v3075
        %3158 = vmatprep.subr.bf16.mxu0 0
        %3159 = vmatpush1.bf16.msra.mxu0 %v3074
        %3160 = vmatprep.subr.bf16.mxu0 0
        %3161 = vmatpush1.bf16.msra.mxu0 %v3073
        %3162 = vmatprep.subr.bf16.mxu0 0
        %3163 = vmatpush2.bf16.msra.mxu0 0
        %3164 = vmatprep.subr.bf16.mxu0 0
        %3165 = vmatpush2.bf16.msra.mxu0 0
        %3166 = vmatprep.subr.bf16.mxu0 0
        %3167 = vmatpush2.bf16.msra.mxu0 0
        %3168 = vmatprep.subr.bf16.mxu0 0
        %3169 = vmatpush2.bf16.msra.mxu0 0
        %3170 = vmatprep.subr.bf16.mxu0 0
        %3171 = vmatpush2.bf16.msra.mxu0 0
        %3172 = vmatprep.subr.bf16.mxu0 0
        %3173 = vmatpush2.bf16.msra.mxu0 0
        %3174 = vmatprep.subr.bf16.mxu0 0
        %3175 = vmatpush2.bf16.msra.mxu0 0
        %3176 = vmatprep.subr.bf16.mxu0 0
        %3177 = vmatpush2.bf16.msra.mxu0 0
        %3178 = vmatprep.mubr.bf16.mxu0 0
        %3179 = vmatmul.mubr.bf16.gmra.mxu0 %v1462
        %v3180 = vpop.f32.mrf.mxu0
        %v3181 = vadd.f32 0.0, %v3180
        %v3182 = vpop.f32.mrf.mxu0
        %v3183 = vpop.f32.mrf.mxu0
        %v3184 = vadd.f32 0.0, %v3183
        %v3185 = vpop.f32.mrf.mxu0
        %3186 = vmatprep.mubr.bf16.mxu0 0
        %3187 = vmatmul.mubr.bf16.gmra.mxu0 %v1465
        %v3188 = vpop.f32.mrf.mxu0
        %v3189 = vadd.f32 0.0, %v3188
        %v3190 = vpop.f32.mrf.mxu0
        %v3191 = vpop.f32.mrf.mxu0
        %v3192 = vadd.f32 0.0, %v3191
        %v3193 = vpop.f32.mrf.mxu0
        %3194 = vmatprep.mubr.bf16.mxu0 0
        %3195 = vmatmul.mubr.bf16.gmra.mxu0 %v1468
        %v3196 = vpop.f32.mrf.mxu0
        %v3197 = vadd.f32 0.0, %v3196
        %v3198 = vpop.f32.mrf.mxu0
        %v3199 = vpop.f32.mrf.mxu0
        %v3200 = vadd.f32 0.0, %v3199
        %v3201 = vpop.f32.mrf.mxu0
        %3202 = vmatprep.mubr.bf16.mxu0 0
        %3203 = vmatmul.mubr.bf16.gmra.mxu0 %v1471
        %v3204 = vpop.f32.mrf.mxu0
        %v3205 = vadd.f32 0.0, %v3204
        %v3206 = vpop.f32.mrf.mxu0
        %v3207 = vpop.f32.mrf.mxu0
        %v3208 = vadd.f32 0.0, %v3207
        %v3209 = vpop.f32.mrf.mxu0
        %3210 = vdwg.mxu0
        %v3211 = vpack.c.bf16 %v3184, %v3181
        %v3212 = vpack.c.bf16 %v3192, %v3189
        %v3213 = vpack.c.bf16 %v3200, %v3197
        %v3214 = vpack.c.bf16 %v3208, %v3205
        %3215 = vmatprep.subr.bf16.mxu0 0
        %3216 = vmatpush1.bf16.msra.mxu0 0
        %3217 = vmatprep.subr.bf16.mxu0 0
        %3218 = vmatpush1.bf16.msra.mxu0 0
        %3219 = vmatprep.subr.bf16.mxu0 0
        %3220 = vmatpush1.bf16.msra.mxu0 0
        %3221 = vmatprep.subr.bf16.mxu0 0
        %3222 = vmatpush1.bf16.msra.mxu0 0
        %3223 = vmatprep.subr.bf16.mxu0 0
        %3224 = vmatpush1.bf16.msra.mxu0 %v3145
        %3225 = vmatprep.subr.bf16.mxu0 0
        %3226 = vmatpush1.bf16.msra.mxu0 %v3144
        %3227 = vmatprep.subr.bf16.mxu0 0
        %3228 = vmatpush1.bf16.msra.mxu0 %v3143
        %3229 = vmatprep.subr.bf16.mxu0 0
        %3230 = vmatpush1.bf16.msra.mxu0 %v3142
        %3231 = vmatprep.subr.bf16.mxu0 0
        %3232 = vmatpush2.bf16.msra.mxu0 0
        %3233 = vmatprep.subr.bf16.mxu0 0
        %3234 = vmatpush2.bf16.msra.mxu0 0
        %3235 = vmatprep.subr.bf16.mxu0 0
        %3236 = vmatpush2.bf16.msra.mxu0 0
        %3237 = vmatprep.subr.bf16.mxu0 0
        %3238 = vmatpush2.bf16.msra.mxu0 0
        %3239 = vmatprep.subr.bf16.mxu0 0
        %3240 = vmatpush2.bf16.msra.mxu0 0
        %3241 = vmatprep.subr.bf16.mxu0 0
        %3242 = vmatpush2.bf16.msra.mxu0 0
        %3243 = vmatprep.subr.bf16.mxu0 0
        %3244 = vmatpush2.bf16.msra.mxu0 0
        %3245 = vmatprep.subr.bf16.mxu0 0
        %3246 = vmatpush2.bf16.msra.mxu0 0
        %3247 = vmatprep.mubr.bf16.mxu0 0
        %3248 = vmatmul.mubr.bf16.gmra.mxu0 %v1062
        %v3249 = vpop.f32.mrf.mxu0
        %v3250 = vadd.f32 0.0, %v3249
        %v3251 = vpop.f32.mrf.mxu0
        %v3252 = vpop.f32.mrf.mxu0
        %v3253 = vadd.f32 0.0, %v3252
        %v3254 = vpop.f32.mrf.mxu0
        %3255 = vmatprep.mubr.bf16.mxu0 0
        %3256 = vmatmul.mubr.bf16.gmra.mxu0 %v1065
        %v3257 = vpop.f32.mrf.mxu0
        %v3258 = vadd.f32 0.0, %v3257
        %v3259 = vpop.f32.mrf.mxu0
        %v3260 = vpop.f32.mrf.mxu0
        %v3261 = vadd.f32 0.0, %v3260
        %v3262 = vpop.f32.mrf.mxu0
        %3263 = vmatprep.mubr.bf16.mxu0 0
        %3264 = vmatmul.mubr.bf16.gmra.mxu0 %v1068
        %v3265 = vpop.f32.mrf.mxu0
        %v3266 = vadd.f32 0.0, %v3265
        %v3267 = vpop.f32.mrf.mxu0
        %v3268 = vpop.f32.mrf.mxu0
        %v3269 = vadd.f32 0.0, %v3268
        %v3270 = vpop.f32.mrf.mxu0
        %3271 = vmatprep.mubr.bf16.mxu0 0
        %3272 = vmatmul.mubr.bf16.gmra.mxu0 %v1071
        %v3273 = vpop.f32.mrf.mxu0
        %v3274 = vadd.f32 0.0, %v3273
        %v3275 = vpop.f32.mrf.mxu0
        %v3276 = vpop.f32.mrf.mxu0
        %v3277 = vadd.f32 0.0, %v3276
        %v3278 = vpop.f32.mrf.mxu0
        %3279 = vdwg.mxu0
        %v3280 = vpack.c.bf16 %v3253, %v3250
        %v3281 = vpack.c.bf16 %v3261, %v3258
        %v3282 = vpack.c.bf16 %v3269, %v3266
        %v3283 = vpack.c.bf16 %v3277, %v3274
        %s3284 = scalar_lea.vmem %s2, 288
        %v3285 = vld [vmem:[%s3284] sm:$0xf]
        %v3286 = vld [vmem:[%s3284 + $0x4] sm:$0xf]
        %v3287 = vld [vmem:[%s3284 + $0x8] sm:$0xf]
        %v3288 = vld [vmem:[%s3284 + $0xc] sm:$0xf]
        %v3289 = vld [vmem:[%s3284 + $0x10] sm:$0xf]
        %v3290 = vld [vmem:[%s3284 + $0x14] sm:$0xf]
        %v3291 = vld [vmem:[%s3284 + $0x18] sm:$0xf]
        %v3292 = vld [vmem:[%s3284 + $0x1c] sm:$0xf]
        %3293 = vmatprep.subr.bf16.mxu0 0
        %3294 = vmatpush1.bf16.msra.mxu0 0
        %3295 = vmatprep.subr.bf16.mxu0 0
        %3296 = vmatpush1.bf16.msra.mxu0 0
        %3297 = vmatprep.subr.bf16.mxu0 0
        %3298 = vmatpush1.bf16.msra.mxu0 0
        %3299 = vmatprep.subr.bf16.mxu0 0
        %3300 = vmatpush1.bf16.msra.mxu0 0
        %3301 = vmatprep.subr.bf16.mxu0 0
        %3302 = vmatpush1.bf16.msra.mxu0 %v3076
        %3303 = vmatprep.subr.bf16.mxu0 0
        %3304 = vmatpush1.bf16.msra.mxu0 %v3075
        %3305 = vmatprep.subr.bf16.mxu0 0
        %3306 = vmatpush1.bf16.msra.mxu0 %v3074
        %3307 = vmatprep.subr.bf16.mxu0 0
        %3308 = vmatpush1.bf16.msra.mxu0 %v3073
        %3309 = vmatprep.subr.bf16.mxu0 0
        %3310 = vmatpush2.bf16.msra.mxu0 0
        %3311 = vmatprep.subr.bf16.mxu0 0
        %3312 = vmatpush2.bf16.msra.mxu0 0
        %3313 = vmatprep.subr.bf16.mxu0 0
        %3314 = vmatpush2.bf16.msra.mxu0 0
        %3315 = vmatprep.subr.bf16.mxu0 0
        %3316 = vmatpush2.bf16.msra.mxu0 0
        %3317 = vmatprep.subr.bf16.mxu0 0
        %3318 = vmatpush2.bf16.msra.mxu0 0
        %3319 = vmatprep.subr.bf16.mxu0 0
        %3320 = vmatpush2.bf16.msra.mxu0 0
        %3321 = vmatprep.subr.bf16.mxu0 0
        %3322 = vmatpush2.bf16.msra.mxu0 0
        %3323 = vmatprep.subr.bf16.mxu0 0
        %3324 = vmatpush2.bf16.msra.mxu0 0
        %3325 = vmatprep.mubr.bf16.mxu0 0
        %3326 = vmatmul.mubr.bf16.gmra.mxu0 %v1062
        %v3327 = vpop.f32.mrf.mxu0
        %v3328 = vadd.f32 0.0, %v3327
        %v3329 = vpop.f32.mrf.mxu0
        %v3330 = vpop.f32.mrf.mxu0
        %v3331 = vadd.f32 0.0, %v3330
        %v3332 = vpop.f32.mrf.mxu0
        %3333 = vmatprep.mubr.bf16.mxu0 0
        %3334 = vmatmul.mubr.bf16.gmra.mxu0 %v1065
        %v3335 = vpop.f32.mrf.mxu0
        %v3336 = vadd.f32 0.0, %v3335
        %v3337 = vpop.f32.mrf.mxu0
        %v3338 = vpop.f32.mrf.mxu0
        %v3339 = vadd.f32 0.0, %v3338
        %v3340 = vpop.f32.mrf.mxu0
        %3341 = vmatprep.mubr.bf16.mxu0 0
        %3342 = vmatmul.mubr.bf16.gmra.mxu0 %v1068
        %v3343 = vpop.f32.mrf.mxu0
        %v3344 = vadd.f32 0.0, %v3343
        %v3345 = vpop.f32.mrf.mxu0
        %v3346 = vpop.f32.mrf.mxu0
        %v3347 = vadd.f32 0.0, %v3346
        %v3348 = vpop.f32.mrf.mxu0
        %3349 = vmatprep.mubr.bf16.mxu0 0
        %3350 = vmatmul.mubr.bf16.gmra.mxu0 %v1071
        %v3351 = vpop.f32.mrf.mxu0
        %v3352 = vadd.f32 0.0, %v3351
        %v3353 = vpop.f32.mrf.mxu0
        %v3354 = vpop.f32.mrf.mxu0
        %v3355 = vadd.f32 0.0, %v3354
        %v3356 = vpop.f32.mrf.mxu0
        %3357 = vdwg.mxu0
        %v3358 = vpack.c.bf16 %v3331, %v3328
        %v3359 = vpack.c.bf16 %v3339, %v3336
        %v3360 = vpack.c.bf16 %v3347, %v3344
        %v3361 = vpack.c.bf16 %v3355, %v3352
        %s3362 = scalar_lea.vmem %s2, 320
        %v3363 = vld [vmem:[%s3362] sm:$0xf]
        %v3364 = vld [vmem:[%s3362 + $0x4] sm:$0xf]
        %v3365 = vld [vmem:[%s3362 + $0x8] sm:$0xf]
        %v3366 = vld [vmem:[%s3362 + $0xc] sm:$0xf]
        %v3367 = vld [vmem:[%s3362 + $0x10] sm:$0xf]
        %v3368 = vld [vmem:[%s3362 + $0x14] sm:$0xf]
        %v3369 = vld [vmem:[%s3362 + $0x18] sm:$0xf]
        %v3370 = vld [vmem:[%s3362 + $0x1c] sm:$0xf]
        %v3379 = vunpack.c.l.b16 %v3363
        %v3380 = vunpack.c.l.b16 %v3364
        %v3381 = vunpack.c.l.b16 %v3365
        %v3382 = vunpack.c.l.b16 %v3366
        %v3383 = vunpack.c.l.b16 %v3367
        %v3384 = vunpack.c.l.b16 %v3368
        %v3385 = vunpack.c.l.b16 %v3369
        %v3386 = vunpack.c.l.b16 %v3370
        %v3387 = vpack.c.b16 %v3380, %v3379
        %v3388 = vpack.c.b16 %v3382, %v3381
        %v3389 = vpack.c.b16 %v3384, %v3383
        %v3390 = vpack.c.b16 %v3386, %v3385
        %v3396 = vsel %vm898, %v3358, 0
        %v3399 = vsel %vm898, %v3359, 0
        %v3402 = vsel %vm898, %v3360, 0
        %v3405 = vsel %vm898, %v3361, 0
        %3407 = vmatprep.subr.bf16.mxu0 0
        %3408 = vmatpush1.bf16.msra.mxu0 0
        %3409 = vmatprep.subr.bf16.mxu0 0
        %3410 = vmatpush1.bf16.msra.mxu0 0
        %3411 = vmatprep.subr.bf16.mxu0 0
        %3412 = vmatpush1.bf16.msra.mxu0 0
        %3413 = vmatprep.subr.bf16.mxu0 0
        %3414 = vmatpush1.bf16.msra.mxu0 0
        %3415 = vmatprep.subr.bf16.mxu0 0
        %3416 = vmatpush1.bf16.msra.mxu0 %v3390
        %3417 = vmatprep.subr.bf16.mxu0 0
        %3418 = vmatpush1.bf16.msra.mxu0 %v3389
        %3419 = vmatprep.subr.bf16.mxu0 0
        %3420 = vmatpush1.bf16.msra.mxu0 %v3388
        %3421 = vmatprep.subr.bf16.mxu0 0
        %3422 = vmatpush1.bf16.msra.mxu0 %v3387
        %3423 = vmatprep.subr.bf16.mxu0 0
        %3424 = vmatpush2.bf16.msra.mxu0 0
        %3425 = vmatprep.subr.bf16.mxu0 0
        %3426 = vmatpush2.bf16.msra.mxu0 0
        %3427 = vmatprep.subr.bf16.mxu0 0
        %3428 = vmatpush2.bf16.msra.mxu0 0
        %3429 = vmatprep.subr.bf16.mxu0 0
        %3430 = vmatpush2.bf16.msra.mxu0 0
        %3431 = vmatprep.subr.bf16.mxu0 0
        %3432 = vmatpush2.bf16.msra.mxu0 0
        %3433 = vmatprep.subr.bf16.mxu0 0
        %3434 = vmatpush2.bf16.msra.mxu0 0
        %3435 = vmatprep.subr.bf16.mxu0 0
        %3436 = vmatpush2.bf16.msra.mxu0 0
        %3437 = vmatprep.subr.bf16.mxu0 0
        %3438 = vmatpush2.bf16.msra.mxu0 0
        %3439 = vmatprep.mubr.bf16.mxu0 0
        %3440 = vmatmul.mubr.bf16.gmra.mxu0 %v3396
        %v3441 = vpop.f32.mrf.mxu0
        %v3442 = vadd.f32 0.0, %v3441
        %v3443 = vpop.f32.mrf.mxu0
        %v3444 = vpop.f32.mrf.mxu0
        %v3445 = vadd.f32 0.0, %v3444
        %v3446 = vpop.f32.mrf.mxu0
        %3447 = vmatprep.mubr.bf16.mxu0 0
        %3448 = vmatmul.mubr.bf16.gmra.mxu0 %v3399
        %v3449 = vpop.f32.mrf.mxu0
        %v3450 = vadd.f32 0.0, %v3449
        %v3451 = vpop.f32.mrf.mxu0
        %v3452 = vpop.f32.mrf.mxu0
        %v3453 = vadd.f32 0.0, %v3452
        %v3454 = vpop.f32.mrf.mxu0
        %3455 = vmatprep.mubr.bf16.mxu0 0
        %3456 = vmatmul.mubr.bf16.gmra.mxu0 %v3402
        %v3457 = vpop.f32.mrf.mxu0
        %v3458 = vadd.f32 0.0, %v3457
        %v3459 = vpop.f32.mrf.mxu0
        %v3460 = vpop.f32.mrf.mxu0
        %v3461 = vadd.f32 0.0, %v3460
        %v3462 = vpop.f32.mrf.mxu0
        %3463 = vmatprep.mubr.bf16.mxu0 0
        %3464 = vmatmul.mubr.bf16.gmra.mxu0 %v3405
        %v3465 = vpop.f32.mrf.mxu0
        %v3466 = vadd.f32 0.0, %v3465
        %v3467 = vpop.f32.mrf.mxu0
        %v3468 = vpop.f32.mrf.mxu0
        %v3469 = vadd.f32 0.0, %v3468
        %v3470 = vpop.f32.mrf.mxu0
        %3471 = vdwg.mxu0
        %v3480 = vunpack.c.l.b16 %v3285
        %v3481 = vunpack.c.l.b16 %v3286
        %v3482 = vunpack.c.l.b16 %v3287
        %v3483 = vunpack.c.l.b16 %v3288
        %v3484 = vunpack.c.l.b16 %v3289
        %v3485 = vunpack.c.l.b16 %v3290
        %v3486 = vunpack.c.l.b16 %v3291
        %v3487 = vunpack.c.l.b16 %v3292
        %v3488 = vpack.c.b16 %v3481, %v3480
        %v3489 = vpack.c.b16 %v3483, %v3482
        %v3490 = vpack.c.b16 %v3485, %v3484
        %v3491 = vpack.c.b16 %v3487, %v3486
        %v3497 = vsel %vm898, %v3280, 0
        %v3500 = vsel %vm898, %v3281, 0
        %v3503 = vsel %vm898, %v3282, 0
        %v3506 = vsel %vm898, %v3283, 0
        %3508 = vmatprep.subr.bf16.mxu0 0
        %3509 = vmatpush1.bf16.msra.mxu0 0
        %3510 = vmatprep.subr.bf16.mxu0 0
        %3511 = vmatpush1.bf16.msra.mxu0 0
        %3512 = vmatprep.subr.bf16.mxu0 0
        %3513 = vmatpush1.bf16.msra.mxu0 0
        %3514 = vmatprep.subr.bf16.mxu0 0
        %3515 = vmatpush1.bf16.msra.mxu0 0
        %3516 = vmatprep.subr.bf16.mxu0 0
        %3517 = vmatpush1.bf16.msra.mxu0 %v3491
        %3518 = vmatprep.subr.bf16.mxu0 0
        %3519 = vmatpush1.bf16.msra.mxu0 %v3490
        %3520 = vmatprep.subr.bf16.mxu0 0
        %3521 = vmatpush1.bf16.msra.mxu0 %v3489
        %3522 = vmatprep.subr.bf16.mxu0 0
        %3523 = vmatpush1.bf16.msra.mxu0 %v3488
        %3524 = vmatprep.subr.bf16.mxu0 0
        %3525 = vmatpush2.bf16.msra.mxu0 0
        %3526 = vmatprep.subr.bf16.mxu0 0
        %3527 = vmatpush2.bf16.msra.mxu0 0
        %3528 = vmatprep.subr.bf16.mxu0 0
        %3529 = vmatpush2.bf16.msra.mxu0 0
        %3530 = vmatprep.subr.bf16.mxu0 0
        %3531 = vmatpush2.bf16.msra.mxu0 0
        %3532 = vmatprep.subr.bf16.mxu0 0
        %3533 = vmatpush2.bf16.msra.mxu0 0
        %3534 = vmatprep.subr.bf16.mxu0 0
        %3535 = vmatpush2.bf16.msra.mxu0 0
        %3536 = vmatprep.subr.bf16.mxu0 0
        %3537 = vmatpush2.bf16.msra.mxu0 0
        %3538 = vmatprep.subr.bf16.mxu0 0
        %3539 = vmatpush2.bf16.msra.mxu0 0
        %3540 = vmatprep.mubr.bf16.mxu0 0
        %3541 = vmatmul.mubr.bf16.gmra.mxu0 %v3497
        %v3542 = vpop.f32.mrf.mxu0
        %v3543 = vadd.f32 %v3442, %v3542
        %v3544 = vpop.f32.mrf.mxu0
        %v3545 = vpop.f32.mrf.mxu0
        %v3546 = vadd.f32 %v3445, %v3545
        %v3547 = vpop.f32.mrf.mxu0
        %3548 = vmatprep.mubr.bf16.mxu0 0
        %3549 = vmatmul.mubr.bf16.gmra.mxu0 %v3500
        %v3550 = vpop.f32.mrf.mxu0
        %v3551 = vadd.f32 %v3450, %v3550
        %v3552 = vpop.f32.mrf.mxu0
        %v3553 = vpop.f32.mrf.mxu0
        %v3554 = vadd.f32 %v3453, %v3553
        %v3555 = vpop.f32.mrf.mxu0
        %3556 = vmatprep.mubr.bf16.mxu0 0
        %3557 = vmatmul.mubr.bf16.gmra.mxu0 %v3503
        %v3558 = vpop.f32.mrf.mxu0
        %v3559 = vadd.f32 %v3458, %v3558
        %v3560 = vpop.f32.mrf.mxu0
        %v3561 = vpop.f32.mrf.mxu0
        %v3562 = vadd.f32 %v3461, %v3561
        %v3563 = vpop.f32.mrf.mxu0
        %3564 = vmatprep.mubr.bf16.mxu0 0
        %3565 = vmatmul.mubr.bf16.gmra.mxu0 %v3506
        %v3566 = vpop.f32.mrf.mxu0
        %v3567 = vadd.f32 %v3466, %v3566
        %v3568 = vpop.f32.mrf.mxu0
        %v3569 = vpop.f32.mrf.mxu0
        %v3570 = vadd.f32 %v3469, %v3569
        %v3571 = vpop.f32.mrf.mxu0
        %3572 = vdwg.mxu0
        %3573 = vmatprep.subr.bf16.mxu0 0
        %3574 = vmatpush1.bf16.msra.mxu0 0
        %3575 = vmatprep.subr.bf16.mxu0 0
        %3576 = vmatpush1.bf16.msra.mxu0 0
        %3577 = vmatprep.subr.bf16.mxu0 0
        %3578 = vmatpush1.bf16.msra.mxu0 0
        %3579 = vmatprep.subr.bf16.mxu0 0
        %3580 = vmatpush1.bf16.msra.mxu0 0
        %3581 = vmatprep.subr.bf16.mxu0 0
        %3582 = vmatpush1.bf16.msra.mxu0 %v3214
        %3583 = vmatprep.subr.bf16.mxu0 0
        %3584 = vmatpush1.bf16.msra.mxu0 %v3213
        %3585 = vmatprep.subr.bf16.mxu0 0
        %3586 = vmatpush1.bf16.msra.mxu0 %v3212
        %3587 = vmatprep.subr.bf16.mxu0 0
        %3588 = vmatpush1.bf16.msra.mxu0 %v3211
        %3589 = vmatprep.subr.bf16.mxu0 0
        %3590 = vmatpush2.bf16.msra.mxu0 0
        %3591 = vmatprep.subr.bf16.mxu0 0
        %3592 = vmatpush2.bf16.msra.mxu0 0
        %3593 = vmatprep.subr.bf16.mxu0 0
        %3594 = vmatpush2.bf16.msra.mxu0 0
        %3595 = vmatprep.subr.bf16.mxu0 0
        %3596 = vmatpush2.bf16.msra.mxu0 0
        %3597 = vmatprep.subr.bf16.mxu0 0
        %3598 = vmatpush2.bf16.msra.mxu0 0
        %3599 = vmatprep.subr.bf16.mxu0 0
        %3600 = vmatpush2.bf16.msra.mxu0 0
        %3601 = vmatprep.subr.bf16.mxu0 0
        %3602 = vmatpush2.bf16.msra.mxu0 0
        %3603 = vmatprep.subr.bf16.mxu0 0
        %3604 = vmatpush2.bf16.msra.mxu0 0
        %3605 = vmatprep.mubr.bf16.mxu0 0
        %3606 = vmatmul.mubr.bf16.gmra.mxu0 %v1062
        %v3607 = vpop.f32.mrf.mxu0
        %v3608 = vadd.f32 0.0, %v3607
        %v3609 = vpop.f32.mrf.mxu0
        %v3610 = vpop.f32.mrf.mxu0
        %v3611 = vadd.f32 0.0, %v3610
        %v3612 = vpop.f32.mrf.mxu0
        %3613 = vmatprep.mubr.bf16.mxu0 0
        %3614 = vmatmul.mubr.bf16.gmra.mxu0 %v1065
        %v3615 = vpop.f32.mrf.mxu0
        %v3616 = vadd.f32 0.0, %v3615
        %v3617 = vpop.f32.mrf.mxu0
        %v3618 = vpop.f32.mrf.mxu0
        %v3619 = vadd.f32 0.0, %v3618
        %v3620 = vpop.f32.mrf.mxu0
        %3621 = vmatprep.mubr.bf16.mxu0 0
        %3622 = vmatmul.mubr.bf16.gmra.mxu0 %v1068
        %v3623 = vpop.f32.mrf.mxu0
        %v3624 = vadd.f32 0.0, %v3623
        %v3625 = vpop.f32.mrf.mxu0
        %v3626 = vpop.f32.mrf.mxu0
        %v3627 = vadd.f32 0.0, %v3626
        %v3628 = vpop.f32.mrf.mxu0
        %3629 = vmatprep.mubr.bf16.mxu0 0
        %3630 = vmatmul.mubr.bf16.gmra.mxu0 %v1071
        %v3631 = vpop.f32.mrf.mxu0
        %v3632 = vadd.f32 0.0, %v3631
        %v3633 = vpop.f32.mrf.mxu0
        %v3634 = vpop.f32.mrf.mxu0
        %v3635 = vadd.f32 0.0, %v3634
        %v3636 = vpop.f32.mrf.mxu0
        %3637 = vdwg.mxu0
        %v3638 = vpack.c.bf16 %v3611, %v3608
        %v3639 = vpack.c.bf16 %v3619, %v3616
        %v3640 = vpack.c.bf16 %v3627, %v3624
        %v3641 = vpack.c.bf16 %v3635, %v3632
        %s3642 = scalar_lea.vmem %s2, 352
        %v3643 = vld [vmem:[%s3642] sm:$0xf]
        %v3644 = vld [vmem:[%s3642 + $0x4] sm:$0xf]
        %v3645 = vld [vmem:[%s3642 + $0x8] sm:$0xf]
        %v3646 = vld [vmem:[%s3642 + $0xc] sm:$0xf]
        %v3647 = vld [vmem:[%s3642 + $0x10] sm:$0xf]
        %v3648 = vld [vmem:[%s3642 + $0x14] sm:$0xf]
        %v3649 = vld [vmem:[%s3642 + $0x18] sm:$0xf]
        %v3650 = vld [vmem:[%s3642 + $0x1c] sm:$0xf]
        %v3659 = vunpack.c.l.b16 %v3643
        %v3660 = vunpack.c.l.b16 %v3644
        %v3661 = vunpack.c.l.b16 %v3645
        %v3662 = vunpack.c.l.b16 %v3646
        %v3663 = vunpack.c.l.b16 %v3647
        %v3664 = vunpack.c.l.b16 %v3648
        %v3665 = vunpack.c.l.b16 %v3649
        %v3666 = vunpack.c.l.b16 %v3650
        %v3667 = vpack.c.b16 %v3660, %v3659
        %v3668 = vpack.c.b16 %v3662, %v3661
        %v3669 = vpack.c.b16 %v3664, %v3663
        %v3670 = vpack.c.b16 %v3666, %v3665
        %v3676 = vsel %vm898, %v3638, 0
        %v3679 = vsel %vm898, %v3639, 0
        %v3682 = vsel %vm898, %v3640, 0
        %v3685 = vsel %vm898, %v3641, 0
        %3687 = vmatprep.subr.bf16.mxu0 0
        %3688 = vmatpush1.bf16.msra.mxu0 0
        %3689 = vmatprep.subr.bf16.mxu0 0
        %3690 = vmatpush1.bf16.msra.mxu0 0
        %3691 = vmatprep.subr.bf16.mxu0 0
        %3692 = vmatpush1.bf16.msra.mxu0 0
        %3693 = vmatprep.subr.bf16.mxu0 0
        %3694 = vmatpush1.bf16.msra.mxu0 0
        %3695 = vmatprep.subr.bf16.mxu0 0
        %3696 = vmatpush1.bf16.msra.mxu0 %v3670
        %3697 = vmatprep.subr.bf16.mxu0 0
        %3698 = vmatpush1.bf16.msra.mxu0 %v3669
        %3699 = vmatprep.subr.bf16.mxu0 0
        %3700 = vmatpush1.bf16.msra.mxu0 %v3668
        %3701 = vmatprep.subr.bf16.mxu0 0
        %3702 = vmatpush1.bf16.msra.mxu0 %v3667
        %3703 = vmatprep.subr.bf16.mxu0 0
        %3704 = vmatpush2.bf16.msra.mxu0 0
        %3705 = vmatprep.subr.bf16.mxu0 0
        %3706 = vmatpush2.bf16.msra.mxu0 0
        %3707 = vmatprep.subr.bf16.mxu0 0
        %3708 = vmatpush2.bf16.msra.mxu0 0
        %3709 = vmatprep.subr.bf16.mxu0 0
        %3710 = vmatpush2.bf16.msra.mxu0 0
        %3711 = vmatprep.subr.bf16.mxu0 0
        %3712 = vmatpush2.bf16.msra.mxu0 0
        %3713 = vmatprep.subr.bf16.mxu0 0
        %3714 = vmatpush2.bf16.msra.mxu0 0
        %3715 = vmatprep.subr.bf16.mxu0 0
        %3716 = vmatpush2.bf16.msra.mxu0 0
        %3717 = vmatprep.subr.bf16.mxu0 0
        %3718 = vmatpush2.bf16.msra.mxu0 0
        %3719 = vmatprep.mubr.bf16.mxu0 0
        %3720 = vmatmul.mubr.bf16.gmra.mxu0 %v3676
        %v3721 = vpop.f32.mrf.mxu0
        %v3722 = vadd.f32 0.0, %v3721
        %v3723 = vpop.f32.mrf.mxu0
        %v3724 = vpop.f32.mrf.mxu0
        %v3725 = vadd.f32 0.0, %v3724
        %v3726 = vpop.f32.mrf.mxu0
        %3727 = vmatprep.mubr.bf16.mxu0 0
        %3728 = vmatmul.mubr.bf16.gmra.mxu0 %v3679
        %v3729 = vpop.f32.mrf.mxu0
        %v3730 = vadd.f32 0.0, %v3729
        %v3731 = vpop.f32.mrf.mxu0
        %v3732 = vpop.f32.mrf.mxu0
        %v3733 = vadd.f32 0.0, %v3732
        %v3734 = vpop.f32.mrf.mxu0
        %3735 = vmatprep.mubr.bf16.mxu0 0
        %3736 = vmatmul.mubr.bf16.gmra.mxu0 %v3682
        %v3737 = vpop.f32.mrf.mxu0
        %v3738 = vadd.f32 0.0, %v3737
        %v3739 = vpop.f32.mrf.mxu0
        %v3740 = vpop.f32.mrf.mxu0
        %v3741 = vadd.f32 0.0, %v3740
        %v3742 = vpop.f32.mrf.mxu0
        %3743 = vmatprep.mubr.bf16.mxu0 0
        %3744 = vmatmul.mubr.bf16.gmra.mxu0 %v3685
        %v3745 = vpop.f32.mrf.mxu0
        %v3746 = vadd.f32 0.0, %v3745
        %v3747 = vpop.f32.mrf.mxu0
        %v3748 = vpop.f32.mrf.mxu0
        %v3749 = vadd.f32 0.0, %v3748
        %v3750 = vpop.f32.mrf.mxu0
        %3751 = vdwg.mxu0
        %v3752 = vadd.f32 %v3543, %v3722
        %v3753 = vadd.f32 %v3546, %v3725
        %v3754 = vadd.f32 %v3551, %v3730
        %v3755 = vadd.f32 %v3554, %v3733
        %v3756 = vadd.f32 %v3559, %v3738
        %v3757 = vadd.f32 %v3562, %v3741
        %v3758 = vadd.f32 %v3567, %v3746
        %v3759 = vadd.f32 %v3570, %v3749
        %s3760 = scalar_lea.vmem %s2, 384
        %v3761 = vld [vmem:[%s3760] sm:$0xf]
        %v3762 = vld [vmem:[%s3760 + $0x4] sm:$0xf]
        %v3763 = vld [vmem:[%s3760 + $0x8] sm:$0xf]
        %v3764 = vld [vmem:[%s3760 + $0xc] sm:$0xf]
        %v3765 = vld [vmem:[%s3760 + $0x10] sm:$0xf]
        %v3766 = vld [vmem:[%s3760 + $0x14] sm:$0xf]
        %v3767 = vld [vmem:[%s3760 + $0x18] sm:$0xf]
        %v3768 = vld [vmem:[%s3760 + $0x1c] sm:$0xf]
        %v3777 = vunpack.c.l.b16 %v3761
        %v3778 = vunpack.c.l.b16 %v3762
        %v3779 = vunpack.c.l.b16 %v3763
        %v3780 = vunpack.c.l.b16 %v3764
        %v3781 = vunpack.c.l.b16 %v3765
        %v3782 = vunpack.c.l.b16 %v3766
        %v3783 = vunpack.c.l.b16 %v3767
        %v3784 = vunpack.c.l.b16 %v3768
        %v3785 = vpack.c.b16 %v3778, %v3777
        %v3786 = vpack.c.b16 %v3780, %v3779
        %v3787 = vpack.c.b16 %v3782, %v3781
        %v3788 = vpack.c.b16 %v3784, %v3783
        %v3794 = vsel %vm898, %v3142, 0
        %v3797 = vsel %vm898, %v3143, 0
        %v3800 = vsel %vm898, %v3144, 0
        %v3803 = vsel %vm898, %v3145, 0
        %3805 = vmatprep.subr.bf16.mxu0 0
        %3806 = vmatpush1.bf16.msra.mxu0 0
        %3807 = vmatprep.subr.bf16.mxu0 0
        %3808 = vmatpush1.bf16.msra.mxu0 0
        %3809 = vmatprep.subr.bf16.mxu0 0
        %3810 = vmatpush1.bf16.msra.mxu0 0
        %3811 = vmatprep.subr.bf16.mxu0 0
        %3812 = vmatpush1.bf16.msra.mxu0 0
        %3813 = vmatprep.subr.bf16.mxu0 0
        %3814 = vmatpush1.bf16.msra.mxu0 %v3788
        %3815 = vmatprep.subr.bf16.mxu0 0
        %3816 = vmatpush1.bf16.msra.mxu0 %v3787
        %3817 = vmatprep.subr.bf16.mxu0 0
        %3818 = vmatpush1.bf16.msra.mxu0 %v3786
        %3819 = vmatprep.subr.bf16.mxu0 0
        %3820 = vmatpush1.bf16.msra.mxu0 %v3785
        %3821 = vmatprep.subr.bf16.mxu0 0
        %3822 = vmatpush2.bf16.msra.mxu0 0
        %3823 = vmatprep.subr.bf16.mxu0 0
        %3824 = vmatpush2.bf16.msra.mxu0 0
        %3825 = vmatprep.subr.bf16.mxu0 0
        %3826 = vmatpush2.bf16.msra.mxu0 0
        %3827 = vmatprep.subr.bf16.mxu0 0
        %3828 = vmatpush2.bf16.msra.mxu0 0
        %3829 = vmatprep.subr.bf16.mxu0 0
        %3830 = vmatpush2.bf16.msra.mxu0 0
        %3831 = vmatprep.subr.bf16.mxu0 0
        %3832 = vmatpush2.bf16.msra.mxu0 0
        %3833 = vmatprep.subr.bf16.mxu0 0
        %3834 = vmatpush2.bf16.msra.mxu0 0
        %3835 = vmatprep.subr.bf16.mxu0 0
        %3836 = vmatpush2.bf16.msra.mxu0 0
        %3837 = vmatprep.mubr.bf16.mxu0 0
        %3838 = vmatmul.mubr.bf16.gmra.mxu0 %v3794
        %v3839 = vpop.f32.mrf.mxu0
        %v3840 = vadd.f32 0.0, %v3839
        %v3841 = vpop.f32.mrf.mxu0
        %v3842 = vpop.f32.mrf.mxu0
        %v3843 = vadd.f32 0.0, %v3842
        %v3844 = vpop.f32.mrf.mxu0
        %3845 = vmatprep.mubr.bf16.mxu0 0
        %3846 = vmatmul.mubr.bf16.gmra.mxu0 %v3797
        %v3847 = vpop.f32.mrf.mxu0
        %v3848 = vadd.f32 0.0, %v3847
        %v3849 = vpop.f32.mrf.mxu0
        %v3850 = vpop.f32.mrf.mxu0
        %v3851 = vadd.f32 0.0, %v3850
        %v3852 = vpop.f32.mrf.mxu0
        %3853 = vmatprep.mubr.bf16.mxu0 0
        %3854 = vmatmul.mubr.bf16.gmra.mxu0 %v3800
        %v3855 = vpop.f32.mrf.mxu0
        %v3856 = vadd.f32 0.0, %v3855
        %v3857 = vpop.f32.mrf.mxu0
        %v3858 = vpop.f32.mrf.mxu0
        %v3859 = vadd.f32 0.0, %v3858
        %v3860 = vpop.f32.mrf.mxu0
        %3861 = vmatprep.mubr.bf16.mxu0 0
        %3862 = vmatmul.mubr.bf16.gmra.mxu0 %v3803
        %v3863 = vpop.f32.mrf.mxu0
        %v3864 = vadd.f32 0.0, %v3863
        %v3865 = vpop.f32.mrf.mxu0
        %v3866 = vpop.f32.mrf.mxu0
        %v3867 = vadd.f32 0.0, %v3866
        %v3868 = vpop.f32.mrf.mxu0
        %3869 = vdwg.mxu0
        %v3870 = vadd.f32 %v3752, %v3840
        %v3871 = vadd.f32 %v3753, %v3843
        %v3872 = vadd.f32 %v3754, %v3848
        %v3873 = vadd.f32 %v3755, %v3851
        %v3874 = vadd.f32 %v3756, %v3856
        %v3875 = vadd.f32 %v3757, %v3859
        %v3876 = vadd.f32 %v3758, %v3864
        %v3877 = vadd.f32 %v3759, %v3867
        %s3878 = scalar_lea.vmem %s2, 416
        %v3879 = vld [vmem:[%s3878] sm:$0xf]
        %v3880 = vld [vmem:[%s3878 + $0x4] sm:$0xf]
        %v3881 = vld [vmem:[%s3878 + $0x8] sm:$0xf]
        %v3882 = vld [vmem:[%s3878 + $0xc] sm:$0xf]
        %v3883 = vld [vmem:[%s3878 + $0x10] sm:$0xf]
        %v3884 = vld [vmem:[%s3878 + $0x14] sm:$0xf]
        %v3885 = vld [vmem:[%s3878 + $0x18] sm:$0xf]
        %v3886 = vld [vmem:[%s3878 + $0x1c] sm:$0xf]
        %v3895 = vunpack.c.l.b16 %v3879
        %v3896 = vunpack.c.l.b16 %v3880
        %v3897 = vunpack.c.l.b16 %v3881
        %v3898 = vunpack.c.l.b16 %v3882
        %v3899 = vunpack.c.l.b16 %v3883
        %v3900 = vunpack.c.l.b16 %v3884
        %v3901 = vunpack.c.l.b16 %v3885
        %v3902 = vunpack.c.l.b16 %v3886
        %v3903 = vpack.c.b16 %v3896, %v3895
        %v3904 = vpack.c.b16 %v3898, %v3897
        %v3905 = vpack.c.b16 %v3900, %v3899
        %v3906 = vpack.c.b16 %v3902, %v3901
        %v3912 = vsel %vm898, %v3073, 0
        %v3915 = vsel %vm898, %v3074, 0
        %v3918 = vsel %vm898, %v3075, 0
        %v3921 = vsel %vm898, %v3076, 0
        %3923 = vmatprep.subr.bf16.mxu0 0
        %3924 = vmatpush1.bf16.msra.mxu0 0
        %3925 = vmatprep.subr.bf16.mxu0 0
        %3926 = vmatpush1.bf16.msra.mxu0 0
        %3927 = vmatprep.subr.bf16.mxu0 0
        %3928 = vmatpush1.bf16.msra.mxu0 0
        %3929 = vmatprep.subr.bf16.mxu0 0
        %3930 = vmatpush1.bf16.msra.mxu0 0
        %3931 = vmatprep.subr.bf16.mxu0 0
        %3932 = vmatpush1.bf16.msra.mxu0 %v3906
        %3933 = vmatprep.subr.bf16.mxu0 0
        %3934 = vmatpush1.bf16.msra.mxu0 %v3905
        %3935 = vmatprep.subr.bf16.mxu0 0
        %3936 = vmatpush1.bf16.msra.mxu0 %v3904
        %3937 = vmatprep.subr.bf16.mxu0 0
        %3938 = vmatpush1.bf16.msra.mxu0 %v3903
        %3939 = vmatprep.subr.bf16.mxu0 0
        %3940 = vmatpush2.bf16.msra.mxu0 0
        %3941 = vmatprep.subr.bf16.mxu0 0
        %3942 = vmatpush2.bf16.msra.mxu0 0
        %3943 = vmatprep.subr.bf16.mxu0 0
        %3944 = vmatpush2.bf16.msra.mxu0 0
        %3945 = vmatprep.subr.bf16.mxu0 0
        %3946 = vmatpush2.bf16.msra.mxu0 0
        %3947 = vmatprep.subr.bf16.mxu0 0
        %3948 = vmatpush2.bf16.msra.mxu0 0
        %3949 = vmatprep.subr.bf16.mxu0 0
        %3950 = vmatpush2.bf16.msra.mxu0 0
        %3951 = vmatprep.subr.bf16.mxu0 0
        %3952 = vmatpush2.bf16.msra.mxu0 0
        %3953 = vmatprep.subr.bf16.mxu0 0
        %3954 = vmatpush2.bf16.msra.mxu0 0
        %3955 = vmatprep.mubr.bf16.mxu0 0
        %3956 = vmatmul.mubr.bf16.gmra.mxu0 %v3912
        %v3957 = vpop.f32.mrf.mxu0
        %v3958 = vadd.f32 0.0, %v3957
        %v3959 = vpop.f32.mrf.mxu0
        %v3960 = vpop.f32.mrf.mxu0
        %v3961 = vadd.f32 0.0, %v3960
        %v3962 = vpop.f32.mrf.mxu0
        %3963 = vmatprep.mubr.bf16.mxu0 0
        %3964 = vmatmul.mubr.bf16.gmra.mxu0 %v3915
        %v3965 = vpop.f32.mrf.mxu0
        %v3966 = vadd.f32 0.0, %v3965
        %v3967 = vpop.f32.mrf.mxu0
        %v3968 = vpop.f32.mrf.mxu0
        %v3969 = vadd.f32 0.0, %v3968
        %v3970 = vpop.f32.mrf.mxu0
        %3971 = vmatprep.mubr.bf16.mxu0 0
        %3972 = vmatmul.mubr.bf16.gmra.mxu0 %v3918
        %v3973 = vpop.f32.mrf.mxu0
        %v3974 = vadd.f32 0.0, %v3973
        %v3975 = vpop.f32.mrf.mxu0
        %v3976 = vpop.f32.mrf.mxu0
        %v3977 = vadd.f32 0.0, %v3976
        %v3978 = vpop.f32.mrf.mxu0
        %3979 = vmatprep.mubr.bf16.mxu0 0
        %3980 = vmatmul.mubr.bf16.gmra.mxu0 %v3921
        %v3981 = vpop.f32.mrf.mxu0
        %v3982 = vadd.f32 0.0, %v3981
        %v3983 = vpop.f32.mrf.mxu0
        %v3984 = vpop.f32.mrf.mxu0
        %v3985 = vadd.f32 0.0, %v3984
        %v3986 = vpop.f32.mrf.mxu0
        %3987 = vdwg.mxu0
        %v3988 = vadd.f32 %v3870, %v3958
        %v3989 = vadd.f32 %v3871, %v3961
        %v3990 = vadd.f32 %v3872, %v3966
        %v3991 = vadd.f32 %v3873, %v3969
        %v3992 = vadd.f32 %v3874, %v3974
        %v3993 = vadd.f32 %v3875, %v3977
        %v3994 = vadd.f32 %v3876, %v3982
        %v3995 = vadd.f32 %v3877, %v3985
        %s3996 = scalar_lea.vmem %s2, 448
        %v3997 = vld [vmem:[%s3996] sm:$0xf]
        %v3998 = vld [vmem:[%s3996 + $0x4] sm:$0xf]
        %v3999 = vld [vmem:[%s3996 + $0x8] sm:$0xf]
        %v4000 = vld [vmem:[%s3996 + $0xc] sm:$0xf]
        %v4001 = vld [vmem:[%s3996 + $0x10] sm:$0xf]
        %v4002 = vld [vmem:[%s3996 + $0x14] sm:$0xf]
        %v4003 = vld [vmem:[%s3996 + $0x18] sm:$0xf]
        %v4004 = vld [vmem:[%s3996 + $0x1c] sm:$0xf]
        %v4013 = vunpack.c.l.b16 %v3997
        %v4014 = vunpack.c.l.b16 %v3998
        %v4015 = vunpack.c.l.b16 %v3999
        %v4016 = vunpack.c.l.b16 %v4000
        %v4017 = vunpack.c.l.b16 %v4001
        %v4018 = vunpack.c.l.b16 %v4002
        %v4019 = vunpack.c.l.b16 %v4003
        %v4020 = vunpack.c.l.b16 %v4004
        %v4021 = vpack.c.b16 %v4014, %v4013
        %v4022 = vpack.c.b16 %v4016, %v4015
        %v4023 = vpack.c.b16 %v4018, %v4017
        %v4024 = vpack.c.b16 %v4020, %v4019
        %v4030 = vsel %vm898, %v3211, 0
        %v4033 = vsel %vm898, %v3212, 0
        %v4036 = vsel %vm898, %v3213, 0
        %v4039 = vsel %vm898, %v3214, 0
        %4041 = vmatprep.subr.bf16.mxu0 0
        %4042 = vmatpush1.bf16.msra.mxu0 0
        %4043 = vmatprep.subr.bf16.mxu0 0
        %4044 = vmatpush1.bf16.msra.mxu0 0
        %4045 = vmatprep.subr.bf16.mxu0 0
        %4046 = vmatpush1.bf16.msra.mxu0 0
        %4047 = vmatprep.subr.bf16.mxu0 0
        %4048 = vmatpush1.bf16.msra.mxu0 0
        %4049 = vmatprep.subr.bf16.mxu0 0
        %4050 = vmatpush1.bf16.msra.mxu0 %v4024
        %4051 = vmatprep.subr.bf16.mxu0 0
        %4052 = vmatpush1.bf16.msra.mxu0 %v4023
        %4053 = vmatprep.subr.bf16.mxu0 0
        %4054 = vmatpush1.bf16.msra.mxu0 %v4022
        %4055 = vmatprep.subr.bf16.mxu0 0
        %4056 = vmatpush1.bf16.msra.mxu0 %v4021
        %4057 = vmatprep.subr.bf16.mxu0 0
        %4058 = vmatpush2.bf16.msra.mxu0 0
        %4059 = vmatprep.subr.bf16.mxu0 0
        %4060 = vmatpush2.bf16.msra.mxu0 0
        %4061 = vmatprep.subr.bf16.mxu0 0
        %4062 = vmatpush2.bf16.msra.mxu0 0
        %4063 = vmatprep.subr.bf16.mxu0 0
        %4064 = vmatpush2.bf16.msra.mxu0 0
        %4065 = vmatprep.subr.bf16.mxu0 0
        %4066 = vmatpush2.bf16.msra.mxu0 0
        %4067 = vmatprep.subr.bf16.mxu0 0
        %4068 = vmatpush2.bf16.msra.mxu0 0
        %4069 = vmatprep.subr.bf16.mxu0 0
        %4070 = vmatpush2.bf16.msra.mxu0 0
        %4071 = vmatprep.subr.bf16.mxu0 0
        %4072 = vmatpush2.bf16.msra.mxu0 0
        %4073 = vmatprep.mubr.bf16.mxu0 0
        %4074 = vmatmul.mubr.bf16.gmra.mxu0 %v4030
        %v4075 = vpop.f32.mrf.mxu0
        %v4076 = vadd.f32 0.0, %v4075
        %v4077 = vpop.f32.mrf.mxu0
        %v4078 = vpop.f32.mrf.mxu0
        %v4079 = vadd.f32 0.0, %v4078
        %v4080 = vpop.f32.mrf.mxu0
        %4081 = vmatprep.mubr.bf16.mxu0 0
        %4082 = vmatmul.mubr.bf16.gmra.mxu0 %v4033
        %v4083 = vpop.f32.mrf.mxu0
        %v4084 = vadd.f32 0.0, %v4083
        %v4085 = vpop.f32.mrf.mxu0
        %v4086 = vpop.f32.mrf.mxu0
        %v4087 = vadd.f32 0.0, %v4086
        %v4088 = vpop.f32.mrf.mxu0
        %4089 = vmatprep.mubr.bf16.mxu0 0
        %4090 = vmatmul.mubr.bf16.gmra.mxu0 %v4036
        %v4091 = vpop.f32.mrf.mxu0
        %v4092 = vadd.f32 0.0, %v4091
        %v4093 = vpop.f32.mrf.mxu0
        %v4094 = vpop.f32.mrf.mxu0
        %v4095 = vadd.f32 0.0, %v4094
        %v4096 = vpop.f32.mrf.mxu0
        %4097 = vmatprep.mubr.bf16.mxu0 0
        %4098 = vmatmul.mubr.bf16.gmra.mxu0 %v4039
        %v4099 = vpop.f32.mrf.mxu0
        %v4100 = vadd.f32 0.0, %v4099
        %v4101 = vpop.f32.mrf.mxu0
        %v4102 = vpop.f32.mrf.mxu0
        %v4103 = vadd.f32 0.0, %v4102
        %v4104 = vpop.f32.mrf.mxu0
        %4105 = vdwg.mxu0
        %v4106 = vadd.f32 %v3988, %v4076
        %v4107 = vadd.f32 %v3989, %v4079
        %v4108 = vadd.f32 %v3990, %v4084
        %v4109 = vadd.f32 %v3991, %v4087
        %v4110 = vadd.f32 %v3992, %v4092
        %v4111 = vadd.f32 %v3993, %v4095
        %v4112 = vadd.f32 %v3994, %v4100
        %v4113 = vadd.f32 %v3995, %v4103
        %4114 = vmatprep.subr.bf16.mxu0 0
        %4115 = vmatpush1.bf16.msra.mxu0 0
        %4116 = vmatprep.subr.bf16.mxu0 0
        %4117 = vmatpush1.bf16.msra.mxu0 0
        %4118 = vmatprep.subr.bf16.mxu0 0
        %4119 = vmatpush1.bf16.msra.mxu0 0
        %4120 = vmatprep.subr.bf16.mxu0 0
        %4121 = vmatpush1.bf16.msra.mxu0 0
        %4122 = vmatprep.subr.bf16.mxu0 0
        %4123 = vmatpush1.bf16.msra.mxu0 %v3145
        %4124 = vmatprep.subr.bf16.mxu0 0
        %4125 = vmatpush1.bf16.msra.mxu0 %v3144
        %4126 = vmatprep.subr.bf16.mxu0 0
        %4127 = vmatpush1.bf16.msra.mxu0 %v3143
        %4128 = vmatprep.subr.bf16.mxu0 0
        %4129 = vmatpush1.bf16.msra.mxu0 %v3142
        %4130 = vmatprep.subr.bf16.mxu0 0
        %4131 = vmatpush2.bf16.msra.mxu0 0
        %4132 = vmatprep.subr.bf16.mxu0 0
        %4133 = vmatpush2.bf16.msra.mxu0 0
        %4134 = vmatprep.subr.bf16.mxu0 0
        %4135 = vmatpush2.bf16.msra.mxu0 0
        %4136 = vmatprep.subr.bf16.mxu0 0
        %4137 = vmatpush2.bf16.msra.mxu0 0
        %4138 = vmatprep.subr.bf16.mxu0 0
        %4139 = vmatpush2.bf16.msra.mxu0 0
        %4140 = vmatprep.subr.bf16.mxu0 0
        %4141 = vmatpush2.bf16.msra.mxu0 0
        %4142 = vmatprep.subr.bf16.mxu0 0
        %4143 = vmatpush2.bf16.msra.mxu0 0
        %4144 = vmatprep.subr.bf16.mxu0 0
        %4145 = vmatpush2.bf16.msra.mxu0 0
        %4146 = vmatprep.mubr.bf16.mxu0 0
        %4147 = vmatmul.mubr.bf16.gmra.mxu0 %v2461
        %v4148 = vpop.f32.mrf.mxu0
        %v4149 = vadd.f32 0.0, %v4148
        %v4150 = vpop.f32.mrf.mxu0
        %v4151 = vpop.f32.mrf.mxu0
        %v4152 = vadd.f32 0.0, %v4151
        %v4153 = vpop.f32.mrf.mxu0
        %4154 = vmatprep.mubr.bf16.mxu0 0
        %4155 = vmatmul.mubr.bf16.gmra.mxu0 %v2464
        %v4156 = vpop.f32.mrf.mxu0
        %v4157 = vadd.f32 0.0, %v4156
        %v4158 = vpop.f32.mrf.mxu0
        %v4159 = vpop.f32.mrf.mxu0
        %v4160 = vadd.f32 0.0, %v4159
        %v4161 = vpop.f32.mrf.mxu0
        %4162 = vmatprep.mubr.bf16.mxu0 0
        %4163 = vmatmul.mubr.bf16.gmra.mxu0 %v2467
        %v4164 = vpop.f32.mrf.mxu0
        %v4165 = vadd.f32 0.0, %v4164
        %v4166 = vpop.f32.mrf.mxu0
        %v4167 = vpop.f32.mrf.mxu0
        %v4168 = vadd.f32 0.0, %v4167
        %v4169 = vpop.f32.mrf.mxu0
        %4170 = vmatprep.mubr.bf16.mxu0 0
        %4171 = vmatmul.mubr.bf16.gmra.mxu0 %v2470
        %v4172 = vpop.f32.mrf.mxu0
        %v4173 = vadd.f32 0.0, %v4172
        %v4174 = vpop.f32.mrf.mxu0
        %v4175 = vpop.f32.mrf.mxu0
        %v4176 = vadd.f32 0.0, %v4175
        %v4177 = vpop.f32.mrf.mxu0
        %4178 = vdwg.mxu0
        %v4179 = vpack.c.bf16 %v4152, %v4149
        %v4180 = vpack.c.bf16 %v4160, %v4157
        %v4181 = vpack.c.bf16 %v4168, %v4165
        %v4182 = vpack.c.bf16 %v4176, %v4173
        %s4183 = scalar_lea.vmem %s2, 480
        %v4184 = vld [vmem:[%s4183] sm:$0xf]
        %v4185 = vld [vmem:[%s4183 + $0x4] sm:$0xf]
        %v4186 = vld [vmem:[%s4183 + $0x8] sm:$0xf]
        %v4187 = vld [vmem:[%s4183 + $0xc] sm:$0xf]
        %v4188 = vld [vmem:[%s4183 + $0x10] sm:$0xf]
        %v4189 = vld [vmem:[%s4183 + $0x14] sm:$0xf]
        %v4190 = vld [vmem:[%s4183 + $0x18] sm:$0xf]
        %v4191 = vld [vmem:[%s4183 + $0x1c] sm:$0xf]
        %v4200 = vunpack.c.l.b16 %v4184
        %v4201 = vunpack.c.l.b16 %v4185
        %v4202 = vunpack.c.l.b16 %v4186
        %v4203 = vunpack.c.l.b16 %v4187
        %v4204 = vunpack.c.l.b16 %v4188
        %v4205 = vunpack.c.l.b16 %v4189
        %v4206 = vunpack.c.l.b16 %v4190
        %v4207 = vunpack.c.l.b16 %v4191
        %v4208 = vpack.c.b16 %v4201, %v4200
        %v4209 = vpack.c.b16 %v4203, %v4202
        %v4210 = vpack.c.b16 %v4205, %v4204
        %v4211 = vpack.c.b16 %v4207, %v4206
        %v4217 = vsel %vm898, %v4179, 0
        %v4220 = vsel %vm898, %v4180, 0
        %v4223 = vsel %vm898, %v4181, 0
        %v4226 = vsel %vm898, %v4182, 0
        %4228 = vmatprep.subr.bf16.mxu0 0
        %4229 = vmatpush1.bf16.msra.mxu0 0
        %4230 = vmatprep.subr.bf16.mxu0 0
        %4231 = vmatpush1.bf16.msra.mxu0 0
        %4232 = vmatprep.subr.bf16.mxu0 0
        %4233 = vmatpush1.bf16.msra.mxu0 0
        %4234 = vmatprep.subr.bf16.mxu0 0
        %4235 = vmatpush1.bf16.msra.mxu0 0
        %4236 = vmatprep.subr.bf16.mxu0 0
        %4237 = vmatpush1.bf16.msra.mxu0 %v4211
        %4238 = vmatprep.subr.bf16.mxu0 0
        %4239 = vmatpush1.bf16.msra.mxu0 %v4210
        %4240 = vmatprep.subr.bf16.mxu0 0
        %4241 = vmatpush1.bf16.msra.mxu0 %v4209
        %4242 = vmatprep.subr.bf16.mxu0 0
        %4243 = vmatpush1.bf16.msra.mxu0 %v4208
        %4244 = vmatprep.subr.bf16.mxu0 0
        %4245 = vmatpush2.bf16.msra.mxu0 0
        %4246 = vmatprep.subr.bf16.mxu0 0
        %4247 = vmatpush2.bf16.msra.mxu0 0
        %4248 = vmatprep.subr.bf16.mxu0 0
        %4249 = vmatpush2.bf16.msra.mxu0 0
        %4250 = vmatprep.subr.bf16.mxu0 0
        %4251 = vmatpush2.bf16.msra.mxu0 0
        %4252 = vmatprep.subr.bf16.mxu0 0
        %4253 = vmatpush2.bf16.msra.mxu0 0
        %4254 = vmatprep.subr.bf16.mxu0 0
        %4255 = vmatpush2.bf16.msra.mxu0 0
        %4256 = vmatprep.subr.bf16.mxu0 0
        %4257 = vmatpush2.bf16.msra.mxu0 0
        %4258 = vmatprep.subr.bf16.mxu0 0
        %4259 = vmatpush2.bf16.msra.mxu0 0
        %4260 = vmatprep.mubr.bf16.mxu0 0
        %4261 = vmatmul.mubr.bf16.gmra.mxu0 %v4217
        %v4262 = vpop.f32.mrf.mxu0
        %v4263 = vadd.f32 0.0, %v4262
        %v4264 = vpop.f32.mrf.mxu0
        %v4265 = vpop.f32.mrf.mxu0
        %v4266 = vadd.f32 0.0, %v4265
        %v4267 = vpop.f32.mrf.mxu0
        %4268 = vmatprep.mubr.bf16.mxu0 0
        %4269 = vmatmul.mubr.bf16.gmra.mxu0 %v4220
        %v4270 = vpop.f32.mrf.mxu0
        %v4271 = vadd.f32 0.0, %v4270
        %v4272 = vpop.f32.mrf.mxu0
        %v4273 = vpop.f32.mrf.mxu0
        %v4274 = vadd.f32 0.0, %v4273
        %v4275 = vpop.f32.mrf.mxu0
        %4276 = vmatprep.mubr.bf16.mxu0 0
        %4277 = vmatmul.mubr.bf16.gmra.mxu0 %v4223
        %v4278 = vpop.f32.mrf.mxu0
        %v4279 = vadd.f32 0.0, %v4278
        %v4280 = vpop.f32.mrf.mxu0
        %v4281 = vpop.f32.mrf.mxu0
        %v4282 = vadd.f32 0.0, %v4281
        %v4283 = vpop.f32.mrf.mxu0
        %4284 = vmatprep.mubr.bf16.mxu0 0
        %4285 = vmatmul.mubr.bf16.gmra.mxu0 %v4226
        %v4286 = vpop.f32.mrf.mxu0
        %v4287 = vadd.f32 0.0, %v4286
        %v4288 = vpop.f32.mrf.mxu0
        %v4289 = vpop.f32.mrf.mxu0
        %v4290 = vadd.f32 0.0, %v4289
        %v4291 = vpop.f32.mrf.mxu0
        %4292 = vdwg.mxu0
        %v4293 = vadd.f32 %v4106, %v4263
        %v4294 = vadd.f32 %v4107, %v4266
        %v4295 = vadd.f32 %v4108, %v4271
        %v4296 = vadd.f32 %v4109, %v4274
        %v4297 = vadd.f32 %v4110, %v4279
        %v4298 = vadd.f32 %v4111, %v4282
        %v4299 = vadd.f32 %v4112, %v4287
        %v4300 = vadd.f32 %v4113, %v4290
        %4301 = vmatprep.subr.bf16.mxu0 0
        %4302 = vmatpush1.bf16.msra.mxu0 0
        %4303 = vmatprep.subr.bf16.mxu0 0
        %4304 = vmatpush1.bf16.msra.mxu0 0
        %4305 = vmatprep.subr.bf16.mxu0 0
        %4306 = vmatpush1.bf16.msra.mxu0 0
        %4307 = vmatprep.subr.bf16.mxu0 0
        %4308 = vmatpush1.bf16.msra.mxu0 0
        %4309 = vmatprep.subr.bf16.mxu0 0
        %4310 = vmatpush1.bf16.msra.mxu0 %v3076
        %4311 = vmatprep.subr.bf16.mxu0 0
        %4312 = vmatpush1.bf16.msra.mxu0 %v3075
        %4313 = vmatprep.subr.bf16.mxu0 0
        %4314 = vmatpush1.bf16.msra.mxu0 %v3074
        %4315 = vmatprep.subr.bf16.mxu0 0
        %4316 = vmatpush1.bf16.msra.mxu0 %v3073
        %4317 = vmatprep.subr.bf16.mxu0 0
        %4318 = vmatpush2.bf16.msra.mxu0 0
        %4319 = vmatprep.subr.bf16.mxu0 0
        %4320 = vmatpush2.bf16.msra.mxu0 0
        %4321 = vmatprep.subr.bf16.mxu0 0
        %4322 = vmatpush2.bf16.msra.mxu0 0
        %4323 = vmatprep.subr.bf16.mxu0 0
        %4324 = vmatpush2.bf16.msra.mxu0 0
        %4325 = vmatprep.subr.bf16.mxu0 0
        %4326 = vmatpush2.bf16.msra.mxu0 0
        %4327 = vmatprep.subr.bf16.mxu0 0
        %4328 = vmatpush2.bf16.msra.mxu0 0
        %4329 = vmatprep.subr.bf16.mxu0 0
        %4330 = vmatpush2.bf16.msra.mxu0 0
        %4331 = vmatprep.subr.bf16.mxu0 0
        %4332 = vmatpush2.bf16.msra.mxu0 0
        %4333 = vmatprep.mubr.bf16.mxu0 0
        %4334 = vmatmul.mubr.bf16.gmra.mxu0 %v2461
        %v4335 = vpop.f32.mrf.mxu0
        %v4336 = vadd.f32 0.0, %v4335
        %v4337 = vpop.f32.mrf.mxu0
        %v4338 = vpop.f32.mrf.mxu0
        %v4339 = vadd.f32 0.0, %v4338
        %v4340 = vpop.f32.mrf.mxu0
        %4341 = vmatprep.mubr.bf16.mxu0 0
        %4342 = vmatmul.mubr.bf16.gmra.mxu0 %v2464
        %v4343 = vpop.f32.mrf.mxu0
        %v4344 = vadd.f32 0.0, %v4343
        %v4345 = vpop.f32.mrf.mxu0
        %v4346 = vpop.f32.mrf.mxu0
        %v4347 = vadd.f32 0.0, %v4346
        %v4348 = vpop.f32.mrf.mxu0
        %4349 = vmatprep.mubr.bf16.mxu0 0
        %4350 = vmatmul.mubr.bf16.gmra.mxu0 %v2467
        %v4351 = vpop.f32.mrf.mxu0
        %v4352 = vadd.f32 0.0, %v4351
        %v4353 = vpop.f32.mrf.mxu0
        %v4354 = vpop.f32.mrf.mxu0
        %v4355 = vadd.f32 0.0, %v4354
        %v4356 = vpop.f32.mrf.mxu0
        %4357 = vmatprep.mubr.bf16.mxu0 0
        %4358 = vmatmul.mubr.bf16.gmra.mxu0 %v2470
        %v4359 = vpop.f32.mrf.mxu0
        %v4360 = vadd.f32 0.0, %v4359
        %v4361 = vpop.f32.mrf.mxu0
        %v4362 = vpop.f32.mrf.mxu0
        %v4363 = vadd.f32 0.0, %v4362
        %v4364 = vpop.f32.mrf.mxu0
        %4365 = vdwg.mxu0
        %v4366 = vpack.c.bf16 %v4339, %v4336
        %v4367 = vpack.c.bf16 %v4347, %v4344
        %v4368 = vpack.c.bf16 %v4355, %v4352
        %v4369 = vpack.c.bf16 %v4363, %v4360
        %s4370 = scalar_lea.vmem %s2, 512
        %v4371 = vld [vmem:[%s4370] sm:$0xf]
        %v4372 = vld [vmem:[%s4370 + $0x4] sm:$0xf]
        %v4373 = vld [vmem:[%s4370 + $0x8] sm:$0xf]
        %v4374 = vld [vmem:[%s4370 + $0xc] sm:$0xf]
        %v4375 = vld [vmem:[%s4370 + $0x10] sm:$0xf]
        %v4376 = vld [vmem:[%s4370 + $0x14] sm:$0xf]
        %v4377 = vld [vmem:[%s4370 + $0x18] sm:$0xf]
        %v4378 = vld [vmem:[%s4370 + $0x1c] sm:$0xf]
        %v4387 = vunpack.c.l.b16 %v4371
        %v4388 = vunpack.c.l.b16 %v4372
        %v4389 = vunpack.c.l.b16 %v4373
        %v4390 = vunpack.c.l.b16 %v4374
        %v4391 = vunpack.c.l.b16 %v4375
        %v4392 = vunpack.c.l.b16 %v4376
        %v4393 = vunpack.c.l.b16 %v4377
        %v4394 = vunpack.c.l.b16 %v4378
        %v4395 = vpack.c.b16 %v4388, %v4387
        %v4396 = vpack.c.b16 %v4390, %v4389
        %v4397 = vpack.c.b16 %v4392, %v4391
        %v4398 = vpack.c.b16 %v4394, %v4393
        %v4404 = vsel %vm898, %v4366, 0
        %v4407 = vsel %vm898, %v4367, 0
        %v4410 = vsel %vm898, %v4368, 0
        %v4413 = vsel %vm898, %v4369, 0
        %4415 = vmatprep.subr.bf16.mxu0 0
        %4416 = vmatpush1.bf16.msra.mxu0 0
        %4417 = vmatprep.subr.bf16.mxu0 0
        %4418 = vmatpush1.bf16.msra.mxu0 0
        %4419 = vmatprep.subr.bf16.mxu0 0
        %4420 = vmatpush1.bf16.msra.mxu0 0
        %4421 = vmatprep.subr.bf16.mxu0 0
        %4422 = vmatpush1.bf16.msra.mxu0 0
        %4423 = vmatprep.subr.bf16.mxu0 0
        %4424 = vmatpush1.bf16.msra.mxu0 %v4398
        %4425 = vmatprep.subr.bf16.mxu0 0
        %4426 = vmatpush1.bf16.msra.mxu0 %v4397
        %4427 = vmatprep.subr.bf16.mxu0 0
        %4428 = vmatpush1.bf16.msra.mxu0 %v4396
        %4429 = vmatprep.subr.bf16.mxu0 0
        %4430 = vmatpush1.bf16.msra.mxu0 %v4395
        %4431 = vmatprep.subr.bf16.mxu0 0
        %4432 = vmatpush2.bf16.msra.mxu0 0
        %4433 = vmatprep.subr.bf16.mxu0 0
        %4434 = vmatpush2.bf16.msra.mxu0 0
        %4435 = vmatprep.subr.bf16.mxu0 0
        %4436 = vmatpush2.bf16.msra.mxu0 0
        %4437 = vmatprep.subr.bf16.mxu0 0
        %4438 = vmatpush2.bf16.msra.mxu0 0
        %4439 = vmatprep.subr.bf16.mxu0 0
        %4440 = vmatpush2.bf16.msra.mxu0 0
        %4441 = vmatprep.subr.bf16.mxu0 0
        %4442 = vmatpush2.bf16.msra.mxu0 0
        %4443 = vmatprep.subr.bf16.mxu0 0
        %4444 = vmatpush2.bf16.msra.mxu0 0
        %4445 = vmatprep.subr.bf16.mxu0 0
        %4446 = vmatpush2.bf16.msra.mxu0 0
        %4447 = vmatprep.mubr.bf16.mxu0 0
        %4448 = vmatmul.mubr.bf16.gmra.mxu0 %v4404
        %v4449 = vpop.f32.mrf.mxu0
        %v4450 = vadd.f32 0.0, %v4449
        %v4451 = vpop.f32.mrf.mxu0
        %v4452 = vpop.f32.mrf.mxu0
        %v4453 = vadd.f32 0.0, %v4452
        %v4454 = vpop.f32.mrf.mxu0
        %4455 = vmatprep.mubr.bf16.mxu0 0
        %4456 = vmatmul.mubr.bf16.gmra.mxu0 %v4407
        %v4457 = vpop.f32.mrf.mxu0
        %v4458 = vadd.f32 0.0, %v4457
        %v4459 = vpop.f32.mrf.mxu0
        %v4460 = vpop.f32.mrf.mxu0
        %v4461 = vadd.f32 0.0, %v4460
        %v4462 = vpop.f32.mrf.mxu0
        %4463 = vmatprep.mubr.bf16.mxu0 0
        %4464 = vmatmul.mubr.bf16.gmra.mxu0 %v4410
        %v4465 = vpop.f32.mrf.mxu0
        %v4466 = vadd.f32 0.0, %v4465
        %v4467 = vpop.f32.mrf.mxu0
        %v4468 = vpop.f32.mrf.mxu0
        %v4469 = vadd.f32 0.0, %v4468
        %v4470 = vpop.f32.mrf.mxu0
        %4471 = vmatprep.mubr.bf16.mxu0 0
        %4472 = vmatmul.mubr.bf16.gmra.mxu0 %v4413
        %v4473 = vpop.f32.mrf.mxu0
        %v4474 = vadd.f32 0.0, %v4473
        %v4475 = vpop.f32.mrf.mxu0
        %v4476 = vpop.f32.mrf.mxu0
        %v4477 = vadd.f32 0.0, %v4476
        %v4478 = vpop.f32.mrf.mxu0
        %4479 = vdwg.mxu0
        %v4480 = vadd.f32 %v4293, %v4450
        %v4481 = vadd.f32 %v4294, %v4453
        %v4482 = vadd.f32 %v4295, %v4458
        %v4483 = vadd.f32 %v4296, %v4461
        %v4484 = vadd.f32 %v4297, %v4466
        %v4485 = vadd.f32 %v4298, %v4469
        %v4486 = vadd.f32 %v4299, %v4474
        %v4487 = vadd.f32 %v4300, %v4477
        %4488 = vmatprep.subr.bf16.mxu0 0
        %4489 = vmatpush1.bf16.msra.mxu0 0
        %4490 = vmatprep.subr.bf16.mxu0 0
        %4491 = vmatpush1.bf16.msra.mxu0 0
        %4492 = vmatprep.subr.bf16.mxu0 0
        %4493 = vmatpush1.bf16.msra.mxu0 0
        %4494 = vmatprep.subr.bf16.mxu0 0
        %4495 = vmatpush1.bf16.msra.mxu0 0
        %4496 = vmatprep.subr.bf16.mxu0 0
        %4497 = vmatpush1.bf16.msra.mxu0 %v3214
        %4498 = vmatprep.subr.bf16.mxu0 0
        %4499 = vmatpush1.bf16.msra.mxu0 %v3213
        %4500 = vmatprep.subr.bf16.mxu0 0
        %4501 = vmatpush1.bf16.msra.mxu0 %v3212
        %4502 = vmatprep.subr.bf16.mxu0 0
        %4503 = vmatpush1.bf16.msra.mxu0 %v3211
        %4504 = vmatprep.subr.bf16.mxu0 0
        %4505 = vmatpush2.bf16.msra.mxu0 0
        %4506 = vmatprep.subr.bf16.mxu0 0
        %4507 = vmatpush2.bf16.msra.mxu0 0
        %4508 = vmatprep.subr.bf16.mxu0 0
        %4509 = vmatpush2.bf16.msra.mxu0 0
        %4510 = vmatprep.subr.bf16.mxu0 0
        %4511 = vmatpush2.bf16.msra.mxu0 0
        %4512 = vmatprep.subr.bf16.mxu0 0
        %4513 = vmatpush2.bf16.msra.mxu0 0
        %4514 = vmatprep.subr.bf16.mxu0 0
        %4515 = vmatpush2.bf16.msra.mxu0 0
        %4516 = vmatprep.subr.bf16.mxu0 0
        %4517 = vmatpush2.bf16.msra.mxu0 0
        %4518 = vmatprep.subr.bf16.mxu0 0
        %4519 = vmatpush2.bf16.msra.mxu0 0
        %4520 = vmatprep.mubr.bf16.mxu0 0
        %4521 = vmatmul.mubr.bf16.gmra.mxu0 %v2461
        %v4522 = vpop.f32.mrf.mxu0
        %v4523 = vadd.f32 0.0, %v4522
        %v4524 = vpop.f32.mrf.mxu0
        %v4525 = vpop.f32.mrf.mxu0
        %v4526 = vadd.f32 0.0, %v4525
        %v4527 = vpop.f32.mrf.mxu0
        %4528 = vmatprep.mubr.bf16.mxu0 0
        %4529 = vmatmul.mubr.bf16.gmra.mxu0 %v2464
        %v4530 = vpop.f32.mrf.mxu0
        %v4531 = vadd.f32 0.0, %v4530
        %v4532 = vpop.f32.mrf.mxu0
        %v4533 = vpop.f32.mrf.mxu0
        %v4534 = vadd.f32 0.0, %v4533
        %v4535 = vpop.f32.mrf.mxu0
        %4536 = vmatprep.mubr.bf16.mxu0 0
        %4537 = vmatmul.mubr.bf16.gmra.mxu0 %v2467
        %v4538 = vpop.f32.mrf.mxu0
        %v4539 = vadd.f32 0.0, %v4538
        %v4540 = vpop.f32.mrf.mxu0
        %v4541 = vpop.f32.mrf.mxu0
        %v4542 = vadd.f32 0.0, %v4541
        %v4543 = vpop.f32.mrf.mxu0
        %4544 = vmatprep.mubr.bf16.mxu0 0
        %4545 = vmatmul.mubr.bf16.gmra.mxu0 %v2470
        %v4546 = vpop.f32.mrf.mxu0
        %v4547 = vadd.f32 0.0, %v4546
        %v4548 = vpop.f32.mrf.mxu0
        %v4549 = vpop.f32.mrf.mxu0
        %v4550 = vadd.f32 0.0, %v4549
        %v4551 = vpop.f32.mrf.mxu0
        %4552 = vdwg.mxu0
        %v4553 = vpack.c.bf16 %v4526, %v4523
        %v4554 = vpack.c.bf16 %v4534, %v4531
        %v4555 = vpack.c.bf16 %v4542, %v4539
        %v4556 = vpack.c.bf16 %v4550, %v4547
        %s4557 = scalar_lea.vmem %s2, 544
        %v4558 = vld [vmem:[%s4557] sm:$0xf]
        %v4559 = vld [vmem:[%s4557 + $0x4] sm:$0xf]
        %v4560 = vld [vmem:[%s4557 + $0x8] sm:$0xf]
        %v4561 = vld [vmem:[%s4557 + $0xc] sm:$0xf]
        %v4562 = vld [vmem:[%s4557 + $0x10] sm:$0xf]
        %v4563 = vld [vmem:[%s4557 + $0x14] sm:$0xf]
        %v4564 = vld [vmem:[%s4557 + $0x18] sm:$0xf]
        %v4565 = vld [vmem:[%s4557 + $0x1c] sm:$0xf]
        %v4574 = vunpack.c.l.b16 %v4558
        %v4575 = vunpack.c.l.b16 %v4559
        %v4576 = vunpack.c.l.b16 %v4560
        %v4577 = vunpack.c.l.b16 %v4561
        %v4578 = vunpack.c.l.b16 %v4562
        %v4579 = vunpack.c.l.b16 %v4563
        %v4580 = vunpack.c.l.b16 %v4564
        %v4581 = vunpack.c.l.b16 %v4565
        %v4582 = vpack.c.b16 %v4575, %v4574
        %v4583 = vpack.c.b16 %v4577, %v4576
        %v4584 = vpack.c.b16 %v4579, %v4578
        %v4585 = vpack.c.b16 %v4581, %v4580
        %v4591 = vsel %vm898, %v4553, 0
        %v4594 = vsel %vm898, %v4554, 0
        %v4597 = vsel %vm898, %v4555, 0
        %v4600 = vsel %vm898, %v4556, 0
        %4602 = vmatprep.subr.bf16.mxu0 0
        %4603 = vmatpush1.bf16.msra.mxu0 0
        %4604 = vmatprep.subr.bf16.mxu0 0
        %4605 = vmatpush1.bf16.msra.mxu0 0
        %4606 = vmatprep.subr.bf16.mxu0 0
        %4607 = vmatpush1.bf16.msra.mxu0 0
        %4608 = vmatprep.subr.bf16.mxu0 0
        %4609 = vmatpush1.bf16.msra.mxu0 0
        %4610 = vmatprep.subr.bf16.mxu0 0
        %4611 = vmatpush1.bf16.msra.mxu0 %v4585
        %4612 = vmatprep.subr.bf16.mxu0 0
        %4613 = vmatpush1.bf16.msra.mxu0 %v4584
        %4614 = vmatprep.subr.bf16.mxu0 0
        %4615 = vmatpush1.bf16.msra.mxu0 %v4583
        %4616 = vmatprep.subr.bf16.mxu0 0
        %4617 = vmatpush1.bf16.msra.mxu0 %v4582
        %4618 = vmatprep.subr.bf16.mxu0 0
        %4619 = vmatpush2.bf16.msra.mxu0 0
        %4620 = vmatprep.subr.bf16.mxu0 0
        %4621 = vmatpush2.bf16.msra.mxu0 0
        %4622 = vmatprep.subr.bf16.mxu0 0
        %4623 = vmatpush2.bf16.msra.mxu0 0
        %4624 = vmatprep.subr.bf16.mxu0 0
        %4625 = vmatpush2.bf16.msra.mxu0 0
        %4626 = vmatprep.subr.bf16.mxu0 0
        %4627 = vmatpush2.bf16.msra.mxu0 0
        %4628 = vmatprep.subr.bf16.mxu0 0
        %4629 = vmatpush2.bf16.msra.mxu0 0
        %4630 = vmatprep.subr.bf16.mxu0 0
        %4631 = vmatpush2.bf16.msra.mxu0 0
        %4632 = vmatprep.subr.bf16.mxu0 0
        %4633 = vmatpush2.bf16.msra.mxu0 0
        %4634 = vmatprep.mubr.bf16.mxu0 0
        %4635 = vmatmul.mubr.bf16.gmra.mxu0 %v4591
        %v4636 = vpop.f32.mrf.mxu0
        %v4637 = vadd.f32 0.0, %v4636
        %v4638 = vpop.f32.mrf.mxu0
        %v4639 = vpop.f32.mrf.mxu0
        %v4640 = vadd.f32 0.0, %v4639
        %v4641 = vpop.f32.mrf.mxu0
        %4642 = vmatprep.mubr.bf16.mxu0 0
        %4643 = vmatmul.mubr.bf16.gmra.mxu0 %v4594
        %v4644 = vpop.f32.mrf.mxu0
        %v4645 = vadd.f32 0.0, %v4644
        %v4646 = vpop.f32.mrf.mxu0
        %v4647 = vpop.f32.mrf.mxu0
        %v4648 = vadd.f32 0.0, %v4647
        %v4649 = vpop.f32.mrf.mxu0
        %4650 = vmatprep.mubr.bf16.mxu0 0
        %4651 = vmatmul.mubr.bf16.gmra.mxu0 %v4597
        %v4652 = vpop.f32.mrf.mxu0
        %v4653 = vadd.f32 0.0, %v4652
        %v4654 = vpop.f32.mrf.mxu0
        %v4655 = vpop.f32.mrf.mxu0
        %v4656 = vadd.f32 0.0, %v4655
        %v4657 = vpop.f32.mrf.mxu0
        %4658 = vmatprep.mubr.bf16.mxu0 0
        %4659 = vmatmul.mubr.bf16.gmra.mxu0 %v4600
        %v4660 = vpop.f32.mrf.mxu0
        %v4661 = vadd.f32 0.0, %v4660
        %v4662 = vpop.f32.mrf.mxu0
        %v4663 = vpop.f32.mrf.mxu0
        %v4664 = vadd.f32 0.0, %v4663
        %v4665 = vpop.f32.mrf.mxu0
        %4666 = vdwg.mxu0
        %v4667 = vadd.f32 %v4480, %v4637
        %v4668 = vadd.f32 %v4481, %v4640
        %v4669 = vadd.f32 %v4482, %v4645
        %v4670 = vadd.f32 %v4483, %v4648
        %v4671 = vadd.f32 %v4484, %v4653
        %v4672 = vadd.f32 %v4485, %v4656
        %v4673 = vadd.f32 %v4486, %v4661
        %v4674 = vadd.f32 %v4487, %v4664
        %s4675 = scalar_lea.vmem %s4, 2
        %v4676 = vld [vmem:[%s4675] sm:$0x1]
        %v4678 = vlaneseq
        %v4679 = vshrl.u32 %v4678, 7
        %v4680 = vsub.s32 0, %v4679
        %v4681 = vrot.slane %v4676, %v4680
        %v4683 = vmul.f32 %v4667, %v4681
        %v4684 = vmul.f32 %v4668, %v4681
        %v4685 = vmul.f32 %v4669, %v4681
        %v4686 = vmul.f32 %v4670, %v4681
        %v4687 = vmul.f32 %v4671, %v4681
        %v4688 = vmul.f32 %v4672, %v4681
        %v4689 = vmul.f32 %v4673, %v4681
        %v4690 = vmul.f32 %v4674, %v4681
        %s4691 = scalar_lea.vmem %s5, 2
        %v4692 = vld [vmem:[%s4691] sm:$0x1]
        %v4694 = vlaneseq
        %v4695 = vshrl.u32 %v4694, 7
        %v4696 = vsub.s32 0, %v4695
        %v4697 = vrot.slane %v4692, %v4696
        %v4699 = vadd.f32 %v4683, %v4697
        %v4700 = vadd.f32 %v4684, %v4697
        %v4701 = vadd.f32 %v4685, %v4697
        %v4702 = vadd.f32 %v4686, %v4697
        %v4703 = vadd.f32 %v4687, %v4697
        %v4704 = vadd.f32 %v4688, %v4697
        %v4705 = vadd.f32 %v4689, %v4697
        %v4706 = vadd.f32 %v4690, %v4697
        %v4707 = vadd.f32 %v4699, %v1360
        %v4708 = vadd.f32 %v4700, %v1361
        %v4709 = vadd.f32 %v4701, %v1362
        %v4710 = vadd.f32 %v4702, %v1363
        %v4711 = vadd.f32 %v4703, %v1364
        %v4712 = vadd.f32 %v4704, %v1365
        %v4713 = vadd.f32 %v4705, %v1366
        %v4714 = vadd.f32 %v4706, %v1367
        %v4715 = vmax.f32 %v4707, 0.0
        %v4716 = vmax.f32 %v4708, 0.0
        %v4717 = vmax.f32 %v4709, 0.0
        %v4718 = vmax.f32 %v4710, 0.0
        %v4719 = vmax.f32 %v4711, 0.0
        %v4720 = vmax.f32 %v4712, 0.0
        %v4721 = vmax.f32 %v4713, 0.0
        %v4722 = vmax.f32 %v4714, 0.0
        %v4723 = vpack.c.bf16 %v4716, %v4715
        %v4724 = vpack.c.bf16 %v4718, %v4717
        %v4725 = vpack.c.bf16 %v4720, %v4719
        %v4726 = vpack.c.bf16 %v4722, %v4721
        %4727 = vmatprep.subr.bf16.mxu0 0
        %4728 = vmatpush1.bf16.msra.mxu0 0
        %4729 = vmatprep.subr.bf16.mxu0 0
        %4730 = vmatpush1.bf16.msra.mxu0 0
        %4731 = vmatprep.subr.bf16.mxu0 0
        %4732 = vmatpush1.bf16.msra.mxu0 0
        %4733 = vmatprep.subr.bf16.mxu0 0
        %4734 = vmatpush1.bf16.msra.mxu0 0
        %4735 = vmatprep.subr.bf16.mxu0 0
        %4736 = vmatpush1.bf16.msra.mxu0 %v4726
        %4737 = vmatprep.subr.bf16.mxu0 0
        %4738 = vmatpush1.bf16.msra.mxu0 %v4725
        %4739 = vmatprep.subr.bf16.mxu0 0
        %4740 = vmatpush1.bf16.msra.mxu0 %v4724
        %4741 = vmatprep.subr.bf16.mxu0 0
        %4742 = vmatpush1.bf16.msra.mxu0 %v4723
        %4743 = vmatprep.subr.bf16.mxu0 0
        %4744 = vmatpush2.bf16.msra.mxu0 0
        %4745 = vmatprep.subr.bf16.mxu0 0
        %4746 = vmatpush2.bf16.msra.mxu0 0
        %4747 = vmatprep.subr.bf16.mxu0 0
        %4748 = vmatpush2.bf16.msra.mxu0 0
        %4749 = vmatprep.subr.bf16.mxu0 0
        %4750 = vmatpush2.bf16.msra.mxu0 0
        %4751 = vmatprep.subr.bf16.mxu0 0
        %4752 = vmatpush2.bf16.msra.mxu0 0
        %4753 = vmatprep.subr.bf16.mxu0 0
        %4754 = vmatpush2.bf16.msra.mxu0 0
        %4755 = vmatprep.subr.bf16.mxu0 0
        %4756 = vmatpush2.bf16.msra.mxu0 0
        %4757 = vmatprep.subr.bf16.mxu0 0
        %4758 = vmatpush2.bf16.msra.mxu0 0
        %4759 = vmatprep.mubr.bf16.mxu0 0
        %4760 = vmatmul.mubr.bf16.gmra.mxu0 %v900
        %v4761 = vpop.f32.mrf.mxu0
        %v4762 = vadd.f32 0.0, %v4761
        %v4763 = vpop.f32.mrf.mxu0
        %v4764 = vpop.f32.mrf.mxu0
        %v4765 = vadd.f32 0.0, %v4764
        %v4766 = vpop.f32.mrf.mxu0
        %4767 = vmatprep.mubr.bf16.mxu0 0
        %4768 = vmatmul.mubr.bf16.gmra.mxu0 %v903
        %v4769 = vpop.f32.mrf.mxu0
        %v4770 = vadd.f32 0.0, %v4769
        %v4771 = vpop.f32.mrf.mxu0
        %v4772 = vpop.f32.mrf.mxu0
        %v4773 = vadd.f32 0.0, %v4772
        %v4774 = vpop.f32.mrf.mxu0
        %4775 = vmatprep.mubr.bf16.mxu0 0
        %4776 = vmatmul.mubr.bf16.gmra.mxu0 %v906
        %v4777 = vpop.f32.mrf.mxu0
        %v4778 = vadd.f32 0.0, %v4777
        %v4779 = vpop.f32.mrf.mxu0
        %v4780 = vpop.f32.mrf.mxu0
        %v4781 = vadd.f32 0.0, %v4780
        %v4782 = vpop.f32.mrf.mxu0
        %4783 = vmatprep.mubr.bf16.mxu0 0
        %4784 = vmatmul.mubr.bf16.gmra.mxu0 %v909
        %v4785 = vpop.f32.mrf.mxu0
        %v4786 = vadd.f32 0.0, %v4785
        %v4787 = vpop.f32.mrf.mxu0
        %v4788 = vpop.f32.mrf.mxu0
        %v4789 = vadd.f32 0.0, %v4788
        %v4790 = vpop.f32.mrf.mxu0
        %4791 = vdwg.mxu0
        %v4792 = vpack.c.bf16 %v4765, %v4762
        %v4793 = vpack.c.bf16 %v4773, %v4770
        %v4794 = vpack.c.bf16 %v4781, %v4778
        %v4795 = vpack.c.bf16 %v4789, %v4786
        %4796 = vmatprep.subr.bf16.mxu0 0
        %4797 = vmatpush1.bf16.msra.mxu0 0
        %4798 = vmatprep.subr.bf16.mxu0 0
        %4799 = vmatpush1.bf16.msra.mxu0 0
        %4800 = vmatprep.subr.bf16.mxu0 0
        %4801 = vmatpush1.bf16.msra.mxu0 0
        %4802 = vmatprep.subr.bf16.mxu0 0
        %4803 = vmatpush1.bf16.msra.mxu0 0
        %4804 = vmatprep.subr.bf16.mxu0 0
        %4805 = vmatpush1.bf16.msra.mxu0 %v4726
        %4806 = vmatprep.subr.bf16.mxu0 0
        %4807 = vmatpush1.bf16.msra.mxu0 %v4725
        %4808 = vmatprep.subr.bf16.mxu0 0
        %4809 = vmatpush1.bf16.msra.mxu0 %v4724
        %4810 = vmatprep.subr.bf16.mxu0 0
        %4811 = vmatpush1.bf16.msra.mxu0 %v4723
        %4812 = vmatprep.subr.bf16.mxu0 0
        %4813 = vmatpush2.bf16.msra.mxu0 0
        %4814 = vmatprep.subr.bf16.mxu0 0
        %4815 = vmatpush2.bf16.msra.mxu0 0
        %4816 = vmatprep.subr.bf16.mxu0 0
        %4817 = vmatpush2.bf16.msra.mxu0 0
        %4818 = vmatprep.subr.bf16.mxu0 0
        %4819 = vmatpush2.bf16.msra.mxu0 0
        %4820 = vmatprep.subr.bf16.mxu0 0
        %4821 = vmatpush2.bf16.msra.mxu0 0
        %4822 = vmatprep.subr.bf16.mxu0 0
        %4823 = vmatpush2.bf16.msra.mxu0 0
        %4824 = vmatprep.subr.bf16.mxu0 0
        %4825 = vmatpush2.bf16.msra.mxu0 0
        %4826 = vmatprep.subr.bf16.mxu0 0
        %4827 = vmatpush2.bf16.msra.mxu0 0
        %4828 = vmatprep.mubr.bf16.mxu0 0
        %4829 = vmatmul.mubr.bf16.gmra.mxu0 %v1462
        %v4830 = vpop.f32.mrf.mxu0
        %v4831 = vadd.f32 0.0, %v4830
        %v4832 = vpop.f32.mrf.mxu0
        %v4833 = vpop.f32.mrf.mxu0
        %v4834 = vadd.f32 0.0, %v4833
        %v4835 = vpop.f32.mrf.mxu0
        %4836 = vmatprep.mubr.bf16.mxu0 0
        %4837 = vmatmul.mubr.bf16.gmra.mxu0 %v1465
        %v4838 = vpop.f32.mrf.mxu0
        %v4839 = vadd.f32 0.0, %v4838
        %v4840 = vpop.f32.mrf.mxu0
        %v4841 = vpop.f32.mrf.mxu0
        %v4842 = vadd.f32 0.0, %v4841
        %v4843 = vpop.f32.mrf.mxu0
        %4844 = vmatprep.mubr.bf16.mxu0 0
        %4845 = vmatmul.mubr.bf16.gmra.mxu0 %v1468
        %v4846 = vpop.f32.mrf.mxu0
        %v4847 = vadd.f32 0.0, %v4846
        %v4848 = vpop.f32.mrf.mxu0
        %v4849 = vpop.f32.mrf.mxu0
        %v4850 = vadd.f32 0.0, %v4849
        %v4851 = vpop.f32.mrf.mxu0
        %4852 = vmatprep.mubr.bf16.mxu0 0
        %4853 = vmatmul.mubr.bf16.gmra.mxu0 %v1471
        %v4854 = vpop.f32.mrf.mxu0
        %v4855 = vadd.f32 0.0, %v4854
        %v4856 = vpop.f32.mrf.mxu0
        %v4857 = vpop.f32.mrf.mxu0
        %v4858 = vadd.f32 0.0, %v4857
        %v4859 = vpop.f32.mrf.mxu0
        %4860 = vdwg.mxu0
        %v4861 = vpack.c.bf16 %v4834, %v4831
        %v4862 = vpack.c.bf16 %v4842, %v4839
        %v4863 = vpack.c.bf16 %v4850, %v4847
        %v4864 = vpack.c.bf16 %v4858, %v4855
        %4865 = vmatprep.subr.bf16.mxu0 0
        %4866 = vmatpush1.bf16.msra.mxu0 0
        %4867 = vmatprep.subr.bf16.mxu0 0
        %4868 = vmatpush1.bf16.msra.mxu0 0
        %4869 = vmatprep.subr.bf16.mxu0 0
        %4870 = vmatpush1.bf16.msra.mxu0 0
        %4871 = vmatprep.subr.bf16.mxu0 0
        %4872 = vmatpush1.bf16.msra.mxu0 0
        %4873 = vmatprep.subr.bf16.mxu0 0
        %4874 = vmatpush1.bf16.msra.mxu0 %v4795
        %4875 = vmatprep.subr.bf16.mxu0 0
        %4876 = vmatpush1.bf16.msra.mxu0 %v4794
        %4877 = vmatprep.subr.bf16.mxu0 0
        %4878 = vmatpush1.bf16.msra.mxu0 %v4793
        %4879 = vmatprep.subr.bf16.mxu0 0
        %4880 = vmatpush1.bf16.msra.mxu0 %v4792
        %4881 = vmatprep.subr.bf16.mxu0 0
        %4882 = vmatpush2.bf16.msra.mxu0 0
        %4883 = vmatprep.subr.bf16.mxu0 0
        %4884 = vmatpush2.bf16.msra.mxu0 0
        %4885 = vmatprep.subr.bf16.mxu0 0
        %4886 = vmatpush2.bf16.msra.mxu0 0
        %4887 = vmatprep.subr.bf16.mxu0 0
        %4888 = vmatpush2.bf16.msra.mxu0 0
        %4889 = vmatprep.subr.bf16.mxu0 0
        %4890 = vmatpush2.bf16.msra.mxu0 0
        %4891 = vmatprep.subr.bf16.mxu0 0
        %4892 = vmatpush2.bf16.msra.mxu0 0
        %4893 = vmatprep.subr.bf16.mxu0 0
        %4894 = vmatpush2.bf16.msra.mxu0 0
        %4895 = vmatprep.subr.bf16.mxu0 0
        %4896 = vmatpush2.bf16.msra.mxu0 0
        %4897 = vmatprep.mubr.bf16.mxu0 0
        %4898 = vmatmul.mubr.bf16.gmra.mxu0 %v1062
        %v4899 = vpop.f32.mrf.mxu0
        %v4900 = vadd.f32 0.0, %v4899
        %v4901 = vpop.f32.mrf.mxu0
        %v4902 = vpop.f32.mrf.mxu0
        %v4903 = vadd.f32 0.0, %v4902
        %v4904 = vpop.f32.mrf.mxu0
        %4905 = vmatprep.mubr.bf16.mxu0 0
        %4906 = vmatmul.mubr.bf16.gmra.mxu0 %v1065
        %v4907 = vpop.f32.mrf.mxu0
        %v4908 = vadd.f32 0.0, %v4907
        %v4909 = vpop.f32.mrf.mxu0
        %v4910 = vpop.f32.mrf.mxu0
        %v4911 = vadd.f32 0.0, %v4910
        %v4912 = vpop.f32.mrf.mxu0
        %4913 = vmatprep.mubr.bf16.mxu0 0
        %4914 = vmatmul.mubr.bf16.gmra.mxu0 %v1068
        %v4915 = vpop.f32.mrf.mxu0
        %v4916 = vadd.f32 0.0, %v4915
        %v4917 = vpop.f32.mrf.mxu0
        %v4918 = vpop.f32.mrf.mxu0
        %v4919 = vadd.f32 0.0, %v4918
        %v4920 = vpop.f32.mrf.mxu0
        %4921 = vmatprep.mubr.bf16.mxu0 0
        %4922 = vmatmul.mubr.bf16.gmra.mxu0 %v1071
        %v4923 = vpop.f32.mrf.mxu0
        %v4924 = vadd.f32 0.0, %v4923
        %v4925 = vpop.f32.mrf.mxu0
        %v4926 = vpop.f32.mrf.mxu0
        %v4927 = vadd.f32 0.0, %v4926
        %v4928 = vpop.f32.mrf.mxu0
        %4929 = vdwg.mxu0
        %v4930 = vpack.c.bf16 %v4903, %v4900
        %v4931 = vpack.c.bf16 %v4911, %v4908
        %v4932 = vpack.c.bf16 %v4919, %v4916
        %v4933 = vpack.c.bf16 %v4927, %v4924
        %s4934 = scalar_lea.vmem %s2, 576
        %v4935 = vld [vmem:[%s4934] sm:$0xf]
        %v4936 = vld [vmem:[%s4934 + $0x4] sm:$0xf]
        %v4937 = vld [vmem:[%s4934 + $0x8] sm:$0xf]
        %v4938 = vld [vmem:[%s4934 + $0xc] sm:$0xf]
        %v4939 = vld [vmem:[%s4934 + $0x10] sm:$0xf]
        %v4940 = vld [vmem:[%s4934 + $0x14] sm:$0xf]
        %v4941 = vld [vmem:[%s4934 + $0x18] sm:$0xf]
        %v4942 = vld [vmem:[%s4934 + $0x1c] sm:$0xf]
        %4943 = vmatprep.subr.bf16.mxu0 0
        %4944 = vmatpush1.bf16.msra.mxu0 0
        %4945 = vmatprep.subr.bf16.mxu0 0
        %4946 = vmatpush1.bf16.msra.mxu0 0
        %4947 = vmatprep.subr.bf16.mxu0 0
        %4948 = vmatpush1.bf16.msra.mxu0 0
        %4949 = vmatprep.subr.bf16.mxu0 0
        %4950 = vmatpush1.bf16.msra.mxu0 0
        %4951 = vmatprep.subr.bf16.mxu0 0
        %4952 = vmatpush1.bf16.msra.mxu0 %v4726
        %4953 = vmatprep.subr.bf16.mxu0 0
        %4954 = vmatpush1.bf16.msra.mxu0 %v4725
        %4955 = vmatprep.subr.bf16.mxu0 0
        %4956 = vmatpush1.bf16.msra.mxu0 %v4724
        %4957 = vmatprep.subr.bf16.mxu0 0
        %4958 = vmatpush1.bf16.msra.mxu0 %v4723
        %4959 = vmatprep.subr.bf16.mxu0 0
        %4960 = vmatpush2.bf16.msra.mxu0 0
        %4961 = vmatprep.subr.bf16.mxu0 0
        %4962 = vmatpush2.bf16.msra.mxu0 0
        %4963 = vmatprep.subr.bf16.mxu0 0
        %4964 = vmatpush2.bf16.msra.mxu0 0
        %4965 = vmatprep.subr.bf16.mxu0 0
        %4966 = vmatpush2.bf16.msra.mxu0 0
        %4967 = vmatprep.subr.bf16.mxu0 0
        %4968 = vmatpush2.bf16.msra.mxu0 0
        %4969 = vmatprep.subr.bf16.mxu0 0
        %4970 = vmatpush2.bf16.msra.mxu0 0
        %4971 = vmatprep.subr.bf16.mxu0 0
        %4972 = vmatpush2.bf16.msra.mxu0 0
        %4973 = vmatprep.subr.bf16.mxu0 0
        %4974 = vmatpush2.bf16.msra.mxu0 0
        %4975 = vmatprep.mubr.bf16.mxu0 0
        %4976 = vmatmul.mubr.bf16.gmra.mxu0 %v1062
        %v4977 = vpop.f32.mrf.mxu0
        %v4978 = vadd.f32 0.0, %v4977
        %v4979 = vpop.f32.mrf.mxu0
        %v4980 = vpop.f32.mrf.mxu0
        %v4981 = vadd.f32 0.0, %v4980
        %v4982 = vpop.f32.mrf.mxu0
        %4983 = vmatprep.mubr.bf16.mxu0 0
        %4984 = vmatmul.mubr.bf16.gmra.mxu0 %v1065
        %v4985 = vpop.f32.mrf.mxu0
        %v4986 = vadd.f32 0.0, %v4985
        %v4987 = vpop.f32.mrf.mxu0
        %v4988 = vpop.f32.mrf.mxu0
        %v4989 = vadd.f32 0.0, %v4988
        %v4990 = vpop.f32.mrf.mxu0
        %4991 = vmatprep.mubr.bf16.mxu0 0
        %4992 = vmatmul.mubr.bf16.gmra.mxu0 %v1068
        %v4993 = vpop.f32.mrf.mxu0
        %v4994 = vadd.f32 0.0, %v4993
        %v4995 = vpop.f32.mrf.mxu0
        %v4996 = vpop.f32.mrf.mxu0
        %v4997 = vadd.f32 0.0, %v4996
        %v4998 = vpop.f32.mrf.mxu0
        %4999 = vmatprep.mubr.bf16.mxu0 0
        %5000 = vmatmul.mubr.bf16.gmra.mxu0 %v1071
        %v5001 = vpop.f32.mrf.mxu0
        %v5002 = vadd.f32 0.0, %v5001
        %v5003 = vpop.f32.mrf.mxu0
        %v5004 = vpop.f32.mrf.mxu0
        %v5005 = vadd.f32 0.0, %v5004
        %v5006 = vpop.f32.mrf.mxu0
        %5007 = vdwg.mxu0
        %v5008 = vpack.c.bf16 %v4981, %v4978
        %v5009 = vpack.c.bf16 %v4989, %v4986
        %v5010 = vpack.c.bf16 %v4997, %v4994
        %v5011 = vpack.c.bf16 %v5005, %v5002
        %s5012 = scalar_lea.vmem %s2, 608
        %v5013 = vld [vmem:[%s5012] sm:$0xf]
        %v5014 = vld [vmem:[%s5012 + $0x4] sm:$0xf]
        %v5015 = vld [vmem:[%s5012 + $0x8] sm:$0xf]
        %v5016 = vld [vmem:[%s5012 + $0xc] sm:$0xf]
        %v5017 = vld [vmem:[%s5012 + $0x10] sm:$0xf]
        %v5018 = vld [vmem:[%s5012 + $0x14] sm:$0xf]
        %v5019 = vld [vmem:[%s5012 + $0x18] sm:$0xf]
        %v5020 = vld [vmem:[%s5012 + $0x1c] sm:$0xf]
        %v5029 = vunpack.c.l.b16 %v5013
        %v5030 = vunpack.c.l.b16 %v5014
        %v5031 = vunpack.c.l.b16 %v5015
        %v5032 = vunpack.c.l.b16 %v5016
        %v5033 = vunpack.c.l.b16 %v5017
        %v5034 = vunpack.c.l.b16 %v5018
        %v5035 = vunpack.c.l.b16 %v5019
        %v5036 = vunpack.c.l.b16 %v5020
        %v5037 = vpack.c.b16 %v5030, %v5029
        %v5038 = vpack.c.b16 %v5032, %v5031
        %v5039 = vpack.c.b16 %v5034, %v5033
        %v5040 = vpack.c.b16 %v5036, %v5035
        %v5046 = vsel %vm898, %v5008, 0
        %v5049 = vsel %vm898, %v5009, 0
        %v5052 = vsel %vm898, %v5010, 0
        %v5055 = vsel %vm898, %v5011, 0
        %5057 = vmatprep.subr.bf16.mxu0 0
        %5058 = vmatpush1.bf16.msra.mxu0 0
        %5059 = vmatprep.subr.bf16.mxu0 0
        %5060 = vmatpush1.bf16.msra.mxu0 0
        %5061 = vmatprep.subr.bf16.mxu0 0
        %5062 = vmatpush1.bf16.msra.mxu0 0
        %5063 = vmatprep.subr.bf16.mxu0 0
        %5064 = vmatpush1.bf16.msra.mxu0 0
        %5065 = vmatprep.subr.bf16.mxu0 0
        %5066 = vmatpush1.bf16.msra.mxu0 %v5040
        %5067 = vmatprep.subr.bf16.mxu0 0
        %5068 = vmatpush1.bf16.msra.mxu0 %v5039
        %5069 = vmatprep.subr.bf16.mxu0 0
        %5070 = vmatpush1.bf16.msra.mxu0 %v5038
        %5071 = vmatprep.subr.bf16.mxu0 0
        %5072 = vmatpush1.bf16.msra.mxu0 %v5037
        %5073 = vmatprep.subr.bf16.mxu0 0
        %5074 = vmatpush2.bf16.msra.mxu0 0
        %5075 = vmatprep.subr.bf16.mxu0 0
        %5076 = vmatpush2.bf16.msra.mxu0 0
        %5077 = vmatprep.subr.bf16.mxu0 0
        %5078 = vmatpush2.bf16.msra.mxu0 0
        %5079 = vmatprep.subr.bf16.mxu0 0
        %5080 = vmatpush2.bf16.msra.mxu0 0
        %5081 = vmatprep.subr.bf16.mxu0 0
        %5082 = vmatpush2.bf16.msra.mxu0 0
        %5083 = vmatprep.subr.bf16.mxu0 0
        %5084 = vmatpush2.bf16.msra.mxu0 0
        %5085 = vmatprep.subr.bf16.mxu0 0
        %5086 = vmatpush2.bf16.msra.mxu0 0
        %5087 = vmatprep.subr.bf16.mxu0 0
        %5088 = vmatpush2.bf16.msra.mxu0 0
        %5089 = vmatprep.mubr.bf16.mxu0 0
        %5090 = vmatmul.mubr.bf16.gmra.mxu0 %v5046
        %v5091 = vpop.f32.mrf.mxu0
        %v5092 = vadd.f32 0.0, %v5091
        %v5093 = vpop.f32.mrf.mxu0
        %v5094 = vpop.f32.mrf.mxu0
        %v5095 = vadd.f32 0.0, %v5094
        %v5096 = vpop.f32.mrf.mxu0
        %5097 = vmatprep.mubr.bf16.mxu0 0
        %5098 = vmatmul.mubr.bf16.gmra.mxu0 %v5049
        %v5099 = vpop.f32.mrf.mxu0
        %v5100 = vadd.f32 0.0, %v5099
        %v5101 = vpop.f32.mrf.mxu0
        %v5102 = vpop.f32.mrf.mxu0
        %v5103 = vadd.f32 0.0, %v5102
        %v5104 = vpop.f32.mrf.mxu0
        %5105 = vmatprep.mubr.bf16.mxu0 0
        %5106 = vmatmul.mubr.bf16.gmra.mxu0 %v5052
        %v5107 = vpop.f32.mrf.mxu0
        %v5108 = vadd.f32 0.0, %v5107
        %v5109 = vpop.f32.mrf.mxu0
        %v5110 = vpop.f32.mrf.mxu0
        %v5111 = vadd.f32 0.0, %v5110
        %v5112 = vpop.f32.mrf.mxu0
        %5113 = vmatprep.mubr.bf16.mxu0 0
        %5114 = vmatmul.mubr.bf16.gmra.mxu0 %v5055
        %v5115 = vpop.f32.mrf.mxu0
        %v5116 = vadd.f32 0.0, %v5115
        %v5117 = vpop.f32.mrf.mxu0
        %v5118 = vpop.f32.mrf.mxu0
        %v5119 = vadd.f32 0.0, %v5118
        %v5120 = vpop.f32.mrf.mxu0
        %5121 = vdwg.mxu0
        %v5130 = vunpack.c.l.b16 %v4935
        %v5131 = vunpack.c.l.b16 %v4936
        %v5132 = vunpack.c.l.b16 %v4937
        %v5133 = vunpack.c.l.b16 %v4938
        %v5134 = vunpack.c.l.b16 %v4939
        %v5135 = vunpack.c.l.b16 %v4940
        %v5136 = vunpack.c.l.b16 %v4941
        %v5137 = vunpack.c.l.b16 %v4942
        %v5138 = vpack.c.b16 %v5131, %v5130
        %v5139 = vpack.c.b16 %v5133, %v5132
        %v5140 = vpack.c.b16 %v5135, %v5134
        %v5141 = vpack.c.b16 %v5137, %v5136
        %v5147 = vsel %vm898, %v4930, 0
        %v5150 = vsel %vm898, %v4931, 0
        %v5153 = vsel %vm898, %v4932, 0
        %v5156 = vsel %vm898, %v4933, 0
        %5158 = vmatprep.subr.bf16.mxu0 0
        %5159 = vmatpush1.bf16.msra.mxu0 0
        %5160 = vmatprep.subr.bf16.mxu0 0
        %5161 = vmatpush1.bf16.msra.mxu0 0
        %5162 = vmatprep.subr.bf16.mxu0 0
        %5163 = vmatpush1.bf16.msra.mxu0 0
        %5164 = vmatprep.subr.bf16.mxu0 0
        %5165 = vmatpush1.bf16.msra.mxu0 0
        %5166 = vmatprep.subr.bf16.mxu0 0
        %5167 = vmatpush1.bf16.msra.mxu0 %v5141
        %5168 = vmatprep.subr.bf16.mxu0 0
        %5169 = vmatpush1.bf16.msra.mxu0 %v5140
        %5170 = vmatprep.subr.bf16.mxu0 0
        %5171 = vmatpush1.bf16.msra.mxu0 %v5139
        %5172 = vmatprep.subr.bf16.mxu0 0
        %5173 = vmatpush1.bf16.msra.mxu0 %v5138
        %5174 = vmatprep.subr.bf16.mxu0 0
        %5175 = vmatpush2.bf16.msra.mxu0 0
        %5176 = vmatprep.subr.bf16.mxu0 0
        %5177 = vmatpush2.bf16.msra.mxu0 0
        %5178 = vmatprep.subr.bf16.mxu0 0
        %5179 = vmatpush2.bf16.msra.mxu0 0
        %5180 = vmatprep.subr.bf16.mxu0 0
        %5181 = vmatpush2.bf16.msra.mxu0 0
        %5182 = vmatprep.subr.bf16.mxu0 0
        %5183 = vmatpush2.bf16.msra.mxu0 0
        %5184 = vmatprep.subr.bf16.mxu0 0
        %5185 = vmatpush2.bf16.msra.mxu0 0
        %5186 = vmatprep.subr.bf16.mxu0 0
        %5187 = vmatpush2.bf16.msra.mxu0 0
        %5188 = vmatprep.subr.bf16.mxu0 0
        %5189 = vmatpush2.bf16.msra.mxu0 0
        %5190 = vmatprep.mubr.bf16.mxu0 0
        %5191 = vmatmul.mubr.bf16.gmra.mxu0 %v5147
        %v5192 = vpop.f32.mrf.mxu0
        %v5193 = vadd.f32 %v5092, %v5192
        %v5194 = vpop.f32.mrf.mxu0
        %v5195 = vpop.f32.mrf.mxu0
        %v5196 = vadd.f32 %v5095, %v5195
        %v5197 = vpop.f32.mrf.mxu0
        %5198 = vmatprep.mubr.bf16.mxu0 0
        %5199 = vmatmul.mubr.bf16.gmra.mxu0 %v5150
        %v5200 = vpop.f32.mrf.mxu0
        %v5201 = vadd.f32 %v5100, %v5200
        %v5202 = vpop.f32.mrf.mxu0
        %v5203 = vpop.f32.mrf.mxu0
        %v5204 = vadd.f32 %v5103, %v5203
        %v5205 = vpop.f32.mrf.mxu0
        %5206 = vmatprep.mubr.bf16.mxu0 0
        %5207 = vmatmul.mubr.bf16.gmra.mxu0 %v5153
        %v5208 = vpop.f32.mrf.mxu0
        %v5209 = vadd.f32 %v5108, %v5208
        %v5210 = vpop.f32.mrf.mxu0
        %v5211 = vpop.f32.mrf.mxu0
        %v5212 = vadd.f32 %v5111, %v5211
        %v5213 = vpop.f32.mrf.mxu0
        %5214 = vmatprep.mubr.bf16.mxu0 0
        %5215 = vmatmul.mubr.bf16.gmra.mxu0 %v5156
        %v5216 = vpop.f32.mrf.mxu0
        %v5217 = vadd.f32 %v5116, %v5216
        %v5218 = vpop.f32.mrf.mxu0
        %v5219 = vpop.f32.mrf.mxu0
        %v5220 = vadd.f32 %v5119, %v5219
        %v5221 = vpop.f32.mrf.mxu0
        %5222 = vdwg.mxu0
        %5223 = vmatprep.subr.bf16.mxu0 0
        %5224 = vmatpush1.bf16.msra.mxu0 0
        %5225 = vmatprep.subr.bf16.mxu0 0
        %5226 = vmatpush1.bf16.msra.mxu0 0
        %5227 = vmatprep.subr.bf16.mxu0 0
        %5228 = vmatpush1.bf16.msra.mxu0 0
        %5229 = vmatprep.subr.bf16.mxu0 0
        %5230 = vmatpush1.bf16.msra.mxu0 0
        %5231 = vmatprep.subr.bf16.mxu0 0
        %5232 = vmatpush1.bf16.msra.mxu0 %v4864
        %5233 = vmatprep.subr.bf16.mxu0 0
        %5234 = vmatpush1.bf16.msra.mxu0 %v4863
        %5235 = vmatprep.subr.bf16.mxu0 0
        %5236 = vmatpush1.bf16.msra.mxu0 %v4862
        %5237 = vmatprep.subr.bf16.mxu0 0
        %5238 = vmatpush1.bf16.msra.mxu0 %v4861
        %5239 = vmatprep.subr.bf16.mxu0 0
        %5240 = vmatpush2.bf16.msra.mxu0 0
        %5241 = vmatprep.subr.bf16.mxu0 0
        %5242 = vmatpush2.bf16.msra.mxu0 0
        %5243 = vmatprep.subr.bf16.mxu0 0
        %5244 = vmatpush2.bf16.msra.mxu0 0
        %5245 = vmatprep.subr.bf16.mxu0 0
        %5246 = vmatpush2.bf16.msra.mxu0 0
        %5247 = vmatprep.subr.bf16.mxu0 0
        %5248 = vmatpush2.bf16.msra.mxu0 0
        %5249 = vmatprep.subr.bf16.mxu0 0
        %5250 = vmatpush2.bf16.msra.mxu0 0
        %5251 = vmatprep.subr.bf16.mxu0 0
        %5252 = vmatpush2.bf16.msra.mxu0 0
        %5253 = vmatprep.subr.bf16.mxu0 0
        %5254 = vmatpush2.bf16.msra.mxu0 0
        %5255 = vmatprep.mubr.bf16.mxu0 0
        %5256 = vmatmul.mubr.bf16.gmra.mxu0 %v1062
        %v5257 = vpop.f32.mrf.mxu0
        %v5258 = vadd.f32 0.0, %v5257
        %v5259 = vpop.f32.mrf.mxu0
        %v5260 = vpop.f32.mrf.mxu0
        %v5261 = vadd.f32 0.0, %v5260
        %v5262 = vpop.f32.mrf.mxu0
        %5263 = vmatprep.mubr.bf16.mxu0 0
        %5264 = vmatmul.mubr.bf16.gmra.mxu0 %v1065
        %v5265 = vpop.f32.mrf.mxu0
        %v5266 = vadd.f32 0.0, %v5265
        %v5267 = vpop.f32.mrf.mxu0
        %v5268 = vpop.f32.mrf.mxu0
        %v5269 = vadd.f32 0.0, %v5268
        %v5270 = vpop.f32.mrf.mxu0
        %5271 = vmatprep.mubr.bf16.mxu0 0
        %5272 = vmatmul.mubr.bf16.gmra.mxu0 %v1068
        %v5273 = vpop.f32.mrf.mxu0
        %v5274 = vadd.f32 0.0, %v5273
        %v5275 = vpop.f32.mrf.mxu0
        %v5276 = vpop.f32.mrf.mxu0
        %v5277 = vadd.f32 0.0, %v5276
        %v5278 = vpop.f32.mrf.mxu0
        %5279 = vmatprep.mubr.bf16.mxu0 0
        %5280 = vmatmul.mubr.bf16.gmra.mxu0 %v1071
        %v5281 = vpop.f32.mrf.mxu0
        %v5282 = vadd.f32 0.0, %v5281
        %v5283 = vpop.f32.mrf.mxu0
        %v5284 = vpop.f32.mrf.mxu0
        %v5285 = vadd.f32 0.0, %v5284
        %v5286 = vpop.f32.mrf.mxu0
        %5287 = vdwg.mxu0
        %v5288 = vpack.c.bf16 %v5261, %v5258
        %v5289 = vpack.c.bf16 %v5269, %v5266
        %v5290 = vpack.c.bf16 %v5277, %v5274
        %v5291 = vpack.c.bf16 %v5285, %v5282
        %s5292 = scalar_lea.vmem %s2, 640
        %v5293 = vld [vmem:[%s5292] sm:$0xf]
        %v5294 = vld [vmem:[%s5292 + $0x4] sm:$0xf]
        %v5295 = vld [vmem:[%s5292 + $0x8] sm:$0xf]
        %v5296 = vld [vmem:[%s5292 + $0xc] sm:$0xf]
        %v5297 = vld [vmem:[%s5292 + $0x10] sm:$0xf]
        %v5298 = vld [vmem:[%s5292 + $0x14] sm:$0xf]
        %v5299 = vld [vmem:[%s5292 + $0x18] sm:$0xf]
        %v5300 = vld [vmem:[%s5292 + $0x1c] sm:$0xf]
        %v5309 = vunpack.c.l.b16 %v5293
        %v5310 = vunpack.c.l.b16 %v5294
        %v5311 = vunpack.c.l.b16 %v5295
        %v5312 = vunpack.c.l.b16 %v5296
        %v5313 = vunpack.c.l.b16 %v5297
        %v5314 = vunpack.c.l.b16 %v5298
        %v5315 = vunpack.c.l.b16 %v5299
        %v5316 = vunpack.c.l.b16 %v5300
        %v5317 = vpack.c.b16 %v5310, %v5309
        %v5318 = vpack.c.b16 %v5312, %v5311
        %v5319 = vpack.c.b16 %v5314, %v5313
        %v5320 = vpack.c.b16 %v5316, %v5315
        %v5326 = vsel %vm898, %v5288, 0
        %v5329 = vsel %vm898, %v5289, 0
        %v5332 = vsel %vm898, %v5290, 0
        %v5335 = vsel %vm898, %v5291, 0
        %5337 = vmatprep.subr.bf16.mxu0 0
        %5338 = vmatpush1.bf16.msra.mxu0 0
        %5339 = vmatprep.subr.bf16.mxu0 0
        %5340 = vmatpush1.bf16.msra.mxu0 0
        %5341 = vmatprep.subr.bf16.mxu0 0
        %5342 = vmatpush1.bf16.msra.mxu0 0
        %5343 = vmatprep.subr.bf16.mxu0 0
        %5344 = vmatpush1.bf16.msra.mxu0 0
        %5345 = vmatprep.subr.bf16.mxu0 0
        %5346 = vmatpush1.bf16.msra.mxu0 %v5320
        %5347 = vmatprep.subr.bf16.mxu0 0
        %5348 = vmatpush1.bf16.msra.mxu0 %v5319
        %5349 = vmatprep.subr.bf16.mxu0 0
        %5350 = vmatpush1.bf16.msra.mxu0 %v5318
        %5351 = vmatprep.subr.bf16.mxu0 0
        %5352 = vmatpush1.bf16.msra.mxu0 %v5317
        %5353 = vmatprep.subr.bf16.mxu0 0
        %5354 = vmatpush2.bf16.msra.mxu0 0
        %5355 = vmatprep.subr.bf16.mxu0 0
        %5356 = vmatpush2.bf16.msra.mxu0 0
        %5357 = vmatprep.subr.bf16.mxu0 0
        %5358 = vmatpush2.bf16.msra.mxu0 0
        %5359 = vmatprep.subr.bf16.mxu0 0
        %5360 = vmatpush2.bf16.msra.mxu0 0
        %5361 = vmatprep.subr.bf16.mxu0 0
        %5362 = vmatpush2.bf16.msra.mxu0 0
        %5363 = vmatprep.subr.bf16.mxu0 0
        %5364 = vmatpush2.bf16.msra.mxu0 0
        %5365 = vmatprep.subr.bf16.mxu0 0
        %5366 = vmatpush2.bf16.msra.mxu0 0
        %5367 = vmatprep.subr.bf16.mxu0 0
        %5368 = vmatpush2.bf16.msra.mxu0 0
        %5369 = vmatprep.mubr.bf16.mxu0 0
        %5370 = vmatmul.mubr.bf16.gmra.mxu0 %v5326
        %v5371 = vpop.f32.mrf.mxu0
        %v5372 = vadd.f32 0.0, %v5371
        %v5373 = vpop.f32.mrf.mxu0
        %v5374 = vpop.f32.mrf.mxu0
        %v5375 = vadd.f32 0.0, %v5374
        %v5376 = vpop.f32.mrf.mxu0
        %5377 = vmatprep.mubr.bf16.mxu0 0
        %5378 = vmatmul.mubr.bf16.gmra.mxu0 %v5329
        %v5379 = vpop.f32.mrf.mxu0
        %v5380 = vadd.f32 0.0, %v5379
        %v5381 = vpop.f32.mrf.mxu0
        %v5382 = vpop.f32.mrf.mxu0
        %v5383 = vadd.f32 0.0, %v5382
        %v5384 = vpop.f32.mrf.mxu0
        %5385 = vmatprep.mubr.bf16.mxu0 0
        %5386 = vmatmul.mubr.bf16.gmra.mxu0 %v5332
        %v5387 = vpop.f32.mrf.mxu0
        %v5388 = vadd.f32 0.0, %v5387
        %v5389 = vpop.f32.mrf.mxu0
        %v5390 = vpop.f32.mrf.mxu0
        %v5391 = vadd.f32 0.0, %v5390
        %v5392 = vpop.f32.mrf.mxu0
        %5393 = vmatprep.mubr.bf16.mxu0 0
        %5394 = vmatmul.mubr.bf16.gmra.mxu0 %v5335
        %v5395 = vpop.f32.mrf.mxu0
        %v5396 = vadd.f32 0.0, %v5395
        %v5397 = vpop.f32.mrf.mxu0
        %v5398 = vpop.f32.mrf.mxu0
        %v5399 = vadd.f32 0.0, %v5398
        %v5400 = vpop.f32.mrf.mxu0
        %5401 = vdwg.mxu0
        %v5402 = vadd.f32 %v5193, %v5372
        %v5403 = vadd.f32 %v5196, %v5375
        %v5404 = vadd.f32 %v5201, %v5380
        %v5405 = vadd.f32 %v5204, %v5383
        %v5406 = vadd.f32 %v5209, %v5388
        %v5407 = vadd.f32 %v5212, %v5391
        %v5408 = vadd.f32 %v5217, %v5396
        %v5409 = vadd.f32 %v5220, %v5399
        %s5410 = scalar_lea.vmem %s2, 672
        %v5411 = vld [vmem:[%s5410] sm:$0xf]
        %v5412 = vld [vmem:[%s5410 + $0x4] sm:$0xf]
        %v5413 = vld [vmem:[%s5410 + $0x8] sm:$0xf]
        %v5414 = vld [vmem:[%s5410 + $0xc] sm:$0xf]
        %v5415 = vld [vmem:[%s5410 + $0x10] sm:$0xf]
        %v5416 = vld [vmem:[%s5410 + $0x14] sm:$0xf]
        %v5417 = vld [vmem:[%s5410 + $0x18] sm:$0xf]
        %v5418 = vld [vmem:[%s5410 + $0x1c] sm:$0xf]
        %v5427 = vunpack.c.l.b16 %v5411
        %v5428 = vunpack.c.l.b16 %v5412
        %v5429 = vunpack.c.l.b16 %v5413
        %v5430 = vunpack.c.l.b16 %v5414
        %v5431 = vunpack.c.l.b16 %v5415
        %v5432 = vunpack.c.l.b16 %v5416
        %v5433 = vunpack.c.l.b16 %v5417
        %v5434 = vunpack.c.l.b16 %v5418
        %v5435 = vpack.c.b16 %v5428, %v5427
        %v5436 = vpack.c.b16 %v5430, %v5429
        %v5437 = vpack.c.b16 %v5432, %v5431
        %v5438 = vpack.c.b16 %v5434, %v5433
        %v5444 = vsel %vm898, %v4792, 0
        %v5447 = vsel %vm898, %v4793, 0
        %v5450 = vsel %vm898, %v4794, 0
        %v5453 = vsel %vm898, %v4795, 0
        %5455 = vmatprep.subr.bf16.mxu0 0
        %5456 = vmatpush1.bf16.msra.mxu0 0
        %5457 = vmatprep.subr.bf16.mxu0 0
        %5458 = vmatpush1.bf16.msra.mxu0 0
        %5459 = vmatprep.subr.bf16.mxu0 0
        %5460 = vmatpush1.bf16.msra.mxu0 0
        %5461 = vmatprep.subr.bf16.mxu0 0
        %5462 = vmatpush1.bf16.msra.mxu0 0
        %5463 = vmatprep.subr.bf16.mxu0 0
        %5464 = vmatpush1.bf16.msra.mxu0 %v5438
        %5465 = vmatprep.subr.bf16.mxu0 0
        %5466 = vmatpush1.bf16.msra.mxu0 %v5437
        %5467 = vmatprep.subr.bf16.mxu0 0
        %5468 = vmatpush1.bf16.msra.mxu0 %v5436
        %5469 = vmatprep.subr.bf16.mxu0 0
        %5470 = vmatpush1.bf16.msra.mxu0 %v5435
        %5471 = vmatprep.subr.bf16.mxu0 0
        %5472 = vmatpush2.bf16.msra.mxu0 0
        %5473 = vmatprep.subr.bf16.mxu0 0
        %5474 = vmatpush2.bf16.msra.mxu0 0
        %5475 = vmatprep.subr.bf16.mxu0 0
        %5476 = vmatpush2.bf16.msra.mxu0 0
        %5477 = vmatprep.subr.bf16.mxu0 0
        %5478 = vmatpush2.bf16.msra.mxu0 0
        %5479 = vmatprep.subr.bf16.mxu0 0
        %5480 = vmatpush2.bf16.msra.mxu0 0
        %5481 = vmatprep.subr.bf16.mxu0 0
        %5482 = vmatpush2.bf16.msra.mxu0 0
        %5483 = vmatprep.subr.bf16.mxu0 0
        %5484 = vmatpush2.bf16.msra.mxu0 0
        %5485 = vmatprep.subr.bf16.mxu0 0
        %5486 = vmatpush2.bf16.msra.mxu0 0
        %5487 = vmatprep.mubr.bf16.mxu0 0
        %5488 = vmatmul.mubr.bf16.gmra.mxu0 %v5444
        %v5489 = vpop.f32.mrf.mxu0
        %v5490 = vadd.f32 0.0, %v5489
        %v5491 = vpop.f32.mrf.mxu0
        %v5492 = vpop.f32.mrf.mxu0
        %v5493 = vadd.f32 0.0, %v5492
        %v5494 = vpop.f32.mrf.mxu0
        %5495 = vmatprep.mubr.bf16.mxu0 0
        %5496 = vmatmul.mubr.bf16.gmra.mxu0 %v5447
        %v5497 = vpop.f32.mrf.mxu0
        %v5498 = vadd.f32 0.0, %v5497
        %v5499 = vpop.f32.mrf.mxu0
        %v5500 = vpop.f32.mrf.mxu0
        %v5501 = vadd.f32 0.0, %v5500
        %v5502 = vpop.f32.mrf.mxu0
        %5503 = vmatprep.mubr.bf16.mxu0 0
        %5504 = vmatmul.mubr.bf16.gmra.mxu0 %v5450
        %v5505 = vpop.f32.mrf.mxu0
        %v5506 = vadd.f32 0.0, %v5505
        %v5507 = vpop.f32.mrf.mxu0
        %v5508 = vpop.f32.mrf.mxu0
        %v5509 = vadd.f32 0.0, %v5508
        %v5510 = vpop.f32.mrf.mxu0
        %5511 = vmatprep.mubr.bf16.mxu0 0
        %5512 = vmatmul.mubr.bf16.gmra.mxu0 %v5453
        %v5513 = vpop.f32.mrf.mxu0
        %v5514 = vadd.f32 0.0, %v5513
        %v5515 = vpop.f32.mrf.mxu0
        %v5516 = vpop.f32.mrf.mxu0
        %v5517 = vadd.f32 0.0, %v5516
        %v5518 = vpop.f32.mrf.mxu0
        %5519 = vdwg.mxu0
        %v5520 = vadd.f32 %v5402, %v5490
        %v5521 = vadd.f32 %v5403, %v5493
        %v5522 = vadd.f32 %v5404, %v5498
        %v5523 = vadd.f32 %v5405, %v5501
        %v5524 = vadd.f32 %v5406, %v5506
        %v5525 = vadd.f32 %v5407, %v5509
        %v5526 = vadd.f32 %v5408, %v5514
        %v5527 = vadd.f32 %v5409, %v5517
        %s5528 = scalar_lea.vmem %s2, 704
        %v5529 = vld [vmem:[%s5528] sm:$0xf]
        %v5530 = vld [vmem:[%s5528 + $0x4] sm:$0xf]
        %v5531 = vld [vmem:[%s5528 + $0x8] sm:$0xf]
        %v5532 = vld [vmem:[%s5528 + $0xc] sm:$0xf]
        %v5533 = vld [vmem:[%s5528 + $0x10] sm:$0xf]
        %v5534 = vld [vmem:[%s5528 + $0x14] sm:$0xf]
        %v5535 = vld [vmem:[%s5528 + $0x18] sm:$0xf]
        %v5536 = vld [vmem:[%s5528 + $0x1c] sm:$0xf]
        %v5545 = vunpack.c.l.b16 %v5529
        %v5546 = vunpack.c.l.b16 %v5530
        %v5547 = vunpack.c.l.b16 %v5531
        %v5548 = vunpack.c.l.b16 %v5532
        %v5549 = vunpack.c.l.b16 %v5533
        %v5550 = vunpack.c.l.b16 %v5534
        %v5551 = vunpack.c.l.b16 %v5535
        %v5552 = vunpack.c.l.b16 %v5536
        %v5553 = vpack.c.b16 %v5546, %v5545
        %v5554 = vpack.c.b16 %v5548, %v5547
        %v5555 = vpack.c.b16 %v5550, %v5549
        %v5556 = vpack.c.b16 %v5552, %v5551
        %v5562 = vsel %vm898, %v4723, 0
        %v5565 = vsel %vm898, %v4724, 0
        %v5568 = vsel %vm898, %v4725, 0
        %v5571 = vsel %vm898, %v4726, 0
        %5573 = vmatprep.subr.bf16.mxu0 0
        %5574 = vmatpush1.bf16.msra.mxu0 0
        %5575 = vmatprep.subr.bf16.mxu0 0
        %5576 = vmatpush1.bf16.msra.mxu0 0
        %5577 = vmatprep.subr.bf16.mxu0 0
        %5578 = vmatpush1.bf16.msra.mxu0 0
        %5579 = vmatprep.subr.bf16.mxu0 0
        %5580 = vmatpush1.bf16.msra.mxu0 0
        %5581 = vmatprep.subr.bf16.mxu0 0
        %5582 = vmatpush1.bf16.msra.mxu0 %v5556
        %5583 = vmatprep.subr.bf16.mxu0 0
        %5584 = vmatpush1.bf16.msra.mxu0 %v5555
        %5585 = vmatprep.subr.bf16.mxu0 0
        %5586 = vmatpush1.bf16.msra.mxu0 %v5554
        %5587 = vmatprep.subr.bf16.mxu0 0
        %5588 = vmatpush1.bf16.msra.mxu0 %v5553
        %5589 = vmatprep.subr.bf16.mxu0 0
        %5590 = vmatpush2.bf16.msra.mxu0 0
        %5591 = vmatprep.subr.bf16.mxu0 0
        %5592 = vmatpush2.bf16.msra.mxu0 0
        %5593 = vmatprep.subr.bf16.mxu0 0
        %5594 = vmatpush2.bf16.msra.mxu0 0
        %5595 = vmatprep.subr.bf16.mxu0 0
        %5596 = vmatpush2.bf16.msra.mxu0 0
        %5597 = vmatprep.subr.bf16.mxu0 0
        %5598 = vmatpush2.bf16.msra.mxu0 0
        %5599 = vmatprep.subr.bf16.mxu0 0
        %5600 = vmatpush2.bf16.msra.mxu0 0
        %5601 = vmatprep.subr.bf16.mxu0 0
        %5602 = vmatpush2.bf16.msra.mxu0 0
        %5603 = vmatprep.subr.bf16.mxu0 0
        %5604 = vmatpush2.bf16.msra.mxu0 0
        %5605 = vmatprep.mubr.bf16.mxu0 0
        %5606 = vmatmul.mubr.bf16.gmra.mxu0 %v5562
        %v5607 = vpop.f32.mrf.mxu0
        %v5608 = vadd.f32 0.0, %v5607
        %v5609 = vpop.f32.mrf.mxu0
        %v5610 = vpop.f32.mrf.mxu0
        %v5611 = vadd.f32 0.0, %v5610
        %v5612 = vpop.f32.mrf.mxu0
        %5613 = vmatprep.mubr.bf16.mxu0 0
        %5614 = vmatmul.mubr.bf16.gmra.mxu0 %v5565
        %v5615 = vpop.f32.mrf.mxu0
        %v5616 = vadd.f32 0.0, %v5615
        %v5617 = vpop.f32.mrf.mxu0
        %v5618 = vpop.f32.mrf.mxu0
        %v5619 = vadd.f32 0.0, %v5618
        %v5620 = vpop.f32.mrf.mxu0
        %5621 = vmatprep.mubr.bf16.mxu0 0
        %5622 = vmatmul.mubr.bf16.gmra.mxu0 %v5568
        %v5623 = vpop.f32.mrf.mxu0
        %v5624 = vadd.f32 0.0, %v5623
        %v5625 = vpop.f32.mrf.mxu0
        %v5626 = vpop.f32.mrf.mxu0
        %v5627 = vadd.f32 0.0, %v5626
        %v5628 = vpop.f32.mrf.mxu0
        %5629 = vmatprep.mubr.bf16.mxu0 0
        %5630 = vmatmul.mubr.bf16.gmra.mxu0 %v5571
        %v5631 = vpop.f32.mrf.mxu0
        %v5632 = vadd.f32 0.0, %v5631
        %v5633 = vpop.f32.mrf.mxu0
        %v5634 = vpop.f32.mrf.mxu0
        %v5635 = vadd.f32 0.0, %v5634
        %v5636 = vpop.f32.mrf.mxu0
        %5637 = vdwg.mxu0
        %v5638 = vadd.f32 %v5520, %v5608
        %v5639 = vadd.f32 %v5521, %v5611
        %v5640 = vadd.f32 %v5522, %v5616
        %v5641 = vadd.f32 %v5523, %v5619
        %v5642 = vadd.f32 %v5524, %v5624
        %v5643 = vadd.f32 %v5525, %v5627
        %v5644 = vadd.f32 %v5526, %v5632
        %v5645 = vadd.f32 %v5527, %v5635
        %s5646 = scalar_lea.vmem %s2, 736
        %v5647 = vld [vmem:[%s5646] sm:$0xf]
        %v5648 = vld [vmem:[%s5646 + $0x4] sm:$0xf]
        %v5649 = vld [vmem:[%s5646 + $0x8] sm:$0xf]
        %v5650 = vld [vmem:[%s5646 + $0xc] sm:$0xf]
        %v5651 = vld [vmem:[%s5646 + $0x10] sm:$0xf]
        %v5652 = vld [vmem:[%s5646 + $0x14] sm:$0xf]
        %v5653 = vld [vmem:[%s5646 + $0x18] sm:$0xf]
        %v5654 = vld [vmem:[%s5646 + $0x1c] sm:$0xf]
        %v5663 = vunpack.c.l.b16 %v5647
        %v5664 = vunpack.c.l.b16 %v5648
        %v5665 = vunpack.c.l.b16 %v5649
        %v5666 = vunpack.c.l.b16 %v5650
        %v5667 = vunpack.c.l.b16 %v5651
        %v5668 = vunpack.c.l.b16 %v5652
        %v5669 = vunpack.c.l.b16 %v5653
        %v5670 = vunpack.c.l.b16 %v5654
        %v5671 = vpack.c.b16 %v5664, %v5663
        %v5672 = vpack.c.b16 %v5666, %v5665
        %v5673 = vpack.c.b16 %v5668, %v5667
        %v5674 = vpack.c.b16 %v5670, %v5669
        %v5680 = vsel %vm898, %v4861, 0
        %v5683 = vsel %vm898, %v4862, 0
        %v5686 = vsel %vm898, %v4863, 0
        %v5689 = vsel %vm898, %v4864, 0
        %5691 = vmatprep.subr.bf16.mxu0 0
        %5692 = vmatpush1.bf16.msra.mxu0 0
        %5693 = vmatprep.subr.bf16.mxu0 0
        %5694 = vmatpush1.bf16.msra.mxu0 0
        %5695 = vmatprep.subr.bf16.mxu0 0
        %5696 = vmatpush1.bf16.msra.mxu0 0
        %5697 = vmatprep.subr.bf16.mxu0 0
        %5698 = vmatpush1.bf16.msra.mxu0 0
        %5699 = vmatprep.subr.bf16.mxu0 0
        %5700 = vmatpush1.bf16.msra.mxu0 %v5674
        %5701 = vmatprep.subr.bf16.mxu0 0
        %5702 = vmatpush1.bf16.msra.mxu0 %v5673
        %5703 = vmatprep.subr.bf16.mxu0 0
        %5704 = vmatpush1.bf16.msra.mxu0 %v5672
        %5705 = vmatprep.subr.bf16.mxu0 0
        %5706 = vmatpush1.bf16.msra.mxu0 %v5671
        %5707 = vmatprep.subr.bf16.mxu0 0
        %5708 = vmatpush2.bf16.msra.mxu0 0
        %5709 = vmatprep.subr.bf16.mxu0 0
        %5710 = vmatpush2.bf16.msra.mxu0 0
        %5711 = vmatprep.subr.bf16.mxu0 0
        %5712 = vmatpush2.bf16.msra.mxu0 0
        %5713 = vmatprep.subr.bf16.mxu0 0
        %5714 = vmatpush2.bf16.msra.mxu0 0
        %5715 = vmatprep.subr.bf16.mxu0 0
        %5716 = vmatpush2.bf16.msra.mxu0 0
        %5717 = vmatprep.subr.bf16.mxu0 0
        %5718 = vmatpush2.bf16.msra.mxu0 0
        %5719 = vmatprep.subr.bf16.mxu0 0
        %5720 = vmatpush2.bf16.msra.mxu0 0
        %5721 = vmatprep.subr.bf16.mxu0 0
        %5722 = vmatpush2.bf16.msra.mxu0 0
        %5723 = vmatprep.mubr.bf16.mxu0 0
        %5724 = vmatmul.mubr.bf16.gmra.mxu0 %v5680
        %v5725 = vpop.f32.mrf.mxu0
        %v5726 = vadd.f32 0.0, %v5725
        %v5727 = vpop.f32.mrf.mxu0
        %v5728 = vpop.f32.mrf.mxu0
        %v5729 = vadd.f32 0.0, %v5728
        %v5730 = vpop.f32.mrf.mxu0
        %5731 = vmatprep.mubr.bf16.mxu0 0
        %5732 = vmatmul.mubr.bf16.gmra.mxu0 %v5683
        %v5733 = vpop.f32.mrf.mxu0
        %v5734 = vadd.f32 0.0, %v5733
        %v5735 = vpop.f32.mrf.mxu0
        %v5736 = vpop.f32.mrf.mxu0
        %v5737 = vadd.f32 0.0, %v5736
        %v5738 = vpop.f32.mrf.mxu0
        %5739 = vmatprep.mubr.bf16.mxu0 0
        %5740 = vmatmul.mubr.bf16.gmra.mxu0 %v5686
        %v5741 = vpop.f32.mrf.mxu0
        %v5742 = vadd.f32 0.0, %v5741
        %v5743 = vpop.f32.mrf.mxu0
        %v5744 = vpop.f32.mrf.mxu0
        %v5745 = vadd.f32 0.0, %v5744
        %v5746 = vpop.f32.mrf.mxu0
        %5747 = vmatprep.mubr.bf16.mxu0 0
        %5748 = vmatmul.mubr.bf16.gmra.mxu0 %v5689
        %v5749 = vpop.f32.mrf.mxu0
        %v5750 = vadd.f32 0.0, %v5749
        %v5751 = vpop.f32.mrf.mxu0
        %v5752 = vpop.f32.mrf.mxu0
        %v5753 = vadd.f32 0.0, %v5752
        %v5754 = vpop.f32.mrf.mxu0
        %5755 = vdwg.mxu0
        %v5756 = vadd.f32 %v5638, %v5726
        %v5757 = vadd.f32 %v5639, %v5729
        %v5758 = vadd.f32 %v5640, %v5734
        %v5759 = vadd.f32 %v5641, %v5737
        %v5760 = vadd.f32 %v5642, %v5742
        %v5761 = vadd.f32 %v5643, %v5745
        %v5762 = vadd.f32 %v5644, %v5750
        %v5763 = vadd.f32 %v5645, %v5753
        %5764 = vmatprep.subr.bf16.mxu0 0
        %5765 = vmatpush1.bf16.msra.mxu0 0
        %5766 = vmatprep.subr.bf16.mxu0 0
        %5767 = vmatpush1.bf16.msra.mxu0 0
        %5768 = vmatprep.subr.bf16.mxu0 0
        %5769 = vmatpush1.bf16.msra.mxu0 0
        %5770 = vmatprep.subr.bf16.mxu0 0
        %5771 = vmatpush1.bf16.msra.mxu0 0
        %5772 = vmatprep.subr.bf16.mxu0 0
        %5773 = vmatpush1.bf16.msra.mxu0 %v4795
        %5774 = vmatprep.subr.bf16.mxu0 0
        %5775 = vmatpush1.bf16.msra.mxu0 %v4794
        %5776 = vmatprep.subr.bf16.mxu0 0
        %5777 = vmatpush1.bf16.msra.mxu0 %v4793
        %5778 = vmatprep.subr.bf16.mxu0 0
        %5779 = vmatpush1.bf16.msra.mxu0 %v4792
        %5780 = vmatprep.subr.bf16.mxu0 0
        %5781 = vmatpush2.bf16.msra.mxu0 0
        %5782 = vmatprep.subr.bf16.mxu0 0
        %5783 = vmatpush2.bf16.msra.mxu0 0
        %5784 = vmatprep.subr.bf16.mxu0 0
        %5785 = vmatpush2.bf16.msra.mxu0 0
        %5786 = vmatprep.subr.bf16.mxu0 0
        %5787 = vmatpush2.bf16.msra.mxu0 0
        %5788 = vmatprep.subr.bf16.mxu0 0
        %5789 = vmatpush2.bf16.msra.mxu0 0
        %5790 = vmatprep.subr.bf16.mxu0 0
        %5791 = vmatpush2.bf16.msra.mxu0 0
        %5792 = vmatprep.subr.bf16.mxu0 0
        %5793 = vmatpush2.bf16.msra.mxu0 0
        %5794 = vmatprep.subr.bf16.mxu0 0
        %5795 = vmatpush2.bf16.msra.mxu0 0
        %5796 = vmatprep.mubr.bf16.mxu0 0
        %5797 = vmatmul.mubr.bf16.gmra.mxu0 %v2461
        %v5798 = vpop.f32.mrf.mxu0
        %v5799 = vadd.f32 0.0, %v5798
        %v5800 = vpop.f32.mrf.mxu0
        %v5801 = vpop.f32.mrf.mxu0
        %v5802 = vadd.f32 0.0, %v5801
        %v5803 = vpop.f32.mrf.mxu0
        %5804 = vmatprep.mubr.bf16.mxu0 0
        %5805 = vmatmul.mubr.bf16.gmra.mxu0 %v2464
        %v5806 = vpop.f32.mrf.mxu0
        %v5807 = vadd.f32 0.0, %v5806
        %v5808 = vpop.f32.mrf.mxu0
        %v5809 = vpop.f32.mrf.mxu0
        %v5810 = vadd.f32 0.0, %v5809
        %v5811 = vpop.f32.mrf.mxu0
        %5812 = vmatprep.mubr.bf16.mxu0 0
        %5813 = vmatmul.mubr.bf16.gmra.mxu0 %v2467
        %v5814 = vpop.f32.mrf.mxu0
        %v5815 = vadd.f32 0.0, %v5814
        %v5816 = vpop.f32.mrf.mxu0
        %v5817 = vpop.f32.mrf.mxu0
        %v5818 = vadd.f32 0.0, %v5817
        %v5819 = vpop.f32.mrf.mxu0
        %5820 = vmatprep.mubr.bf16.mxu0 0
        %5821 = vmatmul.mubr.bf16.gmra.mxu0 %v2470
        %v5822 = vpop.f32.mrf.mxu0
        %v5823 = vadd.f32 0.0, %v5822
        %v5824 = vpop.f32.mrf.mxu0
        %v5825 = vpop.f32.mrf.mxu0
        %v5826 = vadd.f32 0.0, %v5825
        %v5827 = vpop.f32.mrf.mxu0
        %5828 = vdwg.mxu0
        %v5829 = vpack.c.bf16 %v5802, %v5799
        %v5830 = vpack.c.bf16 %v5810, %v5807
        %v5831 = vpack.c.bf16 %v5818, %v5815
        %v5832 = vpack.c.bf16 %v5826, %v5823
        %s5833 = scalar_lea.vmem %s2, 768
        %v5834 = vld [vmem:[%s5833] sm:$0xf]
        %v5835 = vld [vmem:[%s5833 + $0x4] sm:$0xf]
        %v5836 = vld [vmem:[%s5833 + $0x8] sm:$0xf]
        %v5837 = vld [vmem:[%s5833 + $0xc] sm:$0xf]
        %v5838 = vld [vmem:[%s5833 + $0x10] sm:$0xf]
        %v5839 = vld [vmem:[%s5833 + $0x14] sm:$0xf]
        %v5840 = vld [vmem:[%s5833 + $0x18] sm:$0xf]
        %v5841 = vld [vmem:[%s5833 + $0x1c] sm:$0xf]
        %v5850 = vunpack.c.l.b16 %v5834
        %v5851 = vunpack.c.l.b16 %v5835
        %v5852 = vunpack.c.l.b16 %v5836
        %v5853 = vunpack.c.l.b16 %v5837
        %v5854 = vunpack.c.l.b16 %v5838
        %v5855 = vunpack.c.l.b16 %v5839
        %v5856 = vunpack.c.l.b16 %v5840
        %v5857 = vunpack.c.l.b16 %v5841
        %v5858 = vpack.c.b16 %v5851, %v5850
        %v5859 = vpack.c.b16 %v5853, %v5852
        %v5860 = vpack.c.b16 %v5855, %v5854
        %v5861 = vpack.c.b16 %v5857, %v5856
        %v5867 = vsel %vm898, %v5829, 0
        %v5870 = vsel %vm898, %v5830, 0
        %v5873 = vsel %vm898, %v5831, 0
        %v5876 = vsel %vm898, %v5832, 0
        %5878 = vmatprep.subr.bf16.mxu0 0
        %5879 = vmatpush1.bf16.msra.mxu0 0
        %5880 = vmatprep.subr.bf16.mxu0 0
        %5881 = vmatpush1.bf16.msra.mxu0 0
        %5882 = vmatprep.subr.bf16.mxu0 0
        %5883 = vmatpush1.bf16.msra.mxu0 0
        %5884 = vmatprep.subr.bf16.mxu0 0
        %5885 = vmatpush1.bf16.msra.mxu0 0
        %5886 = vmatprep.subr.bf16.mxu0 0
        %5887 = vmatpush1.bf16.msra.mxu0 %v5861
        %5888 = vmatprep.subr.bf16.mxu0 0
        %5889 = vmatpush1.bf16.msra.mxu0 %v5860
        %5890 = vmatprep.subr.bf16.mxu0 0
        %5891 = vmatpush1.bf16.msra.mxu0 %v5859
        %5892 = vmatprep.subr.bf16.mxu0 0
        %5893 = vmatpush1.bf16.msra.mxu0 %v5858
        %5894 = vmatprep.subr.bf16.mxu0 0
        %5895 = vmatpush2.bf16.msra.mxu0 0
        %5896 = vmatprep.subr.bf16.mxu0 0
        %5897 = vmatpush2.bf16.msra.mxu0 0
        %5898 = vmatprep.subr.bf16.mxu0 0
        %5899 = vmatpush2.bf16.msra.mxu0 0
        %5900 = vmatprep.subr.bf16.mxu0 0
        %5901 = vmatpush2.bf16.msra.mxu0 0
        %5902 = vmatprep.subr.bf16.mxu0 0
        %5903 = vmatpush2.bf16.msra.mxu0 0
        %5904 = vmatprep.subr.bf16.mxu0 0
        %5905 = vmatpush2.bf16.msra.mxu0 0
        %5906 = vmatprep.subr.bf16.mxu0 0
        %5907 = vmatpush2.bf16.msra.mxu0 0
        %5908 = vmatprep.subr.bf16.mxu0 0
        %5909 = vmatpush2.bf16.msra.mxu0 0
        %5910 = vmatprep.mubr.bf16.mxu0 0
        %5911 = vmatmul.mubr.bf16.gmra.mxu0 %v5867
        %v5912 = vpop.f32.mrf.mxu0
        %v5913 = vadd.f32 0.0, %v5912
        %v5914 = vpop.f32.mrf.mxu0
        %v5915 = vpop.f32.mrf.mxu0
        %v5916 = vadd.f32 0.0, %v5915
        %v5917 = vpop.f32.mrf.mxu0
        %5918 = vmatprep.mubr.bf16.mxu0 0
        %5919 = vmatmul.mubr.bf16.gmra.mxu0 %v5870
        %v5920 = vpop.f32.mrf.mxu0
        %v5921 = vadd.f32 0.0, %v5920
        %v5922 = vpop.f32.mrf.mxu0
        %v5923 = vpop.f32.mrf.mxu0
        %v5924 = vadd.f32 0.0, %v5923
        %v5925 = vpop.f32.mrf.mxu0
        %5926 = vmatprep.mubr.bf16.mxu0 0
        %5927 = vmatmul.mubr.bf16.gmra.mxu0 %v5873
        %v5928 = vpop.f32.mrf.mxu0
        %v5929 = vadd.f32 0.0, %v5928
        %v5930 = vpop.f32.mrf.mxu0
        %v5931 = vpop.f32.mrf.mxu0
        %v5932 = vadd.f32 0.0, %v5931
        %v5933 = vpop.f32.mrf.mxu0
        %5934 = vmatprep.mubr.bf16.mxu0 0
        %5935 = vmatmul.mubr.bf16.gmra.mxu0 %v5876
        %v5936 = vpop.f32.mrf.mxu0
        %v5937 = vadd.f32 0.0, %v5936
        %v5938 = vpop.f32.mrf.mxu0
        %v5939 = vpop.f32.mrf.mxu0
        %v5940 = vadd.f32 0.0, %v5939
        %v5941 = vpop.f32.mrf.mxu0
        %5942 = vdwg.mxu0
        %v5943 = vadd.f32 %v5756, %v5913
        %v5944 = vadd.f32 %v5757, %v5916
        %v5945 = vadd.f32 %v5758, %v5921
        %v5946 = vadd.f32 %v5759, %v5924
        %v5947 = vadd.f32 %v5760, %v5929
        %v5948 = vadd.f32 %v5761, %v5932
        %v5949 = vadd.f32 %v5762, %v5937
        %v5950 = vadd.f32 %v5763, %v5940
        %5951 = vmatprep.subr.bf16.mxu0 0
        %5952 = vmatpush1.bf16.msra.mxu0 0
        %5953 = vmatprep.subr.bf16.mxu0 0
        %5954 = vmatpush1.bf16.msra.mxu0 0
        %5955 = vmatprep.subr.bf16.mxu0 0
        %5956 = vmatpush1.bf16.msra.mxu0 0
        %5957 = vmatprep.subr.bf16.mxu0 0
        %5958 = vmatpush1.bf16.msra.mxu0 0
        %5959 = vmatprep.subr.bf16.mxu0 0
        %5960 = vmatpush1.bf16.msra.mxu0 %v4726
        %5961 = vmatprep.subr.bf16.mxu0 0
        %5962 = vmatpush1.bf16.msra.mxu0 %v4725
        %5963 = vmatprep.subr.bf16.mxu0 0
        %5964 = vmatpush1.bf16.msra.mxu0 %v4724
        %5965 = vmatprep.subr.bf16.mxu0 0
        %5966 = vmatpush1.bf16.msra.mxu0 %v4723
        %5967 = vmatprep.subr.bf16.mxu0 0
        %5968 = vmatpush2.bf16.msra.mxu0 0
        %5969 = vmatprep.subr.bf16.mxu0 0
        %5970 = vmatpush2.bf16.msra.mxu0 0
        %5971 = vmatprep.subr.bf16.mxu0 0
        %5972 = vmatpush2.bf16.msra.mxu0 0
        %5973 = vmatprep.subr.bf16.mxu0 0
        %5974 = vmatpush2.bf16.msra.mxu0 0
        %5975 = vmatprep.subr.bf16.mxu0 0
        %5976 = vmatpush2.bf16.msra.mxu0 0
        %5977 = vmatprep.subr.bf16.mxu0 0
        %5978 = vmatpush2.bf16.msra.mxu0 0
        %5979 = vmatprep.subr.bf16.mxu0 0
        %5980 = vmatpush2.bf16.msra.mxu0 0
        %5981 = vmatprep.subr.bf16.mxu0 0
        %5982 = vmatpush2.bf16.msra.mxu0 0
        %5983 = vmatprep.mubr.bf16.mxu0 0
        %5984 = vmatmul.mubr.bf16.gmra.mxu0 %v2461
        %v5985 = vpop.f32.mrf.mxu0
        %v5986 = vadd.f32 0.0, %v5985
        %v5987 = vpop.f32.mrf.mxu0
        %v5988 = vpop.f32.mrf.mxu0
        %v5989 = vadd.f32 0.0, %v5988
        %v5990 = vpop.f32.mrf.mxu0
        %5991 = vmatprep.mubr.bf16.mxu0 0
        %5992 = vmatmul.mubr.bf16.gmra.mxu0 %v2464
        %v5993 = vpop.f32.mrf.mxu0
        %v5994 = vadd.f32 0.0, %v5993
        %v5995 = vpop.f32.mrf.mxu0
        %v5996 = vpop.f32.mrf.mxu0
        %v5997 = vadd.f32 0.0, %v5996
        %v5998 = vpop.f32.mrf.mxu0
        %5999 = vmatprep.mubr.bf16.mxu0 0
        %6000 = vmatmul.mubr.bf16.gmra.mxu0 %v2467
        %v6001 = vpop.f32.mrf.mxu0
        %v6002 = vadd.f32 0.0, %v6001
        %v6003 = vpop.f32.mrf.mxu0
        %v6004 = vpop.f32.mrf.mxu0
        %v6005 = vadd.f32 0.0, %v6004
        %v6006 = vpop.f32.mrf.mxu0
        %6007 = vmatprep.mubr.bf16.mxu0 0
        %6008 = vmatmul.mubr.bf16.gmra.mxu0 %v2470
        %v6009 = vpop.f32.mrf.mxu0
        %v6010 = vadd.f32 0.0, %v6009
        %v6011 = vpop.f32.mrf.mxu0
        %v6012 = vpop.f32.mrf.mxu0
        %v6013 = vadd.f32 0.0, %v6012
        %v6014 = vpop.f32.mrf.mxu0
        %6015 = vdwg.mxu0
        %v6016 = vpack.c.bf16 %v5989, %v5986
        %v6017 = vpack.c.bf16 %v5997, %v5994
        %v6018 = vpack.c.bf16 %v6005, %v6002
        %v6019 = vpack.c.bf16 %v6013, %v6010
        %s6020 = scalar_lea.vmem %s2, 800
        %v6021 = vld [vmem:[%s6020] sm:$0xf]
        %v6022 = vld [vmem:[%s6020 + $0x4] sm:$0xf]
        %v6023 = vld [vmem:[%s6020 + $0x8] sm:$0xf]
        %v6024 = vld [vmem:[%s6020 + $0xc] sm:$0xf]
        %v6025 = vld [vmem:[%s6020 + $0x10] sm:$0xf]
        %v6026 = vld [vmem:[%s6020 + $0x14] sm:$0xf]
        %v6027 = vld [vmem:[%s6020 + $0x18] sm:$0xf]
        %v6028 = vld [vmem:[%s6020 + $0x1c] sm:$0xf]
        %v6037 = vunpack.c.l.b16 %v6021
        %v6038 = vunpack.c.l.b16 %v6022
        %v6039 = vunpack.c.l.b16 %v6023
        %v6040 = vunpack.c.l.b16 %v6024
        %v6041 = vunpack.c.l.b16 %v6025
        %v6042 = vunpack.c.l.b16 %v6026
        %v6043 = vunpack.c.l.b16 %v6027
        %v6044 = vunpack.c.l.b16 %v6028
        %v6045 = vpack.c.b16 %v6038, %v6037
        %v6046 = vpack.c.b16 %v6040, %v6039
        %v6047 = vpack.c.b16 %v6042, %v6041
        %v6048 = vpack.c.b16 %v6044, %v6043
        %v6054 = vsel %vm898, %v6016, 0
        %v6057 = vsel %vm898, %v6017, 0
        %v6060 = vsel %vm898, %v6018, 0
        %v6063 = vsel %vm898, %v6019, 0
        %6065 = vmatprep.subr.bf16.mxu0 0
        %6066 = vmatpush1.bf16.msra.mxu0 0
        %6067 = vmatprep.subr.bf16.mxu0 0
        %6068 = vmatpush1.bf16.msra.mxu0 0
        %6069 = vmatprep.subr.bf16.mxu0 0
        %6070 = vmatpush1.bf16.msra.mxu0 0
        %6071 = vmatprep.subr.bf16.mxu0 0
        %6072 = vmatpush1.bf16.msra.mxu0 0
        %6073 = vmatprep.subr.bf16.mxu0 0
        %6074 = vmatpush1.bf16.msra.mxu0 %v6048
        %6075 = vmatprep.subr.bf16.mxu0 0
        %6076 = vmatpush1.bf16.msra.mxu0 %v6047
        %6077 = vmatprep.subr.bf16.mxu0 0
        %6078 = vmatpush1.bf16.msra.mxu0 %v6046
        %6079 = vmatprep.subr.bf16.mxu0 0
        %6080 = vmatpush1.bf16.msra.mxu0 %v6045
        %6081 = vmatprep.subr.bf16.mxu0 0
        %6082 = vmatpush2.bf16.msra.mxu0 0
        %6083 = vmatprep.subr.bf16.mxu0 0
        %6084 = vmatpush2.bf16.msra.mxu0 0
        %6085 = vmatprep.subr.bf16.mxu0 0
        %6086 = vmatpush2.bf16.msra.mxu0 0
        %6087 = vmatprep.subr.bf16.mxu0 0
        %6088 = vmatpush2.bf16.msra.mxu0 0
        %6089 = vmatprep.subr.bf16.mxu0 0
        %6090 = vmatpush2.bf16.msra.mxu0 0
        %6091 = vmatprep.subr.bf16.mxu0 0
        %6092 = vmatpush2.bf16.msra.mxu0 0
        %6093 = vmatprep.subr.bf16.mxu0 0
        %6094 = vmatpush2.bf16.msra.mxu0 0
        %6095 = vmatprep.subr.bf16.mxu0 0
        %6096 = vmatpush2.bf16.msra.mxu0 0
        %6097 = vmatprep.mubr.bf16.mxu0 0
        %6098 = vmatmul.mubr.bf16.gmra.mxu0 %v6054
        %v6099 = vpop.f32.mrf.mxu0
        %v6100 = vadd.f32 0.0, %v6099
        %v6101 = vpop.f32.mrf.mxu0
        %v6102 = vpop.f32.mrf.mxu0
        %v6103 = vadd.f32 0.0, %v6102
        %v6104 = vpop.f32.mrf.mxu0
        %6105 = vmatprep.mubr.bf16.mxu0 0
        %6106 = vmatmul.mubr.bf16.gmra.mxu0 %v6057
        %v6107 = vpop.f32.mrf.mxu0
        %v6108 = vadd.f32 0.0, %v6107
        %v6109 = vpop.f32.mrf.mxu0
        %v6110 = vpop.f32.mrf.mxu0
        %v6111 = vadd.f32 0.0, %v6110
        %v6112 = vpop.f32.mrf.mxu0
        %6113 = vmatprep.mubr.bf16.mxu0 0
        %6114 = vmatmul.mubr.bf16.gmra.mxu0 %v6060
        %v6115 = vpop.f32.mrf.mxu0
        %v6116 = vadd.f32 0.0, %v6115
        %v6117 = vpop.f32.mrf.mxu0
        %v6118 = vpop.f32.mrf.mxu0
        %v6119 = vadd.f32 0.0, %v6118
        %v6120 = vpop.f32.mrf.mxu0
        %6121 = vmatprep.mubr.bf16.mxu0 0
        %6122 = vmatmul.mubr.bf16.gmra.mxu0 %v6063
        %v6123 = vpop.f32.mrf.mxu0
        %v6124 = vadd.f32 0.0, %v6123
        %v6125 = vpop.f32.mrf.mxu0
        %v6126 = vpop.f32.mrf.mxu0
        %v6127 = vadd.f32 0.0, %v6126
        %v6128 = vpop.f32.mrf.mxu0
        %6129 = vdwg.mxu0
        %v6130 = vadd.f32 %v5943, %v6100
        %v6131 = vadd.f32 %v5944, %v6103
        %v6132 = vadd.f32 %v5945, %v6108
        %v6133 = vadd.f32 %v5946, %v6111
        %v6134 = vadd.f32 %v5947, %v6116
        %v6135 = vadd.f32 %v5948, %v6119
        %v6136 = vadd.f32 %v5949, %v6124
        %v6137 = vadd.f32 %v5950, %v6127
        %6138 = vmatprep.subr.bf16.mxu0 0
        %6139 = vmatpush1.bf16.msra.mxu0 0
        %6140 = vmatprep.subr.bf16.mxu0 0
        %6141 = vmatpush1.bf16.msra.mxu0 0
        %6142 = vmatprep.subr.bf16.mxu0 0
        %6143 = vmatpush1.bf16.msra.mxu0 0
        %6144 = vmatprep.subr.bf16.mxu0 0
        %6145 = vmatpush1.bf16.msra.mxu0 0
        %6146 = vmatprep.subr.bf16.mxu0 0
        %6147 = vmatpush1.bf16.msra.mxu0 %v4864
        %6148 = vmatprep.subr.bf16.mxu0 0
        %6149 = vmatpush1.bf16.msra.mxu0 %v4863
        %6150 = vmatprep.subr.bf16.mxu0 0
        %6151 = vmatpush1.bf16.msra.mxu0 %v4862
        %6152 = vmatprep.subr.bf16.mxu0 0
        %6153 = vmatpush1.bf16.msra.mxu0 %v4861
        %6154 = vmatprep.subr.bf16.mxu0 0
        %6155 = vmatpush2.bf16.msra.mxu0 0
        %6156 = vmatprep.subr.bf16.mxu0 0
        %6157 = vmatpush2.bf16.msra.mxu0 0
        %6158 = vmatprep.subr.bf16.mxu0 0
        %6159 = vmatpush2.bf16.msra.mxu0 0
        %6160 = vmatprep.subr.bf16.mxu0 0
        %6161 = vmatpush2.bf16.msra.mxu0 0
        %6162 = vmatprep.subr.bf16.mxu0 0
        %6163 = vmatpush2.bf16.msra.mxu0 0
        %6164 = vmatprep.subr.bf16.mxu0 0
        %6165 = vmatpush2.bf16.msra.mxu0 0
        %6166 = vmatprep.subr.bf16.mxu0 0
        %6167 = vmatpush2.bf16.msra.mxu0 0
        %6168 = vmatprep.subr.bf16.mxu0 0
        %6169 = vmatpush2.bf16.msra.mxu0 0
        %6170 = vmatprep.mubr.bf16.mxu0 0
        %6171 = vmatmul.mubr.bf16.gmra.mxu0 %v2461
        %v6172 = vpop.f32.mrf.mxu0
        %v6173 = vadd.f32 0.0, %v6172
        %v6174 = vpop.f32.mrf.mxu0
        %v6175 = vpop.f32.mrf.mxu0
        %v6176 = vadd.f32 0.0, %v6175
        %v6177 = vpop.f32.mrf.mxu0
        %6178 = vmatprep.mubr.bf16.mxu0 0
        %6179 = vmatmul.mubr.bf16.gmra.mxu0 %v2464
        %v6180 = vpop.f32.mrf.mxu0
        %v6181 = vadd.f32 0.0, %v6180
        %v6182 = vpop.f32.mrf.mxu0
        %v6183 = vpop.f32.mrf.mxu0
        %v6184 = vadd.f32 0.0, %v6183
        %v6185 = vpop.f32.mrf.mxu0
        %6186 = vmatprep.mubr.bf16.mxu0 0
        %6187 = vmatmul.mubr.bf16.gmra.mxu0 %v2467
        %v6188 = vpop.f32.mrf.mxu0
        %v6189 = vadd.f32 0.0, %v6188
        %v6190 = vpop.f32.mrf.mxu0
        %v6191 = vpop.f32.mrf.mxu0
        %v6192 = vadd.f32 0.0, %v6191
        %v6193 = vpop.f32.mrf.mxu0
        %6194 = vmatprep.mubr.bf16.mxu0 0
        %6195 = vmatmul.mubr.bf16.gmra.mxu0 %v2470
        %v6196 = vpop.f32.mrf.mxu0
        %v6197 = vadd.f32 0.0, %v6196
        %v6198 = vpop.f32.mrf.mxu0
        %v6199 = vpop.f32.mrf.mxu0
        %v6200 = vadd.f32 0.0, %v6199
        %v6201 = vpop.f32.mrf.mxu0
        %6202 = vdwg.mxu0
        %v6203 = vpack.c.bf16 %v6176, %v6173
        %v6204 = vpack.c.bf16 %v6184, %v6181
        %v6205 = vpack.c.bf16 %v6192, %v6189
        %v6206 = vpack.c.bf16 %v6200, %v6197
        %s6207 = scalar_lea.vmem %s2, 832
        %v6208 = vld [vmem:[%s6207] sm:$0xf]
        %v6209 = vld [vmem:[%s6207 + $0x4] sm:$0xf]
        %v6210 = vld [vmem:[%s6207 + $0x8] sm:$0xf]
        %v6211 = vld [vmem:[%s6207 + $0xc] sm:$0xf]
        %v6212 = vld [vmem:[%s6207 + $0x10] sm:$0xf]
        %v6213 = vld [vmem:[%s6207 + $0x14] sm:$0xf]
        %v6214 = vld [vmem:[%s6207 + $0x18] sm:$0xf]
        %v6215 = vld [vmem:[%s6207 + $0x1c] sm:$0xf]
        %v6224 = vunpack.c.l.b16 %v6208
        %v6225 = vunpack.c.l.b16 %v6209
        %v6226 = vunpack.c.l.b16 %v6210
        %v6227 = vunpack.c.l.b16 %v6211
        %v6228 = vunpack.c.l.b16 %v6212
        %v6229 = vunpack.c.l.b16 %v6213
        %v6230 = vunpack.c.l.b16 %v6214
        %v6231 = vunpack.c.l.b16 %v6215
        %v6232 = vpack.c.b16 %v6225, %v6224
        %v6233 = vpack.c.b16 %v6227, %v6226
        %v6234 = vpack.c.b16 %v6229, %v6228
        %v6235 = vpack.c.b16 %v6231, %v6230
        %v6241 = vsel %vm898, %v6203, 0
        %v6244 = vsel %vm898, %v6204, 0
        %v6247 = vsel %vm898, %v6205, 0
        %v6250 = vsel %vm898, %v6206, 0
        %6252 = vmatprep.subr.bf16.mxu0 0
        %6253 = vmatpush1.bf16.msra.mxu0 0
        %6254 = vmatprep.subr.bf16.mxu0 0
        %6255 = vmatpush1.bf16.msra.mxu0 0
        %6256 = vmatprep.subr.bf16.mxu0 0
        %6257 = vmatpush1.bf16.msra.mxu0 0
        %6258 = vmatprep.subr.bf16.mxu0 0
        %6259 = vmatpush1.bf16.msra.mxu0 0
        %6260 = vmatprep.subr.bf16.mxu0 0
        %6261 = vmatpush1.bf16.msra.mxu0 %v6235
        %6262 = vmatprep.subr.bf16.mxu0 0
        %6263 = vmatpush1.bf16.msra.mxu0 %v6234
        %6264 = vmatprep.subr.bf16.mxu0 0
        %6265 = vmatpush1.bf16.msra.mxu0 %v6233
        %6266 = vmatprep.subr.bf16.mxu0 0
        %6267 = vmatpush1.bf16.msra.mxu0 %v6232
        %6268 = vmatprep.subr.bf16.mxu0 0
        %6269 = vmatpush2.bf16.msra.mxu0 0
        %6270 = vmatprep.subr.bf16.mxu0 0
        %6271 = vmatpush2.bf16.msra.mxu0 0
        %6272 = vmatprep.subr.bf16.mxu0 0
        %6273 = vmatpush2.bf16.msra.mxu0 0
        %6274 = vmatprep.subr.bf16.mxu0 0
        %6275 = vmatpush2.bf16.msra.mxu0 0
        %6276 = vmatprep.subr.bf16.mxu0 0
        %6277 = vmatpush2.bf16.msra.mxu0 0
        %6278 = vmatprep.subr.bf16.mxu0 0
        %6279 = vmatpush2.bf16.msra.mxu0 0
        %6280 = vmatprep.subr.bf16.mxu0 0
        %6281 = vmatpush2.bf16.msra.mxu0 0
        %6282 = vmatprep.subr.bf16.mxu0 0
        %6283 = vmatpush2.bf16.msra.mxu0 0
        %6284 = vmatprep.mubr.bf16.mxu0 0
        %6285 = vmatmul.mubr.bf16.gmra.mxu0 %v6241
        %v6286 = vpop.f32.mrf.mxu0
        %v6287 = vadd.f32 0.0, %v6286
        %v6288 = vpop.f32.mrf.mxu0
        %v6289 = vpop.f32.mrf.mxu0
        %v6290 = vadd.f32 0.0, %v6289
        %v6291 = vpop.f32.mrf.mxu0
        %6292 = vmatprep.mubr.bf16.mxu0 0
        %6293 = vmatmul.mubr.bf16.gmra.mxu0 %v6244
        %v6294 = vpop.f32.mrf.mxu0
        %v6295 = vadd.f32 0.0, %v6294
        %v6296 = vpop.f32.mrf.mxu0
        %v6297 = vpop.f32.mrf.mxu0
        %v6298 = vadd.f32 0.0, %v6297
        %v6299 = vpop.f32.mrf.mxu0
        %6300 = vmatprep.mubr.bf16.mxu0 0
        %6301 = vmatmul.mubr.bf16.gmra.mxu0 %v6247
        %v6302 = vpop.f32.mrf.mxu0
        %v6303 = vadd.f32 0.0, %v6302
        %v6304 = vpop.f32.mrf.mxu0
        %v6305 = vpop.f32.mrf.mxu0
        %v6306 = vadd.f32 0.0, %v6305
        %v6307 = vpop.f32.mrf.mxu0
        %6308 = vmatprep.mubr.bf16.mxu0 0
        %6309 = vmatmul.mubr.bf16.gmra.mxu0 %v6250
        %v6310 = vpop.f32.mrf.mxu0
        %v6311 = vadd.f32 0.0, %v6310
        %v6312 = vpop.f32.mrf.mxu0
        %v6313 = vpop.f32.mrf.mxu0
        %v6314 = vadd.f32 0.0, %v6313
        %v6315 = vpop.f32.mrf.mxu0
        %6316 = vdwg.mxu0
        %v6317 = vadd.f32 %v6130, %v6287
        %v6318 = vadd.f32 %v6131, %v6290
        %v6319 = vadd.f32 %v6132, %v6295
        %v6320 = vadd.f32 %v6133, %v6298
        %v6321 = vadd.f32 %v6134, %v6303
        %v6322 = vadd.f32 %v6135, %v6306
        %v6323 = vadd.f32 %v6136, %v6311
        %v6324 = vadd.f32 %v6137, %v6314
        %s6325 = scalar_lea.vmem %s4, 3
        %v6326 = vld [vmem:[%s6325] sm:$0x1]
        %v6328 = vlaneseq
        %v6329 = vshrl.u32 %v6328, 7
        %v6330 = vsub.s32 0, %v6329
        %v6331 = vrot.slane %v6326, %v6330
        %v6333 = vmul.f32 %v6317, %v6331
        %v6334 = vmul.f32 %v6318, %v6331
        %v6335 = vmul.f32 %v6319, %v6331
        %v6336 = vmul.f32 %v6320, %v6331
        %v6337 = vmul.f32 %v6321, %v6331
        %v6338 = vmul.f32 %v6322, %v6331
        %v6339 = vmul.f32 %v6323, %v6331
        %v6340 = vmul.f32 %v6324, %v6331
        %s6341 = scalar_lea.vmem %s5, 3
        %v6342 = vld [vmem:[%s6341] sm:$0x1]
        %v6344 = vlaneseq
        %v6345 = vshrl.u32 %v6344, 7
        %v6346 = vsub.s32 0, %v6345
        %v6347 = vrot.slane %v6342, %v6346
        %v6349 = vadd.f32 %v6333, %v6347
        %v6350 = vadd.f32 %v6334, %v6347
        %v6351 = vadd.f32 %v6335, %v6347
        %v6352 = vadd.f32 %v6336, %v6347
        %v6353 = vadd.f32 %v6337, %v6347
        %v6354 = vadd.f32 %v6338, %v6347
        %v6355 = vadd.f32 %v6339, %v6347
        %v6356 = vadd.f32 %v6340, %v6347
        %v6357 = vmax.f32 %v6349, 0.0
        %v6358 = vmax.f32 %v6350, 0.0
        %v6359 = vmax.f32 %v6351, 0.0
        %v6360 = vmax.f32 %v6352, 0.0
        %v6361 = vmax.f32 %v6353, 0.0
        %v6362 = vmax.f32 %v6354, 0.0
        %v6363 = vmax.f32 %v6355, 0.0
        %v6364 = vmax.f32 %v6356, 0.0
        %v6365 = vpack.c.bf16 %v6358, %v6357
        %v6366 = vpack.c.bf16 %v6360, %v6359
        %v6367 = vpack.c.bf16 %v6362, %v6361
        %v6368 = vpack.c.bf16 %v6364, %v6363
        %6369 = vmatprep.subr.bf16.mxu0 0
        %6370 = vmatpush1.bf16.msra.mxu0 0
        %6371 = vmatprep.subr.bf16.mxu0 0
        %6372 = vmatpush1.bf16.msra.mxu0 0
        %6373 = vmatprep.subr.bf16.mxu0 0
        %6374 = vmatpush1.bf16.msra.mxu0 0
        %6375 = vmatprep.subr.bf16.mxu0 0
        %6376 = vmatpush1.bf16.msra.mxu0 0
        %6377 = vmatprep.subr.bf16.mxu0 0
        %6378 = vmatpush1.bf16.msra.mxu0 %v6368
        %6379 = vmatprep.subr.bf16.mxu0 0
        %6380 = vmatpush1.bf16.msra.mxu0 %v6367
        %6381 = vmatprep.subr.bf16.mxu0 0
        %6382 = vmatpush1.bf16.msra.mxu0 %v6366
        %6383 = vmatprep.subr.bf16.mxu0 0
        %6384 = vmatpush1.bf16.msra.mxu0 %v6365
        %6385 = vmatprep.subr.bf16.mxu0 0
        %6386 = vmatpush2.bf16.msra.mxu0 0
        %6387 = vmatprep.subr.bf16.mxu0 0
        %6388 = vmatpush2.bf16.msra.mxu0 0
        %6389 = vmatprep.subr.bf16.mxu0 0
        %6390 = vmatpush2.bf16.msra.mxu0 0
        %6391 = vmatprep.subr.bf16.mxu0 0
        %6392 = vmatpush2.bf16.msra.mxu0 0
        %6393 = vmatprep.subr.bf16.mxu0 0
        %6394 = vmatpush2.bf16.msra.mxu0 0
        %6395 = vmatprep.subr.bf16.mxu0 0
        %6396 = vmatpush2.bf16.msra.mxu0 0
        %6397 = vmatprep.subr.bf16.mxu0 0
        %6398 = vmatpush2.bf16.msra.mxu0 0
        %6399 = vmatprep.subr.bf16.mxu0 0
        %6400 = vmatpush2.bf16.msra.mxu0 0
        %6401 = vmatprep.mubr.bf16.mxu0 0
        %6402 = vmatmul.mubr.bf16.gmra.mxu0 %v900
        %v6403 = vpop.f32.mrf.mxu0
        %v6404 = vadd.f32 0.0, %v6403
        %v6405 = vpop.f32.mrf.mxu0
        %v6406 = vpop.f32.mrf.mxu0
        %v6407 = vadd.f32 0.0, %v6406
        %v6408 = vpop.f32.mrf.mxu0
        %6409 = vmatprep.mubr.bf16.mxu0 0
        %6410 = vmatmul.mubr.bf16.gmra.mxu0 %v903
        %v6411 = vpop.f32.mrf.mxu0
        %v6412 = vadd.f32 0.0, %v6411
        %v6413 = vpop.f32.mrf.mxu0
        %v6414 = vpop.f32.mrf.mxu0
        %v6415 = vadd.f32 0.0, %v6414
        %v6416 = vpop.f32.mrf.mxu0
        %6417 = vmatprep.mubr.bf16.mxu0 0
        %6418 = vmatmul.mubr.bf16.gmra.mxu0 %v906
        %v6419 = vpop.f32.mrf.mxu0
        %v6420 = vadd.f32 0.0, %v6419
        %v6421 = vpop.f32.mrf.mxu0
        %v6422 = vpop.f32.mrf.mxu0
        %v6423 = vadd.f32 0.0, %v6422
        %v6424 = vpop.f32.mrf.mxu0
        %6425 = vmatprep.mubr.bf16.mxu0 0
        %6426 = vmatmul.mubr.bf16.gmra.mxu0 %v909
        %v6427 = vpop.f32.mrf.mxu0
        %v6428 = vadd.f32 0.0, %v6427
        %v6429 = vpop.f32.mrf.mxu0
        %v6430 = vpop.f32.mrf.mxu0
        %v6431 = vadd.f32 0.0, %v6430
        %v6432 = vpop.f32.mrf.mxu0
        %6433 = vdwg.mxu0
        %v6434 = vpack.c.bf16 %v6407, %v6404
        %v6435 = vpack.c.bf16 %v6415, %v6412
        %v6436 = vpack.c.bf16 %v6423, %v6420
        %v6437 = vpack.c.bf16 %v6431, %v6428
        %6438 = vmatprep.subr.bf16.mxu0 0
        %6439 = vmatpush1.bf16.msra.mxu0 0
        %6440 = vmatprep.subr.bf16.mxu0 0
        %6441 = vmatpush1.bf16.msra.mxu0 0
        %6442 = vmatprep.subr.bf16.mxu0 0
        %6443 = vmatpush1.bf16.msra.mxu0 0
        %6444 = vmatprep.subr.bf16.mxu0 0
        %6445 = vmatpush1.bf16.msra.mxu0 0
        %6446 = vmatprep.subr.bf16.mxu0 0
        %6447 = vmatpush1.bf16.msra.mxu0 %v6368
        %6448 = vmatprep.subr.bf16.mxu0 0
        %6449 = vmatpush1.bf16.msra.mxu0 %v6367
        %6450 = vmatprep.subr.bf16.mxu0 0
        %6451 = vmatpush1.bf16.msra.mxu0 %v6366
        %6452 = vmatprep.subr.bf16.mxu0 0
        %6453 = vmatpush1.bf16.msra.mxu0 %v6365
        %6454 = vmatprep.subr.bf16.mxu0 0
        %6455 = vmatpush2.bf16.msra.mxu0 0
        %6456 = vmatprep.subr.bf16.mxu0 0
        %6457 = vmatpush2.bf16.msra.mxu0 0
        %6458 = vmatprep.subr.bf16.mxu0 0
        %6459 = vmatpush2.bf16.msra.mxu0 0
        %6460 = vmatprep.subr.bf16.mxu0 0
        %6461 = vmatpush2.bf16.msra.mxu0 0
        %6462 = vmatprep.subr.bf16.mxu0 0
        %6463 = vmatpush2.bf16.msra.mxu0 0
        %6464 = vmatprep.subr.bf16.mxu0 0
        %6465 = vmatpush2.bf16.msra.mxu0 0
        %6466 = vmatprep.subr.bf16.mxu0 0
        %6467 = vmatpush2.bf16.msra.mxu0 0
        %6468 = vmatprep.subr.bf16.mxu0 0
        %6469 = vmatpush2.bf16.msra.mxu0 0
        %6470 = vmatprep.mubr.bf16.mxu0 0
        %6471 = vmatmul.mubr.bf16.gmra.mxu0 %v1462
        %v6472 = vpop.f32.mrf.mxu0
        %v6473 = vadd.f32 0.0, %v6472
        %v6474 = vpop.f32.mrf.mxu0
        %v6475 = vpop.f32.mrf.mxu0
        %v6476 = vadd.f32 0.0, %v6475
        %v6477 = vpop.f32.mrf.mxu0
        %6478 = vmatprep.mubr.bf16.mxu0 0
        %6479 = vmatmul.mubr.bf16.gmra.mxu0 %v1465
        %v6480 = vpop.f32.mrf.mxu0
        %v6481 = vadd.f32 0.0, %v6480
        %v6482 = vpop.f32.mrf.mxu0
        %v6483 = vpop.f32.mrf.mxu0
        %v6484 = vadd.f32 0.0, %v6483
        %v6485 = vpop.f32.mrf.mxu0
        %6486 = vmatprep.mubr.bf16.mxu0 0
        %6487 = vmatmul.mubr.bf16.gmra.mxu0 %v1468
        %v6488 = vpop.f32.mrf.mxu0
        %v6489 = vadd.f32 0.0, %v6488
        %v6490 = vpop.f32.mrf.mxu0
        %v6491 = vpop.f32.mrf.mxu0
        %v6492 = vadd.f32 0.0, %v6491
        %v6493 = vpop.f32.mrf.mxu0
        %6494 = vmatprep.mubr.bf16.mxu0 0
        %6495 = vmatmul.mubr.bf16.gmra.mxu0 %v1471
        %v6496 = vpop.f32.mrf.mxu0
        %v6497 = vadd.f32 0.0, %v6496
        %v6498 = vpop.f32.mrf.mxu0
        %v6499 = vpop.f32.mrf.mxu0
        %v6500 = vadd.f32 0.0, %v6499
        %v6501 = vpop.f32.mrf.mxu0
        %6502 = vdwg.mxu0
        %v6503 = vpack.c.bf16 %v6476, %v6473
        %v6504 = vpack.c.bf16 %v6484, %v6481
        %v6505 = vpack.c.bf16 %v6492, %v6489
        %v6506 = vpack.c.bf16 %v6500, %v6497
        %6507 = vmatprep.subr.bf16.mxu0 0
        %6508 = vmatpush1.bf16.msra.mxu0 0
        %6509 = vmatprep.subr.bf16.mxu0 0
        %6510 = vmatpush1.bf16.msra.mxu0 0
        %6511 = vmatprep.subr.bf16.mxu0 0
        %6512 = vmatpush1.bf16.msra.mxu0 0
        %6513 = vmatprep.subr.bf16.mxu0 0
        %6514 = vmatpush1.bf16.msra.mxu0 0
        %6515 = vmatprep.subr.bf16.mxu0 0
        %6516 = vmatpush1.bf16.msra.mxu0 %v6437
        %6517 = vmatprep.subr.bf16.mxu0 0
        %6518 = vmatpush1.bf16.msra.mxu0 %v6436
        %6519 = vmatprep.subr.bf16.mxu0 0
        %6520 = vmatpush1.bf16.msra.mxu0 %v6435
        %6521 = vmatprep.subr.bf16.mxu0 0
        %6522 = vmatpush1.bf16.msra.mxu0 %v6434
        %6523 = vmatprep.subr.bf16.mxu0 0
        %6524 = vmatpush2.bf16.msra.mxu0 0
        %6525 = vmatprep.subr.bf16.mxu0 0
        %6526 = vmatpush2.bf16.msra.mxu0 0
        %6527 = vmatprep.subr.bf16.mxu0 0
        %6528 = vmatpush2.bf16.msra.mxu0 0
        %6529 = vmatprep.subr.bf16.mxu0 0
        %6530 = vmatpush2.bf16.msra.mxu0 0
        %6531 = vmatprep.subr.bf16.mxu0 0
        %6532 = vmatpush2.bf16.msra.mxu0 0
        %6533 = vmatprep.subr.bf16.mxu0 0
        %6534 = vmatpush2.bf16.msra.mxu0 0
        %6535 = vmatprep.subr.bf16.mxu0 0
        %6536 = vmatpush2.bf16.msra.mxu0 0
        %6537 = vmatprep.subr.bf16.mxu0 0
        %6538 = vmatpush2.bf16.msra.mxu0 0
        %6539 = vmatprep.mubr.bf16.mxu0 0
        %6540 = vmatmul.mubr.bf16.gmra.mxu0 %v1062
        %v6541 = vpop.f32.mrf.mxu0
        %v6542 = vadd.f32 0.0, %v6541
        %v6543 = vpop.f32.mrf.mxu0
        %v6544 = vpop.f32.mrf.mxu0
        %v6545 = vadd.f32 0.0, %v6544
        %v6546 = vpop.f32.mrf.mxu0
        %6547 = vmatprep.mubr.bf16.mxu0 0
        %6548 = vmatmul.mubr.bf16.gmra.mxu0 %v1065
        %v6549 = vpop.f32.mrf.mxu0
        %v6550 = vadd.f32 0.0, %v6549
        %v6551 = vpop.f32.mrf.mxu0
        %v6552 = vpop.f32.mrf.mxu0
        %v6553 = vadd.f32 0.0, %v6552
        %v6554 = vpop.f32.mrf.mxu0
        %6555 = vmatprep.mubr.bf16.mxu0 0
        %6556 = vmatmul.mubr.bf16.gmra.mxu0 %v1068
        %v6557 = vpop.f32.mrf.mxu0
        %v6558 = vadd.f32 0.0, %v6557
        %v6559 = vpop.f32.mrf.mxu0
        %v6560 = vpop.f32.mrf.mxu0
        %v6561 = vadd.f32 0.0, %v6560
        %v6562 = vpop.f32.mrf.mxu0
        %6563 = vmatprep.mubr.bf16.mxu0 0
        %6564 = vmatmul.mubr.bf16.gmra.mxu0 %v1071
        %v6565 = vpop.f32.mrf.mxu0
        %v6566 = vadd.f32 0.0, %v6565
        %v6567 = vpop.f32.mrf.mxu0
        %v6568 = vpop.f32.mrf.mxu0
        %v6569 = vadd.f32 0.0, %v6568
        %v6570 = vpop.f32.mrf.mxu0
        %6571 = vdwg.mxu0
        %v6572 = vpack.c.bf16 %v6545, %v6542
        %v6573 = vpack.c.bf16 %v6553, %v6550
        %v6574 = vpack.c.bf16 %v6561, %v6558
        %v6575 = vpack.c.bf16 %v6569, %v6566
        %s6576 = scalar_lea.vmem %s2, 864
        %v6577 = vld [vmem:[%s6576] sm:$0xf]
        %v6578 = vld [vmem:[%s6576 + $0x4] sm:$0xf]
        %v6579 = vld [vmem:[%s6576 + $0x8] sm:$0xf]
        %v6580 = vld [vmem:[%s6576 + $0xc] sm:$0xf]
        %v6581 = vld [vmem:[%s6576 + $0x10] sm:$0xf]
        %v6582 = vld [vmem:[%s6576 + $0x14] sm:$0xf]
        %v6583 = vld [vmem:[%s6576 + $0x18] sm:$0xf]
        %v6584 = vld [vmem:[%s6576 + $0x1c] sm:$0xf]
        %6585 = vmatprep.subr.bf16.mxu0 0
        %6586 = vmatpush1.bf16.msra.mxu0 0
        %6587 = vmatprep.subr.bf16.mxu0 0
        %6588 = vmatpush1.bf16.msra.mxu0 0
        %6589 = vmatprep.subr.bf16.mxu0 0
        %6590 = vmatpush1.bf16.msra.mxu0 0
        %6591 = vmatprep.subr.bf16.mxu0 0
        %6592 = vmatpush1.bf16.msra.mxu0 0
        %6593 = vmatprep.subr.bf16.mxu0 0
        %6594 = vmatpush1.bf16.msra.mxu0 %v6368
        %6595 = vmatprep.subr.bf16.mxu0 0
        %6596 = vmatpush1.bf16.msra.mxu0 %v6367
        %6597 = vmatprep.subr.bf16.mxu0 0
        %6598 = vmatpush1.bf16.msra.mxu0 %v6366
        %6599 = vmatprep.subr.bf16.mxu0 0
        %6600 = vmatpush1.bf16.msra.mxu0 %v6365
        %6601 = vmatprep.subr.bf16.mxu0 0
        %6602 = vmatpush2.bf16.msra.mxu0 0
        %6603 = vmatprep.subr.bf16.mxu0 0
        %6604 = vmatpush2.bf16.msra.mxu0 0
        %6605 = vmatprep.subr.bf16.mxu0 0
        %6606 = vmatpush2.bf16.msra.mxu0 0
        %6607 = vmatprep.subr.bf16.mxu0 0
        %6608 = vmatpush2.bf16.msra.mxu0 0
        %6609 = vmatprep.subr.bf16.mxu0 0
        %6610 = vmatpush2.bf16.msra.mxu0 0
        %6611 = vmatprep.subr.bf16.mxu0 0
        %6612 = vmatpush2.bf16.msra.mxu0 0
        %6613 = vmatprep.subr.bf16.mxu0 0
        %6614 = vmatpush2.bf16.msra.mxu0 0
        %6615 = vmatprep.subr.bf16.mxu0 0
        %6616 = vmatpush2.bf16.msra.mxu0 0
        %6617 = vmatprep.mubr.bf16.mxu0 0
        %6618 = vmatmul.mubr.bf16.gmra.mxu0 %v1062
        %v6619 = vpop.f32.mrf.mxu0
        %v6620 = vadd.f32 0.0, %v6619
        %v6621 = vpop.f32.mrf.mxu0
        %v6622 = vpop.f32.mrf.mxu0
        %v6623 = vadd.f32 0.0, %v6622
        %v6624 = vpop.f32.mrf.mxu0
        %6625 = vmatprep.mubr.bf16.mxu0 0
        %6626 = vmatmul.mubr.bf16.gmra.mxu0 %v1065
        %v6627 = vpop.f32.mrf.mxu0
        %v6628 = vadd.f32 0.0, %v6627
        %v6629 = vpop.f32.mrf.mxu0
        %v6630 = vpop.f32.mrf.mxu0
        %v6631 = vadd.f32 0.0, %v6630
        %v6632 = vpop.f32.mrf.mxu0
        %6633 = vmatprep.mubr.bf16.mxu0 0
        %6634 = vmatmul.mubr.bf16.gmra.mxu0 %v1068
        %v6635 = vpop.f32.mrf.mxu0
        %v6636 = vadd.f32 0.0, %v6635
        %v6637 = vpop.f32.mrf.mxu0
        %v6638 = vpop.f32.mrf.mxu0
        %v6639 = vadd.f32 0.0, %v6638
        %v6640 = vpop.f32.mrf.mxu0
        %6641 = vmatprep.mubr.bf16.mxu0 0
        %6642 = vmatmul.mubr.bf16.gmra.mxu0 %v1071
        %v6643 = vpop.f32.mrf.mxu0
        %v6644 = vadd.f32 0.0, %v6643
        %v6645 = vpop.f32.mrf.mxu0
        %v6646 = vpop.f32.mrf.mxu0
        %v6647 = vadd.f32 0.0, %v6646
        %v6648 = vpop.f32.mrf.mxu0
        %6649 = vdwg.mxu0
        %v6650 = vpack.c.bf16 %v6623, %v6620
        %v6651 = vpack.c.bf16 %v6631, %v6628
        %v6652 = vpack.c.bf16 %v6639, %v6636
        %v6653 = vpack.c.bf16 %v6647, %v6644
        %s6654 = scalar_lea.vmem %s2, 896
        %v6655 = vld [vmem:[%s6654] sm:$0xf]
        %v6656 = vld [vmem:[%s6654 + $0x4] sm:$0xf]
        %v6657 = vld [vmem:[%s6654 + $0x8] sm:$0xf]
        %v6658 = vld [vmem:[%s6654 + $0xc] sm:$0xf]
        %v6659 = vld [vmem:[%s6654 + $0x10] sm:$0xf]
        %v6660 = vld [vmem:[%s6654 + $0x14] sm:$0xf]
        %v6661 = vld [vmem:[%s6654 + $0x18] sm:$0xf]
        %v6662 = vld [vmem:[%s6654 + $0x1c] sm:$0xf]
        %v6671 = vunpack.c.l.b16 %v6655
        %v6672 = vunpack.c.l.b16 %v6656
        %v6673 = vunpack.c.l.b16 %v6657
        %v6674 = vunpack.c.l.b16 %v6658
        %v6675 = vunpack.c.l.b16 %v6659
        %v6676 = vunpack.c.l.b16 %v6660
        %v6677 = vunpack.c.l.b16 %v6661
        %v6678 = vunpack.c.l.b16 %v6662
        %v6679 = vpack.c.b16 %v6672, %v6671
        %v6680 = vpack.c.b16 %v6674, %v6673
        %v6681 = vpack.c.b16 %v6676, %v6675
        %v6682 = vpack.c.b16 %v6678, %v6677
        %v6688 = vsel %vm898, %v6650, 0
        %v6691 = vsel %vm898, %v6651, 0
        %v6694 = vsel %vm898, %v6652, 0
        %v6697 = vsel %vm898, %v6653, 0
        %6699 = vmatprep.subr.bf16.mxu0 0
        %6700 = vmatpush1.bf16.msra.mxu0 0
        %6701 = vmatprep.subr.bf16.mxu0 0
        %6702 = vmatpush1.bf16.msra.mxu0 0
        %6703 = vmatprep.subr.bf16.mxu0 0
        %6704 = vmatpush1.bf16.msra.mxu0 0
        %6705 = vmatprep.subr.bf16.mxu0 0
        %6706 = vmatpush1.bf16.msra.mxu0 0
        %6707 = vmatprep.subr.bf16.mxu0 0
        %6708 = vmatpush1.bf16.msra.mxu0 %v6682
        %6709 = vmatprep.subr.bf16.mxu0 0
        %6710 = vmatpush1.bf16.msra.mxu0 %v6681
        %6711 = vmatprep.subr.bf16.mxu0 0
        %6712 = vmatpush1.bf16.msra.mxu0 %v6680
        %6713 = vmatprep.subr.bf16.mxu0 0
        %6714 = vmatpush1.bf16.msra.mxu0 %v6679
        %6715 = vmatprep.subr.bf16.mxu0 0
        %6716 = vmatpush2.bf16.msra.mxu0 0
        %6717 = vmatprep.subr.bf16.mxu0 0
        %6718 = vmatpush2.bf16.msra.mxu0 0
        %6719 = vmatprep.subr.bf16.mxu0 0
        %6720 = vmatpush2.bf16.msra.mxu0 0
        %6721 = vmatprep.subr.bf16.mxu0 0
        %6722 = vmatpush2.bf16.msra.mxu0 0
        %6723 = vmatprep.subr.bf16.mxu0 0
        %6724 = vmatpush2.bf16.msra.mxu0 0
        %6725 = vmatprep.subr.bf16.mxu0 0
        %6726 = vmatpush2.bf16.msra.mxu0 0
        %6727 = vmatprep.subr.bf16.mxu0 0
        %6728 = vmatpush2.bf16.msra.mxu0 0
        %6729 = vmatprep.subr.bf16.mxu0 0
        %6730 = vmatpush2.bf16.msra.mxu0 0
        %6731 = vmatprep.mubr.bf16.mxu0 0
        %6732 = vmatmul.mubr.bf16.gmra.mxu0 %v6688
        %v6733 = vpop.f32.mrf.mxu0
        %v6734 = vadd.f32 0.0, %v6733
        %v6735 = vpop.f32.mrf.mxu0
        %v6736 = vpop.f32.mrf.mxu0
        %v6737 = vadd.f32 0.0, %v6736
        %v6738 = vpop.f32.mrf.mxu0
        %6739 = vmatprep.mubr.bf16.mxu0 0
        %6740 = vmatmul.mubr.bf16.gmra.mxu0 %v6691
        %v6741 = vpop.f32.mrf.mxu0
        %v6742 = vadd.f32 0.0, %v6741
        %v6743 = vpop.f32.mrf.mxu0
        %v6744 = vpop.f32.mrf.mxu0
        %v6745 = vadd.f32 0.0, %v6744
        %v6746 = vpop.f32.mrf.mxu0
        %6747 = vmatprep.mubr.bf16.mxu0 0
        %6748 = vmatmul.mubr.bf16.gmra.mxu0 %v6694
        %v6749 = vpop.f32.mrf.mxu0
        %v6750 = vadd.f32 0.0, %v6749
        %v6751 = vpop.f32.mrf.mxu0
        %v6752 = vpop.f32.mrf.mxu0
        %v6753 = vadd.f32 0.0, %v6752
        %v6754 = vpop.f32.mrf.mxu0
        %6755 = vmatprep.mubr.bf16.mxu0 0
        %6756 = vmatmul.mubr.bf16.gmra.mxu0 %v6697
        %v6757 = vpop.f32.mrf.mxu0
        %v6758 = vadd.f32 0.0, %v6757
        %v6759 = vpop.f32.mrf.mxu0
        %v6760 = vpop.f32.mrf.mxu0
        %v6761 = vadd.f32 0.0, %v6760
        %v6762 = vpop.f32.mrf.mxu0
        %6763 = vdwg.mxu0
        %v6772 = vunpack.c.l.b16 %v6577
        %v6773 = vunpack.c.l.b16 %v6578
        %v6774 = vunpack.c.l.b16 %v6579
        %v6775 = vunpack.c.l.b16 %v6580
        %v6776 = vunpack.c.l.b16 %v6581
        %v6777 = vunpack.c.l.b16 %v6582
        %v6778 = vunpack.c.l.b16 %v6583
        %v6779 = vunpack.c.l.b16 %v6584
        %v6780 = vpack.c.b16 %v6773, %v6772
        %v6781 = vpack.c.b16 %v6775, %v6774
        %v6782 = vpack.c.b16 %v6777, %v6776
        %v6783 = vpack.c.b16 %v6779, %v6778
        %v6789 = vsel %vm898, %v6572, 0
        %v6792 = vsel %vm898, %v6573, 0
        %v6795 = vsel %vm898, %v6574, 0
        %v6798 = vsel %vm898, %v6575, 0
        %6800 = vmatprep.subr.bf16.mxu0 0
        %6801 = vmatpush1.bf16.msra.mxu0 0
        %6802 = vmatprep.subr.bf16.mxu0 0
        %6803 = vmatpush1.bf16.msra.mxu0 0
        %6804 = vmatprep.subr.bf16.mxu0 0
        %6805 = vmatpush1.bf16.msra.mxu0 0
        %6806 = vmatprep.subr.bf16.mxu0 0
        %6807 = vmatpush1.bf16.msra.mxu0 0
        %6808 = vmatprep.subr.bf16.mxu0 0
        %6809 = vmatpush1.bf16.msra.mxu0 %v6783
        %6810 = vmatprep.subr.bf16.mxu0 0
        %6811 = vmatpush1.bf16.msra.mxu0 %v6782
        %6812 = vmatprep.subr.bf16.mxu0 0
        %6813 = vmatpush1.bf16.msra.mxu0 %v6781
        %6814 = vmatprep.subr.bf16.mxu0 0
        %6815 = vmatpush1.bf16.msra.mxu0 %v6780
        %6816 = vmatprep.subr.bf16.mxu0 0
        %6817 = vmatpush2.bf16.msra.mxu0 0
        %6818 = vmatprep.subr.bf16.mxu0 0
        %6819 = vmatpush2.bf16.msra.mxu0 0
        %6820 = vmatprep.subr.bf16.mxu0 0
        %6821 = vmatpush2.bf16.msra.mxu0 0
        %6822 = vmatprep.subr.bf16.mxu0 0
        %6823 = vmatpush2.bf16.msra.mxu0 0
        %6824 = vmatprep.subr.bf16.mxu0 0
        %6825 = vmatpush2.bf16.msra.mxu0 0
        %6826 = vmatprep.subr.bf16.mxu0 0
        %6827 = vmatpush2.bf16.msra.mxu0 0
        %6828 = vmatprep.subr.bf16.mxu0 0
        %6829 = vmatpush2.bf16.msra.mxu0 0
        %6830 = vmatprep.subr.bf16.mxu0 0
        %6831 = vmatpush2.bf16.msra.mxu0 0
        %6832 = vmatprep.mubr.bf16.mxu0 0
        %6833 = vmatmul.mubr.bf16.gmra.mxu0 %v6789
        %v6834 = vpop.f32.mrf.mxu0
        %v6835 = vadd.f32 %v6734, %v6834
        %v6836 = vpop.f32.mrf.mxu0
        %v6837 = vpop.f32.mrf.mxu0
        %v6838 = vadd.f32 %v6737, %v6837
        %v6839 = vpop.f32.mrf.mxu0
        %6840 = vmatprep.mubr.bf16.mxu0 0
        %6841 = vmatmul.mubr.bf16.gmra.mxu0 %v6792
        %v6842 = vpop.f32.mrf.mxu0
        %v6843 = vadd.f32 %v6742, %v6842
        %v6844 = vpop.f32.mrf.mxu0
        %v6845 = vpop.f32.mrf.mxu0
        %v6846 = vadd.f32 %v6745, %v6845
        %v6847 = vpop.f32.mrf.mxu0
        %6848 = vmatprep.mubr.bf16.mxu0 0
        %6849 = vmatmul.mubr.bf16.gmra.mxu0 %v6795
        %v6850 = vpop.f32.mrf.mxu0
        %v6851 = vadd.f32 %v6750, %v6850
        %v6852 = vpop.f32.mrf.mxu0
        %v6853 = vpop.f32.mrf.mxu0
        %v6854 = vadd.f32 %v6753, %v6853
        %v6855 = vpop.f32.mrf.mxu0
        %6856 = vmatprep.mubr.bf16.mxu0 0
        %6857 = vmatmul.mubr.bf16.gmra.mxu0 %v6798
        %v6858 = vpop.f32.mrf.mxu0
        %v6859 = vadd.f32 %v6758, %v6858
        %v6860 = vpop.f32.mrf.mxu0
        %v6861 = vpop.f32.mrf.mxu0
        %v6862 = vadd.f32 %v6761, %v6861
        %v6863 = vpop.f32.mrf.mxu0
        %6864 = vdwg.mxu0
        %6865 = vmatprep.subr.bf16.mxu0 0
        %6866 = vmatpush1.bf16.msra.mxu0 0
        %6867 = vmatprep.subr.bf16.mxu0 0
        %6868 = vmatpush1.bf16.msra.mxu0 0
        %6869 = vmatprep.subr.bf16.mxu0 0
        %6870 = vmatpush1.bf16.msra.mxu0 0
        %6871 = vmatprep.subr.bf16.mxu0 0
        %6872 = vmatpush1.bf16.msra.mxu0 0
        %6873 = vmatprep.subr.bf16.mxu0 0
        %6874 = vmatpush1.bf16.msra.mxu0 %v6506
        %6875 = vmatprep.subr.bf16.mxu0 0
        %6876 = vmatpush1.bf16.msra.mxu0 %v6505
        %6877 = vmatprep.subr.bf16.mxu0 0
        %6878 = vmatpush1.bf16.msra.mxu0 %v6504
        %6879 = vmatprep.subr.bf16.mxu0 0
        %6880 = vmatpush1.bf16.msra.mxu0 %v6503
        %6881 = vmatprep.subr.bf16.mxu0 0
        %6882 = vmatpush2.bf16.msra.mxu0 0
        %6883 = vmatprep.subr.bf16.mxu0 0
        %6884 = vmatpush2.bf16.msra.mxu0 0
        %6885 = vmatprep.subr.bf16.mxu0 0
        %6886 = vmatpush2.bf16.msra.mxu0 0
        %6887 = vmatprep.subr.bf16.mxu0 0
        %6888 = vmatpush2.bf16.msra.mxu0 0
        %6889 = vmatprep.subr.bf16.mxu0 0
        %6890 = vmatpush2.bf16.msra.mxu0 0
        %6891 = vmatprep.subr.bf16.mxu0 0
        %6892 = vmatpush2.bf16.msra.mxu0 0
        %6893 = vmatprep.subr.bf16.mxu0 0
        %6894 = vmatpush2.bf16.msra.mxu0 0
        %6895 = vmatprep.subr.bf16.mxu0 0
        %6896 = vmatpush2.bf16.msra.mxu0 0
        %6897 = vmatprep.mubr.bf16.mxu0 0
        %6898 = vmatmul.mubr.bf16.gmra.mxu0 %v1062
        %v6899 = vpop.f32.mrf.mxu0
        %v6900 = vadd.f32 0.0, %v6899
        %v6901 = vpop.f32.mrf.mxu0
        %v6902 = vpop.f32.mrf.mxu0
        %v6903 = vadd.f32 0.0, %v6902
        %v6904 = vpop.f32.mrf.mxu0
        %6905 = vmatprep.mubr.bf16.mxu0 0
        %6906 = vmatmul.mubr.bf16.gmra.mxu0 %v1065
        %v6907 = vpop.f32.mrf.mxu0
        %v6908 = vadd.f32 0.0, %v6907
        %v6909 = vpop.f32.mrf.mxu0
        %v6910 = vpop.f32.mrf.mxu0
        %v6911 = vadd.f32 0.0, %v6910
        %v6912 = vpop.f32.mrf.mxu0
        %6913 = vmatprep.mubr.bf16.mxu0 0
        %6914 = vmatmul.mubr.bf16.gmra.mxu0 %v1068
        %v6915 = vpop.f32.mrf.mxu0
        %v6916 = vadd.f32 0.0, %v6915
        %v6917 = vpop.f32.mrf.mxu0
        %v6918 = vpop.f32.mrf.mxu0
        %v6919 = vadd.f32 0.0, %v6918
        %v6920 = vpop.f32.mrf.mxu0
        %6921 = vmatprep.mubr.bf16.mxu0 0
        %6922 = vmatmul.mubr.bf16.gmra.mxu0 %v1071
        %v6923 = vpop.f32.mrf.mxu0
        %v6924 = vadd.f32 0.0, %v6923
        %v6925 = vpop.f32.mrf.mxu0
        %v6926 = vpop.f32.mrf.mxu0
        %v6927 = vadd.f32 0.0, %v6926
        %v6928 = vpop.f32.mrf.mxu0
        %6929 = vdwg.mxu0
        %v6930 = vpack.c.bf16 %v6903, %v6900
        %v6931 = vpack.c.bf16 %v6911, %v6908
        %v6932 = vpack.c.bf16 %v6919, %v6916
        %v6933 = vpack.c.bf16 %v6927, %v6924
        %s6934 = scalar_lea.vmem %s2, 928
        %v6935 = vld [vmem:[%s6934] sm:$0xf]
        %v6936 = vld [vmem:[%s6934 + $0x4] sm:$0xf]
        %v6937 = vld [vmem:[%s6934 + $0x8] sm:$0xf]
        %v6938 = vld [vmem:[%s6934 + $0xc] sm:$0xf]
        %v6939 = vld [vmem:[%s6934 + $0x10] sm:$0xf]
        %v6940 = vld [vmem:[%s6934 + $0x14] sm:$0xf]
        %v6941 = vld [vmem:[%s6934 + $0x18] sm:$0xf]
        %v6942 = vld [vmem:[%s6934 + $0x1c] sm:$0xf]
        %v6951 = vunpack.c.l.b16 %v6935
        %v6952 = vunpack.c.l.b16 %v6936
        %v6953 = vunpack.c.l.b16 %v6937
        %v6954 = vunpack.c.l.b16 %v6938
        %v6955 = vunpack.c.l.b16 %v6939
        %v6956 = vunpack.c.l.b16 %v6940
        %v6957 = vunpack.c.l.b16 %v6941
        %v6958 = vunpack.c.l.b16 %v6942
        %v6959 = vpack.c.b16 %v6952, %v6951
        %v6960 = vpack.c.b16 %v6954, %v6953
        %v6961 = vpack.c.b16 %v6956, %v6955
        %v6962 = vpack.c.b16 %v6958, %v6957
        %v6968 = vsel %vm898, %v6930, 0
        %v6971 = vsel %vm898, %v6931, 0
        %v6974 = vsel %vm898, %v6932, 0
        %v6977 = vsel %vm898, %v6933, 0
        %6979 = vmatprep.subr.bf16.mxu0 0
        %6980 = vmatpush1.bf16.msra.mxu0 0
        %6981 = vmatprep.subr.bf16.mxu0 0
        %6982 = vmatpush1.bf16.msra.mxu0 0
        %6983 = vmatprep.subr.bf16.mxu0 0
        %6984 = vmatpush1.bf16.msra.mxu0 0
        %6985 = vmatprep.subr.bf16.mxu0 0
        %6986 = vmatpush1.bf16.msra.mxu0 0
        %6987 = vmatprep.subr.bf16.mxu0 0
        %6988 = vmatpush1.bf16.msra.mxu0 %v6962
        %6989 = vmatprep.subr.bf16.mxu0 0
        %6990 = vmatpush1.bf16.msra.mxu0 %v6961
        %6991 = vmatprep.subr.bf16.mxu0 0
        %6992 = vmatpush1.bf16.msra.mxu0 %v6960
        %6993 = vmatprep.subr.bf16.mxu0 0
        %6994 = vmatpush1.bf16.msra.mxu0 %v6959
        %6995 = vmatprep.subr.bf16.mxu0 0
        %6996 = vmatpush2.bf16.msra.mxu0 0
        %6997 = vmatprep.subr.bf16.mxu0 0
        %6998 = vmatpush2.bf16.msra.mxu0 0
        %6999 = vmatprep.subr.bf16.mxu0 0
        %7000 = vmatpush2.bf16.msra.mxu0 0
        %7001 = vmatprep.subr.bf16.mxu0 0
        %7002 = vmatpush2.bf16.msra.mxu0 0
        %7003 = vmatprep.subr.bf16.mxu0 0
        %7004 = vmatpush2.bf16.msra.mxu0 0
        %7005 = vmatprep.subr.bf16.mxu0 0
        %7006 = vmatpush2.bf16.msra.mxu0 0
        %7007 = vmatprep.subr.bf16.mxu0 0
        %7008 = vmatpush2.bf16.msra.mxu0 0
        %7009 = vmatprep.subr.bf16.mxu0 0
        %7010 = vmatpush2.bf16.msra.mxu0 0
        %7011 = vmatprep.mubr.bf16.mxu0 0
        %7012 = vmatmul.mubr.bf16.gmra.mxu0 %v6968
        %v7013 = vpop.f32.mrf.mxu0
        %v7014 = vadd.f32 0.0, %v7013
        %v7015 = vpop.f32.mrf.mxu0
        %v7016 = vpop.f32.mrf.mxu0
        %v7017 = vadd.f32 0.0, %v7016
        %v7018 = vpop.f32.mrf.mxu0
        %7019 = vmatprep.mubr.bf16.mxu0 0
        %7020 = vmatmul.mubr.bf16.gmra.mxu0 %v6971
        %v7021 = vpop.f32.mrf.mxu0
        %v7022 = vadd.f32 0.0, %v7021
        %v7023 = vpop.f32.mrf.mxu0
        %v7024 = vpop.f32.mrf.mxu0
        %v7025 = vadd.f32 0.0, %v7024
        %v7026 = vpop.f32.mrf.mxu0
        %7027 = vmatprep.mubr.bf16.mxu0 0
        %7028 = vmatmul.mubr.bf16.gmra.mxu0 %v6974
        %v7029 = vpop.f32.mrf.mxu0
        %v7030 = vadd.f32 0.0, %v7029
        %v7031 = vpop.f32.mrf.mxu0
        %v7032 = vpop.f32.mrf.mxu0
        %v7033 = vadd.f32 0.0, %v7032
        %v7034 = vpop.f32.mrf.mxu0
        %7035 = vmatprep.mubr.bf16.mxu0 0
        %7036 = vmatmul.mubr.bf16.gmra.mxu0 %v6977
        %v7037 = vpop.f32.mrf.mxu0
        %v7038 = vadd.f32 0.0, %v7037
        %v7039 = vpop.f32.mrf.mxu0
        %v7040 = vpop.f32.mrf.mxu0
        %v7041 = vadd.f32 0.0, %v7040
        %v7042 = vpop.f32.mrf.mxu0
        %7043 = vdwg.mxu0
        %v7044 = vadd.f32 %v6835, %v7014
        %v7045 = vadd.f32 %v6838, %v7017
        %v7046 = vadd.f32 %v6843, %v7022
        %v7047 = vadd.f32 %v6846, %v7025
        %v7048 = vadd.f32 %v6851, %v7030
        %v7049 = vadd.f32 %v6854, %v7033
        %v7050 = vadd.f32 %v6859, %v7038
        %v7051 = vadd.f32 %v6862, %v7041
        %s7052 = scalar_lea.vmem %s2, 960
        %v7053 = vld [vmem:[%s7052] sm:$0xf]
        %v7054 = vld [vmem:[%s7052 + $0x4] sm:$0xf]
        %v7055 = vld [vmem:[%s7052 + $0x8] sm:$0xf]
        %v7056 = vld [vmem:[%s7052 + $0xc] sm:$0xf]
        %v7057 = vld [vmem:[%s7052 + $0x10] sm:$0xf]
        %v7058 = vld [vmem:[%s7052 + $0x14] sm:$0xf]
        %v7059 = vld [vmem:[%s7052 + $0x18] sm:$0xf]
        %v7060 = vld [vmem:[%s7052 + $0x1c] sm:$0xf]
        %v7069 = vunpack.c.l.b16 %v7053
        %v7070 = vunpack.c.l.b16 %v7054
        %v7071 = vunpack.c.l.b16 %v7055
        %v7072 = vunpack.c.l.b16 %v7056
        %v7073 = vunpack.c.l.b16 %v7057
        %v7074 = vunpack.c.l.b16 %v7058
        %v7075 = vunpack.c.l.b16 %v7059
        %v7076 = vunpack.c.l.b16 %v7060
        %v7077 = vpack.c.b16 %v7070, %v7069
        %v7078 = vpack.c.b16 %v7072, %v7071
        %v7079 = vpack.c.b16 %v7074, %v7073
        %v7080 = vpack.c.b16 %v7076, %v7075
        %v7086 = vsel %vm898, %v6434, 0
        %v7089 = vsel %vm898, %v6435, 0
        %v7092 = vsel %vm898, %v6436, 0
        %v7095 = vsel %vm898, %v6437, 0
        %7097 = vmatprep.subr.bf16.mxu0 0
        %7098 = vmatpush1.bf16.msra.mxu0 0
        %7099 = vmatprep.subr.bf16.mxu0 0
        %7100 = vmatpush1.bf16.msra.mxu0 0
        %7101 = vmatprep.subr.bf16.mxu0 0
        %7102 = vmatpush1.bf16.msra.mxu0 0
        %7103 = vmatprep.subr.bf16.mxu0 0
        %7104 = vmatpush1.bf16.msra.mxu0 0
        %7105 = vmatprep.subr.bf16.mxu0 0
        %7106 = vmatpush1.bf16.msra.mxu0 %v7080
        %7107 = vmatprep.subr.bf16.mxu0 0
        %7108 = vmatpush1.bf16.msra.mxu0 %v7079
        %7109 = vmatprep.subr.bf16.mxu0 0
        %7110 = vmatpush1.bf16.msra.mxu0 %v7078
        %7111 = vmatprep.subr.bf16.mxu0 0
        %7112 = vmatpush1.bf16.msra.mxu0 %v7077
        %7113 = vmatprep.subr.bf16.mxu0 0
        %7114 = vmatpush2.bf16.msra.mxu0 0
        %7115 = vmatprep.subr.bf16.mxu0 0
        %7116 = vmatpush2.bf16.msra.mxu0 0
        %7117 = vmatprep.subr.bf16.mxu0 0
        %7118 = vmatpush2.bf16.msra.mxu0 0
        %7119 = vmatprep.subr.bf16.mxu0 0
        %7120 = vmatpush2.bf16.msra.mxu0 0
        %7121 = vmatprep.subr.bf16.mxu0 0
        %7122 = vmatpush2.bf16.msra.mxu0 0
        %7123 = vmatprep.subr.bf16.mxu0 0
        %7124 = vmatpush2.bf16.msra.mxu0 0
        %7125 = vmatprep.subr.bf16.mxu0 0
        %7126 = vmatpush2.bf16.msra.mxu0 0
        %7127 = vmatprep.subr.bf16.mxu0 0
        %7128 = vmatpush2.bf16.msra.mxu0 0
        %7129 = vmatprep.mubr.bf16.mxu0 0
        %7130 = vmatmul.mubr.bf16.gmra.mxu0 %v7086
        %v7131 = vpop.f32.mrf.mxu0
        %v7132 = vadd.f32 0.0, %v7131
        %v7133 = vpop.f32.mrf.mxu0
        %v7134 = vpop.f32.mrf.mxu0
        %v7135 = vadd.f32 0.0, %v7134
        %v7136 = vpop.f32.mrf.mxu0
        %7137 = vmatprep.mubr.bf16.mxu0 0
        %7138 = vmatmul.mubr.bf16.gmra.mxu0 %v7089
        %v7139 = vpop.f32.mrf.mxu0
        %v7140 = vadd.f32 0.0, %v7139
        %v7141 = vpop.f32.mrf.mxu0
        %v7142 = vpop.f32.mrf.mxu0
        %v7143 = vadd.f32 0.0, %v7142
        %v7144 = vpop.f32.mrf.mxu0
        %7145 = vmatprep.mubr.bf16.mxu0 0
        %7146 = vmatmul.mubr.bf16.gmra.mxu0 %v7092
        %v7147 = vpop.f32.mrf.mxu0
        %v7148 = vadd.f32 0.0, %v7147
        %v7149 = vpop.f32.mrf.mxu0
        %v7150 = vpop.f32.mrf.mxu0
        %v7151 = vadd.f32 0.0, %v7150
        %v7152 = vpop.f32.mrf.mxu0
        %7153 = vmatprep.mubr.bf16.mxu0 0
        %7154 = vmatmul.mubr.bf16.gmra.mxu0 %v7095
        %v7155 = vpop.f32.mrf.mxu0
        %v7156 = vadd.f32 0.0, %v7155
        %v7157 = vpop.f32.mrf.mxu0
        %v7158 = vpop.f32.mrf.mxu0
        %v7159 = vadd.f32 0.0, %v7158
        %v7160 = vpop.f32.mrf.mxu0
        %7161 = vdwg.mxu0
        %v7162 = vadd.f32 %v7044, %v7132
        %v7163 = vadd.f32 %v7045, %v7135
        %v7164 = vadd.f32 %v7046, %v7140
        %v7165 = vadd.f32 %v7047, %v7143
        %v7166 = vadd.f32 %v7048, %v7148
        %v7167 = vadd.f32 %v7049, %v7151
        %v7168 = vadd.f32 %v7050, %v7156
        %v7169 = vadd.f32 %v7051, %v7159
        %s7170 = scalar_lea.vmem %s2, 992
        %v7171 = vld [vmem:[%s7170] sm:$0xf]
        %v7172 = vld [vmem:[%s7170 + $0x4] sm:$0xf]
        %v7173 = vld [vmem:[%s7170 + $0x8] sm:$0xf]
        %v7174 = vld [vmem:[%s7170 + $0xc] sm:$0xf]
        %v7175 = vld [vmem:[%s7170 + $0x10] sm:$0xf]
        %v7176 = vld [vmem:[%s7170 + $0x14] sm:$0xf]
        %v7177 = vld [vmem:[%s7170 + $0x18] sm:$0xf]
        %v7178 = vld [vmem:[%s7170 + $0x1c] sm:$0xf]
        %v7187 = vunpack.c.l.b16 %v7171
        %v7188 = vunpack.c.l.b16 %v7172
        %v7189 = vunpack.c.l.b16 %v7173
        %v7190 = vunpack.c.l.b16 %v7174
        %v7191 = vunpack.c.l.b16 %v7175
        %v7192 = vunpack.c.l.b16 %v7176
        %v7193 = vunpack.c.l.b16 %v7177
        %v7194 = vunpack.c.l.b16 %v7178
        %v7195 = vpack.c.b16 %v7188, %v7187
        %v7196 = vpack.c.b16 %v7190, %v7189
        %v7197 = vpack.c.b16 %v7192, %v7191
        %v7198 = vpack.c.b16 %v7194, %v7193
        %v7204 = vsel %vm898, %v6365, 0
        %v7207 = vsel %vm898, %v6366, 0
        %v7210 = vsel %vm898, %v6367, 0
        %v7213 = vsel %vm898, %v6368, 0
        %7215 = vmatprep.subr.bf16.mxu0 0
        %7216 = vmatpush1.bf16.msra.mxu0 0
        %7217 = vmatprep.subr.bf16.mxu0 0
        %7218 = vmatpush1.bf16.msra.mxu0 0
        %7219 = vmatprep.subr.bf16.mxu0 0
        %7220 = vmatpush1.bf16.msra.mxu0 0
        %7221 = vmatprep.subr.bf16.mxu0 0
        %7222 = vmatpush1.bf16.msra.mxu0 0
        %7223 = vmatprep.subr.bf16.mxu0 0
        %7224 = vmatpush1.bf16.msra.mxu0 %v7198
        %7225 = vmatprep.subr.bf16.mxu0 0
        %7226 = vmatpush1.bf16.msra.mxu0 %v7197
        %7227 = vmatprep.subr.bf16.mxu0 0
        %7228 = vmatpush1.bf16.msra.mxu0 %v7196
        %7229 = vmatprep.subr.bf16.mxu0 0
        %7230 = vmatpush1.bf16.msra.mxu0 %v7195
        %7231 = vmatprep.subr.bf16.mxu0 0
        %7232 = vmatpush2.bf16.msra.mxu0 0
        %7233 = vmatprep.subr.bf16.mxu0 0
        %7234 = vmatpush2.bf16.msra.mxu0 0
        %7235 = vmatprep.subr.bf16.mxu0 0
        %7236 = vmatpush2.bf16.msra.mxu0 0
        %7237 = vmatprep.subr.bf16.mxu0 0
        %7238 = vmatpush2.bf16.msra.mxu0 0
        %7239 = vmatprep.subr.bf16.mxu0 0
        %7240 = vmatpush2.bf16.msra.mxu0 0
        %7241 = vmatprep.subr.bf16.mxu0 0
        %7242 = vmatpush2.bf16.msra.mxu0 0
        %7243 = vmatprep.subr.bf16.mxu0 0
        %7244 = vmatpush2.bf16.msra.mxu0 0
        %7245 = vmatprep.subr.bf16.mxu0 0
        %7246 = vmatpush2.bf16.msra.mxu0 0
        %7247 = vmatprep.mubr.bf16.mxu0 0
        %7248 = vmatmul.mubr.bf16.gmra.mxu0 %v7204
        %v7249 = vpop.f32.mrf.mxu0
        %v7250 = vadd.f32 0.0, %v7249
        %v7251 = vpop.f32.mrf.mxu0
        %v7252 = vpop.f32.mrf.mxu0
        %v7253 = vadd.f32 0.0, %v7252
        %v7254 = vpop.f32.mrf.mxu0
        %7255 = vmatprep.mubr.bf16.mxu0 0
        %7256 = vmatmul.mubr.bf16.gmra.mxu0 %v7207
        %v7257 = vpop.f32.mrf.mxu0
        %v7258 = vadd.f32 0.0, %v7257
        %v7259 = vpop.f32.mrf.mxu0
        %v7260 = vpop.f32.mrf.mxu0
        %v7261 = vadd.f32 0.0, %v7260
        %v7262 = vpop.f32.mrf.mxu0
        %7263 = vmatprep.mubr.bf16.mxu0 0
        %7264 = vmatmul.mubr.bf16.gmra.mxu0 %v7210
        %v7265 = vpop.f32.mrf.mxu0
        %v7266 = vadd.f32 0.0, %v7265
        %v7267 = vpop.f32.mrf.mxu0
        %v7268 = vpop.f32.mrf.mxu0
        %v7269 = vadd.f32 0.0, %v7268
        %v7270 = vpop.f32.mrf.mxu0
        %7271 = vmatprep.mubr.bf16.mxu0 0
        %7272 = vmatmul.mubr.bf16.gmra.mxu0 %v7213
        %v7273 = vpop.f32.mrf.mxu0
        %v7274 = vadd.f32 0.0, %v7273
        %v7275 = vpop.f32.mrf.mxu0
        %v7276 = vpop.f32.mrf.mxu0
        %v7277 = vadd.f32 0.0, %v7276
        %v7278 = vpop.f32.mrf.mxu0
        %7279 = vdwg.mxu0
        %v7280 = vadd.f32 %v7162, %v7250
        %v7281 = vadd.f32 %v7163, %v7253
        %v7282 = vadd.f32 %v7164, %v7258
        %v7283 = vadd.f32 %v7165, %v7261
        %v7284 = vadd.f32 %v7166, %v7266
        %v7285 = vadd.f32 %v7167, %v7269
        %v7286 = vadd.f32 %v7168, %v7274
        %v7287 = vadd.f32 %v7169, %v7277
        %s7288 = scalar_lea.vmem %s2, 1024
        %v7289 = vld [vmem:[%s7288] sm:$0xf]
        %v7290 = vld [vmem:[%s7288 + $0x4] sm:$0xf]
        %v7291 = vld [vmem:[%s7288 + $0x8] sm:$0xf]
        %v7292 = vld [vmem:[%s7288 + $0xc] sm:$0xf]
        %v7293 = vld [vmem:[%s7288 + $0x10] sm:$0xf]
        %v7294 = vld [vmem:[%s7288 + $0x14] sm:$0xf]
        %v7295 = vld [vmem:[%s7288 + $0x18] sm:$0xf]
        %v7296 = vld [vmem:[%s7288 + $0x1c] sm:$0xf]
        %v7305 = vunpack.c.l.b16 %v7289
        %v7306 = vunpack.c.l.b16 %v7290
        %v7307 = vunpack.c.l.b16 %v7291
        %v7308 = vunpack.c.l.b16 %v7292
        %v7309 = vunpack.c.l.b16 %v7293
        %v7310 = vunpack.c.l.b16 %v7294
        %v7311 = vunpack.c.l.b16 %v7295
        %v7312 = vunpack.c.l.b16 %v7296
        %v7313 = vpack.c.b16 %v7306, %v7305
        %v7314 = vpack.c.b16 %v7308, %v7307
        %v7315 = vpack.c.b16 %v7310, %v7309
        %v7316 = vpack.c.b16 %v7312, %v7311
        %v7322 = vsel %vm898, %v6503, 0
        %v7325 = vsel %vm898, %v6504, 0
        %v7328 = vsel %vm898, %v6505, 0
        %v7331 = vsel %vm898, %v6506, 0
        %7333 = vmatprep.subr.bf16.mxu0 0
        %7334 = vmatpush1.bf16.msra.mxu0 0
        %7335 = vmatprep.subr.bf16.mxu0 0
        %7336 = vmatpush1.bf16.msra.mxu0 0
        %7337 = vmatprep.subr.bf16.mxu0 0
        %7338 = vmatpush1.bf16.msra.mxu0 0
        %7339 = vmatprep.subr.bf16.mxu0 0
        %7340 = vmatpush1.bf16.msra.mxu0 0
        %7341 = vmatprep.subr.bf16.mxu0 0
        %7342 = vmatpush1.bf16.msra.mxu0 %v7316
        %7343 = vmatprep.subr.bf16.mxu0 0
        %7344 = vmatpush1.bf16.msra.mxu0 %v7315
        %7345 = vmatprep.subr.bf16.mxu0 0
        %7346 = vmatpush1.bf16.msra.mxu0 %v7314
        %7347 = vmatprep.subr.bf16.mxu0 0
        %7348 = vmatpush1.bf16.msra.mxu0 %v7313
        %7349 = vmatprep.subr.bf16.mxu0 0
        %7350 = vmatpush2.bf16.msra.mxu0 0
        %7351 = vmatprep.subr.bf16.mxu0 0
        %7352 = vmatpush2.bf16.msra.mxu0 0
        %7353 = vmatprep.subr.bf16.mxu0 0
        %7354 = vmatpush2.bf16.msra.mxu0 0
        %7355 = vmatprep.subr.bf16.mxu0 0
        %7356 = vmatpush2.bf16.msra.mxu0 0
        %7357 = vmatprep.subr.bf16.mxu0 0
        %7358 = vmatpush2.bf16.msra.mxu0 0
        %7359 = vmatprep.subr.bf16.mxu0 0
        %7360 = vmatpush2.bf16.msra.mxu0 0
        %7361 = vmatprep.subr.bf16.mxu0 0
        %7362 = vmatpush2.bf16.msra.mxu0 0
        %7363 = vmatprep.subr.bf16.mxu0 0
        %7364 = vmatpush2.bf16.msra.mxu0 0
        %7365 = vmatprep.mubr.bf16.mxu0 0
        %7366 = vmatmul.mubr.bf16.gmra.mxu0 %v7322
        %v7367 = vpop.f32.mrf.mxu0
        %v7368 = vadd.f32 0.0, %v7367
        %v7369 = vpop.f32.mrf.mxu0
        %v7370 = vpop.f32.mrf.mxu0
        %v7371 = vadd.f32 0.0, %v7370
        %v7372 = vpop.f32.mrf.mxu0
        %7373 = vmatprep.mubr.bf16.mxu0 0
        %7374 = vmatmul.mubr.bf16.gmra.mxu0 %v7325
        %v7375 = vpop.f32.mrf.mxu0
        %v7376 = vadd.f32 0.0, %v7375
        %v7377 = vpop.f32.mrf.mxu0
        %v7378 = vpop.f32.mrf.mxu0
        %v7379 = vadd.f32 0.0, %v7378
        %v7380 = vpop.f32.mrf.mxu0
        %7381 = vmatprep.mubr.bf16.mxu0 0
        %7382 = vmatmul.mubr.bf16.gmra.mxu0 %v7328
        %v7383 = vpop.f32.mrf.mxu0
        %v7384 = vadd.f32 0.0, %v7383
        %v7385 = vpop.f32.mrf.mxu0
        %v7386 = vpop.f32.mrf.mxu0
        %v7387 = vadd.f32 0.0, %v7386
        %v7388 = vpop.f32.mrf.mxu0
        %7389 = vmatprep.mubr.bf16.mxu0 0
        %7390 = vmatmul.mubr.bf16.gmra.mxu0 %v7331
        %v7391 = vpop.f32.mrf.mxu0
        %v7392 = vadd.f32 0.0, %v7391
        %v7393 = vpop.f32.mrf.mxu0
        %v7394 = vpop.f32.mrf.mxu0
        %v7395 = vadd.f32 0.0, %v7394
        %v7396 = vpop.f32.mrf.mxu0
        %7397 = vdwg.mxu0
        %v7398 = vadd.f32 %v7280, %v7368
        %v7399 = vadd.f32 %v7281, %v7371
        %v7400 = vadd.f32 %v7282, %v7376
        %v7401 = vadd.f32 %v7283, %v7379
        %v7402 = vadd.f32 %v7284, %v7384
        %v7403 = vadd.f32 %v7285, %v7387
        %v7404 = vadd.f32 %v7286, %v7392
        %v7405 = vadd.f32 %v7287, %v7395
        %7406 = vmatprep.subr.bf16.mxu0 0
        %7407 = vmatpush1.bf16.msra.mxu0 0
        %7408 = vmatprep.subr.bf16.mxu0 0
        %7409 = vmatpush1.bf16.msra.mxu0 0
        %7410 = vmatprep.subr.bf16.mxu0 0
        %7411 = vmatpush1.bf16.msra.mxu0 0
        %7412 = vmatprep.subr.bf16.mxu0 0
        %7413 = vmatpush1.bf16.msra.mxu0 0
        %7414 = vmatprep.subr.bf16.mxu0 0
        %7415 = vmatpush1.bf16.msra.mxu0 %v6437
        %7416 = vmatprep.subr.bf16.mxu0 0
        %7417 = vmatpush1.bf16.msra.mxu0 %v6436
        %7418 = vmatprep.subr.bf16.mxu0 0
        %7419 = vmatpush1.bf16.msra.mxu0 %v6435
        %7420 = vmatprep.subr.bf16.mxu0 0
        %7421 = vmatpush1.bf16.msra.mxu0 %v6434
        %7422 = vmatprep.subr.bf16.mxu0 0
        %7423 = vmatpush2.bf16.msra.mxu0 0
        %7424 = vmatprep.subr.bf16.mxu0 0
        %7425 = vmatpush2.bf16.msra.mxu0 0
        %7426 = vmatprep.subr.bf16.mxu0 0
        %7427 = vmatpush2.bf16.msra.mxu0 0
        %7428 = vmatprep.subr.bf16.mxu0 0
        %7429 = vmatpush2.bf16.msra.mxu0 0
        %7430 = vmatprep.subr.bf16.mxu0 0
        %7431 = vmatpush2.bf16.msra.mxu0 0
        %7432 = vmatprep.subr.bf16.mxu0 0
        %7433 = vmatpush2.bf16.msra.mxu0 0
        %7434 = vmatprep.subr.bf16.mxu0 0
        %7435 = vmatpush2.bf16.msra.mxu0 0
        %7436 = vmatprep.subr.bf16.mxu0 0
        %7437 = vmatpush2.bf16.msra.mxu0 0
        %7438 = vmatprep.mubr.bf16.mxu0 0
        %7439 = vmatmul.mubr.bf16.gmra.mxu0 %v2461
        %v7440 = vpop.f32.mrf.mxu0
        %v7441 = vadd.f32 0.0, %v7440
        %v7442 = vpop.f32.mrf.mxu0
        %v7443 = vpop.f32.mrf.mxu0
        %v7444 = vadd.f32 0.0, %v7443
        %v7445 = vpop.f32.mrf.mxu0
        %7446 = vmatprep.mubr.bf16.mxu0 0
        %7447 = vmatmul.mubr.bf16.gmra.mxu0 %v2464
        %v7448 = vpop.f32.mrf.mxu0
        %v7449 = vadd.f32 0.0, %v7448
        %v7450 = vpop.f32.mrf.mxu0
        %v7451 = vpop.f32.mrf.mxu0
        %v7452 = vadd.f32 0.0, %v7451
        %v7453 = vpop.f32.mrf.mxu0
        %7454 = vmatprep.mubr.bf16.mxu0 0
        %7455 = vmatmul.mubr.bf16.gmra.mxu0 %v2467
        %v7456 = vpop.f32.mrf.mxu0
        %v7457 = vadd.f32 0.0, %v7456
        %v7458 = vpop.f32.mrf.mxu0
        %v7459 = vpop.f32.mrf.mxu0
        %v7460 = vadd.f32 0.0, %v7459
        %v7461 = vpop.f32.mrf.mxu0
        %7462 = vmatprep.mubr.bf16.mxu0 0
        %7463 = vmatmul.mubr.bf16.gmra.mxu0 %v2470
        %v7464 = vpop.f32.mrf.mxu0
        %v7465 = vadd.f32 0.0, %v7464
        %v7466 = vpop.f32.mrf.mxu0
        %v7467 = vpop.f32.mrf.mxu0
        %v7468 = vadd.f32 0.0, %v7467
        %v7469 = vpop.f32.mrf.mxu0
        %7470 = vdwg.mxu0
        %v7471 = vpack.c.bf16 %v7444, %v7441
        %v7472 = vpack.c.bf16 %v7452, %v7449
        %v7473 = vpack.c.bf16 %v7460, %v7457
        %v7474 = vpack.c.bf16 %v7468, %v7465
        %s7475 = scalar_lea.vmem %s2, 1056
        %v7476 = vld [vmem:[%s7475] sm:$0xf]
        %v7477 = vld [vmem:[%s7475 + $0x4] sm:$0xf]
        %v7478 = vld [vmem:[%s7475 + $0x8] sm:$0xf]
        %v7479 = vld [vmem:[%s7475 + $0xc] sm:$0xf]
        %v7480 = vld [vmem:[%s7475 + $0x10] sm:$0xf]
        %v7481 = vld [vmem:[%s7475 + $0x14] sm:$0xf]
        %v7482 = vld [vmem:[%s7475 + $0x18] sm:$0xf]
        %v7483 = vld [vmem:[%s7475 + $0x1c] sm:$0xf]
        %v7492 = vunpack.c.l.b16 %v7476
        %v7493 = vunpack.c.l.b16 %v7477
        %v7494 = vunpack.c.l.b16 %v7478
        %v7495 = vunpack.c.l.b16 %v7479
        %v7496 = vunpack.c.l.b16 %v7480
        %v7497 = vunpack.c.l.b16 %v7481
        %v7498 = vunpack.c.l.b16 %v7482
        %v7499 = vunpack.c.l.b16 %v7483
        %v7500 = vpack.c.b16 %v7493, %v7492
        %v7501 = vpack.c.b16 %v7495, %v7494
        %v7502 = vpack.c.b16 %v7497, %v7496
        %v7503 = vpack.c.b16 %v7499, %v7498
        %v7509 = vsel %vm898, %v7471, 0
        %v7512 = vsel %vm898, %v7472, 0
        %v7515 = vsel %vm898, %v7473, 0
        %v7518 = vsel %vm898, %v7474, 0
        %7520 = vmatprep.subr.bf16.mxu0 0
        %7521 = vmatpush1.bf16.msra.mxu0 0
        %7522 = vmatprep.subr.bf16.mxu0 0
        %7523 = vmatpush1.bf16.msra.mxu0 0
        %7524 = vmatprep.subr.bf16.mxu0 0
        %7525 = vmatpush1.bf16.msra.mxu0 0
        %7526 = vmatprep.subr.bf16.mxu0 0
        %7527 = vmatpush1.bf16.msra.mxu0 0
        %7528 = vmatprep.subr.bf16.mxu0 0
        %7529 = vmatpush1.bf16.msra.mxu0 %v7503
        %7530 = vmatprep.subr.bf16.mxu0 0
        %7531 = vmatpush1.bf16.msra.mxu0 %v7502
        %7532 = vmatprep.subr.bf16.mxu0 0
        %7533 = vmatpush1.bf16.msra.mxu0 %v7501
        %7534 = vmatprep.subr.bf16.mxu0 0
        %7535 = vmatpush1.bf16.msra.mxu0 %v7500
        %7536 = vmatprep.subr.bf16.mxu0 0
        %7537 = vmatpush2.bf16.msra.mxu0 0
        %7538 = vmatprep.subr.bf16.mxu0 0
        %7539 = vmatpush2.bf16.msra.mxu0 0
        %7540 = vmatprep.subr.bf16.mxu0 0
        %7541 = vmatpush2.bf16.msra.mxu0 0
        %7542 = vmatprep.subr.bf16.mxu0 0
        %7543 = vmatpush2.bf16.msra.mxu0 0
        %7544 = vmatprep.subr.bf16.mxu0 0
        %7545 = vmatpush2.bf16.msra.mxu0 0
        %7546 = vmatprep.subr.bf16.mxu0 0
        %7547 = vmatpush2.bf16.msra.mxu0 0
        %7548 = vmatprep.subr.bf16.mxu0 0
        %7549 = vmatpush2.bf16.msra.mxu0 0
        %7550 = vmatprep.subr.bf16.mxu0 0
        %7551 = vmatpush2.bf16.msra.mxu0 0
        %7552 = vmatprep.mubr.bf16.mxu0 0
        %7553 = vmatmul.mubr.bf16.gmra.mxu0 %v7509
        %v7554 = vpop.f32.mrf.mxu0
        %v7555 = vadd.f32 0.0, %v7554
        %v7556 = vpop.f32.mrf.mxu0
        %v7557 = vpop.f32.mrf.mxu0
        %v7558 = vadd.f32 0.0, %v7557
        %v7559 = vpop.f32.mrf.mxu0
        %7560 = vmatprep.mubr.bf16.mxu0 0
        %7561 = vmatmul.mubr.bf16.gmra.mxu0 %v7512
        %v7562 = vpop.f32.mrf.mxu0
        %v7563 = vadd.f32 0.0, %v7562
        %v7564 = vpop.f32.mrf.mxu0
        %v7565 = vpop.f32.mrf.mxu0
        %v7566 = vadd.f32 0.0, %v7565
        %v7567 = vpop.f32.mrf.mxu0
        %7568 = vmatprep.mubr.bf16.mxu0 0
        %7569 = vmatmul.mubr.bf16.gmra.mxu0 %v7515
        %v7570 = vpop.f32.mrf.mxu0
        %v7571 = vadd.f32 0.0, %v7570
        %v7572 = vpop.f32.mrf.mxu0
        %v7573 = vpop.f32.mrf.mxu0
        %v7574 = vadd.f32 0.0, %v7573
        %v7575 = vpop.f32.mrf.mxu0
        %7576 = vmatprep.mubr.bf16.mxu0 0
        %7577 = vmatmul.mubr.bf16.gmra.mxu0 %v7518
        %v7578 = vpop.f32.mrf.mxu0
        %v7579 = vadd.f32 0.0, %v7578
        %v7580 = vpop.f32.mrf.mxu0
        %v7581 = vpop.f32.mrf.mxu0
        %v7582 = vadd.f32 0.0, %v7581
        %v7583 = vpop.f32.mrf.mxu0
        %7584 = vdwg.mxu0
        %v7585 = vadd.f32 %v7398, %v7555
        %v7586 = vadd.f32 %v7399, %v7558
        %v7587 = vadd.f32 %v7400, %v7563
        %v7588 = vadd.f32 %v7401, %v7566
        %v7589 = vadd.f32 %v7402, %v7571
        %v7590 = vadd.f32 %v7403, %v7574
        %v7591 = vadd.f32 %v7404, %v7579
        %v7592 = vadd.f32 %v7405, %v7582
        %7593 = vmatprep.subr.bf16.mxu0 0
        %7594 = vmatpush1.bf16.msra.mxu0 0
        %7595 = vmatprep.subr.bf16.mxu0 0
        %7596 = vmatpush1.bf16.msra.mxu0 0
        %7597 = vmatprep.subr.bf16.mxu0 0
        %7598 = vmatpush1.bf16.msra.mxu0 0
        %7599 = vmatprep.subr.bf16.mxu0 0
        %7600 = vmatpush1.bf16.msra.mxu0 0
        %7601 = vmatprep.subr.bf16.mxu0 0
        %7602 = vmatpush1.bf16.msra.mxu0 %v6368
        %7603 = vmatprep.subr.bf16.mxu0 0
        %7604 = vmatpush1.bf16.msra.mxu0 %v6367
        %7605 = vmatprep.subr.bf16.mxu0 0
        %7606 = vmatpush1.bf16.msra.mxu0 %v6366
        %7607 = vmatprep.subr.bf16.mxu0 0
        %7608 = vmatpush1.bf16.msra.mxu0 %v6365
        %7609 = vmatprep.subr.bf16.mxu0 0
        %7610 = vmatpush2.bf16.msra.mxu0 0
        %7611 = vmatprep.subr.bf16.mxu0 0
        %7612 = vmatpush2.bf16.msra.mxu0 0
        %7613 = vmatprep.subr.bf16.mxu0 0
        %7614 = vmatpush2.bf16.msra.mxu0 0
        %7615 = vmatprep.subr.bf16.mxu0 0
        %7616 = vmatpush2.bf16.msra.mxu0 0
        %7617 = vmatprep.subr.bf16.mxu0 0
        %7618 = vmatpush2.bf16.msra.mxu0 0
        %7619 = vmatprep.subr.bf16.mxu0 0
        %7620 = vmatpush2.bf16.msra.mxu0 0
        %7621 = vmatprep.subr.bf16.mxu0 0
        %7622 = vmatpush2.bf16.msra.mxu0 0
        %7623 = vmatprep.subr.bf16.mxu0 0
        %7624 = vmatpush2.bf16.msra.mxu0 0
        %7625 = vmatprep.mubr.bf16.mxu0 0
        %7626 = vmatmul.mubr.bf16.gmra.mxu0 %v2461
        %v7627 = vpop.f32.mrf.mxu0
        %v7628 = vadd.f32 0.0, %v7627
        %v7629 = vpop.f32.mrf.mxu0
        %v7630 = vpop.f32.mrf.mxu0
        %v7631 = vadd.f32 0.0, %v7630
        %v7632 = vpop.f32.mrf.mxu0
        %7633 = vmatprep.mubr.bf16.mxu0 0
        %7634 = vmatmul.mubr.bf16.gmra.mxu0 %v2464
        %v7635 = vpop.f32.mrf.mxu0
        %v7636 = vadd.f32 0.0, %v7635
        %v7637 = vpop.f32.mrf.mxu0
        %v7638 = vpop.f32.mrf.mxu0
        %v7639 = vadd.f32 0.0, %v7638
        %v7640 = vpop.f32.mrf.mxu0
        %7641 = vmatprep.mubr.bf16.mxu0 0
        %7642 = vmatmul.mubr.bf16.gmra.mxu0 %v2467
        %v7643 = vpop.f32.mrf.mxu0
        %v7644 = vadd.f32 0.0, %v7643
        %v7645 = vpop.f32.mrf.mxu0
        %v7646 = vpop.f32.mrf.mxu0
        %v7647 = vadd.f32 0.0, %v7646
        %v7648 = vpop.f32.mrf.mxu0
        %7649 = vmatprep.mubr.bf16.mxu0 0
        %7650 = vmatmul.mubr.bf16.gmra.mxu0 %v2470
        %v7651 = vpop.f32.mrf.mxu0
        %v7652 = vadd.f32 0.0, %v7651
        %v7653 = vpop.f32.mrf.mxu0
        %v7654 = vpop.f32.mrf.mxu0
        %v7655 = vadd.f32 0.0, %v7654
        %v7656 = vpop.f32.mrf.mxu0
        %7657 = vdwg.mxu0
        %v7658 = vpack.c.bf16 %v7631, %v7628
        %v7659 = vpack.c.bf16 %v7639, %v7636
        %v7660 = vpack.c.bf16 %v7647, %v7644
        %v7661 = vpack.c.bf16 %v7655, %v7652
        %s7662 = scalar_lea.vmem %s2, 1088
        %v7663 = vld [vmem:[%s7662] sm:$0xf]
        %v7664 = vld [vmem:[%s7662 + $0x4] sm:$0xf]
        %v7665 = vld [vmem:[%s7662 + $0x8] sm:$0xf]
        %v7666 = vld [vmem:[%s7662 + $0xc] sm:$0xf]
        %v7667 = vld [vmem:[%s7662 + $0x10] sm:$0xf]
        %v7668 = vld [vmem:[%s7662 + $0x14] sm:$0xf]
        %v7669 = vld [vmem:[%s7662 + $0x18] sm:$0xf]
        %v7670 = vld [vmem:[%s7662 + $0x1c] sm:$0xf]
        %v7679 = vunpack.c.l.b16 %v7663
        %v7680 = vunpack.c.l.b16 %v7664
        %v7681 = vunpack.c.l.b16 %v7665
        %v7682 = vunpack.c.l.b16 %v7666
        %v7683 = vunpack.c.l.b16 %v7667
        %v7684 = vunpack.c.l.b16 %v7668
        %v7685 = vunpack.c.l.b16 %v7669
        %v7686 = vunpack.c.l.b16 %v7670
        %v7687 = vpack.c.b16 %v7680, %v7679
        %v7688 = vpack.c.b16 %v7682, %v7681
        %v7689 = vpack.c.b16 %v7684, %v7683
        %v7690 = vpack.c.b16 %v7686, %v7685
        %v7696 = vsel %vm898, %v7658, 0
        %v7699 = vsel %vm898, %v7659, 0
        %v7702 = vsel %vm898, %v7660, 0
        %v7705 = vsel %vm898, %v7661, 0
        %7707 = vmatprep.subr.bf16.mxu0 0
        %7708 = vmatpush1.bf16.msra.mxu0 0
        %7709 = vmatprep.subr.bf16.mxu0 0
        %7710 = vmatpush1.bf16.msra.mxu0 0
        %7711 = vmatprep.subr.bf16.mxu0 0
        %7712 = vmatpush1.bf16.msra.mxu0 0
        %7713 = vmatprep.subr.bf16.mxu0 0
        %7714 = vmatpush1.bf16.msra.mxu0 0
        %7715 = vmatprep.subr.bf16.mxu0 0
        %7716 = vmatpush1.bf16.msra.mxu0 %v7690
        %7717 = vmatprep.subr.bf16.mxu0 0
        %7718 = vmatpush1.bf16.msra.mxu0 %v7689
        %7719 = vmatprep.subr.bf16.mxu0 0
        %7720 = vmatpush1.bf16.msra.mxu0 %v7688
        %7721 = vmatprep.subr.bf16.mxu0 0
        %7722 = vmatpush1.bf16.msra.mxu0 %v7687
        %7723 = vmatprep.subr.bf16.mxu0 0
        %7724 = vmatpush2.bf16.msra.mxu0 0
        %7725 = vmatprep.subr.bf16.mxu0 0
        %7726 = vmatpush2.bf16.msra.mxu0 0
        %7727 = vmatprep.subr.bf16.mxu0 0
        %7728 = vmatpush2.bf16.msra.mxu0 0
        %7729 = vmatprep.subr.bf16.mxu0 0
        %7730 = vmatpush2.bf16.msra.mxu0 0
        %7731 = vmatprep.subr.bf16.mxu0 0
        %7732 = vmatpush2.bf16.msra.mxu0 0
        %7733 = vmatprep.subr.bf16.mxu0 0
        %7734 = vmatpush2.bf16.msra.mxu0 0
        %7735 = vmatprep.subr.bf16.mxu0 0
        %7736 = vmatpush2.bf16.msra.mxu0 0
        %7737 = vmatprep.subr.bf16.mxu0 0
        %7738 = vmatpush2.bf16.msra.mxu0 0
        %7739 = vmatprep.mubr.bf16.mxu0 0
        %7740 = vmatmul.mubr.bf16.gmra.mxu0 %v7696
        %v7741 = vpop.f32.mrf.mxu0
        %v7742 = vadd.f32 0.0, %v7741
        %v7743 = vpop.f32.mrf.mxu0
        %v7744 = vpop.f32.mrf.mxu0
        %v7745 = vadd.f32 0.0, %v7744
        %v7746 = vpop.f32.mrf.mxu0
        %7747 = vmatprep.mubr.bf16.mxu0 0
        %7748 = vmatmul.mubr.bf16.gmra.mxu0 %v7699
        %v7749 = vpop.f32.mrf.mxu0
        %v7750 = vadd.f32 0.0, %v7749
        %v7751 = vpop.f32.mrf.mxu0
        %v7752 = vpop.f32.mrf.mxu0
        %v7753 = vadd.f32 0.0, %v7752
        %v7754 = vpop.f32.mrf.mxu0
        %7755 = vmatprep.mubr.bf16.mxu0 0
        %7756 = vmatmul.mubr.bf16.gmra.mxu0 %v7702
        %v7757 = vpop.f32.mrf.mxu0
        %v7758 = vadd.f32 0.0, %v7757
        %v7759 = vpop.f32.mrf.mxu0
        %v7760 = vpop.f32.mrf.mxu0
        %v7761 = vadd.f32 0.0, %v7760
        %v7762 = vpop.f32.mrf.mxu0
        %7763 = vmatprep.mubr.bf16.mxu0 0
        %7764 = vmatmul.mubr.bf16.gmra.mxu0 %v7705
        %v7765 = vpop.f32.mrf.mxu0
        %v7766 = vadd.f32 0.0, %v7765
        %v7767 = vpop.f32.mrf.mxu0
        %v7768 = vpop.f32.mrf.mxu0
        %v7769 = vadd.f32 0.0, %v7768
        %v7770 = vpop.f32.mrf.mxu0
        %7771 = vdwg.mxu0
        %v7772 = vadd.f32 %v7585, %v7742
        %v7773 = vadd.f32 %v7586, %v7745
        %v7774 = vadd.f32 %v7587, %v7750
        %v7775 = vadd.f32 %v7588, %v7753
        %v7776 = vadd.f32 %v7589, %v7758
        %v7777 = vadd.f32 %v7590, %v7761
        %v7778 = vadd.f32 %v7591, %v7766
        %v7779 = vadd.f32 %v7592, %v7769
        %7780 = vmatprep.subr.bf16.mxu0 0
        %7781 = vmatpush1.bf16.msra.mxu0 0
        %7782 = vmatprep.subr.bf16.mxu0 0
        %7783 = vmatpush1.bf16.msra.mxu0 0
        %7784 = vmatprep.subr.bf16.mxu0 0
        %7785 = vmatpush1.bf16.msra.mxu0 0
        %7786 = vmatprep.subr.bf16.mxu0 0
        %7787 = vmatpush1.bf16.msra.mxu0 0
        %7788 = vmatprep.subr.bf16.mxu0 0
        %7789 = vmatpush1.bf16.msra.mxu0 %v6506
        %7790 = vmatprep.subr.bf16.mxu0 0
        %7791 = vmatpush1.bf16.msra.mxu0 %v6505
        %7792 = vmatprep.subr.bf16.mxu0 0
        %7793 = vmatpush1.bf16.msra.mxu0 %v6504
        %7794 = vmatprep.subr.bf16.mxu0 0
        %7795 = vmatpush1.bf16.msra.mxu0 %v6503
        %7796 = vmatprep.subr.bf16.mxu0 0
        %7797 = vmatpush2.bf16.msra.mxu0 0
        %7798 = vmatprep.subr.bf16.mxu0 0
        %7799 = vmatpush2.bf16.msra.mxu0 0
        %7800 = vmatprep.subr.bf16.mxu0 0
        %7801 = vmatpush2.bf16.msra.mxu0 0
        %7802 = vmatprep.subr.bf16.mxu0 0
        %7803 = vmatpush2.bf16.msra.mxu0 0
        %7804 = vmatprep.subr.bf16.mxu0 0
        %7805 = vmatpush2.bf16.msra.mxu0 0
        %7806 = vmatprep.subr.bf16.mxu0 0
        %7807 = vmatpush2.bf16.msra.mxu0 0
        %7808 = vmatprep.subr.bf16.mxu0 0
        %7809 = vmatpush2.bf16.msra.mxu0 0
        %7810 = vmatprep.subr.bf16.mxu0 0
        %7811 = vmatpush2.bf16.msra.mxu0 0
        %7812 = vmatprep.mubr.bf16.mxu0 0
        %7813 = vmatmul.mubr.bf16.gmra.mxu0 %v2461
        %v7814 = vpop.f32.mrf.mxu0
        %v7815 = vadd.f32 0.0, %v7814
        %v7816 = vpop.f32.mrf.mxu0
        %v7817 = vpop.f32.mrf.mxu0
        %v7818 = vadd.f32 0.0, %v7817
        %v7819 = vpop.f32.mrf.mxu0
        %7820 = vmatprep.mubr.bf16.mxu0 0
        %7821 = vmatmul.mubr.bf16.gmra.mxu0 %v2464
        %v7822 = vpop.f32.mrf.mxu0
        %v7823 = vadd.f32 0.0, %v7822
        %v7824 = vpop.f32.mrf.mxu0
        %v7825 = vpop.f32.mrf.mxu0
        %v7826 = vadd.f32 0.0, %v7825
        %v7827 = vpop.f32.mrf.mxu0
        %7828 = vmatprep.mubr.bf16.mxu0 0
        %7829 = vmatmul.mubr.bf16.gmra.mxu0 %v2467
        %v7830 = vpop.f32.mrf.mxu0
        %v7831 = vadd.f32 0.0, %v7830
        %v7832 = vpop.f32.mrf.mxu0
        %v7833 = vpop.f32.mrf.mxu0
        %v7834 = vadd.f32 0.0, %v7833
        %v7835 = vpop.f32.mrf.mxu0
        %7836 = vmatprep.mubr.bf16.mxu0 0
        %7837 = vmatmul.mubr.bf16.gmra.mxu0 %v2470
        %v7838 = vpop.f32.mrf.mxu0
        %v7839 = vadd.f32 0.0, %v7838
        %v7840 = vpop.f32.mrf.mxu0
        %v7841 = vpop.f32.mrf.mxu0
        %v7842 = vadd.f32 0.0, %v7841
        %v7843 = vpop.f32.mrf.mxu0
        %7844 = vdwg.mxu0
        %v7845 = vpack.c.bf16 %v7818, %v7815
        %v7846 = vpack.c.bf16 %v7826, %v7823
        %v7847 = vpack.c.bf16 %v7834, %v7831
        %v7848 = vpack.c.bf16 %v7842, %v7839
        %s7849 = scalar_lea.vmem %s2, 1120
        %v7850 = vld [vmem:[%s7849] sm:$0xf]
        %v7851 = vld [vmem:[%s7849 + $0x4] sm:$0xf]
        %v7852 = vld [vmem:[%s7849 + $0x8] sm:$0xf]
        %v7853 = vld [vmem:[%s7849 + $0xc] sm:$0xf]
        %v7854 = vld [vmem:[%s7849 + $0x10] sm:$0xf]
        %v7855 = vld [vmem:[%s7849 + $0x14] sm:$0xf]
        %v7856 = vld [vmem:[%s7849 + $0x18] sm:$0xf]
        %v7857 = vld [vmem:[%s7849 + $0x1c] sm:$0xf]
        %v7866 = vunpack.c.l.b16 %v7850
        %v7867 = vunpack.c.l.b16 %v7851
        %v7868 = vunpack.c.l.b16 %v7852
        %v7869 = vunpack.c.l.b16 %v7853
        %v7870 = vunpack.c.l.b16 %v7854
        %v7871 = vunpack.c.l.b16 %v7855
        %v7872 = vunpack.c.l.b16 %v7856
        %v7873 = vunpack.c.l.b16 %v7857
        %v7874 = vpack.c.b16 %v7867, %v7866
        %v7875 = vpack.c.b16 %v7869, %v7868
        %v7876 = vpack.c.b16 %v7871, %v7870
        %v7877 = vpack.c.b16 %v7873, %v7872
        %v7883 = vsel %vm898, %v7845, 0
        %v7886 = vsel %vm898, %v7846, 0
        %v7889 = vsel %vm898, %v7847, 0
        %v7892 = vsel %vm898, %v7848, 0
        %7894 = vmatprep.subr.bf16.mxu0 0
        %7895 = vmatpush1.bf16.msra.mxu0 0
        %7896 = vmatprep.subr.bf16.mxu0 0
        %7897 = vmatpush1.bf16.msra.mxu0 0
        %7898 = vmatprep.subr.bf16.mxu0 0
        %7899 = vmatpush1.bf16.msra.mxu0 0
        %7900 = vmatprep.subr.bf16.mxu0 0
        %7901 = vmatpush1.bf16.msra.mxu0 0
        %7902 = vmatprep.subr.bf16.mxu0 0
        %7903 = vmatpush1.bf16.msra.mxu0 %v7877
        %7904 = vmatprep.subr.bf16.mxu0 0
        %7905 = vmatpush1.bf16.msra.mxu0 %v7876
        %7906 = vmatprep.subr.bf16.mxu0 0
        %7907 = vmatpush1.bf16.msra.mxu0 %v7875
        %7908 = vmatprep.subr.bf16.mxu0 0
        %7909 = vmatpush1.bf16.msra.mxu0 %v7874
        %7910 = vmatprep.subr.bf16.mxu0 0
        %7911 = vmatpush2.bf16.msra.mxu0 0
        %7912 = vmatprep.subr.bf16.mxu0 0
        %7913 = vmatpush2.bf16.msra.mxu0 0
        %7914 = vmatprep.subr.bf16.mxu0 0
        %7915 = vmatpush2.bf16.msra.mxu0 0
        %7916 = vmatprep.subr.bf16.mxu0 0
        %7917 = vmatpush2.bf16.msra.mxu0 0
        %7918 = vmatprep.subr.bf16.mxu0 0
        %7919 = vmatpush2.bf16.msra.mxu0 0
        %7920 = vmatprep.subr.bf16.mxu0 0
        %7921 = vmatpush2.bf16.msra.mxu0 0
        %7922 = vmatprep.subr.bf16.mxu0 0
        %7923 = vmatpush2.bf16.msra.mxu0 0
        %7924 = vmatprep.subr.bf16.mxu0 0
        %7925 = vmatpush2.bf16.msra.mxu0 0
        %7926 = vmatprep.mubr.bf16.mxu0 0
        %7927 = vmatmul.mubr.bf16.gmra.mxu0 %v7883
        %v7928 = vpop.f32.mrf.mxu0
        %v7929 = vadd.f32 0.0, %v7928
        %v7930 = vpop.f32.mrf.mxu0
        %v7931 = vpop.f32.mrf.mxu0
        %v7932 = vadd.f32 0.0, %v7931
        %v7933 = vpop.f32.mrf.mxu0
        %7934 = vmatprep.mubr.bf16.mxu0 0
        %7935 = vmatmul.mubr.bf16.gmra.mxu0 %v7886
        %v7936 = vpop.f32.mrf.mxu0
        %v7937 = vadd.f32 0.0, %v7936
        %v7938 = vpop.f32.mrf.mxu0
        %v7939 = vpop.f32.mrf.mxu0
        %v7940 = vadd.f32 0.0, %v7939
        %v7941 = vpop.f32.mrf.mxu0
        %7942 = vmatprep.mubr.bf16.mxu0 0
        %7943 = vmatmul.mubr.bf16.gmra.mxu0 %v7889
        %v7944 = vpop.f32.mrf.mxu0
        %v7945 = vadd.f32 0.0, %v7944
        %v7946 = vpop.f32.mrf.mxu0
        %v7947 = vpop.f32.mrf.mxu0
        %v7948 = vadd.f32 0.0, %v7947
        %v7949 = vpop.f32.mrf.mxu0
        %7950 = vmatprep.mubr.bf16.mxu0 0
        %7951 = vmatmul.mubr.bf16.gmra.mxu0 %v7892
        %v7952 = vpop.f32.mrf.mxu0
        %v7953 = vadd.f32 0.0, %v7952
        %v7954 = vpop.f32.mrf.mxu0
        %v7955 = vpop.f32.mrf.mxu0
        %v7956 = vadd.f32 0.0, %v7955
        %v7957 = vpop.f32.mrf.mxu0
        %7958 = vdwg.mxu0
        %v7959 = vadd.f32 %v7772, %v7929
        %v7960 = vadd.f32 %v7773, %v7932
        %v7961 = vadd.f32 %v7774, %v7937
        %v7962 = vadd.f32 %v7775, %v7940
        %v7963 = vadd.f32 %v7776, %v7945
        %v7964 = vadd.f32 %v7777, %v7948
        %v7965 = vadd.f32 %v7778, %v7953
        %v7966 = vadd.f32 %v7779, %v7956
        %s7967 = scalar_lea.vmem %s4, 4
        %v7968 = vld [vmem:[%s7967] sm:$0x1]
        %v7970 = vlaneseq
        %v7971 = vshrl.u32 %v7970, 7
        %v7972 = vsub.s32 0, %v7971
        %v7973 = vrot.slane %v7968, %v7972
        %v7975 = vmul.f32 %v7959, %v7973
        %v7976 = vmul.f32 %v7960, %v7973
        %v7977 = vmul.f32 %v7961, %v7973
        %v7978 = vmul.f32 %v7962, %v7973
        %v7979 = vmul.f32 %v7963, %v7973
        %v7980 = vmul.f32 %v7964, %v7973
        %v7981 = vmul.f32 %v7965, %v7973
        %v7982 = vmul.f32 %v7966, %v7973
        %s7983 = scalar_lea.vmem %s5, 4
        %v7984 = vld [vmem:[%s7983] sm:$0x1]
        %v7986 = vlaneseq
        %v7987 = vshrl.u32 %v7986, 7
        %v7988 = vsub.s32 0, %v7987
        %v7989 = vrot.slane %v7984, %v7988
        %v7991 = vadd.f32 %v7975, %v7989
        %v7992 = vadd.f32 %v7976, %v7989
        %v7993 = vadd.f32 %v7977, %v7989
        %v7994 = vadd.f32 %v7978, %v7989
        %v7995 = vadd.f32 %v7979, %v7989
        %v7996 = vadd.f32 %v7980, %v7989
        %v7997 = vadd.f32 %v7981, %v7989
        %v7998 = vadd.f32 %v7982, %v7989
        %v7999 = vadd.f32 %v7991, %v4715
        %v8000 = vadd.f32 %v7992, %v4716
        %v8001 = vadd.f32 %v7993, %v4717
        %v8002 = vadd.f32 %v7994, %v4718
        %v8003 = vadd.f32 %v7995, %v4719
        %v8004 = vadd.f32 %v7996, %v4720
        %v8005 = vadd.f32 %v7997, %v4721
        %v8006 = vadd.f32 %v7998, %v4722
        %v8007 = vmax.f32 %v7999, 0.0
        %v8008 = vmax.f32 %v8000, 0.0
        %v8009 = vmax.f32 %v8001, 0.0
        %v8010 = vmax.f32 %v8002, 0.0
        %v8011 = vmax.f32 %v8003, 0.0
        %v8012 = vmax.f32 %v8004, 0.0
        %v8013 = vmax.f32 %v8005, 0.0
        %v8014 = vmax.f32 %v8006, 0.0
        %8015 = vst.msk [vmem:[%s244] sm:$0xff] %vm898, %v8007
        %8016 = vst.msk [vmem:[%s244 + $0x8] sm:$0xff] %vm898, %v8008
        %8017 = vst.msk [vmem:[%s244 + $0x10] sm:$0xff] %vm898, %v8009
        %8018 = vst.msk [vmem:[%s244 + $0x18] sm:$0xff] %vm898, %v8010
        %8019 = vst.msk [vmem:[%s244 + $0x20] sm:$0xff] %vm898, %v8011
        %8020 = vst.msk [vmem:[%s244 + $0x28] sm:$0xff] %vm898, %v8012
        %8021 = vst.msk [vmem:[%s244 + $0x30] sm:$0xff] %vm898, %v8013
        %8022 = vst.msk [vmem:[%s244 + $0x38] sm:$0xff] %vm898, %v8014
        %s8023 = sand.u32 %s159, 1
        %s8024 = scalar_lea.sflag [#allocation3], %s8023
        %s8025 = sand.u32 %s159, 1
        %s8026 = smul.addr %s8025, 64
        %s8027 = scalar_lea.vmem [#allocation2], %s8026
        // Predicated region
        $region45: #{truncate_resnet_forward.1} parent=43 // pred_check
          %p8028 = pneg %p169
        $region46: #{truncate_resnet_forward.1} parent=43 // pred_check_branch
          %8030 = sbr.rel (%p8028) target = $region48
        $region47: #{truncate_resnet_forward.1} parent=43 // pred_region
          %s8032 = ssub.s32 1024, 1024
          %8033 = vsyncadd %s8024, %s8032
          %s8034 = smul.addr %s20, 8
          %s8035 = smul.addr %s8034, 128
          %s8036 = scalar_lea.hbm %s6, %s8035
          %s8037 = sshll.u32 %s8027, 4
          %s8038 = int_to_ptr.vmem [resolvable:$true] %s8037
          %8043 = dma.vmem_to_hbm [thread:$0]  %s8038, 1024, %s8036, %s8024, 128, 128, 8
        $region48: #{truncate_resnet_forward.1} parent=43 // pred_fallthru
          _
      $region44: #{truncate_resnet_forward.1} parent=5 // pred_fallthru
        _
      %p8044 = scmp.le.s32.totalorder 2, %s15
      // Predicated region
      $region49: #{truncate_resnet_forward.1} parent=5 // pred_check
        %p8045 = pneg %p8044
      $region50: #{truncate_resnet_forward.1} parent=5 // pred_check_branch
        %8047 = sbr.rel (%p8045) target = $region52
      $region51: #{truncate_resnet_forward.1} parent=5 // pred_region
        %s8048 = ssub.s32 %s15, 2
        // Predicated region
        $region53: #{truncate_resnet_forward.1} parent=51 // pred_check
          %p8049 = pneg %p175
        $region54: #{truncate_resnet_forward.1} parent=51 // pred_check_branch
          %8051 = sbr.rel (%p8049) target = $region56
        $region55: #{truncate_resnet_forward.1} parent=51 // pred_region
          %s8052 = sand.u32 %s160, 1
          %s8053 = scalar_lea.sflag [#allocation3], %s8052
          %s8054 = sand.u32 %s160, 1
          %s8055 = smul.addr %s8054, 64
          %s8056 = scalar_lea.vmem [#allocation2], %s8055
          %8057 = dma.done %s8053, 1024
        $region56: #{truncate_resnet_forward.1} parent=51 // pred_fallthru
          _
      $region52: #{truncate_resnet_forward.1} parent=5 // pred_fallthru
        _
    $region6: #{truncate_resnet_forward.1} parent=1 // loop_footer
      %s19 = sadd.s32 1, %s15
    $region7: #{truncate_resnet_forward.1} parent=1 // loop_footer_branch
      %14 = sbr.rel target = $region3
    $region8: #{truncate_resnet_forward.1} parent=1 // loop_exit
      _
    %8058 = vsyncpa [#allocation3], 1
    %s8059 = scalar_lea.sflag [#allocation3], 1
    %8060 = vsyncpa %s8059, 1

</llo_original>
